<compile_context>
chip_gen: v7x
topology: tpu7x:2x2x1
jax: 0.10.0
libtpu: 0.0.40
codegen_flags: <defaults>
</compile_context>

<pallas_src>
import math

import jax
import jax.numpy as jnp
from jax.experimental import pallas as pl
from jax.experimental.pallas import tpu as pltpu

MODEL_DIM = 128
N_HEADS = 4
N_LAYERS = 6
STEP = 256
WINDOW = 512
# Scaled-down demo config (original module uses n_samples = 2**15 -> seq_len = 128)
N_SAMPLES = 2 ** 12
SEQ_LEN = N_SAMPLES // STEP          # 16
HEAD_DIM = MODEL_DIM // N_HEADS      # 32


# --------------------------------- kernel helpers ------------------------------
def _leaky(x, slope=0.2):
    return jnp.where(x > 0, x, slope * x)


def _mm(x, w):
    # bf16 inputs on the MXU, f32 accumulation.
    return jnp.dot(x.astype(w.dtype), w, preferred_element_type=jnp.float32)


def _stack4(x, w0, b0, w1, b1, w2, b2, w3, b3):
    # LinearOutputStack(ch, 3): 3 x (Linear + LeakyReLU(0.2)) + final Linear
    h = _leaky(_mm(x, w0) + b0)
    h = _leaky(_mm(h, w1) + b1)
    h = _leaky(_mm(h, w2) + b2)
    return _mm(h, w3) + b3


# -------------------- kernel 1: plain LinearOutputStack (pos path) -------------
def _linear_stack_kernel(x_ref, w0, b0, w1, b1, w2, b2, w3, b3, o_ref):
    o_ref[...] = _stack4(x_ref[...], w0[...], b0[...], w1[...], b1[...],
                         w2[...], b2[...], w3[...], b3[...]).astype(o_ref.dtype)


def linear_stack(x, params):
    """x: (N, Cin) fp32.  Weights bf16 stored (in, out); biases fp32 (1, out)."""
    w0, b0, w1, b1, w2, b2, w3, b3 = params
    n, c_in = x.shape
    c_out = w3.shape[1]
    pad = (-c_in) % 128                       # lane-align odd in_channels (e.g. 33)
    if pad:
        x = jnp.pad(x, ((0, 0), (0, pad)))
        w0 = jnp.pad(w0, ((0, pad), (0, 0)))
    return pl.pallas_call(
        _linear_stack_kernel,
        out_shape=jax.ShapeDtypeStruct((n, c_out), jnp.float32),
    )(x, w0, b0, w1, b1, w2, b2, w3, b3)


# ------------- kernel 2: framing + window + frame-stack + reduce-stack ---------
def _frame_reduce_kernel(hops_ref, win_ref, pos_ref,
                         wf0, bf0, wf1, bf1, wf2, bf2, wf3, bf3,
                         wr0h, wr0p, br0, wr1, br1, wr2, br2, wr3, br3,
                         o_ref):
    hops = hops_ref[0]                                              # (S+1, STEP)
    # frame s = [hop s, hop s+1]  (STEP == WINDOW // 2), then analysis window
    frames = jnp.concatenate([hops[:-1, :], hops[1:, :]], axis=-1) * win_ref[...]
    h = _stack4(frames, wf0[...], bf0[...], wf1[...], bf1[...],
                wf2[...], bf2[...], wf3[...], bf3[...])             # (S, D)
    p = pos_ref[...]                                                # (S, D)
    # reduce stack with its first-layer weight split -> no lane concat of [h, p]
    r = _leaky(_mm(h, wr0h[...]) + _mm(p, wr0p[...]) + br0[...])
    r = _leaky(_mm(r, wr1[...]) + br1[...])
    r = _leaky(_mm(r, wr2[...]) + br2[...])
    o_ref[0] = (_mm(r, wr3[...]) + br3[...]).astype(o_ref.dtype)


def frame_reduce(hops, window, pos_emb, frame_params, reduce_params):
    b, sp1, step = hops.shape
    s = sp1 - 1
    wf0, bf0, wf1, bf1, wf2, bf2, wf3, bf3 = frame_params
    wr0, br0, wr1, br1, wr2, br2, wr3, br3 = reduce_params
    wr0h, wr0p = wr0[:MODEL_DIM], wr0[MODEL_DIM:]
    win = window.reshape(1, WINDOW)
    args = (hops, win, pos_emb, wf0, bf0, wf1, bf1, wf2, bf2, wf3, bf3,
            wr0h, wr0p, br0, wr1, br1, wr2, br2, wr3, br3)
    in_specs = [pl.BlockSpec((1, sp1, step), lambda i: (i, 0, 0))]
    in_specs += [pl.BlockSpec(a.shape, lambda i: (0, 0)) for a in args[1:]]
    return pl.pallas_call(
        _frame_reduce_kernel,
        out_shape=jax.ShapeDtypeStruct((b, s, MODEL_DIM), jnp.float32),
        grid=(b,),
        in_specs=in_specs,
        out_specs=pl.BlockSpec((1, s, MODEL_DIM), lambda i: (i, 0, 0)),
        compiler_params=pltpu.CompilerParams(dimension_semantics=("parallel",)),
    )(*args)


# ------------- kernel 3: fused 6-layer TransformerEncoder (norm = NoOp) --------
def _transformer_kernel(z_ref, wqkv_ref, bqkv_ref, wo_ref, bo_ref,
                        w1_ref, b1_ref, w2_ref, b2_ref, o_ref, z_sc):
    layer = pl.program_id(1)

    @pl.when(layer == 0)
    def _():
        z_sc[...] = z_ref[0]                                        # residual -> VMEM

    d = z_sc.shape[-1]
    hd = d // N_HEADS
    x = z_sc[...]                                                   # (S, D) f32

    # fused QKV projection: one (D, 3D) matmul instead of three (D, D)
    qkv = _mm(x, wqkv_ref[0]) + bqkv_ref[0]                         # (S, 3D)
    q = qkv[:, :d] * (1.0 / math.sqrt(hd))
    k = qkv[:, d:2 * d]
    v = qkv[:, 2 * d:]

    # per-head attention via lane masks: no 32-lane slices, no lane-axis concat.
    lane = jax.lax.broadcasted_iota(jnp.int32, (1, d), 1)
    attn = jnp.zeros_like(x)
    for h in range(N_HEADS):
        m = ((lane >= h * hd) & (lane < (h + 1) * hd)).astype(jnp.float32)
        scores = jax.lax.dot_general(q, k * m, (((1,), (1,)), ((), ())),
                                     preferred_element_type=jnp.float32)   # (S, S)
        scores = scores - jnp.max(scores, axis=-1, keepdims=True)
        p = jnp.exp(scores)
        p = p * pl.reciprocal(jnp.sum(p, axis=-1, keepdims=True), approx=True)
        attn = attn + jnp.dot(p, v * m, preferred_element_type=jnp.float32)

    x = x + _mm(attn, wo_ref[0]) + bo_ref[0]                        # norm1 = NoOp
    ff = jnp.maximum(_mm(x, w1_ref[0]) + b1_ref[0], 0.0)            # ReLU FFN
    x = x + _mm(ff, w2_ref[0]) + b2_ref[0]                          # norm2 = NoOp
    z_sc[...] = x

    @pl.when(layer == pl.num_programs(1) - 1)
    def _():
        o_ref[0] = x.astype(o_ref.dtype)


def transformer_encoder(z, layer_params):
    """z: (B, S, D).  layer_params: 8 stacked tensors with leading layer axis."""
    b, s, d = z.shape
    wqkv, bqkv, wo, bo, w1, b1, w2, b2 = layer_params
    n_layers = wqkv.shape[0]

    z_spec = pl.BlockSpec((1, s, d), lambda i, l: (i, 0, 0))

    def wspec(a):
        return pl.BlockSpec((1,) + a.shape[1:], lambda i, l: (l, 0, 0))

    return pl.pallas_call(
        _transformer_kernel,
        out_shape=jax.ShapeDtypeStruct((b, s, d), jnp.float32),
        grid=(b, n_layers),
        in_specs=[z_spec, wspec(wqkv), wspec(bqkv), wspec(wo), wspec(bo),
                  wspec(w1), wspec(b1), wspec(w2), wspec(b2)],
        out_specs=pl.BlockSpec((1, s, d), lambda i, l: (i, 0, 0)),
        scratch_shapes=[pltpu.VMEM((s, d), jnp.float32)],
        compiler_params=pltpu.CompilerParams(
            dimension_semantics=("parallel", "arbitrary")),
    )(z, wqkv, bqkv, wo, bo, w1, b1, w2, b2)


# --------- kernel 4: to_samples stack + synthesis window + overlap-add ----------
def _to_samples_oa_kernel(z_ref, win_ref, w0, b0, w1, b1, w2, b2, w3, b3, o_ref):
    s = z_ref.shape[1]
    w = win_ref.shape[1]
    half = w // 2
    y = _stack4(z_ref[0], w0[...], b0[...], w1[...], b1[...],
                w2[...], b2[...], w3[...], b3[...])                 # (S, W)
    f = y * win_ref[...]                                            # synthesis window
    first = f[:, :half]                                             # (S, half)
    second = f[:, half:]                                            # (S, half)
    # direct slice stores (hop = W//2): out[0]=first[0]; out[r]=first[r]+second[r-1]; out[S]=second[S-1]
    o_ref[0, 0:1, :] = first[0:1, :]
    o_ref[0, 1:s, :] = first[1:, :] + second[:s - 1, :]
    o_ref[0, s:s + 1, :] = second[s - 1:, :]


def to_samples_overlap_add(z, window, params):
    b, s, d = z.shape
    w0, b0, w1, b1, w2, b2, w3, b3 = params
    w_out = w3.shape[1]
    half = w_out // 2
    win = window.reshape(1, w_out)
    args = (z, win, w0, b0, w1, b1, w2, b2, w3, b3)
    in_specs = [pl.BlockSpec((1, s, d), lambda i: (i, 0, 0))]
    in_specs += [pl.BlockSpec(a.shape, lambda i: (0, 0)) for a in args[1:]]
    return pl.pallas_call(
        _to_samples_oa_kernel,
        out_shape=jax.ShapeDtypeStruct((b, s + 1, half), jnp.float32),
        grid=(b,),
        in_specs=in_specs,
        out_specs=pl.BlockSpec((1, s + 1, half), lambda i: (i, 0, 0)),
        compiler_params=pltpu.CompilerParams(dimension_semantics=("parallel",)),
    )(*args)


# --------------------------------- plain-JAX glue ------------------------------
def hamming_window(n):
    k = jnp.arange(n, dtype=jnp.float32)
    return 0.54 - 0.46 * jnp.cos(2.0 * jnp.pi * k / n)   # periodic (torch default)


def pos_encoded_feats(time_dim, n_freqs):
    t = jnp.linspace(-1.0, 1.0, time_dim, dtype=jnp.float32)[:, None]   # (T, 1)
    feats = [t]
    for i in range(n_freqs):
        feats.append(jnp.sin((2.0 ** i) * t))
        feats.append(jnp.cos((2.0 ** i) * t))
    return jnp.concatenate(feats, axis=-1)                               # (T, 33)


def _uniform(key, shape, scale=0.1):
    return jax.random.uniform(key, shape, jnp.float32, -scale, scale)


def init_linear_stack(key, c_in, channels, c_out):
    ks = jax.random.split(key, 8)

    def w(k, shape):
        return _uniform(k, shape).astype(jnp.bfloat16)     # bf16 weights, f32 biases

    return (w(ks[0], (c_in, channels)), _uniform(ks[1], (1, channels)),
            w(ks[2], (channels, channels)), _uniform(ks[3], (1, channels)),
            w(ks[4], (channels, channels)), _uniform(ks[5], (1, channels)),
            w(ks[6], (channels, c_out)), _uniform(ks[7], (1, c_out)))


def init_transformer_stack(key, n_layers, d, d_ff):
    ks = jax.random.split(key, 8)

    def w(k, shape):
        return _uniform(k, shape).astype(jnp.bfloat16)

    return (w(ks[0], (n_layers, d, 3 * d)), _uniform(ks[1], (n_layers, 1, 3 * d)),  # fused QKV
            w(ks[2], (n_layers, d, d)),     _uniform(ks[3], (n_layers, 1, d)),      # out proj
            w(ks[4], (n_layers, d, d_ff)),  _uniform(ks[5], (n_layers, 1, d_ff)),   # linear1
            w(ks[6], (n_layers, d_ff, d)),  _uniform(ks[7], (n_layers, 1, d)))      # linear2


def init_generator_params(key):
    ks = jax.random.split(key, 5)
    return {
        'pos': init_linear_stack(ks[0], 33, MODEL_DIM, MODEL_DIM),
        'frame': init_linear_stack(ks[1], WINDOW, MODEL_DIM, MODEL_DIM),
        'reduce': init_linear_stack(ks[2], MODEL_DIM * 2, MODEL_DIM, MODEL_DIM),
        'to_samples': init_linear_stack(ks[3], MODEL_DIM, MODEL_DIM, WINDOW),
        'layers': init_transformer_stack(ks[4], N_LAYERS, MODEL_DIM, MODEL_DIM),
    }


@jax.jit
def generator_forward(x, params):
    """x: (B, 1, N_SAMPLES) fp32 -> (B, 1, N_SAMPLES) fp32."""
    b = x.shape[0]
    window = hamming_window(WINDOW)

    # pad by one hop; keep only hop-sized chunks in HBM (framing happens in-kernel)
    xz = jnp.concatenate([x[:, 0, :], jnp.zeros((b, STEP), x.dtype)], axis=-1)
    hops = xz.reshape(b, SEQ_LEN + 1, STEP)                        # (B, S+1, STEP)

    # positional branch is batch-invariant -> compute once per sequence
    pos_emb = linear_stack(pos_encoded_feats(SEQ_LEN, 16), params['pos'])   # (S, D)

    # fused framing + window + frame-stack + reduce-stack
    z = frame_reduce(hops, window, pos_emb, params['frame'], params['reduce'])

    # fused 6-layer transformer encoder (norm1/norm2 NoOp, dropout identity in eval)
    z = transformer_encoder(z, params['layers'])

    # fused to_samples + synthesis window + overlap-add
    # TODO(synk): the repo's overlap_add window type is not in the snippet;
    # Hamming (matching the registered `self.window`) is used here.
    oa = to_samples_overlap_add(z, window, params['to_samples'])   # (B, S+1, STEP)
    out = oa.reshape(b, (SEQ_LEN + 1) * STEP)[:, :N_SAMPLES]
    return out[:, None, :]


if __name__ == "__main__":
    key = jax.random.PRNGKey(0)
    pkey, xkey = jax.random.split(key)
    params = init_generator_params(pkey)
    x = jax.random.normal(xkey, (2, 1, N_SAMPLES), jnp.float32)
    out = jax.block_until_ready(generator_forward(x, params))
    assert out.shape == (2, 1, N_SAMPLES), out.shape
    assert bool(jnp.all(jnp.isfinite(out)))
    print("KERNEL_OK")
</pallas_src>

<mosaic_0001>
module attributes {stable_mosaic.version = 11 : i64} {
  func.func @_linear_stack_kernel(%arg0: memref<16x128xf32, #tpu.memory_space<vmem>>, %arg1: memref<128x128xbf16, #tpu.memory_space<vmem>>, %arg2: memref<1x128xf32, #tpu.memory_space<vmem>>, %arg3: memref<128x128xbf16, #tpu.memory_space<vmem>>, %arg4: memref<1x128xf32, #tpu.memory_space<vmem>>, %arg5: memref<128x128xbf16, #tpu.memory_space<vmem>>, %arg6: memref<1x128xf32, #tpu.memory_space<vmem>>, %arg7: memref<128x128xbf16, #tpu.memory_space<vmem>>, %arg8: memref<1x128xf32, #tpu.memory_space<vmem>>, %arg9: memref<16x128xf32, #tpu.memory_space<vmem>>) attributes {dimension_semantics = [], scalar_prefetch = 0 : i64, scratch_operands = 0 : i64, tpu.core_type = #tpu.core_type<tc>} {
    %c0 = arith.constant 0 : index
    %c0_0 = arith.constant 0 : index
    %0 = vector.load %arg0[%c0, %c0_0] : memref<16x128xf32, #tpu.memory_space<vmem>>, vector<16x128xf32>
    %c0_1 = arith.constant 0 : index
    %c0_2 = arith.constant 0 : index
    %1 = vector.load %arg1[%c0_1, %c0_2] : memref<128x128xbf16, #tpu.memory_space<vmem>>, vector<128x128xbf16>
    %c0_3 = arith.constant 0 : index
    %c0_4 = arith.constant 0 : index
    %2 = vector.load %arg2[%c0_3, %c0_4] : memref<1x128xf32, #tpu.memory_space<vmem>>, vector<1x128xf32>
    %c0_5 = arith.constant 0 : index
    %c0_6 = arith.constant 0 : index
    %3 = vector.load %arg3[%c0_5, %c0_6] : memref<128x128xbf16, #tpu.memory_space<vmem>>, vector<128x128xbf16>
    %c0_7 = arith.constant 0 : index
    %c0_8 = arith.constant 0 : index
    %4 = vector.load %arg4[%c0_7, %c0_8] : memref<1x128xf32, #tpu.memory_space<vmem>>, vector<1x128xf32>
    %c0_9 = arith.constant 0 : index
    %c0_10 = arith.constant 0 : index
    %5 = vector.load %arg5[%c0_9, %c0_10] : memref<128x128xbf16, #tpu.memory_space<vmem>>, vector<128x128xbf16>
    %c0_11 = arith.constant 0 : index
    %c0_12 = arith.constant 0 : index
    %6 = vector.load %arg6[%c0_11, %c0_12] : memref<1x128xf32, #tpu.memory_space<vmem>>, vector<1x128xf32>
    %c0_13 = arith.constant 0 : index
    %c0_14 = arith.constant 0 : index
    %7 = vector.load %arg7[%c0_13, %c0_14] : memref<128x128xbf16, #tpu.memory_space<vmem>>, vector<128x128xbf16>
    %c0_15 = arith.constant 0 : index
    %c0_16 = arith.constant 0 : index
    %8 = vector.load %arg8[%c0_15, %c0_16] : memref<1x128xf32, #tpu.memory_space<vmem>>, vector<1x128xf32>
    %9 = arith.truncf %0 : vector<16x128xf32> to vector<16x128xbf16>
    %cst = arith.constant dense<0.000000e+00> : vector<16x128xf32>
    %10 = tpu.matmul %9, %1, %cst {dimension_numbers = #tpu.dot_dimension_numbers<[1], [0], [0], [1], [0, 0, 1, 1], [], []>} : vector<16x128xbf16>, vector<128x128xbf16>, vector<16x128xf32> -> vector<16x128xf32>
    %11 = vector.broadcast %2 : vector<1x128xf32> to vector<16x128xf32>
    %12 = arith.addf %10, %11 : vector<16x128xf32>
    %cst_17 = arith.constant 0.000000e+00 : f32
    %13 = vector.broadcast %cst_17 : f32 to vector<16x128xf32>
    %14 = arith.cmpf ogt, %12, %13 : vector<16x128xf32>
    %cst_18 = arith.constant 2.000000e-01 : f32
    %15 = vector.broadcast %cst_18 : f32 to vector<16x128xf32>
    %16 = arith.mulf %15, %12 : vector<16x128xf32>
    %17 = arith.select %14, %12, %16 : vector<16x128xi1>, vector<16x128xf32>
    %18 = arith.truncf %17 : vector<16x128xf32> to vector<16x128xbf16>
    %cst_19 = arith.constant dense<0.000000e+00> : vector<16x128xf32>
    %19 = tpu.matmul %18, %3, %cst_19 {dimension_numbers = #tpu.dot_dimension_numbers<[1], [0], [0], [1], [0, 0, 1, 1], [], []>} : vector<16x128xbf16>, vector<128x128xbf16>, vector<16x128xf32> -> vector<16x128xf32>
    %20 = vector.broadcast %4 : vector<1x128xf32> to vector<16x128xf32>
    %21 = arith.addf %19, %20 : vector<16x128xf32>
    %cst_20 = arith.constant 0.000000e+00 : f32
    %22 = vector.broadcast %cst_20 : f32 to vector<16x128xf32>
    %23 = arith.cmpf ogt, %21, %22 : vector<16x128xf32>
    %cst_21 = arith.constant 2.000000e-01 : f32
    %24 = vector.broadcast %cst_21 : f32 to vector<16x128xf32>
    %25 = arith.mulf %24, %21 : vector<16x128xf32>
    %26 = arith.select %23, %21, %25 : vector<16x128xi1>, vector<16x128xf32>
    %27 = arith.truncf %26 : vector<16x128xf32> to vector<16x128xbf16>
    %cst_22 = arith.constant dense<0.000000e+00> : vector<16x128xf32>
    %28 = tpu.matmul %27, %5, %cst_22 {dimension_numbers = #tpu.dot_dimension_numbers<[1], [0], [0], [1], [0, 0, 1, 1], [], []>} : vector<16x128xbf16>, vector<128x128xbf16>, vector<16x128xf32> -> vector<16x128xf32>
    %29 = vector.broadcast %6 : vector<1x128xf32> to vector<16x128xf32>
    %30 = arith.addf %28, %29 : vector<16x128xf32>
    %cst_23 = arith.constant 0.000000e+00 : f32
    %31 = vector.broadcast %cst_23 : f32 to vector<16x128xf32>
    %32 = arith.cmpf ogt, %30, %31 : vector<16x128xf32>
    %cst_24 = arith.constant 2.000000e-01 : f32
    %33 = vector.broadcast %cst_24 : f32 to vector<16x128xf32>
    %34 = arith.mulf %33, %30 : vector<16x128xf32>
    %35 = arith.select %32, %30, %34 : vector<16x128xi1>, vector<16x128xf32>
    %36 = arith.truncf %35 : vector<16x128xf32> to vector<16x128xbf16>
    %cst_25 = arith.constant dense<0.000000e+00> : vector<16x128xf32>
    %37 = tpu.matmul %36, %7, %cst_25 {dimension_numbers = #tpu.dot_dimension_numbers<[1], [0], [0], [1], [0, 0, 1, 1], [], []>} : vector<16x128xbf16>, vector<128x128xbf16>, vector<16x128xf32> -> vector<16x128xf32>
    %38 = vector.broadcast %8 : vector<1x128xf32> to vector<16x128xf32>
    %39 = arith.addf %37, %38 : vector<16x128xf32>
    %c0_26 = arith.constant 0 : index
    %c0_27 = arith.constant 0 : index
    %40 = vector.load %arg9[%c0_26, %c0_27] : memref<16x128xf32, #tpu.memory_space<vmem>>, vector<16x128xf32>
    tpu.vector_store %arg9[%c0_26, %c0_27], %39 {strides = array<i32>} : memref<16x128xf32, #tpu.memory_space<vmem>>, vector<16x128xf32>,
    return
  }
}

module attributes {stable_mosaic.version = 11 : i64} {
  func.func @_frame_reduce_kernel(%arg0: i32, %arg1: memref<1x17x256xf32, #tpu.memory_space<vmem>>, %arg2: memref<1x512xf32, #tpu.memory_space<vmem>>, %arg3: memref<16x128xf32, #tpu.memory_space<vmem>>, %arg4: memref<512x128xbf16, #tpu.memory_space<vmem>>, %arg5: memref<1x128xf32, #tpu.memory_space<vmem>>, %arg6: memref<128x128xbf16, #tpu.memory_space<vmem>>, %arg7: memref<1x128xf32, #tpu.memory_space<vmem>>, %arg8: memref<128x128xbf16, #tpu.memory_space<vmem>>, %arg9: memref<1x128xf32, #tpu.memory_space<vmem>>, %arg10: memref<128x128xbf16, #tpu.memory_space<vmem>>, %arg11: memref<1x128xf32, #tpu.memory_space<vmem>>, %arg12: memref<128x128xbf16, #tpu.memory_space<vmem>>, %arg13: memref<128x128xbf16, #tpu.memory_space<vmem>>, %arg14: memref<1x128xf32, #tpu.memory_space<vmem>>, %arg15: memref<128x128xbf16, #tpu.memory_space<vmem>>, %arg16: memref<1x128xf32, #tpu.memory_space<vmem>>, %arg17: memref<128x128xbf16, #tpu.memory_space<vmem>>, %arg18: memref<1x128xf32, #tpu.memory_space<vmem>>, %arg19: memref<128x128xbf16, #tpu.memory_space<vmem>>, %arg20: memref<1x128xf32, #tpu.memory_space<vmem>>, %arg21: memref<1x16x128xf32, #tpu.memory_space<vmem>>) attributes {dimension_semantics = [#tpu.dimension_semantics<parallel>], iteration_bounds = array<i64: 2>, scalar_prefetch = 0 : i64, scratch_operands = 0 : i64, tpu.core_type = #tpu.core_type<tc>, window_params = [{transform_indices = @transform_0, window_bounds = array<i64: 1, 17, 256>}, {pipeline_mode = #tpu.pipeline_mode<synchronous>, transform_indices = @transform_1, window_bounds = array<i64: 1, 512>}, {pipeline_mode = #tpu.pipeline_mode<synchronous>, transform_indices = @transform_2, window_bounds = array<i64: 16, 128>}, {pipeline_mode = #tpu.pipeline_mode<synchronous>, transform_indices = @transform_3, window_bounds = array<i64: 512, 128>}, {pipeline_mode = #tpu.pipeline_mode<synchronous>, transform_indices = @transform_4, window_bounds = array<i64: 1, 128>}, {pipeline_mode = #tpu.pipeline_mode<synchronous>, transform_indices = @transform_5, window_bounds = array<i64: 128, 128>}, {pipeline_mode = #tpu.pipeline_mode<synchronous>, transform_indices = @transform_6, window_bounds = array<i64: 1, 128>}, {pipeline_mode = #tpu.pipeline_mode<synchronous>, transform_indices = @transform_7, window_bounds = array<i64: 128, 128>}, {pipeline_mode = #tpu.pipeline_mode<synchronous>, transform_indices = @transform_8, window_bounds = array<i64: 1, 128>}, {pipeline_mode = #tpu.pipeline_mode<synchronous>, transform_indices = @transform_9, window_bounds = array<i64: 128, 128>}, {pipeline_mode = #tpu.pipeline_mode<synchronous>, transform_indices = @transform_10, window_bounds = array<i64: 1, 128>}, {pipeline_mode = #tpu.pipeline_mode<synchronous>, transform_indices = @transform_11, window_bounds = array<i64: 128, 128>}, {pipeline_mode = #tpu.pipeline_mode<synchronous>, transform_indices = @transform_12, window_bounds = array<i64: 128, 128>}, {pipeline_mode = #tpu.pipeline_mode<synchronous>, transform_indices = @transform_13, window_bounds = array<i64: 1, 128>}, {pipeline_mode = #tpu.pipeline_mode<synchronous>, transform_indices = @transform_14, window_bounds = array<i64: 128, 128>}, {pipeline_mode = #tpu.pipeline_mode<synchronous>, transform_indices = @transform_15, window_bounds = array<i64: 1, 128>}, {pipeline_mode = #tpu.pipeline_mode<synchronous>, transform_indices = @transform_16, window_bounds = array<i64: 128, 128>}, {pipeline_mode = #tpu.pipeline_mode<synchronous>, transform_indices = @transform_17, window_bounds = array<i64: 1, 128>}, {pipeline_mode = #tpu.pipeline_mode<synchronous>, transform_indices = @transform_18, window_bounds = array<i64: 128, 128>}, {pipeline_mode = #tpu.pipeline_mode<synchronous>, transform_indices = @transform_19, window_bounds = array<i64: 1, 128>}, {transform_indices = @transform_20, window_bounds = array<i64: 1, 16, 128>}]} {
    %c0 = arith.constant 0 : index
    %c0_0 = arith.constant 0 : index
    %c0_1 = arith.constant 0 : index
    %0 = vector.load %arg1[%c0, %c0_0, %c0_1] : memref<1x17x256xf32, #tpu.memory_space<vmem>>, vector<1x17x256xf32>
    %1 = vector.shape_cast %0 : vector<1x17x256xf32> to vector<17x256xf32>
    %2 = vector.extract_strided_slice %1 {offsets = [0, 0], sizes = [16, 256], strides = [1, 1]} : vector<17x256xf32> to vector<16x256xf32>
    %3 = vector.extract_strided_slice %1 {offsets = [1, 0], sizes = [16, 256], strides = [1, 1]} : vector<17x256xf32> to vector<16x256xf32>
    %4 = tpu.concatenate %2, %3 in 1 : vector<16x256xf32>, vector<16x256xf32> -> vector<16x512xf32>
    %c0_2 = arith.constant 0 : index
    %c0_3 = arith.constant 0 : index
    %5 = vector.load %arg2[%c0_2, %c0_3] : memref<1x512xf32, #tpu.memory_space<vmem>>, vector<1x512xf32>
    %6 = vector.broadcast %5 : vector<1x512xf32> to vector<16x512xf32>
    %7 = arith.mulf %4, %6 : vector<16x512xf32>
    %c0_4 = arith.constant 0 : index
    %c0_5 = arith.constant 0 : index
    %8 = vector.load %arg4[%c0_4, %c0_5] : memref<512x128xbf16, #tpu.memory_space<vmem>>, vector<512x128xbf16>
    %c0_6 = arith.constant 0 : index
    %c0_7 = arith.constant 0 : index
    %9 = vector.load %arg5[%c0_6, %c0_7] : memref<1x128xf32, #tpu.memory_space<vmem>>, vector<1x128xf32>
    %c0_8 = arith.constant 0 : index
    %c0_9 = arith.constant 0 : index
    %10 = vector.load %arg6[%c0_8, %c0_9] : memref<128x128xbf16, #tpu.memory_space<vmem>>, vector<128x128xbf16>
    %c0_10 = arith.constant 0 : index
    %c0_11 = arith.constant 0 : index
    %11 = vector.load %arg7[%c0_10, %c0_11] : memref<1x128xf32, #tpu.memory_space<vmem>>, vector<1x128xf32>
    %c0_12 = arith.constant 0 : index
    %c0_13 = arith.constant 0 : index
    %12 = vector.load %arg8[%c0_12, %c0_13] : memref<128x128xbf16, #tpu.memory_space<vmem>>, vector<128x128xbf16>
    %c0_14 = arith.constant 0 : index
    %c0_15 = arith.constant 0 : index
    %13 = vector.load %arg9[%c0_14, %c0_15] : memref<1x128xf32, #tpu.memory_space<vmem>>, vector<1x128xf32>
    %c0_16 = arith.constant 0 : index
    %c0_17 = arith.constant 0 : index
    %14 = vector.load %arg10[%c0_16, %c0_17] : memref<128x128xbf16, #tpu.memory_space<vmem>>, vector<128x128xbf16>
    %c0_18 = arith.constant 0 : index
    %c0_19 = arith.constant 0 : index
    %15 = vector.load %arg11[%c0_18, %c0_19] : memref<1x128xf32, #tpu.memory_space<vmem>>, vector<1x128xf32>
    %16 = arith.truncf %7 : vector<16x512xf32> to vector<16x512xbf16>
    %cst = arith.constant dense<0.000000e+00> : vector<16x128xf32>
    %17 = tpu.matmul %16, %8, %cst {dimension_numbers = #tpu.dot_dimension_numbers<[1], [0], [0], [1], [0, 0, 1, 1], [], []>} : vector<16x512xbf16>, vector<512x128xbf16>, vector<16x128xf32> -> vector<16x128xf32>
    %18 = vector.broadcast %9 : vector<1x128xf32> to vector<16x128xf32>
    %19 = arith.addf %17, %18 : vector<16x128xf32>
    %cst_20 = arith.constant 0.000000e+00 : f32
    %20 = vector.broadcast %cst_20 : f32 to vector<16x128xf32>
    %21 = arith.cmpf ogt, %19, %20 : vector<16x128xf32>
    %cst_21 = arith.constant 2.000000e-01 : f32
    %22 = vector.broadcast %cst_21 : f32 to vector<16x128xf32>
    %23 = arith.mulf %22, %19 : vector<16x128xf32>
    %24 = arith.select %21, %19, %23 : vector<16x128xi1>, vector<16x128xf32>
    %25 = arith.truncf %24 : vector<16x128xf32> to vector<16x128xbf16>
    %cst_22 = arith.constant dense<0.000000e+00> : vector<16x128xf32>
    %26 = tpu.matmul %25, %10, %cst_22 {dimension_numbers = #tpu.dot_dimension_numbers<[1], [0], [0], [1], [0, 0, 1, 1], [], []>} : vector<16x128xbf16>, vector<128x128xbf16>, vector<16x128xf32> -> vector<16x128xf32>
    %27 = vector.broadcast %11 : vector<1x128xf32> to vector<16x128xf32>
    %28 = arith.addf %26, %27 : vector<16x128xf32>
    %cst_23 = arith.constant 0.000000e+00 : f32
    %29 = vector.broadcast %cst_23 : f32 to vector<16x128xf32>
    %30 = arith.cmpf ogt, %28, %29 : vector<16x128xf32>
    %cst_24 = arith.constant 2.000000e-01 : f32
    %31 = vector.broadcast %cst_24 : f32 to vector<16x128xf32>
    %32 = arith.mulf %31, %28 : vector<16x128xf32>
    %33 = arith.select %30, %28, %32 : vector<16x128xi1>, vector<16x128xf32>
    %34 = arith.truncf %33 : vector<16x128xf32> to vector<16x128xbf16>
    %cst_25 = arith.constant dense<0.000000e+00> : vector<16x128xf32>
    %35 = tpu.matmul %34, %12, %cst_25 {dimension_numbers = #tpu.dot_dimension_numbers<[1], [0], [0], [1], [0, 0, 1, 1], [], []>} : vector<16x128xbf16>, vector<128x128xbf16>, vector<16x128xf32> -> vector<16x128xf32>
    %36 = vector.broadcast %13 : vector<1x128xf32> to vector<16x128xf32>
    %37 = arith.addf %35, %36 : vector<16x128xf32>
    %cst_26 = arith.constant 0.000000e+00 : f32
    %38 = vector.broadcast %cst_26 : f32 to vector<16x128xf32>
    %39 = arith.cmpf ogt, %37, %38 : vector<16x128xf32>
    %cst_27 = arith.constant 2.000000e-01 : f32
    %40 = vector.broadcast %cst_27 : f32 to vector<16x128xf32>
    %41 = arith.mulf %40, %37 : vector<16x128xf32>
    %42 = arith.select %39, %37, %41 : vector<16x128xi1>, vector<16x128xf32>
    %43 = arith.truncf %42 : vector<16x128xf32> to vector<16x128xbf16>
    %cst_28 = arith.constant dense<0.000000e+00> : vector<16x128xf32>
    %44 = tpu.matmul %43, %14, %cst_28 {dimension_numbers = #tpu.dot_dimension_numbers<[1], [0], [0], [1], [0, 0, 1, 1], [], []>} : vector<16x128xbf16>, vector<128x128xbf16>, vector<16x128xf32> -> vector<16x128xf32>
    %45 = vector.broadcast %15 : vector<1x128xf32> to vector<16x128xf32>
    %46 = arith.addf %44, %45 : vector<16x128xf32>
    %c0_29 = arith.constant 0 : index
    %c0_30 = arith.constant 0 : index
    %47 = vector.load %arg3[%c0_29, %c0_30] : memref<16x128xf32, #tpu.memory_space<vmem>>, vector<16x128xf32>
    %c0_31 = arith.constant 0 : index
    %c0_32 = arith.constant 0 : index
    %48 = vector.load %arg12[%c0_31, %c0_32] : memref<128x128xbf16, #tpu.memory_space<vmem>>, vector<128x128xbf16>
    %49 = arith.truncf %46 : vector<16x128xf32> to vector<16x128xbf16>
    %cst_33 = arith.constant dense<0.000000e+00> : vector<16x128xf32>
    %50 = tpu.matmul %49, %48, %cst_33 {dimension_numbers = #tpu.dot_dimension_numbers<[1], [0], [0], [1], [0, 0, 1, 1], [], []>} : vector<16x128xbf16>, vector<128x128xbf16>, vector<16x128xf32> -> vector<16x128xf32>
    %c0_34 = arith.constant 0 : index
    %c0_35 = arith.constant 0 : index
    %51 = vector.load %arg13[%c0_34, %c0_35] : memref<128x128xbf16, #tpu.memory_space<vmem>>, vector<128x128xbf16>
    %52 = arith.truncf %47 : vector<16x128xf32> to vector<16x128xbf16>
    %cst_36 = arith.constant dense<0.000000e+00> : vector<16x128xf32>
    %53 = tpu.matmul %52, %51, %cst_36 {dimension_numbers = #tpu.dot_dimension_numbers<[1], [0], [0], [1], [0, 0, 1, 1], [], []>} : vector<16x128xbf16>, vector<128x128xbf16>, vector<16x128xf32> -> vector<16x128xf32>
    %54 = arith.addf %50, %53 : vector<16x128xf32>
    %c0_37 = arith.constant 0 : index
    %c0_38 = arith.constant 0 : index
    %55 = vector.load %arg14[%c0_37, %c0_38] : memref<1x128xf32, #tpu.memory_space<vmem>>, vector<1x128xf32>
    %56 = vector.broadcast %55 : vector<1x128xf32> to vector<16x128xf32>
    %57 = arith.addf %54, %56 : vector<16x128xf32>
    %cst_39 = arith.constant 0.000000e+00 : f32
    %58 = vector.broadcast %cst_39 : f32 to vector<16x128xf32>
    %59 = arith.cmpf ogt, %57, %58 : vector<16x128xf32>
    %cst_40 = arith.constant 2.000000e-01 : f32
    %60 = vector.broadcast %cst_40 : f32 to vector<16x128xf32>
    %61 = arith.mulf %60, %57 : vector<16x128xf32>
    %62 = arith.select %59, %57, %61 : vector<16x128xi1>, vector<16x128xf32>
    %c0_41 = arith.constant 0 : index
    %c0_42 = arith.constant 0 : index
    %63 = vector.load %arg15[%c0_41, %c0_42] : memref<128x128xbf16, #tpu.memory_space<vmem>>, vector<128x128xbf16>
    %64 = arith.truncf %62 : vector<16x128xf32> to vector<16x128xbf16>
    %cst_43 = arith.constant dense<0.000000e+00> : vector<16x128xf32>
    %65 = tpu.matmul %64, %63, %cst_43 {dimension_numbers = #tpu.dot_dimension_numbers<[1], [0], [0], [1], [0, 0, 1, 1], [], []>} : vector<16x128xbf16>, vector<128x128xbf16>, vector<16x128xf32> -> vector<16x128xf32>
    %c0_44 = arith.constant 0 : index
    %c0_45 = arith.constant 0 : index
    %66 = vector.load %arg16[%c0_44, %c0_45] : memref<1x128xf32, #tpu.memory_space<vmem>>, vector<1x128xf32>
    %67 = vector.broadcast %66 : vector<1x128xf32> to vector<16x128xf32>
    %68 = arith.addf %65, %67 : vector<16x128xf32>
    %cst_46 = arith.constant 0.000000e+00 : f32
    %69 = vector.broadcast %cst_46 : f32 to vector<16x128xf32>
    %70 = arith.cmpf ogt, %68, %69 : vector<16x128xf32>
    %cst_47 = arith.constant 2.000000e-01 : f32
    %71 = vector.broadcast %cst_47 : f32 to vector<16x128xf32>
    %72 = arith.mulf %71, %68 : vector<16x128xf32>
    %73 = arith.select %70, %68, %72 : vector<16x128xi1>, vector<16x128xf32>
    %c0_48 = arith.constant 0 : index
    %c0_49 = arith.constant 0 : index
    %74 = vector.load %arg17[%c0_48, %c0_49] : memref<128x128xbf16, #tpu.memory_space<vmem>>, vector<128x128xbf16>
    %75 = arith.truncf %73 : vector<16x128xf32> to vector<16x128xbf16>
    %cst_50 = arith.constant dense<0.000000e+00> : vector<16x128xf32>
    %76 = tpu.matmul %75, %74, %cst_50 {dimension_numbers = #tpu.dot_dimension_numbers<[1], [0], [0], [1], [0, 0, 1, 1], [], []>} : vector<16x128xbf16>, vector<128x128xbf16>, vector<16x128xf32> -> vector<16x128xf32>
    %c0_51 = arith.constant 0 : index
    %c0_52 = arith.constant 0 : index
    %77 = vector.load %arg18[%c0_51, %c0_52] : memref<1x128xf32, #tpu.memory_space<vmem>>, vector<1x128xf32>
    %78 = vector.broadcast %77 : vector<1x128xf32> to vector<16x128xf32>
    %79 = arith.addf %76, %78 : vector<16x128xf32>
    %cst_53 = arith.constant 0.000000e+00 : f32
    %80 = vector.broadcast %cst_53 : f32 to vector<16x128xf32>
    %81 = arith.cmpf ogt, %79, %80 : vector<16x128xf32>
    %cst_54 = arith.constant 2.000000e-01 : f32
    %82 = vector.broadcast %cst_54 : f32 to vector<16x128xf32>
    %83 = arith.mulf %82, %79 : vector<16x128xf32>
    %84 = arith.select %81, %79, %83 : vector<16x128xi1>, vector<16x128xf32>
    %c0_55 = arith.constant 0 : index
    %c0_56 = arith.constant 0 : index
    %85 = vector.load %arg19[%c0_55, %c0_56] : memref<128x128xbf16, #tpu.memory_space<vmem>>, vector<128x128xbf16>
    %86 = arith.truncf %84 : vector<16x128xf32> to vector<16x128xbf16>
    %cst_57 = arith.constant dense<0.000000e+00> : vector<16x128xf32>
    %87 = tpu.matmul %86, %85, %cst_57 {dimension_numbers = #tpu.dot_dimension_numbers<[1], [0], [0], [1], [0, 0, 1, 1], [], []>} : vector<16x128xbf16>, vector<128x128xbf16>, vector<16x128xf32> -> vector<16x128xf32>
    %c0_58 = arith.constant 0 : index
    %c0_59 = arith.constant 0 : index
    %88 = vector.load %arg20[%c0_58, %c0_59] : memref<1x128xf32, #tpu.memory_space<vmem>>, vector<1x128xf32>
    %89 = vector.broadcast %88 : vector<1x128xf32> to vector<16x128xf32>
    %90 = arith.addf %87, %89 : vector<16x128xf32>
    %c0_60 = arith.constant 0 : index
    %c0_61 = arith.constant 0 : index
    %c0_62 = arith.constant 0 : index
    %91 = vector.load %arg21[%c0_60, %c0_61, %c0_62] : memref<1x16x128xf32, #tpu.memory_space<vmem>>, vector<1x16x128xf32>
    %92 = vector.shape_cast %91 : vector<1x16x128xf32> to vector<16x128xf32>
    %93 = vector.shape_cast %90 : vector<16x128xf32> to vector<1x16x128xf32>
    tpu.vector_store %arg21[%c0_60, %c0_61, %c0_62], %93 {strides = array<i32>} : memref<1x16x128xf32, #tpu.memory_space<vmem>>, vector<1x16x128xf32>,
    return
  }
  func.func @transform_0(%arg0: i32) -> (i32, i32, i32) {
    %c0_i32 = arith.constant 0 : i32
    %c0_i32_0 = arith.constant 0 : i32
    %c0_i32_1 = arith.constant 0 : i32
    return %arg0, %c0_i32, %c0_i32_0 : i32, i32, i32
  }
  func.func @transform_1(%arg0: i32) -> (i32, i32) {
    %c0_i32 = arith.constant 0 : i32
    %c0_i32_0 = arith.constant 0 : i32
    %c0_i32_1 = arith.constant 0 : i32
    return %c0_i32, %c0_i32_0 : i32, i32
  }
  func.func @transform_2(%arg0: i32) -> (i32, i32) {
    %c0_i32 = arith.constant 0 : i32
    %c0_i32_0 = arith.constant 0 : i32
    %c0_i32_1 = arith.constant 0 : i32
    return %c0_i32, %c0_i32_0 : i32, i32
  }
  func.func @transform_3(%arg0: i32) -> (i32, i32) {
    %c0_i32 = arith.constant 0 : i32
    %c0_i32_0 = arith.constant 0 : i32
    %c0_i32_1 = arith.constant 0 : i32
    return %c0_i32, %c0_i32_0 : i32, i32
  }
  func.func @transform_4(%arg0: i32) -> (i32, i32) {
    %c0_i32 = arith.constant 0 : i32
    %c0_i32_0 = arith.constant 0 : i32
    %c0_i32_1 = arith.constant 0 : i32
    return %c0_i32, %c0_i32_0 : i32, i32
  }
  func.func @transform_5(%arg0: i32) -> (i32, i32) {
    %c0_i32 = arith.constant 0 : i32
    %c0_i32_0 = arith.constant 0 : i32
    %c0_i32_1 = arith.constant 0 : i32
    return %c0_i32, %c0_i32_0 : i32, i32
  }
  func.func @transform_6(%arg0: i32) -> (i32, i32) {
    %c0_i32 = arith.constant 0 : i32
    %c0_i32_0 = arith.constant 0 : i32
    %c0_i32_1 = arith.constant 0 : i32
    return %c0_i32, %c0_i32_0 : i32, i32
  }
  func.func @transform_7(%arg0: i32) -> (i32, i32) {
    %c0_i32 = arith.constant 0 : i32
    %c0_i32_0 = arith.constant 0 : i32
    %c0_i32_1 = arith.constant 0 : i32
    return %c0_i32, %c0_i32_0 : i32, i32
  }
  func.func @transform_8(%arg0: i32) -> (i32, i32) {
    %c0_i32 = arith.constant 0 : i32
    %c0_i32_0 = arith.constant 0 : i32
    %c0_i32_1 = arith.constant 0 : i32
    return %c0_i32, %c0_i32_0 : i32, i32
  }
  func.func @transform_9(%arg0: i32) -> (i32, i32) {
    %c0_i32 = arith.constant 0 : i32
    %c0_i32_0 = arith.constant 0 : i32
    %c0_i32_1 = arith.constant 0 : i32
    return %c0_i32, %c0_i32_0 : i32, i32
  }
  func.func @transform_10(%arg0: i32) -> (i32, i32) {
    %c0_i32 = arith.constant 0 : i32
    %c0_i32_0 = arith.constant 0 : i32
    %c0_i32_1 = arith.constant 0 : i32
    return %c0_i32, %c0_i32_0 : i32, i32
  }
  func.func @transform_11(%arg0: i32) -> (i32, i32) {
    %c0_i32 = arith.constant 0 : i32
    %c0_i32_0 = arith.constant 0 : i32
    %c0_i32_1 = arith.constant 0 : i32
    return %c0_i32, %c0_i32_0 : i32, i32
  }
  func.func @transform_12(%arg0: i32) -> (i32, i32) {
    %c0_i32 = arith.constant 0 : i32
    %c0_i32_0 = arith.constant 0 : i32
    %c0_i32_1 = arith.constant 0 : i32
    return %c0_i32, %c0_i32_0 : i32, i32
  }
  func.func @transform_13(%arg0: i32) -> (i32, i32) {
    %c0_i32 = arith.constant 0 : i32
    %c0_i32_0 = arith.constant 0 : i32
    %c0_i32_1 = arith.constant 0 : i32
    return %c0_i32, %c0_i32_0 : i32, i32
  }
  func.func @transform_14(%arg0: i32) -> (i32, i32) {
    %c0_i32 = arith.constant 0 : i32
    %c0_i32_0 = arith.constant 0 : i32
    %c0_i32_1 = arith.constant 0 : i32
    return %c0_i32, %c0_i32_0 : i32, i32
  }
  func.func @transform_15(%arg0: i32) -> (i32, i32) {
    %c0_i32 = arith.constant 0 : i32
    %c0_i32_0 = arith.constant 0 : i32
    %c0_i32_1 = arith.constant 0 : i32
    return %c0_i32, %c0_i32_0 : i32, i32
  }
  func.func @transform_16(%arg0: i32) -> (i32, i32) {
    %c0_i32 = arith.constant 0 : i32
    %c0_i32_0 = arith.constant 0 : i32
    %c0_i32_1 = arith.constant 0 : i32
    return %c0_i32, %c0_i32_0 : i32, i32
  }
  func.func @transform_17(%arg0: i32) -> (i32, i32) {
    %c0_i32 = arith.constant 0 : i32
    %c0_i32_0 = arith.constant 0 : i32
    %c0_i32_1 = arith.constant 0 : i32
    return %c0_i32, %c0_i32_0 : i32, i32
  }
  func.func @transform_18(%arg0: i32) -> (i32, i32) {
    %c0_i32 = arith.constant 0 : i32
    %c0_i32_0 = arith.constant 0 : i32
    %c0_i32_1 = arith.constant 0 : i32
    return %c0_i32, %c0_i32_0 : i32, i32
  }
  func.func @transform_19(%arg0: i32) -> (i32, i32) {
    %c0_i32 = arith.constant 0 : i32
    %c0_i32_0 = arith.constant 0 : i32
    %c0_i32_1 = arith.constant 0 : i32
    return %c0_i32, %c0_i32_0 : i32, i32
  }
  func.func @transform_20(%arg0: i32) -> (i32, i32, i32) {
    %c0_i32 = arith.constant 0 : i32
    %c0_i32_0 = arith.constant 0 : i32
    %c0_i32_1 = arith.constant 0 : i32
    return %arg0, %c0_i32, %c0_i32_0 : i32, i32, i32
  }
}

module attributes {stable_mosaic.version = 11 : i64} {
  func.func @_transformer_kernel(%arg0: i32, %arg1: i32, %arg2: memref<1x16x128xf32, #tpu.memory_space<vmem>>, %arg3: memref<1x128x384xbf16, #tpu.memory_space<vmem>>, %arg4: memref<1x1x384xf32, #tpu.memory_space<vmem>>, %arg5: memref<1x128x128xbf16, #tpu.memory_space<vmem>>, %arg6: memref<1x1x128xf32, #tpu.memory_space<vmem>>, %arg7: memref<1x128x128xbf16, #tpu.memory_space<vmem>>, %arg8: memref<1x1x128xf32, #tpu.memory_space<vmem>>, %arg9: memref<1x128x128xbf16, #tpu.memory_space<vmem>>, %arg10: memref<1x1x128xf32, #tpu.memory_space<vmem>>, %arg11: memref<1x16x128xf32, #tpu.memory_space<vmem>>, %arg12: memref<16x128xf32, #tpu.memory_space<vmem>>) attributes {dimension_semantics = [#tpu.dimension_semantics<parallel>, #tpu.dimension_semantics<arbitrary>], iteration_bounds = array<i64: 2, 6>, scalar_prefetch = 0 : i64, scratch_operands = 1 : i64, tpu.core_type = #tpu.core_type<tc>, window_params = [{transform_indices = @transform_0, window_bounds = array<i64: 1, 16, 128>}, {transform_indices = @transform_1, window_bounds = array<i64: 1, 128, 384>}, {transform_indices = @transform_2, window_bounds = array<i64: 1, 1, 384>}, {transform_indices = @transform_3, window_bounds = array<i64: 1, 128, 128>}, {transform_indices = @transform_4, window_bounds = array<i64: 1, 1, 128>}, {transform_indices = @transform_5, window_bounds = array<i64: 1, 128, 128>}, {transform_indices = @transform_6, window_bounds = array<i64: 1, 1, 128>}, {transform_indices = @transform_7, window_bounds = array<i64: 1, 128, 128>}, {transform_indices = @transform_8, window_bounds = array<i64: 1, 1, 128>}, {transform_indices = @transform_9, window_bounds = array<i64: 1, 16, 128>}]} {
    %c0_i32 = arith.constant 0 : i32
    %0 = arith.cmpi eq, %arg1, %c0_i32 : i32
    %1 = arith.extui %0 : i1 to i32
    %c0_i32_0 = arith.constant 0 : i32
    %2 = arith.cmpi ne, %1, %c0_i32_0 : i32
    scf.if %2 {
      %c0_55 = arith.constant 0 : index
      %c0_56 = arith.constant 0 : index
      %c0_57 = arith.constant 0 : index
      %147 = vector.load %arg2[%c0_55, %c0_56, %c0_57] : memref<1x16x128xf32, #tpu.memory_space<vmem>>, vector<1x16x128xf32>
      %148 = vector.shape_cast %147 : vector<1x16x128xf32> to vector<16x128xf32>
      %c0_58 = arith.constant 0 : index
      %c0_59 = arith.constant 0 : index
      %149 = vector.load %arg12[%c0_58, %c0_59] : memref<16x128xf32, #tpu.memory_space<vmem>>, vector<16x128xf32>
      tpu.vector_store %arg12[%c0_58, %c0_59], %148 {strides = array<i32>} : memref<16x128xf32, #tpu.memory_space<vmem>>, vector<16x128xf32>,
    } else {
    }
    %c0 = arith.constant 0 : index
    %c0_1 = arith.constant 0 : index
    %3 = vector.load %arg12[%c0, %c0_1] : memref<16x128xf32, #tpu.memory_space<vmem>>, vector<16x128xf32>
    %c0_2 = arith.constant 0 : index
    %c0_3 = arith.constant 0 : index
    %c0_4 = arith.constant 0 : index
    %4 = vector.load %arg3[%c0_2, %c0_3, %c0_4] : memref<1x128x384xbf16, #tpu.memory_space<vmem>>, vector<1x128x384xbf16>
    %5 = vector.shape_cast %4 : vector<1x128x384xbf16> to vector<128x384xbf16>
    %6 = arith.truncf %3 : vector<16x128xf32> to vector<16x128xbf16>
    %cst = arith.constant dense<0.000000e+00> : vector<16x384xf32>
    %7 = tpu.matmul %6, %5, %cst {dimension_numbers = #tpu.dot_dimension_numbers<[1], [0], [0], [1], [0, 0, 1, 1], [], []>} : vector<16x128xbf16>, vector<128x384xbf16>, vector<16x384xf32> -> vector<16x384xf32>
    %c0_5 = arith.constant 0 : index
    %c0_6 = arith.constant 0 : index
    %c0_7 = arith.constant 0 : index
    %8 = vector.load %arg4[%c0_5, %c0_6, %c0_7] : memref<1x1x384xf32, #tpu.memory_space<vmem>>, vector<1x1x384xf32>
    %9 = vector.shape_cast %8 : vector<1x1x384xf32> to vector<1x384xf32>
    %10 = vector.broadcast %9 : vector<1x384xf32> to vector<16x384xf32>
    %11 = arith.addf %7, %10 : vector<16x384xf32>
    %12 = vector.extract_strided_slice %11 {offsets = [0, 0], sizes = [16, 128], strides = [1, 1]} : vector<16x384xf32> to vector<16x128xf32>
    %cst_8 = arith.constant 0.176776692 : f32
    %13 = vector.broadcast %cst_8 : f32 to vector<16x128xf32>
    %14 = arith.mulf %12, %13 : vector<16x128xf32>
    %15 = vector.extract_strided_slice %11 {offsets = [0, 128], sizes = [16, 128], strides = [1, 1]} : vector<16x384xf32> to vector<16x128xf32>
    %16 = vector.extract_strided_slice %11 {offsets = [0, 256], sizes = [16, 128], strides = [1, 1]} : vector<16x384xf32> to vector<16x128xf32>
    %17 = tpu.iota {dimensions = array<i32: 1>} : vector<1x128xi32>
    %cst_9 = arith.constant 0.000000e+00 : f32
    %18 = vector.broadcast %cst_9 : f32 to vector<16x128xf32>
    %c0_i32_10 = arith.constant 0 : i32
    %19 = vector.broadcast %c0_i32_10 : i32 to vector<1x128xi32>
    %20 = arith.cmpi sge, %17, %19 : vector<1x128xi32>
    %c32_i32 = arith.constant 32 : i32
    %21 = vector.broadcast %c32_i32 : i32 to vector<1x128xi32>
    %22 = arith.cmpi slt, %17, %21 : vector<1x128xi32>
    %23 = arith.andi %20, %22 : vector<1x128xi1>
    %24 = arith.extui %23 : vector<1x128xi1> to vector<1x128xi32>
    %25 = arith.sitofp %24 : vector<1x128xi32> to vector<1x128xf32>
    %26 = vector.broadcast %25 : vector<1x128xf32> to vector<16x128xf32>
    %27 = arith.mulf %15, %26 : vector<16x128xf32>
    %cst_11 = arith.constant dense<0.000000e+00> : vector<16x16xf32>
    %28 = tpu.matmul %14, %27, %cst_11 {dimension_numbers = #tpu.dot_dimension_numbers<[1], [1], [0], [0], [0, 0, 1, 0], [], []>} : vector<16x128xf32>, vector<16x128xf32>, vector<16x16xf32> -> vector<16x16xf32>
    %cst_12 = arith.constant dense<0xFF800000> : vector<16xf32>
    %29 = vector.multi_reduction <maximumf>, %28, %cst_12 [1] : vector<16x16xf32> to vector<16xf32>
    %30 = vector.shape_cast %29 : vector<16xf32> to vector<16x1xf32>
    %31 = vector.broadcast %30 : vector<16x1xf32> to vector<16x16xf32>
    %32 = arith.subf %28, %31 : vector<16x16xf32>
    %33 = math.exp %32 : vector<16x16xf32>
    %cst_13 = arith.constant dense<0.000000e+00> : vector<16xf32>
    %34 = vector.multi_reduction <add>, %33, %cst_13 [1] : vector<16x16xf32> to vector<16xf32>
    %35 = vector.shape_cast %34 : vector<16xf32> to vector<16x1xf32>
    %36 = tpu.reciprocal %35 {approx = true} : vector<16x1xf32> -> vector<16x1xf32>
    %37 = vector.broadcast %36 : vector<16x1xf32> to vector<16x16xf32>
    %38 = arith.mulf %33, %37 : vector<16x16xf32>
    %39 = vector.broadcast %25 : vector<1x128xf32> to vector<16x128xf32>
    %40 = arith.mulf %16, %39 : vector<16x128xf32>
    %cst_14 = arith.constant dense<0.000000e+00> : vector<16x128xf32>
    %41 = tpu.matmul %38, %40, %cst_14 {dimension_numbers = #tpu.dot_dimension_numbers<[1], [0], [0], [1], [0, 0, 1, 1], [], []>} : vector<16x16xf32>, vector<16x128xf32>, vector<16x128xf32> -> vector<16x128xf32>
    %42 = arith.addf %18, %41 : vector<16x128xf32>
    %c32_i32_15 = arith.constant 32 : i32
    %43 = vector.broadcast %c32_i32_15 : i32 to vector<1x128xi32>
    %44 = arith.cmpi sge, %17, %43 : vector<1x128xi32>
    %c64_i32 = arith.constant 64 : i32
    %45 = vector.broadcast %c64_i32 : i32 to vector<1x128xi32>
    %46 = arith.cmpi slt, %17, %45 : vector<1x128xi32>
    %47 = arith.andi %44, %46 : vector<1x128xi1>
    %48 = arith.extui %47 : vector<1x128xi1> to vector<1x128xi32>
    %49 = arith.sitofp %48 : vector<1x128xi32> to vector<1x128xf32>
    %50 = vector.broadcast %49 : vector<1x128xf32> to vector<16x128xf32>
    %51 = arith.mulf %15, %50 : vector<16x128xf32>
    %cst_16 = arith.constant dense<0.000000e+00> : vector<16x16xf32>
    %52 = tpu.matmul %14, %51, %cst_16 {dimension_numbers = #tpu.dot_dimension_numbers<[1], [1], [0], [0], [0, 0, 1, 0], [], []>} : vector<16x128xf32>, vector<16x128xf32>, vector<16x16xf32> -> vector<16x16xf32>
    %cst_17 = arith.constant dense<0xFF800000> : vector<16xf32>
    %53 = vector.multi_reduction <maximumf>, %52, %cst_17 [1] : vector<16x16xf32> to vector<16xf32>
    %54 = vector.shape_cast %53 : vector<16xf32> to vector<16x1xf32>
    %55 = vector.broadcast %54 : vector<16x1xf32> to vector<16x16xf32>
    %56 = arith.subf %52, %55 : vector<16x16xf32>
    %57 = math.exp %56 : vector<16x16xf32>
    %cst_18 = arith.constant dense<0.000000e+00> : vector<16xf32>
    %58 = vector.multi_reduction <add>, %57, %cst_18 [1] : vector<16x16xf32> to vector<16xf32>
    %59 = vector.shape_cast %58 : vector<16xf32> to vector<16x1xf32>
    %60 = tpu.reciprocal %59 {approx = true} : vector<16x1xf32> -> vector<16x1xf32>
    %61 = vector.broadcast %60 : vector<16x1xf32> to vector<16x16xf32>
    %62 = arith.mulf %57, %61 : vector<16x16xf32>
    %63 = vector.broadcast %49 : vector<1x128xf32> to vector<16x128xf32>
    %64 = arith.mulf %16, %63 : vector<16x128xf32>
    %cst_19 = arith.constant dense<0.000000e+00> : vector<16x128xf32>
    %65 = tpu.matmul %62, %64, %cst_19 {dimension_numbers = #tpu.dot_dimension_numbers<[1], [0], [0], [1], [0, 0, 1, 1], [], []>} : vector<16x16xf32>, vector<16x128xf32>, vector<16x128xf32> -> vector<16x128xf32>
    %66 = arith.addf %42, %65 : vector<16x128xf32>
    %c64_i32_20 = arith.constant 64 : i32
    %67 = vector.broadcast %c64_i32_20 : i32 to vector<1x128xi32>
    %68 = arith.cmpi sge, %17, %67 : vector<1x128xi32>
    %c96_i32 = arith.constant 96 : i32
    %69 = vector.broadcast %c96_i32 : i32 to vector<1x128xi32>
    %70 = arith.cmpi slt, %17, %69 : vector<1x128xi32>
    %71 = arith.andi %68, %70 : vector<1x128xi1>
    %72 = arith.extui %71 : vector<1x128xi1> to vector<1x128xi32>
    %73 = arith.sitofp %72 : vector<1x128xi32> to vector<1x128xf32>
    %74 = vector.broadcast %73 : vector<1x128xf32> to vector<16x128xf32>
    %75 = arith.mulf %15, %74 : vector<16x128xf32>
    %cst_21 = arith.constant dense<0.000000e+00> : vector<16x16xf32>
    %76 = tpu.matmul %14, %75, %cst_21 {dimension_numbers = #tpu.dot_dimension_numbers<[1], [1], [0], [0], [0, 0, 1, 0], [], []>} : vector<16x128xf32>, vector<16x128xf32>, vector<16x16xf32> -> vector<16x16xf32>
    %cst_22 = arith.constant dense<0xFF800000> : vector<16xf32>
    %77 = vector.multi_reduction <maximumf>, %76, %cst_22 [1] : vector<16x16xf32> to vector<16xf32>
    %78 = vector.shape_cast %77 : vector<16xf32> to vector<16x1xf32>
    %79 = vector.broadcast %78 : vector<16x1xf32> to vector<16x16xf32>
    %80 = arith.subf %76, %79 : vector<16x16xf32>
    %81 = math.exp %80 : vector<16x16xf32>
    %cst_23 = arith.constant dense<0.000000e+00> : vector<16xf32>
    %82 = vector.multi_reduction <add>, %81, %cst_23 [1] : vector<16x16xf32> to vector<16xf32>
    %83 = vector.shape_cast %82 : vector<16xf32> to vector<16x1xf32>
    %84 = tpu.reciprocal %83 {approx = true} : vector<16x1xf32> -> vector<16x1xf32>
    %85 = vector.broadcast %84 : vector<16x1xf32> to vector<16x16xf32>
    %86 = arith.mulf %81, %85 : vector<16x16xf32>
    %87 = vector.broadcast %73 : vector<1x128xf32> to vector<16x128xf32>
    %88 = arith.mulf %16, %87 : vector<16x128xf32>
    %cst_24 = arith.constant dense<0.000000e+00> : vector<16x128xf32>
    %89 = tpu.matmul %86, %88, %cst_24 {dimension_numbers = #tpu.dot_dimension_numbers<[1], [0], [0], [1], [0, 0, 1, 1], [], []>} : vector<16x16xf32>, vector<16x128xf32>, vector<16x128xf32> -> vector<16x128xf32>
    %90 = arith.addf %66, %89 : vector<16x128xf32>
    %c96_i32_25 = arith.constant 96 : i32
    %91 = vector.broadcast %c96_i32_25 : i32 to vector<1x128xi32>
    %92 = arith.cmpi sge, %17, %91 : vector<1x128xi32>
    %c128_i32 = arith.constant 128 : i32
    %93 = vector.broadcast %c128_i32 : i32 to vector<1x128xi32>
    %94 = arith.cmpi slt, %17, %93 : vector<1x128xi32>
    %95 = arith.andi %92, %94 : vector<1x128xi1>
    %96 = arith.extui %95 : vector<1x128xi1> to vector<1x128xi32>
    %97 = arith.sitofp %96 : vector<1x128xi32> to vector<1x128xf32>
    %98 = vector.broadcast %97 : vector<1x128xf32> to vector<16x128xf32>
    %99 = arith.mulf %15, %98 : vector<16x128xf32>
    %cst_26 = arith.constant dense<0.000000e+00> : vector<16x16xf32>
    %100 = tpu.matmul %14, %99, %cst_26 {dimension_numbers = #tpu.dot_dimension_numbers<[1], [1], [0], [0], [0, 0, 1, 0], [], []>} : vector<16x128xf32>, vector<16x128xf32>, vector<16x16xf32> -> vector<16x16xf32>
    %cst_27 = arith.constant dense<0xFF800000> : vector<16xf32>
    %101 = vector.multi_reduction <maximumf>, %100, %cst_27 [1] : vector<16x16xf32> to vector<16xf32>
    %102 = vector.shape_cast %101 : vector<16xf32> to vector<16x1xf32>
    %103 = vector.broadcast %102 : vector<16x1xf32> to vector<16x16xf32>
    %104 = arith.subf %100, %103 : vector<16x16xf32>
    %105 = math.exp %104 : vector<16x16xf32>
    %cst_28 = arith.constant dense<0.000000e+00> : vector<16xf32>
    %106 = vector.multi_reduction <add>, %105, %cst_28 [1] : vector<16x16xf32> to vector<16xf32>
    %107 = vector.shape_cast %106 : vector<16xf32> to vector<16x1xf32>
    %108 = tpu.reciprocal %107 {approx = true} : vector<16x1xf32> -> vector<16x1xf32>
    %109 = vector.broadcast %108 : vector<16x1xf32> to vector<16x16xf32>
    %110 = arith.mulf %105, %109 : vector<16x16xf32>
    %111 = vector.broadcast %97 : vector<1x128xf32> to vector<16x128xf32>
    %112 = arith.mulf %16, %111 : vector<16x128xf32>
    %cst_29 = arith.constant dense<0.000000e+00> : vector<16x128xf32>
    %113 = tpu.matmul %110, %112, %cst_29 {dimension_numbers = #tpu.dot_dimension_numbers<[1], [0], [0], [1], [0, 0, 1, 1], [], []>} : vector<16x16xf32>, vector<16x128xf32>, vector<16x128xf32> -> vector<16x128xf32>
    %114 = arith.addf %90, %113 : vector<16x128xf32>
    %c0_30 = arith.constant 0 : index
    %c0_31 = arith.constant 0 : index
    %c0_32 = arith.constant 0 : index
    %115 = vector.load %arg5[%c0_30, %c0_31, %c0_32] : memref<1x128x128xbf16, #tpu.memory_space<vmem>>, vector<1x128x128xbf16>
    %116 = vector.shape_cast %115 : vector<1x128x128xbf16> to vector<128x128xbf16>
    %117 = arith.truncf %114 : vector<16x128xf32> to vector<16x128xbf16>
    %cst_33 = arith.constant dense<0.000000e+00> : vector<16x128xf32>
    %118 = tpu.matmul %117, %116, %cst_33 {dimension_numbers = #tpu.dot_dimension_numbers<[1], [0], [0], [1], [0, 0, 1, 1], [], []>} : vector<16x128xbf16>, vector<128x128xbf16>, vector<16x128xf32> -> vector<16x128xf32>
    %119 = arith.addf %3, %118 : vector<16x128xf32>
    %c0_34 = arith.constant 0 : index
    %c0_35 = arith.constant 0 : index
    %c0_36 = arith.constant 0 : index
    %120 = vector.load %arg6[%c0_34, %c0_35, %c0_36] : memref<1x1x128xf32, #tpu.memory_space<vmem>>, vector<1x1x128xf32>
    %121 = vector.shape_cast %120 : vector<1x1x128xf32> to vector<1x128xf32>
    %122 = vector.broadcast %121 : vector<1x128xf32> to vector<16x128xf32>
    %123 = arith.addf %119, %122 : vector<16x128xf32>
    %c0_37 = arith.constant 0 : index
    %c0_38 = arith.constant 0 : index
    %c0_39 = arith.constant 0 : index
    %124 = vector.load %arg7[%c0_37, %c0_38, %c0_39] : memref<1x128x128xbf16, #tpu.memory_space<vmem>>, vector<1x128x128xbf16>
    %125 = vector.shape_cast %124 : vector<1x128x128xbf16> to vector<128x128xbf16>
    %126 = arith.truncf %123 : vector<16x128xf32> to vector<16x128xbf16>
    %cst_40 = arith.constant dense<0.000000e+00> : vector<16x128xf32>
    %127 = tpu.matmul %126, %125, %cst_40 {dimension_numbers = #tpu.dot_dimension_numbers<[1], [0], [0], [1], [0, 0, 1, 1], [], []>} : vector<16x128xbf16>, vector<128x128xbf16>, vector<16x128xf32> -> vector<16x128xf32>
    %c0_41 = arith.constant 0 : index
    %c0_42 = arith.constant 0 : index
    %c0_43 = arith.constant 0 : index
    %128 = vector.load %arg8[%c0_41, %c0_42, %c0_43] : memref<1x1x128xf32, #tpu.memory_space<vmem>>, vector<1x1x128xf32>
    %129 = vector.shape_cast %128 : vector<1x1x128xf32> to vector<1x128xf32>
    %130 = vector.broadcast %129 : vector<1x128xf32> to vector<16x128xf32>
    %131 = arith.addf %127, %130 : vector<16x128xf32>
    %cst_44 = arith.constant 0.000000e+00 : f32
    %132 = vector.broadcast %cst_44 : f32 to vector<16x128xf32>
    %133 = arith.maximumf %131, %132 : vector<16x128xf32>
    %c0_45 = arith.constant 0 : index
    %c0_46 = arith.constant 0 : index
    %c0_47 = arith.constant 0 : index
    %134 = vector.load %arg9[%c0_45, %c0_46, %c0_47] : memref<1x128x128xbf16, #tpu.memory_space<vmem>>, vector<1x128x128xbf16>
    %135 = vector.shape_cast %134 : vector<1x128x128xbf16> to vector<128x128xbf16>
    %136 = arith.truncf %133 : vector<16x128xf32> to vector<16x128xbf16>
    %cst_48 = arith.constant dense<0.000000e+00> : vector<16x128xf32>
    %137 = tpu.matmul %136, %135, %cst_48 {dimension_numbers = #tpu.dot_dimension_numbers<[1], [0], [0], [1], [0, 0, 1, 1], [], []>} : vector<16x128xbf16>, vector<128x128xbf16>, vector<16x128xf32> -> vector<16x128xf32>
    %138 = arith.addf %123, %137 : vector<16x128xf32>
    %c0_49 = arith.constant 0 : index
    %c0_50 = arith.constant 0 : index
    %c0_51 = arith.constant 0 : index
    %139 = vector.load %arg10[%c0_49, %c0_50, %c0_51] : memref<1x1x128xf32, #tpu.memory_space<vmem>>, vector<1x1x128xf32>
    %140 = vector.shape_cast %139 : vector<1x1x128xf32> to vector<1x128xf32>
    %141 = vector.broadcast %140 : vector<1x128xf32> to vector<16x128xf32>
    %142 = arith.addf %138, %141 : vector<16x128xf32>
    %c0_52 = arith.constant 0 : index
    %c0_53 = arith.constant 0 : index
    %143 = vector.load %arg12[%c0_52, %c0_53] : memref<16x128xf32, #tpu.memory_space<vmem>>, vector<16x128xf32>
    tpu.vector_store %arg12[%c0_52, %c0_53], %142 {strides = array<i32>} : memref<16x128xf32, #tpu.memory_space<vmem>>, vector<16x128xf32>,
    %c5_i32 = arith.constant 5 : i32
    %144 = arith.cmpi eq, %arg1, %c5_i32 : i32
    %145 = arith.extui %144 : i1 to i32
    %c0_i32_54 = arith.constant 0 : i32
    %146 = arith.cmpi ne, %145, %c0_i32_54 : i32
    scf.if %146 {
      %c0_55 = arith.constant 0 : index
      %c0_56 = arith.constant 0 : index
      %c0_57 = arith.constant 0 : index
      %147 = vector.load %arg11[%c0_55, %c0_56, %c0_57] : memref<1x16x128xf32, #tpu.memory_space<vmem>>, vector<1x16x128xf32>
      %148 = vector.shape_cast %147 : vector<1x16x128xf32> to vector<16x128xf32>
      %149 = vector.shape_cast %142 : vector<16x128xf32> to vector<1x16x128xf32>
      tpu.vector_store %arg11[%c0_55, %c0_56, %c0_57], %149 {strides = array<i32>} : memref<1x16x128xf32, #tpu.memory_space<vmem>>, vector<1x16x128xf32>,
    } else {
    }
    return
  }
  func.func @transform_0(%arg0: i32, %arg1: i32) -> (i32, i32, i32) {
    %c0_i32 = arith.constant 0 : i32
    %c0_i32_0 = arith.constant 0 : i32
    %c0_i32_1 = arith.constant 0 : i32
    return %arg0, %c0_i32, %c0_i32_0 : i32, i32, i32
  }
  func.func @transform_1(%arg0: i32, %arg1: i32) -> (i32, i32, i32) {
    %c0_i32 = arith.constant 0 : i32
    %c0_i32_0 = arith.constant 0 : i32
    %c0_i32_1 = arith.constant 0 : i32
    return %arg1, %c0_i32, %c0_i32_0 : i32, i32, i32
  }
  func.func @transform_2(%arg0: i32, %arg1: i32) -> (i32, i32, i32) {
    %c0_i32 = arith.constant 0 : i32
    %c0_i32_0 = arith.constant 0 : i32
    %c0_i32_1 = arith.constant 0 : i32
    return %arg1, %c0_i32, %c0_i32_0 : i32, i32, i32
  }
  func.func @transform_3(%arg0: i32, %arg1: i32) -> (i32, i32, i32) {
    %c0_i32 = arith.constant 0 : i32
    %c0_i32_0 = arith.constant 0 : i32
    %c0_i32_1 = arith.constant 0 : i32
    return %arg1, %c0_i32, %c0_i32_0 : i32, i32, i32
  }
  func.func @transform_4(%arg0: i32, %arg1: i32) -> (i32, i32, i32) {
    %c0_i32 = arith.constant 0 : i32
    %c0_i32_0 = arith.constant 0 : i32
    %c0_i32_1 = arith.constant 0 : i32
    return %arg1, %c0_i32, %c0_i32_0 : i32, i32, i32
  }
  func.func @transform_5(%arg0: i32, %arg1: i32) -> (i32, i32, i32) {
    %c0_i32 = arith.constant 0 : i32
    %c0_i32_0 = arith.constant 0 : i32
    %c0_i32_1 = arith.constant 0 : i32
    return %arg1, %c0_i32, %c0_i32_0 : i32, i32, i32
  }
  func.func @transform_6(%arg0: i32, %arg1: i32) -> (i32, i32, i32) {
    %c0_i32 = arith.constant 0 : i32
    %c0_i32_0 = arith.constant 0 : i32
    %c0_i32_1 = arith.constant 0 : i32
    return %arg1, %c0_i32, %c0_i32_0 : i32, i32, i32
  }
  func.func @transform_7(%arg0: i32, %arg1: i32) -> (i32, i32, i32) {
    %c0_i32 = arith.constant 0 : i32
    %c0_i32_0 = arith.constant 0 : i32
    %c0_i32_1 = arith.constant 0 : i32
    return %arg1, %c0_i32, %c0_i32_0 : i32, i32, i32
  }
  func.func @transform_8(%arg0: i32, %arg1: i32) -> (i32, i32, i32) {
    %c0_i32 = arith.constant 0 : i32
    %c0_i32_0 = arith.constant 0 : i32
    %c0_i32_1 = arith.constant 0 : i32
    return %arg1, %c0_i32, %c0_i32_0 : i32, i32, i32
  }
  func.func @transform_9(%arg0: i32, %arg1: i32) -> (i32, i32, i32) {
    %c0_i32 = arith.constant 0 : i32
    %c0_i32_0 = arith.constant 0 : i32
    %c0_i32_1 = arith.constant 0 : i32
    return %arg0, %c0_i32, %c0_i32_0 : i32, i32, i32
  }
}

module attributes {stable_mosaic.version = 11 : i64} {
  func.func @_to_samples_oa_kernel(%arg0: i32, %arg1: memref<1x16x128xf32, #tpu.memory_space<vmem>>, %arg2: memref<1x512xf32, #tpu.memory_space<vmem>>, %arg3: memref<128x128xbf16, #tpu.memory_space<vmem>>, %arg4: memref<1x128xf32, #tpu.memory_space<vmem>>, %arg5: memref<128x128xbf16, #tpu.memory_space<vmem>>, %arg6: memref<1x128xf32, #tpu.memory_space<vmem>>, %arg7: memref<128x128xbf16, #tpu.memory_space<vmem>>, %arg8: memref<1x128xf32, #tpu.memory_space<vmem>>, %arg9: memref<128x512xbf16, #tpu.memory_space<vmem>>, %arg10: memref<1x512xf32, #tpu.memory_space<vmem>>, %arg11: memref<1x17x256xf32, #tpu.memory_space<vmem>>) attributes {dimension_semantics = [#tpu.dimension_semantics<parallel>], iteration_bounds = array<i64: 2>, scalar_prefetch = 0 : i64, scratch_operands = 0 : i64, tpu.core_type = #tpu.core_type<tc>, window_params = [{transform_indices = @transform_0, window_bounds = array<i64: 1, 16, 128>}, {pipeline_mode = #tpu.pipeline_mode<synchronous>, transform_indices = @transform_1, window_bounds = array<i64: 1, 512>}, {pipeline_mode = #tpu.pipeline_mode<synchronous>, transform_indices = @transform_2, window_bounds = array<i64: 128, 128>}, {pipeline_mode = #tpu.pipeline_mode<synchronous>, transform_indices = @transform_3, window_bounds = array<i64: 1, 128>}, {pipeline_mode = #tpu.pipeline_mode<synchronous>, transform_indices = @transform_4, window_bounds = array<i64: 128, 128>}, {pipeline_mode = #tpu.pipeline_mode<synchronous>, transform_indices = @transform_5, window_bounds = array<i64: 1, 128>}, {pipeline_mode = #tpu.pipeline_mode<synchronous>, transform_indices = @transform_6, window_bounds = array<i64: 128, 128>}, {pipeline_mode = #tpu.pipeline_mode<synchronous>, transform_indices = @transform_7, window_bounds = array<i64: 1, 128>}, {pipeline_mode = #tpu.pipeline_mode<synchronous>, transform_indices = @transform_8, window_bounds = array<i64: 128, 512>}, {pipeline_mode = #tpu.pipeline_mode<synchronous>, transform_indices = @transform_9, window_bounds = array<i64: 1, 512>}, {transform_indices = @transform_10, window_bounds = array<i64: 1, 17, 256>}]} {
    %c0 = arith.constant 0 : index
    %c0_0 = arith.constant 0 : index
    %c0_1 = arith.constant 0 : index
    %0 = vector.load %arg1[%c0, %c0_0, %c0_1] : memref<1x16x128xf32, #tpu.memory_space<vmem>>, vector<1x16x128xf32>
    %1 = vector.shape_cast %0 : vector<1x16x128xf32> to vector<16x128xf32>
    %c0_2 = arith.constant 0 : index
    %c0_3 = arith.constant 0 : index
    %2 = vector.load %arg3[%c0_2, %c0_3] : memref<128x128xbf16, #tpu.memory_space<vmem>>, vector<128x128xbf16>
    %c0_4 = arith.constant 0 : index
    %c0_5 = arith.constant 0 : index
    %3 = vector.load %arg4[%c0_4, %c0_5] : memref<1x128xf32, #tpu.memory_space<vmem>>, vector<1x128xf32>
    %c0_6 = arith.constant 0 : index
    %c0_7 = arith.constant 0 : index
    %4 = vector.load %arg5[%c0_6, %c0_7] : memref<128x128xbf16, #tpu.memory_space<vmem>>, vector<128x128xbf16>
    %c0_8 = arith.constant 0 : index
    %c0_9 = arith.constant 0 : index
    %5 = vector.load %arg6[%c0_8, %c0_9] : memref<1x128xf32, #tpu.memory_space<vmem>>, vector<1x128xf32>
    %c0_10 = arith.constant 0 : index
    %c0_11 = arith.constant 0 : index
    %6 = vector.load %arg7[%c0_10, %c0_11] : memref<128x128xbf16, #tpu.memory_space<vmem>>, vector<128x128xbf16>
    %c0_12 = arith.constant 0 : index
    %c0_13 = arith.constant 0 : index
    %7 = vector.load %arg8[%c0_12, %c0_13] : memref<1x128xf32, #tpu.memory_space<vmem>>, vector<1x128xf32>
    %c0_14 = arith.constant 0 : index
    %c0_15 = arith.constant 0 : index
    %8 = vector.load %arg9[%c0_14, %c0_15] : memref<128x512xbf16, #tpu.memory_space<vmem>>, vector<128x512xbf16>
    %c0_16 = arith.constant 0 : index
    %c0_17 = arith.constant 0 : index
    %9 = vector.load %arg10[%c0_16, %c0_17] : memref<1x512xf32, #tpu.memory_space<vmem>>, vector<1x512xf32>
    %10 = arith.truncf %1 : vector<16x128xf32> to vector<16x128xbf16>
    %cst = arith.constant dense<0.000000e+00> : vector<16x128xf32>
    %11 = tpu.matmul %10, %2, %cst {dimension_numbers = #tpu.dot_dimension_numbers<[1], [0], [0], [1], [0, 0, 1, 1], [], []>} : vector<16x128xbf16>, vector<128x128xbf16>, vector<16x128xf32> -> vector<16x128xf32>
    %12 = vector.broadcast %3 : vector<1x128xf32> to vector<16x128xf32>
    %13 = arith.addf %11, %12 : vector<16x128xf32>
    %cst_18 = arith.constant 0.000000e+00 : f32
    %14 = vector.broadcast %cst_18 : f32 to vector<16x128xf32>
    %15 = arith.cmpf ogt, %13, %14 : vector<16x128xf32>
    %cst_19 = arith.constant 2.000000e-01 : f32
    %16 = vector.broadcast %cst_19 : f32 to vector<16x128xf32>
    %17 = arith.mulf %16, %13 : vector<16x128xf32>
    %18 = arith.select %15, %13, %17 : vector<16x128xi1>, vector<16x128xf32>
    %19 = arith.truncf %18 : vector<16x128xf32> to vector<16x128xbf16>
    %cst_20 = arith.constant dense<0.000000e+00> : vector<16x128xf32>
    %20 = tpu.matmul %19, %4, %cst_20 {dimension_numbers = #tpu.dot_dimension_numbers<[1], [0], [0], [1], [0, 0, 1, 1], [], []>} : vector<16x128xbf16>, vector<128x128xbf16>, vector<16x128xf32> -> vector<16x128xf32>
    %21 = vector.broadcast %5 : vector<1x128xf32> to vector<16x128xf32>
    %22 = arith.addf %20, %21 : vector<16x128xf32>
    %cst_21 = arith.constant 0.000000e+00 : f32
    %23 = vector.broadcast %cst_21 : f32 to vector<16x128xf32>
    %24 = arith.cmpf ogt, %22, %23 : vector<16x128xf32>
    %cst_22 = arith.constant 2.000000e-01 : f32
    %25 = vector.broadcast %cst_22 : f32 to vector<16x128xf32>
    %26 = arith.mulf %25, %22 : vector<16x128xf32>
    %27 = arith.select %24, %22, %26 : vector<16x128xi1>, vector<16x128xf32>
    %28 = arith.truncf %27 : vector<16x128xf32> to vector<16x128xbf16>
    %cst_23 = arith.constant dense<0.000000e+00> : vector<16x128xf32>
    %29 = tpu.matmul %28, %6, %cst_23 {dimension_numbers = #tpu.dot_dimension_numbers<[1], [0], [0], [1], [0, 0, 1, 1], [], []>} : vector<16x128xbf16>, vector<128x128xbf16>, vector<16x128xf32> -> vector<16x128xf32>
    %30 = vector.broadcast %7 : vector<1x128xf32> to vector<16x128xf32>
    %31 = arith.addf %29, %30 : vector<16x128xf32>
    %cst_24 = arith.constant 0.000000e+00 : f32
    %32 = vector.broadcast %cst_24 : f32 to vector<16x128xf32>
    %33 = arith.cmpf ogt, %31, %32 : vector<16x128xf32>
    %cst_25 = arith.constant 2.000000e-01 : f32
    %34 = vector.broadcast %cst_25 : f32 to vector<16x128xf32>
    %35 = arith.mulf %34, %31 : vector<16x128xf32>
    %36 = arith.select %33, %31, %35 : vector<16x128xi1>, vector<16x128xf32>
    %37 = arith.truncf %36 : vector<16x128xf32> to vector<16x128xbf16>
    %cst_26 = arith.constant dense<0.000000e+00> : vector<16x512xf32>
    %38 = tpu.matmul %37, %8, %cst_26 {dimension_numbers = #tpu.dot_dimension_numbers<[1], [0], [0], [1], [0, 0, 1, 1], [], []>} : vector<16x128xbf16>, vector<128x512xbf16>, vector<16x512xf32> -> vector<16x512xf32>
    %39 = vector.broadcast %9 : vector<1x512xf32> to vector<16x512xf32>
    %40 = arith.addf %38, %39 : vector<16x512xf32>
    %c0_27 = arith.constant 0 : index
    %c0_28 = arith.constant 0 : index
    %41 = vector.load %arg2[%c0_27, %c0_28] : memref<1x512xf32, #tpu.memory_space<vmem>>, vector<1x512xf32>
    %42 = vector.broadcast %41 : vector<1x512xf32> to vector<16x512xf32>
    %43 = arith.mulf %40, %42 : vector<16x512xf32>
    %44 = vector.extract_strided_slice %43 {offsets = [0, 0], sizes = [16, 256], strides = [1, 1]} : vector<16x512xf32> to vector<16x256xf32>
    %45 = vector.extract_strided_slice %43 {offsets = [0, 256], sizes = [16, 256], strides = [1, 1]} : vector<16x512xf32> to vector<16x256xf32>
    %46 = vector.extract_strided_slice %44 {offsets = [0, 0], sizes = [1, 256], strides = [1, 1]} : vector<16x256xf32> to vector<1x256xf32>
    %c0_29 = arith.constant 0 : index
    %c0_30 = arith.constant 0 : index
    %c0_31 = arith.constant 0 : index
    %47 = vector.load %arg11[%c0_29, %c0_30, %c0_31] : memref<1x17x256xf32, #tpu.memory_space<vmem>>, vector<1x1x256xf32>
    %48 = vector.shape_cast %47 : vector<1x1x256xf32> to vector<1x256xf32>
    %49 = vector.shape_cast %46 : vector<1x256xf32> to vector<1x1x256xf32>
    tpu.vector_store %arg11[%c0_29, %c0_30, %c0_31], %49 {strides = array<i32>} : memref<1x17x256xf32, #tpu.memory_space<vmem>>, vector<1x1x256xf32>,
    %50 = vector.extract_strided_slice %44 {offsets = [1, 0], sizes = [15, 256], strides = [1, 1]} : vector<16x256xf32> to vector<15x256xf32>
    %51 = vector.extract_strided_slice %45 {offsets = [0, 0], sizes = [15, 256], strides = [1, 1]} : vector<16x256xf32> to vector<15x256xf32>
    %52 = arith.addf %50, %51 : vector<15x256xf32>
    %c0_32 = arith.constant 0 : index
    %c1 = arith.constant 1 : index
    %c0_33 = arith.constant 0 : index
    %53 = vector.load %arg11[%c0_32, %c1, %c0_33] : memref<1x17x256xf32, #tpu.memory_space<vmem>>, vector<1x15x256xf32>
    %54 = vector.shape_cast %53 : vector<1x15x256xf32> to vector<15x256xf32>
    %55 = vector.shape_cast %52 : vector<15x256xf32> to vector<1x15x256xf32>
    tpu.vector_store %arg11[%c0_32, %c1, %c0_33], %55 {strides = array<i32>} : memref<1x17x256xf32, #tpu.memory_space<vmem>>, vector<1x15x256xf32>,
    %56 = vector.extract_strided_slice %45 {offsets = [15, 0], sizes = [1, 256], strides = [1, 1]} : vector<16x256xf32> to vector<1x256xf32>
    %c0_34 = arith.constant 0 : index
    %c16 = arith.constant 16 : index
    %c0_35 = arith.constant 0 : index
    %57 = vector.load %arg11[%c0_34, %c16, %c0_35] : memref<1x17x256xf32, #tpu.memory_space<vmem>>, vector<1x1x256xf32>
    %58 = vector.shape_cast %57 : vector<1x1x256xf32> to vector<1x256xf32>
    %59 = vector.shape_cast %56 : vector<1x256xf32> to vector<1x1x256xf32>
    tpu.vector_store %arg11[%c0_34, %c16, %c0_35], %59 {strides = array<i32>} : memref<1x17x256xf32, #tpu.memory_space<vmem>>, vector<1x1x256xf32>,
    return
  }
  func.func @transform_0(%arg0: i32) -> (i32, i32, i32) {
    %c0_i32 = arith.constant 0 : i32
    %c0_i32_0 = arith.constant 0 : i32
    %c0_i32_1 = arith.constant 0 : i32
    return %arg0, %c0_i32, %c0_i32_0 : i32, i32, i32
  }
  func.func @transform_1(%arg0: i32) -> (i32, i32) {
    %c0_i32 = arith.constant 0 : i32
    %c0_i32_0 = arith.constant 0 : i32
    %c0_i32_1 = arith.constant 0 : i32
    return %c0_i32, %c0_i32_0 : i32, i32
  }
  func.func @transform_2(%arg0: i32) -> (i32, i32) {
    %c0_i32 = arith.constant 0 : i32
    %c0_i32_0 = arith.constant 0 : i32
    %c0_i32_1 = arith.constant 0 : i32
    return %c0_i32, %c0_i32_0 : i32, i32
  }
  func.func @transform_3(%arg0: i32) -> (i32, i32) {
    %c0_i32 = arith.constant 0 : i32
    %c0_i32_0 = arith.constant 0 : i32
    %c0_i32_1 = arith.constant 0 : i32
    return %c0_i32, %c0_i32_0 : i32, i32
  }
  func.func @transform_4(%arg0: i32) -> (i32, i32) {
    %c0_i32 = arith.constant 0 : i32
    %c0_i32_0 = arith.constant 0 : i32
    %c0_i32_1 = arith.constant 0 : i32
    return %c0_i32, %c0_i32_0 : i32, i32
  }
  func.func @transform_5(%arg0: i32) -> (i32, i32) {
    %c0_i32 = arith.constant 0 : i32
    %c0_i32_0 = arith.constant 0 : i32
    %c0_i32_1 = arith.constant 0 : i32
    return %c0_i32, %c0_i32_0 : i32, i32
  }
  func.func @transform_6(%arg0: i32) -> (i32, i32) {
    %c0_i32 = arith.constant 0 : i32
    %c0_i32_0 = arith.constant 0 : i32
    %c0_i32_1 = arith.constant 0 : i32
    return %c0_i32, %c0_i32_0 : i32, i32
  }
  func.func @transform_7(%arg0: i32) -> (i32, i32) {
    %c0_i32 = arith.constant 0 : i32
    %c0_i32_0 = arith.constant 0 : i32
    %c0_i32_1 = arith.constant 0 : i32
    return %c0_i32, %c0_i32_0 : i32, i32
  }
  func.func @transform_8(%arg0: i32) -> (i32, i32) {
    %c0_i32 = arith.constant 0 : i32
    %c0_i32_0 = arith.constant 0 : i32
    %c0_i32_1 = arith.constant 0 : i32
    return %c0_i32, %c0_i32_0 : i32, i32
  }
  func.func @transform_9(%arg0: i32) -> (i32, i32) {
    %c0_i32 = arith.constant 0 : i32
    %c0_i32_0 = arith.constant 0 : i32
    %c0_i32_1 = arith.constant 0 : i32
    return %c0_i32, %c0_i32_0 : i32, i32
  }
  func.func @transform_10(%arg0: i32) -> (i32, i32, i32) {
    %c0_i32 = arith.constant 0 : i32
    %c0_i32_0 = arith.constant 0 : i32
    %c0_i32_1 = arith.constant 0 : i32
    return %arg0, %c0_i32, %c0_i32_0 : i32, i32, i32
  }
}

</mosaic_0001>

<llo_original>
// kernel: sin.128
$region0: #{sin.128}
  #allocation0 [shape = 's32[1]{0}', space=sflag, size = 0x4, scoped, tag = 'scoped memory for sin.128']
  %s0 = inlined_call_operand.vmem [shape: f32[16,1], index: 0, kind: input, shape index: {}]
  %s1 = inlined_call_operand.vmem [shape: f32[16,1], index: 1, kind: output, shape index: {}]
  %v2 = vld [vmem:[%s0] sm:$0x1]
  %v3 = vand.u32 2147483647, %v2
  %vm4 = vcmp.le.f32.partialorder %v3, 0.7853982
  %vm5 = vcmp.lt.s32.totalorder %v2, 0
  %v6 = vand.u32 %v2, 2139095040
  %v7 = vshrl.u32 %v6, 23
  %v8 = vsub.s32 %v7, 127
  %v9 = vand.u32 2147483647, %v2
  %v10 = vand.u32 %v9, 8388607
  %v11 = vor.u32 %v10, 8388608
  %v12 = vsub.s32 0, %v11
  %v13 = vadd.s32 %v8, 1
  %vm14 = vcmp.gt.s32.totalorder %v13, 0
  %v15 = vsel %vm14, %v13, 0
  %v16 = vshrl.u32 %v15, 5
  %v17 = vand.u32 %v15, 31
  %v18 = vsub.s32 32, %v17
  %v19 = vshrl.u32 683565275, %v18
  %v20 = vshll.u32 683565275, %v17
  %v21 = vshrl.u32 2475754826, %v18
  %v22 = vor.u32 %v20, %v21
  %v23 = vshll.u32 2475754826, %v17
  %v24 = vshrl.u32 2131351028, %v18
  %v25 = vor.u32 %v23, %v24
  %v26 = vshll.u32 2131351028, %v17
  %v27 = vshrl.u32 2102212464, %v18
  %v28 = vor.u32 %v26, %v27
  %v29 = vshll.u32 2102212464, %v17
  %v30 = vshrl.u32 920167782, %v18
  %v31 = vor.u32 %v29, %v30
  %v32 = vshll.u32 920167782, %v17
  %v33 = vshrl.u32 1326507024, %v18
  %v34 = vor.u32 %v32, %v33
  %vm35 = vcmp.lt.s32.totalorder %v16, 1
  %vm36 = vcmp.lt.s32.totalorder %v16, 2
  %vm37 = vcmp.lt.s32.totalorder %v16, 3
  %vm38 = vcmp.lt.s32.totalorder %v16, 4
  %v39 = vsel %vm35, %v19, %v22
  %v40 = vsel %vm38, %v28, 2102212464
  %v41 = vsel %vm37, %v25, %v40
  %v42 = vsel %vm36, %v39, %v41
  %v43 = vsel %vm35, %v22, %v25
  %v44 = vsel %vm38, %v31, 920167782
  %v45 = vsel %vm37, %v28, %v44
  %v46 = vsel %vm36, %v43, %v45
  %v47 = vsel %vm35, %v25, %v28
  %v48 = vsel %vm38, %v34, 1326507024
  %v49 = vsel %vm37, %v31, %v48
  %v50 = vsel %vm36, %v47, %v49
  %v51 = vshll.u32 %v11, 8
  %v52 = vmul.u32.u64.compose %v51, %v50
  %v53 = vextract.low.u32 %v52
  %v54 = vextract.high.u32 %v52
  %v55 = vmul.u32.u64.compose %v51, %v46
  %v56 = vextract.low.u32 %v55
  %v57 = vextract.high.u32 %v55
  %v58 = vmul.u32 %v51, %v42
  %v59 = vadd.s32 %v54, %v56
  %vm60 = vc.u32 %v54, %v56
  %v61 = vadd.s32 %v57, 1
  %v62 = vsel %vm60, %v61, %v57
  %v63 = vadd.s32 %v58, %v62
  %v64 = vadd.s32 %v63, 536870912
  %v65 = vshrl.u32 %v64, 30
  %v66 = vshll.u32 %v65, 30
  %v67 = vsub.s32 %v63, %v66
  %vm68 = vcmp.lt.s32.totalorder %v67, 0
  %v69 = vsub.s32 0, %v67
  %v70 = vsel %vm68, %v69, %v67
  %v71 = vclz %v70
  %v72 = vsub.s32 %v71, 2
  %vm73 = vcmp.gt.s32.totalorder 0, %v72
  %v74 = vsel %vm73, 0, %v72
  %v75 = vsub.s32 32, %v74
  %v76 = vshll.u32 %v67, %v74
  %v77 = vshrl.u32 %v59, %v75
  %v78 = vor.u32 %v76, %v77
  %v79 = vsub.s32 4294967266, %v74
  %v80 = vadd.s32 %v79, 127
  %v81 = vshll.u32 %v80, 23
  %v82 = vor.u32 4788187, %v81
  %v83 = vand.u32 2147483647, %v82
  %v85 = vcvt.s32.f32 %v78
  %v86 = vmul.f32 %v85, %v83
  %v87 = vxor.u32 %v86, 2147483648
  %v88 = vsel %vm5, %v87, %v86
  %v89 = vsub.s32 4, %v65
  %v90 = vsel %vm5, %v89, %v65
  %v91 = vsel %vm4, %v2, %v88
  %v92 = vsel %vm4, 0, %v90
  %v93 = vcosq.f32.pop %v91
  %v94 = vsinq.f32.pop %v91
  %vm95 = vweird.f32 %v2
  %v96 = vadd.s32 %v92, 3
  %v97 = vand.u32 %v96, 3
  %vm98 = vcmp.lt.s32.totalorder %v97, 2
  %vm99 = vcmp.eq.s32.totalorder %v97, 0
  %v100 = vxor.u32 %v94, 2147483648
  %v101 = vsel %vm99, %v93, %v100
  %vm102 = vcmp.eq.s32.totalorder %v97, 2
  %v103 = vxor.u32 %v93, 2147483648
  %v104 = vsel %vm102, %v103, %v94
  %v105 = vsel %vm98, %v101, %v104
  %v106 = vsel %vm95, nan, %v105
  %107 = vst [vmem:[%s1] sm:$0x1] %v106

// kernel: generator_forward.4
$region0: #{generator_forward.4}
  #allocation0 [shape = 'u32[]', space=smem, size = 0x4, offset = 0x4, fixed_abs, tag = 'smem constant byte address 0x4 - core index']
  #allocation1 [shape = 'u32[144,128]{1,0:T(1,128)}', space=vmem, size = 0x12000, scoped, tag = 'internal scratch']
  %s0 = inlined_call_operand.vmem [shape: f32[16,128], index: 0, kind: input, shape index: {}]
  %s1 = inlined_call_operand.vmem [shape: bf16[128,128], index: 1, kind: input, shape index: {}]
  %s2 = inlined_call_operand.vmem [shape: f32[1,128], index: 2, kind: input, shape index: {}]
  %s3 = inlined_call_operand.vmem [shape: bf16[128,128], index: 3, kind: input, shape index: {}]
  %s4 = inlined_call_operand.vmem [shape: f32[1,128], index: 4, kind: input, shape index: {}]
  %s5 = inlined_call_operand.vmem [shape: bf16[128,128], index: 5, kind: input, shape index: {}]
  %s6 = inlined_call_operand.vmem [shape: f32[1,128], index: 6, kind: input, shape index: {}]
  %s7 = inlined_call_operand.vmem [shape: bf16[128,128], index: 7, kind: input, shape index: {}]
  %s8 = inlined_call_operand.vmem [shape: f32[1,128], index: 8, kind: input, shape index: {}]
  %s9 = inlined_call_operand.vmem [shape: f32[16,128], index: 9, kind: output, shape index: {}]
  %s10 = sld [smem:[#allocation0]]
  $region46: #{generator_forward.4} parent=0
    _
  %s12 = ssub.s32 1, %s10
  %s13 = scalar_select 0, %s12, %s10
  // Predicated region
  $region2: #{generator_forward.4} parent=0 // pred_check
    _
  $region3: #{generator_forward.4} parent=0 // pred_check_branch
    %15 = sbr.rel (0) target = $region5
  $region4: #{generator_forward.4} parent=0 // pred_region
    _
  $region5: #{generator_forward.4} parent=0 // pred_fallthru
    _
  // Predicated region
  $region6: #{generator_forward.4} parent=0 // pred_check
    _
  $region7: #{generator_forward.4} parent=0 // pred_check_branch
    %17 = sbr.rel (0) target = $region9
  $region8: #{generator_forward.4} parent=0 // pred_region
    _
  $region9: #{generator_forward.4} parent=0 // pred_fallthru
    _
  // Predicated region
  $region10: #{generator_forward.4} parent=0 // pred_check
    _
  $region11: #{generator_forward.4} parent=0 // pred_check_branch
    %19 = sbr.rel (0) target = $region13
  $region12: #{generator_forward.4} parent=0 // pred_region
    _
  $region13: #{generator_forward.4} parent=0 // pred_fallthru
    _
  // Predicated region
  $region14: #{generator_forward.4} parent=0 // pred_check
    _
  $region15: #{generator_forward.4} parent=0 // pred_check_branch
    %21 = sbr.rel (0) target = $region17
  $region16: #{generator_forward.4} parent=0 // pred_region
    _
  $region17: #{generator_forward.4} parent=0 // pred_fallthru
    _
  // Predicated region
  $region18: #{generator_forward.4} parent=0 // pred_check
    _
  $region19: #{generator_forward.4} parent=0 // pred_check_branch
    %23 = sbr.rel (0) target = $region21
  $region20: #{generator_forward.4} parent=0 // pred_region
    _
  $region21: #{generator_forward.4} parent=0 // pred_fallthru
    _
  // Predicated region
  $region22: #{generator_forward.4} parent=0 // pred_check
    _
  $region23: #{generator_forward.4} parent=0 // pred_check_branch
    %25 = sbr.rel (0) target = $region25
  $region24: #{generator_forward.4} parent=0 // pred_region
    _
  $region25: #{generator_forward.4} parent=0 // pred_fallthru
    _
  // Predicated region
  $region26: #{generator_forward.4} parent=0 // pred_check
    _
  $region27: #{generator_forward.4} parent=0 // pred_check_branch
    %27 = sbr.rel (0) target = $region29
  $region28: #{generator_forward.4} parent=0 // pred_region
    _
  $region29: #{generator_forward.4} parent=0 // pred_fallthru
    _
  // Predicated region
  $region30: #{generator_forward.4} parent=0 // pred_check
    _
  $region31: #{generator_forward.4} parent=0 // pred_check_branch
    %29 = sbr.rel (0) target = $region33
  $region32: #{generator_forward.4} parent=0 // pred_region
    _
  $region33: #{generator_forward.4} parent=0 // pred_fallthru
    _
  // Predicated region
  $region34: #{generator_forward.4} parent=0 // pred_check
    _
  $region35: #{generator_forward.4} parent=0 // pred_check_branch
    %31 = sbr.rel (0) target = $region37
  $region36: #{generator_forward.4} parent=0 // pred_region
    _
  $region37: #{generator_forward.4} parent=0 // pred_fallthru
    _
  %v33 = vld [vmem:[%s0] sm:$0xff]
  %v34 = vld [vmem:[%s0 + $0x8] sm:$0xff]
  %v35 = vld [vmem:[%s1] sm:$0xf]
  %v36 = vld [vmem:[%s1 + $0x4] sm:$0xf]
  %v37 = vld [vmem:[%s1 + $0x8] sm:$0xf]
  %v38 = vld [vmem:[%s1 + $0xc] sm:$0xf]
  %v39 = vld [vmem:[%s1 + $0x10] sm:$0xf]
  %v40 = vld [vmem:[%s1 + $0x14] sm:$0xf]
  %v41 = vld [vmem:[%s1 + $0x18] sm:$0xf]
  %v42 = vld [vmem:[%s1 + $0x1c] sm:$0xf]
  %v43 = vld [vmem:[%s1 + $0x20] sm:$0xf]
  %v44 = vld [vmem:[%s1 + $0x24] sm:$0xf]
  %v45 = vld [vmem:[%s1 + $0x28] sm:$0xf]
  %v46 = vld [vmem:[%s1 + $0x2c] sm:$0xf]
  %v47 = vld [vmem:[%s1 + $0x30] sm:$0xf]
  %v48 = vld [vmem:[%s1 + $0x34] sm:$0xf]
  %v49 = vld [vmem:[%s1 + $0x38] sm:$0xf]
  %v50 = vld [vmem:[%s1 + $0x3c] sm:$0xf]
  %v51 = vld [vmem:[%s2] sm:$0x1]
  %v52 = vld [vmem:[%s3] sm:$0xf]
  %v53 = vld [vmem:[%s3 + $0x4] sm:$0xf]
  %v54 = vld [vmem:[%s3 + $0x8] sm:$0xf]
  %v55 = vld [vmem:[%s3 + $0xc] sm:$0xf]
  %v56 = vld [vmem:[%s3 + $0x10] sm:$0xf]
  %v57 = vld [vmem:[%s3 + $0x14] sm:$0xf]
  %v58 = vld [vmem:[%s3 + $0x18] sm:$0xf]
  %v59 = vld [vmem:[%s3 + $0x1c] sm:$0xf]
  %v60 = vld [vmem:[%s3 + $0x20] sm:$0xf]
  %v61 = vld [vmem:[%s3 + $0x24] sm:$0xf]
  %v62 = vld [vmem:[%s3 + $0x28] sm:$0xf]
  %v63 = vld [vmem:[%s3 + $0x2c] sm:$0xf]
  %v64 = vld [vmem:[%s3 + $0x30] sm:$0xf]
  %v65 = vld [vmem:[%s3 + $0x34] sm:$0xf]
  %v66 = vld [vmem:[%s3 + $0x38] sm:$0xf]
  %v67 = vld [vmem:[%s3 + $0x3c] sm:$0xf]
  %v68 = vld [vmem:[%s4] sm:$0x1]
  %v69 = vld [vmem:[%s5] sm:$0xf]
  %v70 = vld [vmem:[%s5 + $0x4] sm:$0xf]
  %v71 = vld [vmem:[%s5 + $0x8] sm:$0xf]
  %v72 = vld [vmem:[%s5 + $0xc] sm:$0xf]
  %v73 = vld [vmem:[%s5 + $0x10] sm:$0xf]
  %v74 = vld [vmem:[%s5 + $0x14] sm:$0xf]
  %v75 = vld [vmem:[%s5 + $0x18] sm:$0xf]
  %v76 = vld [vmem:[%s5 + $0x1c] sm:$0xf]
  %v77 = vld [vmem:[%s5 + $0x20] sm:$0xf]
  %v78 = vld [vmem:[%s5 + $0x24] sm:$0xf]
  %v79 = vld [vmem:[%s5 + $0x28] sm:$0xf]
  %v80 = vld [vmem:[%s5 + $0x2c] sm:$0xf]
  %v81 = vld [vmem:[%s5 + $0x30] sm:$0xf]
  %v82 = vld [vmem:[%s5 + $0x34] sm:$0xf]
  %v83 = vld [vmem:[%s5 + $0x38] sm:$0xf]
  %v84 = vld [vmem:[%s5 + $0x3c] sm:$0xf]
  %v85 = vld [vmem:[%s6] sm:$0x1]
  %v86 = vld [vmem:[%s7] sm:$0xf]
  %v87 = vld [vmem:[%s7 + $0x4] sm:$0xf]
  %v88 = vld [vmem:[%s7 + $0x8] sm:$0xf]
  %v89 = vld [vmem:[%s7 + $0xc] sm:$0xf]
  %v90 = vld [vmem:[%s7 + $0x10] sm:$0xf]
  %v91 = vld [vmem:[%s7 + $0x14] sm:$0xf]
  %v92 = vld [vmem:[%s7 + $0x18] sm:$0xf]
  %v93 = vld [vmem:[%s7 + $0x1c] sm:$0xf]
  %v94 = vld [vmem:[%s7 + $0x20] sm:$0xf]
  %v95 = vld [vmem:[%s7 + $0x24] sm:$0xf]
  %v96 = vld [vmem:[%s7 + $0x28] sm:$0xf]
  %v97 = vld [vmem:[%s7 + $0x2c] sm:$0xf]
  %v98 = vld [vmem:[%s7 + $0x30] sm:$0xf]
  %v99 = vld [vmem:[%s7 + $0x34] sm:$0xf]
  %v100 = vld [vmem:[%s7 + $0x38] sm:$0xf]
  %v101 = vld [vmem:[%s7 + $0x3c] sm:$0xf]
  %v102 = vld [vmem:[%s8] sm:$0x1]
  %v103 = vpack.c.bf16 %v34, %v33
  %v105 = vlaneseq
  %v106 = vshrl.u32 %v105, 7
  %v107 = vsub.s32 0, %v106
  %v108 = vrot.slane %v51, %v107
  %v126 = vunpack.c.l.b16 %v35
  %v127 = vunpack.c.l.b16 %v36
  %v128 = vunpack.c.l.b16 %v37
  %v129 = vunpack.c.l.b16 %v38
  %v130 = vunpack.c.l.b16 %v39
  %v131 = vunpack.c.l.b16 %v40
  %v132 = vunpack.c.l.b16 %v41
  %v133 = vunpack.c.l.b16 %v42
  %v134 = vunpack.c.l.b16 %v43
  %v135 = vunpack.c.l.b16 %v44
  %v136 = vunpack.c.l.b16 %v45
  %v137 = vunpack.c.l.b16 %v46
  %v138 = vunpack.c.l.b16 %v47
  %v139 = vunpack.c.l.b16 %v48
  %v140 = vunpack.c.l.b16 %v49
  %v141 = vunpack.c.l.b16 %v50
  %v142 = vpack.c.b16 %v127, %v126
  %v143 = vpack.c.b16 %v129, %v128
  %v144 = vpack.c.b16 %v131, %v130
  %v145 = vpack.c.b16 %v133, %v132
  %v146 = vpack.c.b16 %v135, %v134
  %v147 = vpack.c.b16 %v137, %v136
  %v148 = vpack.c.b16 %v139, %v138
  %v149 = vpack.c.b16 %v141, %v140
  %158 = vmatprep.subr.bf16.mxu0 0
  %159 = vmatpush1.bf16.msra.mxu0 %v142
  %160 = vmatprep.subr.bf16.mxu0 0
  %161 = vmatpush1.bf16.msra.mxu0 %v143
  %162 = vmatprep.subr.bf16.mxu0 0
  %163 = vmatpush1.bf16.msra.mxu0 %v144
  %164 = vmatprep.subr.bf16.mxu0 0
  %165 = vmatpush1.bf16.msra.mxu0 %v145
  %166 = vmatprep.subr.bf16.mxu0 0
  %167 = vmatpush1.bf16.msra.mxu0 %v146
  %168 = vmatprep.subr.bf16.mxu0 0
  %169 = vmatpush1.bf16.msra.mxu0 %v147
  %170 = vmatprep.subr.bf16.mxu0 0
  %171 = vmatpush1.bf16.msra.mxu0 %v148
  %172 = vmatprep.subr.bf16.mxu0 0
  %173 = vmatpush1.bf16.msra.mxu0 %v149
  %174 = vmatprep.subr.bf16.mxu0 0
  %175 = vmatpush1.bf16.msra.mxu0 0
  %176 = vmatprep.subr.bf16.mxu0 0
  %177 = vmatpush1.bf16.msra.mxu0 0
  %178 = vmatprep.subr.bf16.mxu0 0
  %179 = vmatpush1.bf16.msra.mxu0 0
  %180 = vmatprep.subr.bf16.mxu0 0
  %181 = vmatpush1.bf16.msra.mxu0 0
  %182 = vmatprep.subr.bf16.mxu0 0
  %183 = vmatpush1.bf16.msra.mxu0 0
  %184 = vmatprep.subr.bf16.mxu0 0
  %185 = vmatpush1.bf16.msra.mxu0 0
  %186 = vmatprep.subr.bf16.mxu0 0
  %187 = vmatpush1.bf16.msra.mxu0 0
  %188 = vmatprep.subr.bf16.mxu0 0
  %189 = vmatpush1.bf16.msra.mxu0 0
  %190 = vmatprep.mubr.bf16.mxu0 0
  %191 = vmatmul.mubr.bf16.gmra.mrb[0].mxu0 %v103
  %v192 = vpop.f32.mrb[0].mxu0
  %v193 = vadd.f32 %v108, %v192
  %v194 = vpop.f32.mrb[0].mxu0
  %v195 = vpop.f32.mrb[0].mxu0
  %v196 = vadd.f32 %v108, %v195
  %v197 = vpop.f32.mrb[0].mxu0
  %198 = vdwg.mxu0
  %vm199 = vcmp.gt.f32.partialorder %v193, 0.0
  %vm200 = vcmp.gt.f32.partialorder %v196, 0.0
  %v201 = vmul.f32 %v193, 0.2
  %v202 = vmul.f32 %v196, 0.2
  %v203 = vsel %vm199, %v193, %v201
  %v204 = vsel %vm200, %v196, %v202
  %v205 = vpack.c.bf16 %v204, %v203
  %v207 = vlaneseq
  %v208 = vshrl.u32 %v207, 7
  %v209 = vsub.s32 0, %v208
  %v210 = vrot.slane %v68, %v209
  %v228 = vunpack.c.l.b16 %v52
  %v229 = vunpack.c.l.b16 %v53
  %v230 = vunpack.c.l.b16 %v54
  %v231 = vunpack.c.l.b16 %v55
  %v232 = vunpack.c.l.b16 %v56
  %v233 = vunpack.c.l.b16 %v57
  %v234 = vunpack.c.l.b16 %v58
  %v235 = vunpack.c.l.b16 %v59
  %v236 = vunpack.c.l.b16 %v60
  %v237 = vunpack.c.l.b16 %v61
  %v238 = vunpack.c.l.b16 %v62
  %v239 = vunpack.c.l.b16 %v63
  %v240 = vunpack.c.l.b16 %v64
  %v241 = vunpack.c.l.b16 %v65
  %v242 = vunpack.c.l.b16 %v66
  %v243 = vunpack.c.l.b16 %v67
  %v244 = vpack.c.b16 %v229, %v228
  %v245 = vpack.c.b16 %v231, %v230
  %v246 = vpack.c.b16 %v233, %v232
  %v247 = vpack.c.b16 %v235, %v234
  %v248 = vpack.c.b16 %v237, %v236
  %v249 = vpack.c.b16 %v239, %v238
  %v250 = vpack.c.b16 %v241, %v240
  %v251 = vpack.c.b16 %v243, %v242
  %260 = vmatprep.subr.bf16.mxu0 0
  %261 = vmatpush1.bf16.msra.mxu0 %v244
  %262 = vmatprep.subr.bf16.mxu0 0
  %263 = vmatpush1.bf16.msra.mxu0 %v245
  %264 = vmatprep.subr.bf16.mxu0 0
  %265 = vmatpush1.bf16.msra.mxu0 %v246
  %266 = vmatprep.subr.bf16.mxu0 0
  %267 = vmatpush1.bf16.msra.mxu0 %v247
  %268 = vmatprep.subr.bf16.mxu0 0
  %269 = vmatpush1.bf16.msra.mxu0 %v248
  %270 = vmatprep.subr.bf16.mxu0 0
  %271 = vmatpush1.bf16.msra.mxu0 %v249
  %272 = vmatprep.subr.bf16.mxu0 0
  %273 = vmatpush1.bf16.msra.mxu0 %v250
  %274 = vmatprep.subr.bf16.mxu0 0
  %275 = vmatpush1.bf16.msra.mxu0 %v251
  %276 = vmatprep.subr.bf16.mxu0 0
  %277 = vmatpush1.bf16.msra.mxu0 0
  %278 = vmatprep.subr.bf16.mxu0 0
  %279 = vmatpush1.bf16.msra.mxu0 0
  %280 = vmatprep.subr.bf16.mxu0 0
  %281 = vmatpush1.bf16.msra.mxu0 0
  %282 = vmatprep.subr.bf16.mxu0 0
  %283 = vmatpush1.bf16.msra.mxu0 0
  %284 = vmatprep.subr.bf16.mxu0 0
  %285 = vmatpush1.bf16.msra.mxu0 0
  %286 = vmatprep.subr.bf16.mxu0 0
  %287 = vmatpush1.bf16.msra.mxu0 0
  %288 = vmatprep.subr.bf16.mxu0 0
  %289 = vmatpush1.bf16.msra.mxu0 0
  %290 = vmatprep.subr.bf16.mxu0 0
  %291 = vmatpush1.bf16.msra.mxu0 0
  %292 = vmatprep.mubr.bf16.mxu0 0
  %293 = vmatmul.mubr.bf16.gmra.mrb[0].mxu0 %v205
  %v294 = vpop.f32.mrb[0].mxu0
  %v295 = vadd.f32 %v210, %v294
  %v296 = vpop.f32.mrb[0].mxu0
  %v297 = vpop.f32.mrb[0].mxu0
  %v298 = vadd.f32 %v210, %v297
  %v299 = vpop.f32.mrb[0].mxu0
  %300 = vdwg.mxu0
  %vm301 = vcmp.gt.f32.partialorder %v295, 0.0
  %vm302 = vcmp.gt.f32.partialorder %v298, 0.0
  %v303 = vmul.f32 %v295, 0.2
  %v304 = vmul.f32 %v298, 0.2
  %v305 = vsel %vm301, %v295, %v303
  %v306 = vsel %vm302, %v298, %v304
  %v307 = vpack.c.bf16 %v306, %v305
  %v309 = vlaneseq
  %v310 = vshrl.u32 %v309, 7
  %v311 = vsub.s32 0, %v310
  %v312 = vrot.slane %v85, %v311
  %v330 = vunpack.c.l.b16 %v69
  %v331 = vunpack.c.l.b16 %v70
  %v332 = vunpack.c.l.b16 %v71
  %v333 = vunpack.c.l.b16 %v72
  %v334 = vunpack.c.l.b16 %v73
  %v335 = vunpack.c.l.b16 %v74
  %v336 = vunpack.c.l.b16 %v75
  %v337 = vunpack.c.l.b16 %v76
  %v338 = vunpack.c.l.b16 %v77
  %v339 = vunpack.c.l.b16 %v78
  %v340 = vunpack.c.l.b16 %v79
  %v341 = vunpack.c.l.b16 %v80
  %v342 = vunpack.c.l.b16 %v81
  %v343 = vunpack.c.l.b16 %v82
  %v344 = vunpack.c.l.b16 %v83
  %v345 = vunpack.c.l.b16 %v84
  %v346 = vpack.c.b16 %v331, %v330
  %v347 = vpack.c.b16 %v333, %v332
  %v348 = vpack.c.b16 %v335, %v334
  %v349 = vpack.c.b16 %v337, %v336
  %v350 = vpack.c.b16 %v339, %v338
  %v351 = vpack.c.b16 %v341, %v340
  %v352 = vpack.c.b16 %v343, %v342
  %v353 = vpack.c.b16 %v345, %v344
  %362 = vmatprep.subr.bf16.mxu0 0
  %363 = vmatpush1.bf16.msra.mxu0 %v346
  %364 = vmatprep.subr.bf16.mxu0 0
  %365 = vmatpush1.bf16.msra.mxu0 %v347
  %366 = vmatprep.subr.bf16.mxu0 0
  %367 = vmatpush1.bf16.msra.mxu0 %v348
  %368 = vmatprep.subr.bf16.mxu0 0
  %369 = vmatpush1.bf16.msra.mxu0 %v349
  %370 = vmatprep.subr.bf16.mxu0 0
  %371 = vmatpush1.bf16.msra.mxu0 %v350
  %372 = vmatprep.subr.bf16.mxu0 0
  %373 = vmatpush1.bf16.msra.mxu0 %v351
  %374 = vmatprep.subr.bf16.mxu0 0
  %375 = vmatpush1.bf16.msra.mxu0 %v352
  %376 = vmatprep.subr.bf16.mxu0 0
  %377 = vmatpush1.bf16.msra.mxu0 %v353
  %378 = vmatprep.subr.bf16.mxu0 0
  %379 = vmatpush1.bf16.msra.mxu0 0
  %380 = vmatprep.subr.bf16.mxu0 0
  %381 = vmatpush1.bf16.msra.mxu0 0
  %382 = vmatprep.subr.bf16.mxu0 0
  %383 = vmatpush1.bf16.msra.mxu0 0
  %384 = vmatprep.subr.bf16.mxu0 0
  %385 = vmatpush1.bf16.msra.mxu0 0
  %386 = vmatprep.subr.bf16.mxu0 0
  %387 = vmatpush1.bf16.msra.mxu0 0
  %388 = vmatprep.subr.bf16.mxu0 0
  %389 = vmatpush1.bf16.msra.mxu0 0
  %390 = vmatprep.subr.bf16.mxu0 0
  %391 = vmatpush1.bf16.msra.mxu0 0
  %392 = vmatprep.subr.bf16.mxu0 0
  %393 = vmatpush1.bf16.msra.mxu0 0
  %394 = vmatprep.mubr.bf16.mxu0 0
  %395 = vmatmul.mubr.bf16.gmra.mrb[0].mxu0 %v307
  %v396 = vpop.f32.mrb[0].mxu0
  %v397 = vadd.f32 %v312, %v396
  %v398 = vpop.f32.mrb[0].mxu0
  %v399 = vpop.f32.mrb[0].mxu0
  %v400 = vadd.f32 %v312, %v399
  %v401 = vpop.f32.mrb[0].mxu0
  %402 = vdwg.mxu0
  %vm403 = vcmp.gt.f32.partialorder %v397, 0.0
  %vm404 = vcmp.gt.f32.partialorder %v400, 0.0
  %v405 = vmul.f32 %v397, 0.2
  %v406 = vmul.f32 %v400, 0.2
  %v407 = vsel %vm403, %v397, %v405
  %v408 = vsel %vm404, %v400, %v406
  %v409 = vpack.c.bf16 %v408, %v407
  %v411 = vlaneseq
  %v412 = vshrl.u32 %v411, 7
  %v413 = vsub.s32 0, %v412
  %v414 = vrot.slane %v102, %v413
  %v432 = vunpack.c.l.b16 %v86
  %v433 = vunpack.c.l.b16 %v87
  %v434 = vunpack.c.l.b16 %v88
  %v435 = vunpack.c.l.b16 %v89
  %v436 = vunpack.c.l.b16 %v90
  %v437 = vunpack.c.l.b16 %v91
  %v438 = vunpack.c.l.b16 %v92
  %v439 = vunpack.c.l.b16 %v93
  %v440 = vunpack.c.l.b16 %v94
  %v441 = vunpack.c.l.b16 %v95
  %v442 = vunpack.c.l.b16 %v96
  %v443 = vunpack.c.l.b16 %v97
  %v444 = vunpack.c.l.b16 %v98
  %v445 = vunpack.c.l.b16 %v99
  %v446 = vunpack.c.l.b16 %v100
  %v447 = vunpack.c.l.b16 %v101
  %v448 = vpack.c.b16 %v433, %v432
  %v449 = vpack.c.b16 %v435, %v434
  %v450 = vpack.c.b16 %v437, %v436
  %v451 = vpack.c.b16 %v439, %v438
  %v452 = vpack.c.b16 %v441, %v440
  %v453 = vpack.c.b16 %v443, %v442
  %v454 = vpack.c.b16 %v445, %v444
  %v455 = vpack.c.b16 %v447, %v446
  %464 = vmatprep.subr.bf16.mxu0 0
  %465 = vmatpush1.bf16.msra.mxu0 %v448
  %466 = vmatprep.subr.bf16.mxu0 0
  %467 = vmatpush1.bf16.msra.mxu0 %v449
  %468 = vmatprep.subr.bf16.mxu0 0
  %469 = vmatpush1.bf16.msra.mxu0 %v450
  %470 = vmatprep.subr.bf16.mxu0 0
  %471 = vmatpush1.bf16.msra.mxu0 %v451
  %472 = vmatprep.subr.bf16.mxu0 0
  %473 = vmatpush1.bf16.msra.mxu0 %v452
  %474 = vmatprep.subr.bf16.mxu0 0
  %475 = vmatpush1.bf16.msra.mxu0 %v453
  %476 = vmatprep.subr.bf16.mxu0 0
  %477 = vmatpush1.bf16.msra.mxu0 %v454
  %478 = vmatprep.subr.bf16.mxu0 0
  %479 = vmatpush1.bf16.msra.mxu0 %v455
  %480 = vmatprep.subr.bf16.mxu0 0
  %481 = vmatpush1.bf16.msra.mxu0 0
  %482 = vmatprep.subr.bf16.mxu0 0
  %483 = vmatpush1.bf16.msra.mxu0 0
  %484 = vmatprep.subr.bf16.mxu0 0
  %485 = vmatpush1.bf16.msra.mxu0 0
  %486 = vmatprep.subr.bf16.mxu0 0
  %487 = vmatpush1.bf16.msra.mxu0 0
  %488 = vmatprep.subr.bf16.mxu0 0
  %489 = vmatpush1.bf16.msra.mxu0 0
  %490 = vmatprep.subr.bf16.mxu0 0
  %491 = vmatpush1.bf16.msra.mxu0 0
  %492 = vmatprep.subr.bf16.mxu0 0
  %493 = vmatpush1.bf16.msra.mxu0 0
  %494 = vmatprep.subr.bf16.mxu0 0
  %495 = vmatpush1.bf16.msra.mxu0 0
  %496 = vmatprep.mubr.bf16.mxu0 0
  %497 = vmatmul.mubr.bf16.gmra.mrb[0].mxu0 %v409
  %v498 = vpop.f32.mrb[0].mxu0
  %v499 = vadd.f32 %v414, %v498
  %v500 = vpop.f32.mrb[0].mxu0
  %v501 = vpop.f32.mrb[0].mxu0
  %v502 = vadd.f32 %v414, %v501
  %v503 = vpop.f32.mrb[0].mxu0
  %504 = vdwg.mxu0
  %505 = vst [vmem:[%s9] sm:$0xff] %v499
  %506 = vst [vmem:[%s9 + $0x8] sm:$0xff] %v502
  // Predicated region
  $region38: #{generator_forward.4} parent=0 // pred_check
    _
  $region39: #{generator_forward.4} parent=0 // pred_check_branch
    %508 = sbr.rel (0) target = $region41
  $region40: #{generator_forward.4} parent=0 // pred_region
    _
  $region41: #{generator_forward.4} parent=0 // pred_fallthru
    _
  // Predicated region
  $region42: #{generator_forward.4} parent=0 // pred_check
    _
  $region43: #{generator_forward.4} parent=0 // pred_check_branch
    %510 = sbr.rel (0) target = $region45
  $region44: #{generator_forward.4} parent=0 // pred_region
    _
  $region45: #{generator_forward.4} parent=0 // pred_fallthru
    _

// kernel: generator_forward.6
$region0: #{generator_forward.6}
  #allocation0 [shape = 'u32[]', space=smem, size = 0x4, offset = 0x4, fixed_abs, tag = 'smem constant byte address 0x4 - core index']
  #allocation1 [shape = 'u32[144,128]{1,0:T(1,128)}', space=vmem, size = 0x12000, scoped, tag = 'internal scratch']
  #allocation2 [shape = 'f32[16,128]{1,0:T(8,128)}', space=vmem, size = 0x2000, scoped, tag = 'scratch operand']
  %s0 = inlined_call_operand.vmem [shape: f32[2,16,128], index: 0, kind: input, shape index: {}]
  %s1 = inlined_call_operand.vmem [shape: bf16[6,128,384], index: 1, kind: input, shape index: {}]
  %s2 = inlined_call_operand.vmem [shape: f32[6,1,384], index: 2, kind: input, shape index: {}]
  %s3 = inlined_call_operand.vmem [shape: bf16[6,128,128], index: 3, kind: input, shape index: {}]
  %s4 = inlined_call_operand.vmem [shape: f32[6,1,128], index: 4, kind: input, shape index: {}]
  %s5 = inlined_call_operand.vmem [shape: bf16[6,128,128], index: 5, kind: input, shape index: {}]
  %s6 = inlined_call_operand.hbm [shape: f32[6,1,128], index: 6, kind: input, shape index: {}]
  %s7 = inlined_call_operand.vmem [shape: bf16[6,128,128], index: 7, kind: input, shape index: {}]
  %s8 = inlined_call_operand.hbm [shape: f32[6,1,128], index: 8, kind: input, shape index: {}]
  %s9 = inlined_call_operand.vmem [shape: f32[2,16,128], index: 9, kind: output, shape index: {}]
  %s10 = sld [smem:[#allocation0]]
  $region85: #{generator_forward.6} parent=0
    _
  %s12 = ssub.s32 1, %s10
  %s13 = scalar_select 0, %s12, %s10
  $region1: #{generator_forward.6} parent=0
    #allocation3 [shape = 'u8[1024]{0}', space=vmem, size = 0x400, scoped, tag = 'input window, operand 6']
    #allocation4 [shape = 's32[2]{0}', space=sflag, size = 0x8, scoped, tag = 'scoped memory for generator_forward.6']
    #allocation5 [shape = 'u8[1024]{0}', space=vmem, size = 0x400, scoped, tag = 'input window, operand 8']
    #allocation6 [shape = 's32[2]{0}', space=sflag, size = 0x8, scoped, tag = 'scoped memory for generator_forward.6']
    %14 = vsyncpa [#allocation4], 0
    %s15 = scalar_lea.sflag [#allocation4], 1
    %16 = vsyncpa %s15, 0
    %17 = vsyncpa [#allocation6], 0
    %s18 = scalar_lea.sflag [#allocation6], 1
    %19 = vsyncpa %s18, 0
    loop: start=0, step=1, limit=14
    $region2: #{generator_forward.6} parent=1 // loop_pre_header
      _
    $region3: #{generator_forward.6} parent=1 // loop_header
      %s21 = sphi 0, %s25
      %p22 = scmp.ge.s32.totalorder %s21, 14
      %s28 = sphi 0, %s40
      %s29 = sphi 0, %s36
      %s30 = sphi 0, %s28
      %s31 = sphi 0, %s29
      %s32 = sphi 0, %s30
      %s33 = sphi 0, %s31
      %s43 = sphi 0, %s45
      %s46 = sphi 0, %s43
      %s47 = sphi 0, %s46
      %s63 = sphi 0, %s47
      %s69 = sphi 0, %s71
      %s72 = sphi 0, %s69
      %s73 = sphi 0, %s72
      %s89 = sphi 0, %s73
      %s95 = sphi 0, %s97
      %s98 = sphi 0, %s95
      %s99 = sphi 0, %s98
      %s115 = sphi 0, %s99
      %s121 = sphi 0, %s123
      %s124 = sphi 0, %s121
      %s125 = sphi 0, %s124
      %s141 = sphi 0, %s125
      %s147 = sphi 0, %s149
      %s150 = sphi 0, %s147
      %s151 = sphi 0, %s150
      %s167 = sphi 0, %s151
      %s173 = sphi 0, %s175
      %s176 = sphi 0, %s173
      %s177 = sphi 0, %s176
      %s193 = sphi 0, %s177
      %s199 = sphi 0, %s201
      %s202 = sphi 0, %s199
      %s203 = sphi 0, %s202
      %s219 = sphi 0, %s203
      %s225 = sphi 0, %s227
      %s228 = sphi 0, %s225
      %s229 = sphi 0, %s228
      %s245 = sphi 0, %s229
      %s251 = sphi 0, %s253
      %s254 = sphi 0, %s251
      %s255 = sphi 0, %s254
      %s271 = sphi 0, %s255
      %s277 = sphi 0, %s279
      %s280 = sphi 0, %s277
      %s281 = sphi 0, %s280
      %s297 = sphi 0, %s281
    $region4: #{generator_forward.6} parent=1 // loop_header_branch
      %24 = sbr.rel (%p22) target = $region8
    $region5: #{generator_forward.6} parent=1 // loop_body
      %s26 = ssub.s32 %s21, 1
      %s27 = ssub.s32 %s21, 2
      %s34 = sadd.s32 1, %s29
      %p35 = scmp.ge.s32.totalorder %s34, 6
      %s36 = scalar_select %p35, 0, %s34
      %s37 = sadd.s32 1, %s28
      %s38 = scalar_select %p35, %s37, %s28
      %p39 = scmp.ge.s32.totalorder %s38, 2
      %s40 = scalar_select %p39, 0, %s38
      %s41 = ssub.s32 %s28, %s40
      %p42 = scmp.eq.s32.totalorder %s41, 0
      %s44 = sadd.s32 %s43, 1
      %s45 = scalar_select %p42, %s43, %s44
      %p48 = pneg %p42
      %p49 = scmp.eq.s32.totalorder %s21, 11
      %p50 = por %p48, %p49
      %p51 = scmp.ne.s32.totalorder %s43, %s46
      %p52 = scmp.eq.s32.totalorder %s21, 0
      %p53 = por %p51, %p52
      %p54 = scmp.ne.s32.totalorder %s43, %s46
      %p55 = scmp.eq.s32.totalorder %s26, 11
      %p56 = por %p54, %p55
      %p57 = scmp.ne.s32.totalorder %s46, %s47
      %p58 = scmp.eq.s32.totalorder %s26, 0
      %p59 = por %p57, %p58
      %p60 = scmp.ne.s32.totalorder %s46, %s47
      %p61 = scmp.eq.s32.totalorder %s27, 11
      %p62 = por %p60, %p61
      %p64 = scmp.ne.s32.totalorder %s47, %s63
      %p65 = scmp.eq.s32.totalorder %s27, 0
      %p66 = por %p64, %p65
      %s67 = ssub.s32 %s29, %s36
      %p68 = scmp.eq.s32.totalorder %s67, 0
      %s70 = sadd.s32 %s69, 1
      %s71 = scalar_select %p68, %s69, %s70
      %p74 = pneg %p68
      %p75 = scmp.eq.s32.totalorder %s21, 11
      %p76 = por %p74, %p75
      %p77 = scmp.ne.s32.totalorder %s69, %s72
      %p78 = scmp.eq.s32.totalorder %s21, 0
      %p79 = por %p77, %p78
      %p80 = scmp.ne.s32.totalorder %s69, %s72
      %p81 = scmp.eq.s32.totalorder %s26, 11
      %p82 = por %p80, %p81
      %p83 = scmp.ne.s32.totalorder %s72, %s73
      %p84 = scmp.eq.s32.totalorder %s26, 0
      %p85 = por %p83, %p84
      %p86 = scmp.ne.s32.totalorder %s72, %s73
      %p87 = scmp.eq.s32.totalorder %s27, 11
      %p88 = por %p86, %p87
      %p90 = scmp.ne.s32.totalorder %s73, %s89
      %p91 = scmp.eq.s32.totalorder %s27, 0
      %p92 = por %p90, %p91
      %s93 = ssub.s32 %s29, %s36
      %p94 = scmp.eq.s32.totalorder %s93, 0
      %s96 = sadd.s32 %s95, 1
      %s97 = scalar_select %p94, %s95, %s96
      %p100 = pneg %p94
      %p101 = scmp.eq.s32.totalorder %s21, 11
      %p102 = por %p100, %p101
      %p103 = scmp.ne.s32.totalorder %s95, %s98
      %p104 = scmp.eq.s32.totalorder %s21, 0
      %p105 = por %p103, %p104
      %p106 = scmp.ne.s32.totalorder %s95, %s98
      %p107 = scmp.eq.s32.totalorder %s26, 11
      %p108 = por %p106, %p107
      %p109 = scmp.ne.s32.totalorder %s98, %s99
      %p110 = scmp.eq.s32.totalorder %s26, 0
      %p111 = por %p109, %p110
      %p112 = scmp.ne.s32.totalorder %s98, %s99
      %p113 = scmp.eq.s32.totalorder %s27, 11
      %p114 = por %p112, %p113
      %p116 = scmp.ne.s32.totalorder %s99, %s115
      %p117 = scmp.eq.s32.totalorder %s27, 0
      %p118 = por %p116, %p117
      %s119 = ssub.s32 %s29, %s36
      %p120 = scmp.eq.s32.totalorder %s119, 0
      %s122 = sadd.s32 %s121, 1
      %s123 = scalar_select %p120, %s121, %s122
      %p126 = pneg %p120
      %p127 = scmp.eq.s32.totalorder %s21, 11
      %p128 = por %p126, %p127
      %p129 = scmp.ne.s32.totalorder %s121, %s124
      %p130 = scmp.eq.s32.totalorder %s21, 0
      %p131 = por %p129, %p130
      %p132 = scmp.ne.s32.totalorder %s121, %s124
      %p133 = scmp.eq.s32.totalorder %s26, 11
      %p134 = por %p132, %p133
      %p135 = scmp.ne.s32.totalorder %s124, %s125
      %p136 = scmp.eq.s32.totalorder %s26, 0
      %p137 = por %p135, %p136
      %p138 = scmp.ne.s32.totalorder %s124, %s125
      %p139 = scmp.eq.s32.totalorder %s27, 11
      %p140 = por %p138, %p139
      %p142 = scmp.ne.s32.totalorder %s125, %s141
      %p143 = scmp.eq.s32.totalorder %s27, 0
      %p144 = por %p142, %p143
      %s145 = ssub.s32 %s29, %s36
      %p146 = scmp.eq.s32.totalorder %s145, 0
      %s148 = sadd.s32 %s147, 1
      %s149 = scalar_select %p146, %s147, %s148
      %p152 = pneg %p146
      %p153 = scmp.eq.s32.totalorder %s21, 11
      %p154 = por %p152, %p153
      %p155 = scmp.ne.s32.totalorder %s147, %s150
      %p156 = scmp.eq.s32.totalorder %s21, 0
      %p157 = por %p155, %p156
      %p158 = scmp.ne.s32.totalorder %s147, %s150
      %p159 = scmp.eq.s32.totalorder %s26, 11
      %p160 = por %p158, %p159
      %p161 = scmp.ne.s32.totalorder %s150, %s151
      %p162 = scmp.eq.s32.totalorder %s26, 0
      %p163 = por %p161, %p162
      %p164 = scmp.ne.s32.totalorder %s150, %s151
      %p165 = scmp.eq.s32.totalorder %s27, 11
      %p166 = por %p164, %p165
      %p168 = scmp.ne.s32.totalorder %s151, %s167
      %p169 = scmp.eq.s32.totalorder %s27, 0
      %p170 = por %p168, %p169
      %s171 = ssub.s32 %s29, %s36
      %p172 = scmp.eq.s32.totalorder %s171, 0
      %s174 = sadd.s32 %s173, 1
      %s175 = scalar_select %p172, %s173, %s174
      %p178 = pneg %p172
      %p179 = scmp.eq.s32.totalorder %s21, 11
      %p180 = por %p178, %p179
      %p181 = scmp.ne.s32.totalorder %s173, %s176
      %p182 = scmp.eq.s32.totalorder %s21, 0
      %p183 = por %p181, %p182
      %p184 = scmp.ne.s32.totalorder %s173, %s176
      %p185 = scmp.eq.s32.totalorder %s26, 11
      %p186 = por %p184, %p185
      %p187 = scmp.ne.s32.totalorder %s176, %s177
      %p188 = scmp.eq.s32.totalorder %s26, 0
      %p189 = por %p187, %p188
      %p190 = scmp.ne.s32.totalorder %s176, %s177
      %p191 = scmp.eq.s32.totalorder %s27, 11
      %p192 = por %p190, %p191
      %p194 = scmp.ne.s32.totalorder %s177, %s193
      %p195 = scmp.eq.s32.totalorder %s27, 0
      %p196 = por %p194, %p195
      %s197 = ssub.s32 %s29, %s36
      %p198 = scmp.eq.s32.totalorder %s197, 0
      %s200 = sadd.s32 %s199, 1
      %s201 = scalar_select %p198, %s199, %s200
      %p204 = pneg %p198
      %p205 = scmp.eq.s32.totalorder %s21, 11
      %p206 = por %p204, %p205
      %p207 = scmp.ne.s32.totalorder %s199, %s202
      %p208 = scmp.eq.s32.totalorder %s21, 0
      %p209 = por %p207, %p208
      %p210 = scmp.ne.s32.totalorder %s199, %s202
      %p211 = scmp.eq.s32.totalorder %s26, 11
      %p212 = por %p210, %p211
      %p213 = scmp.ne.s32.totalorder %s202, %s203
      %p214 = scmp.eq.s32.totalorder %s26, 0
      %p215 = por %p213, %p214
      %p216 = scmp.ne.s32.totalorder %s202, %s203
      %p217 = scmp.eq.s32.totalorder %s27, 11
      %p218 = por %p216, %p217
      %p220 = scmp.ne.s32.totalorder %s203, %s219
      %p221 = scmp.eq.s32.totalorder %s27, 0
      %p222 = por %p220, %p221
      %s223 = ssub.s32 %s29, %s36
      %p224 = scmp.eq.s32.totalorder %s223, 0
      %s226 = sadd.s32 %s225, 1
      %s227 = scalar_select %p224, %s225, %s226
      %p230 = pneg %p224
      %p231 = scmp.eq.s32.totalorder %s21, 11
      %p232 = por %p230, %p231
      %p233 = scmp.ne.s32.totalorder %s225, %s228
      %p234 = scmp.eq.s32.totalorder %s21, 0
      %p235 = por %p233, %p234
      %p236 = scmp.ne.s32.totalorder %s225, %s228
      %p237 = scmp.eq.s32.totalorder %s26, 11
      %p238 = por %p236, %p237
      %p239 = scmp.ne.s32.totalorder %s228, %s229
      %p240 = scmp.eq.s32.totalorder %s26, 0
      %p241 = por %p239, %p240
      %p242 = scmp.ne.s32.totalorder %s228, %s229
      %p243 = scmp.eq.s32.totalorder %s27, 11
      %p244 = por %p242, %p243
      %p246 = scmp.ne.s32.totalorder %s229, %s245
      %p247 = scmp.eq.s32.totalorder %s27, 0
      %p248 = por %p246, %p247
      %s249 = ssub.s32 %s29, %s36
      %p250 = scmp.eq.s32.totalorder %s249, 0
      %s252 = sadd.s32 %s251, 1
      %s253 = scalar_select %p250, %s251, %s252
      %p256 = pneg %p250
      %p257 = scmp.eq.s32.totalorder %s21, 11
      %p258 = por %p256, %p257
      %p259 = scmp.ne.s32.totalorder %s251, %s254
      %p260 = scmp.eq.s32.totalorder %s21, 0
      %p261 = por %p259, %p260
      %p262 = scmp.ne.s32.totalorder %s251, %s254
      %p263 = scmp.eq.s32.totalorder %s26, 11
      %p264 = por %p262, %p263
      %p265 = scmp.ne.s32.totalorder %s254, %s255
      %p266 = scmp.eq.s32.totalorder %s26, 0
      %p267 = por %p265, %p266
      %p268 = scmp.ne.s32.totalorder %s254, %s255
      %p269 = scmp.eq.s32.totalorder %s27, 11
      %p270 = por %p268, %p269
      %p272 = scmp.ne.s32.totalorder %s255, %s271
      %p273 = scmp.eq.s32.totalorder %s27, 0
      %p274 = por %p272, %p273
      %s275 = ssub.s32 %s28, %s40
      %p276 = scmp.eq.s32.totalorder %s275, 0
      %s278 = sadd.s32 %s277, 1
      %s279 = scalar_select %p276, %s277, %s278
      %p282 = pneg %p276
      %p283 = scmp.eq.s32.totalorder %s21, 11
      %p284 = por %p282, %p283
      %p285 = scmp.ne.s32.totalorder %s277, %s280
      %p286 = scmp.eq.s32.totalorder %s21, 0
      %p287 = por %p285, %p286
      %p288 = scmp.ne.s32.totalorder %s277, %s280
      %p289 = scmp.eq.s32.totalorder %s26, 11
      %p290 = por %p288, %p289
      %p291 = scmp.ne.s32.totalorder %s280, %s281
      %p292 = scmp.eq.s32.totalorder %s26, 0
      %p293 = por %p291, %p292
      %p294 = scmp.ne.s32.totalorder %s280, %s281
      %p295 = scmp.eq.s32.totalorder %s27, 11
      %p296 = por %p294, %p295
      %p298 = scmp.ne.s32.totalorder %s281, %s297
      %p299 = scmp.eq.s32.totalorder %s27, 0
      %p300 = por %p298, %p299
      %p301 = scmp.le.s32.totalorder 1, %s21
      %p302 = scmp.lt.s32.totalorder %s21, 13
      %p303 = pnand %p301, %p302
      %p304 = pneg %p303
      // Predicated region
      $region9: #{generator_forward.6} parent=5 // pred_check
        _
      $region10: #{generator_forward.6} parent=5 // pred_check_branch
        %306 = sbr.rel (%p303) target = $region12
      $region11: #{generator_forward.6} parent=5 // pred_region
        %s307 = ssub.s32 %s21, 1
      $region12: #{generator_forward.6} parent=5 // pred_fallthru
        _
      %p308 = scmp.lt.s32.totalorder %s21, 12
      // Predicated region
      $region13: #{generator_forward.6} parent=5 // pred_check
        %p309 = pneg %p308
      $region14: #{generator_forward.6} parent=5 // pred_check_branch
        %311 = sbr.rel (%p309) target = $region16
      $region15: #{generator_forward.6} parent=5 // pred_region
        // Predicated region
        $region17: #{generator_forward.6} parent=15 // pred_check
          %p312 = pneg %p53
        $region18: #{generator_forward.6} parent=15 // pred_check_branch
          %314 = sbr.rel (%p312) target = $region20
        $region19: #{generator_forward.6} parent=15 // pred_region
          %p315 = scmp.lt.s32.totalorder %s28, 1
          %s316 = scalar_select %p315, %s28, 1
          %s317 = smul.addr %s316, 2
          %s318 = smul.addr %s317, 8
          %s319 = scalar_lea.vmem %s0, %s318
        $region20: #{generator_forward.6} parent=15 // pred_fallthru
          _
        // Predicated region
        $region21: #{generator_forward.6} parent=15 // pred_check
          %p320 = pneg %p79
        $region22: #{generator_forward.6} parent=15 // pred_check_branch
          %322 = sbr.rel (%p320) target = $region24
        $region23: #{generator_forward.6} parent=15 // pred_region
          %p323 = scmp.lt.s32.totalorder %s29, 5
          %s324 = scalar_select %p323, %s29, 5
          %s325 = smul.addr %s324, 48
          %s326 = smul.addr %s325, 4
          %s327 = scalar_lea.vmem %s1, %s326
        $region24: #{generator_forward.6} parent=15 // pred_fallthru
          _
        // Predicated region
        $region25: #{generator_forward.6} parent=15 // pred_check
          %p328 = pneg %p105
        $region26: #{generator_forward.6} parent=15 // pred_check_branch
          %330 = sbr.rel (%p328) target = $region28
        $region27: #{generator_forward.6} parent=15 // pred_region
          %p331 = scmp.lt.s32.totalorder %s29, 5
          %s332 = scalar_select %p331, %s29, 5
          %s333 = smul.addr %s332, 3
          %s334 = scalar_lea.vmem %s2, %s333
        $region28: #{generator_forward.6} parent=15 // pred_fallthru
          _
        // Predicated region
        $region29: #{generator_forward.6} parent=15 // pred_check
          %p335 = pneg %p131
        $region30: #{generator_forward.6} parent=15 // pred_check_branch
          %337 = sbr.rel (%p335) target = $region32
        $region31: #{generator_forward.6} parent=15 // pred_region
          %p338 = scmp.lt.s32.totalorder %s29, 5
          %s339 = scalar_select %p338, %s29, 5
          %s340 = smul.addr %s339, 16
          %s341 = smul.addr %s340, 4
          %s342 = scalar_lea.vmem %s3, %s341
        $region32: #{generator_forward.6} parent=15 // pred_fallthru
          _
        // Predicated region
        $region33: #{generator_forward.6} parent=15 // pred_check
          %p343 = pneg %p157
        $region34: #{generator_forward.6} parent=15 // pred_check_branch
          %345 = sbr.rel (%p343) target = $region36
        $region35: #{generator_forward.6} parent=15 // pred_region
          %p346 = scmp.lt.s32.totalorder %s29, 5
          %s347 = scalar_select %p346, %s29, 5
          %s348 = scalar_lea.vmem %s4, %s347
        $region36: #{generator_forward.6} parent=15 // pred_fallthru
          _
        // Predicated region
        $region37: #{generator_forward.6} parent=15 // pred_check
          %p349 = pneg %p183
        $region38: #{generator_forward.6} parent=15 // pred_check_branch
          %351 = sbr.rel (%p349) target = $region40
        $region39: #{generator_forward.6} parent=15 // pred_region
          %p352 = scmp.lt.s32.totalorder %s29, 5
          %s353 = scalar_select %p352, %s29, 5
          %s354 = smul.addr %s353, 16
          %s355 = smul.addr %s354, 4
          %s356 = scalar_lea.vmem %s5, %s355
        $region40: #{generator_forward.6} parent=15 // pred_fallthru
          _
        // Predicated region
        $region41: #{generator_forward.6} parent=15 // pred_check
          %p357 = pneg %p209
        $region42: #{generator_forward.6} parent=15 // pred_check_branch
          %359 = sbr.rel (%p357) target = $region44
        $region43: #{generator_forward.6} parent=15 // pred_region
          %s360 = sand.u32 %s199, 1
          %s361 = scalar_lea.sflag [#allocation4], %s360
          %s362 = sand.u32 %s199, 1
          %s363 = scalar_lea.vmem [#allocation3], %s362
          %s365 = ssub.s32 16, 16
          %366 = vsyncadd %s361, %s365
          %s367 = smul.addr %s29, 16
          %s368 = scalar_lea.hbm %s6, %s367
          %s370 = sshll.u32 %s363, 4
          %s371 = int_to_ptr.vmem [resolvable:$true] %s370
          %373 = dma.hbm_to_vmem [thread:$0]  %s368, 16, %s371, %s361
        $region44: #{generator_forward.6} parent=15 // pred_fallthru
          _
        // Predicated region
        $region45: #{generator_forward.6} parent=15 // pred_check
          %p374 = pneg %p235
        $region46: #{generator_forward.6} parent=15 // pred_check_branch
          %376 = sbr.rel (%p374) target = $region48
        $region47: #{generator_forward.6} parent=15 // pred_region
          %p377 = scmp.lt.s32.totalorder %s29, 5
          %s378 = scalar_select %p377, %s29, 5
          %s379 = smul.addr %s378, 16
          %s380 = smul.addr %s379, 4
          %s381 = scalar_lea.vmem %s7, %s380
        $region48: #{generator_forward.6} parent=15 // pred_fallthru
          _
        // Predicated region
        $region49: #{generator_forward.6} parent=15 // pred_check
          %p382 = pneg %p261
        $region50: #{generator_forward.6} parent=15 // pred_check_branch
          %384 = sbr.rel (%p382) target = $region52
        $region51: #{generator_forward.6} parent=15 // pred_region
          %s385 = sand.u32 %s251, 1
          %s386 = scalar_lea.sflag [#allocation6], %s385
          %s387 = sand.u32 %s251, 1
          %s388 = scalar_lea.vmem [#allocation5], %s387
          %s390 = ssub.s32 16, 16
          %391 = vsyncadd %s386, %s390
          %s392 = smul.addr %s29, 16
          %s393 = scalar_lea.hbm %s8, %s392
          %s395 = sshll.u32 %s388, 4
          %s396 = int_to_ptr.vmem [resolvable:$true] %s395
          %398 = dma.hbm_to_vmem [thread:$0]  %s393, 16, %s396, %s386
        $region52: #{generator_forward.6} parent=15 // pred_fallthru
          _
      $region16: #{generator_forward.6} parent=5 // pred_fallthru
        _
      %p399 = scmp.le.s32.totalorder 1, %s21
      %p400 = scmp.lt.s32.totalorder %s21, 13
      %p401 = pnand %p399, %p400
      %p402 = pneg %p401
      // Predicated region
      $region53: #{generator_forward.6} parent=5 // pred_check
        _
      $region54: #{generator_forward.6} parent=5 // pred_check_branch
        %404 = sbr.rel (%p401) target = $region56
      $region55: #{generator_forward.6} parent=5 // pred_region
        %s405 = ssub.s32 %s21, 1
        %s406 = sand.u32 %s202, 1
        %s407 = scalar_lea.sflag [#allocation4], %s406
        %s408 = sand.u32 %s202, 1
        %s409 = scalar_lea.vmem [#allocation3], %s408
        // Predicated region
        $region57: #{generator_forward.6} parent=55 // pred_check
          %p410 = pneg %p215
        $region58: #{generator_forward.6} parent=55 // pred_check_branch
          %412 = sbr.rel (%p410) target = $region60
        $region59: #{generator_forward.6} parent=55 // pred_region
          %413 = dma.done %s407, 16
        $region60: #{generator_forward.6} parent=55 // pred_fallthru
          _
        %s414 = sand.u32 %s254, 1
        %s415 = scalar_lea.sflag [#allocation6], %s414
        %s416 = sand.u32 %s254, 1
        %s417 = scalar_lea.vmem [#allocation5], %s416
        // Predicated region
        $region61: #{generator_forward.6} parent=55 // pred_check
          %p418 = pneg %p267
        $region62: #{generator_forward.6} parent=55 // pred_check_branch
          %420 = sbr.rel (%p418) target = $region64
        $region63: #{generator_forward.6} parent=55 // pred_region
          %421 = dma.done %s415, 16
        $region64: #{generator_forward.6} parent=55 // pred_fallthru
          _
        %p422 = scmp.lt.s32.totalorder %s30, 1
        %s423 = scalar_select %p422, %s30, 1
        %s424 = smul.addr %s423, 2
        %s425 = smul.addr %s424, 8
        %s426 = scalar_lea.vmem %s0, %s425
        %p427 = pneg %p59
        %p428 = pneg %p56
        %p429 = scmp.lt.s32.totalorder %s31, 5
        %s430 = scalar_select %p429, %s31, 5
        %s431 = smul.addr %s430, 48
        %s432 = smul.addr %s431, 4
        %s433 = scalar_lea.vmem %s1, %s432
        %p434 = pneg %p85
        %p435 = pneg %p82
        %p436 = scmp.lt.s32.totalorder %s31, 5
        %s437 = scalar_select %p436, %s31, 5
        %s438 = smul.addr %s437, 3
        %s439 = scalar_lea.vmem %s2, %s438
        %p440 = pneg %p111
        %p441 = pneg %p108
        %p442 = scmp.lt.s32.totalorder %s31, 5
        %s443 = scalar_select %p442, %s31, 5
        %s444 = smul.addr %s443, 16
        %s445 = smul.addr %s444, 4
        %s446 = scalar_lea.vmem %s3, %s445
        %p447 = pneg %p137
        %p448 = pneg %p134
        %p449 = scmp.lt.s32.totalorder %s31, 5
        %s450 = scalar_select %p449, %s31, 5
        %s451 = scalar_lea.vmem %s4, %s450
        %p452 = pneg %p163
        %p453 = pneg %p160
        %p454 = scmp.lt.s32.totalorder %s31, 5
        %s455 = scalar_select %p454, %s31, 5
        %s456 = smul.addr %s455, 16
        %s457 = smul.addr %s456, 4
        %s458 = scalar_lea.vmem %s5, %s457
        %p459 = pneg %p189
        %p460 = pneg %p186
        %s461 = sand.u32 %s202, 1
        %s462 = scalar_lea.sflag [#allocation4], %s461
        %s463 = sand.u32 %s202, 1
        %s464 = scalar_lea.vmem [#allocation3], %s463
        %p465 = pneg %p215
        %p466 = pneg %p212
        %p467 = scmp.lt.s32.totalorder %s31, 5
        %s468 = scalar_select %p467, %s31, 5
        %s469 = smul.addr %s468, 16
        %s470 = smul.addr %s469, 4
        %s471 = scalar_lea.vmem %s7, %s470
        %p472 = pneg %p241
        %p473 = pneg %p238
        %s474 = sand.u32 %s254, 1
        %s475 = scalar_lea.sflag [#allocation6], %s474
        %s476 = sand.u32 %s254, 1
        %s477 = scalar_lea.vmem [#allocation5], %s476
        %p478 = pneg %p267
        %p479 = pneg %p264
        %p480 = pneg %p293
        %p481 = pneg %p290
        %p482 = scmp.lt.s32.totalorder %s30, 1
        %s483 = scalar_select %p482, %s30, 1
        %s484 = smul.addr %s483, 2
        %s485 = smul.addr %s484, 8
        %s486 = scalar_lea.vmem %s9, %s485
        %p487 = scmp.lt.s32.totalorder %s30, 1
        %s488 = scalar_select %p487, %s30, 1
        %s489 = smul.addr %s488, 2
        %s490 = smul.addr %s489, 8
        %s491 = scalar_lea.vmem %s0, %s490
        %p492 = scmp.lt.s32.totalorder %s31, 5
        %s493 = scalar_select %p492, %s31, 5
        %s494 = smul.addr %s493, 48
        %s495 = smul.addr %s494, 4
        %s496 = scalar_lea.vmem %s1, %s495
        %p497 = scmp.lt.s32.totalorder %s31, 5
        %s498 = scalar_select %p497, %s31, 5
        %s499 = smul.addr %s498, 3
        %s500 = scalar_lea.vmem %s2, %s499
        %p501 = scmp.lt.s32.totalorder %s31, 5
        %s502 = scalar_select %p501, %s31, 5
        %s503 = smul.addr %s502, 16
        %s504 = smul.addr %s503, 4
        %s505 = scalar_lea.vmem %s3, %s504
        %p506 = scmp.lt.s32.totalorder %s31, 5
        %s507 = scalar_select %p506, %s31, 5
        %s508 = scalar_lea.vmem %s4, %s507
        %p509 = scmp.lt.s32.totalorder %s31, 5
        %s510 = scalar_select %p509, %s31, 5
        %s511 = smul.addr %s510, 16
        %s512 = smul.addr %s511, 4
        %s513 = scalar_lea.vmem %s5, %s512
        %p514 = scmp.lt.s32.totalorder %s31, 5
        %s515 = scalar_select %p514, %s31, 5
        %s516 = smul.addr %s515, 16
        %s517 = smul.addr %s516, 4
        %s518 = scalar_lea.vmem %s7, %s517
        %p519 = scmp.lt.s32.totalorder %s30, 1
        %s520 = scalar_select %p519, %s30, 1
        %s521 = smul.addr %s520, 2
        %s522 = smul.addr %s521, 8
        %s523 = scalar_lea.vmem %s9, %s522
        %p525 = scmp.eq.s32.totalorder %s31, 0
        // Predicated region
        $region65: #{generator_forward.6} parent=55 // pred_check
          %p526 = pneg %p525
        $region66: #{generator_forward.6} parent=55 // pred_check_branch
          %528 = sbr.rel (%p526) target = $region68
        $region67: #{generator_forward.6} parent=55 // pred_region
          %v529 = vld [vmem:[%s491] sm:$0xff]
          %v530 = vld [vmem:[%s491 + $0x8] sm:$0xff]
          %531 = vst [vmem:[#allocation2] sm:$0xff] %v529
          %532 = vst [vmem:[#allocation2 + $0x8] sm:$0xff] %v530
        $region68: #{generator_forward.6} parent=55 // pred_fallthru
          _
        %v533 = vld [vmem:[#allocation2] sm:$0xff]
        %v534 = vld [vmem:[#allocation2 + $0x8] sm:$0xff]
        %v535 = vld [vmem:[%s496] sm:$0xff]
        %v536 = vld [vmem:[%s496 + $0x8] sm:$0xf]
        %v537 = vld [vmem:[%s496 + $0xc] sm:$0xff]
        %v538 = vld [vmem:[%s496 + $0x14] sm:$0xf]
        %v539 = vld [vmem:[%s496 + $0x18] sm:$0xff]
        %v540 = vld [vmem:[%s496 + $0x20] sm:$0xf]
        %v541 = vld [vmem:[%s496 + $0x24] sm:$0xff]
        %v542 = vld [vmem:[%s496 + $0x2c] sm:$0xf]
        %v543 = vld [vmem:[%s496 + $0x30] sm:$0xff]
        %v544 = vld [vmem:[%s496 + $0x38] sm:$0xf]
        %v545 = vld [vmem:[%s496 + $0x3c] sm:$0xff]
        %v546 = vld [vmem:[%s496 + $0x44] sm:$0xf]
        %v547 = vld [vmem:[%s496 + $0x48] sm:$0xff]
        %v548 = vld [vmem:[%s496 + $0x50] sm:$0xf]
        %v549 = vld [vmem:[%s496 + $0x54] sm:$0xff]
        %v550 = vld [vmem:[%s496 + $0x5c] sm:$0xf]
        %v551 = vld [vmem:[%s496 + $0x60] sm:$0xff]
        %v552 = vld [vmem:[%s496 + $0x68] sm:$0xf]
        %v553 = vld [vmem:[%s496 + $0x6c] sm:$0xff]
        %v554 = vld [vmem:[%s496 + $0x74] sm:$0xf]
        %v555 = vld [vmem:[%s496 + $0x78] sm:$0xff]
        %v556 = vld [vmem:[%s496 + $0x80] sm:$0xf]
        %v557 = vld [vmem:[%s496 + $0x84] sm:$0xff]
        %v558 = vld [vmem:[%s496 + $0x8c] sm:$0xf]
        %v559 = vld [vmem:[%s496 + $0x90] sm:$0xff]
        %v560 = vld [vmem:[%s496 + $0x98] sm:$0xf]
        %v561 = vld [vmem:[%s496 + $0x9c] sm:$0xff]
        %v562 = vld [vmem:[%s496 + $0xa4] sm:$0xf]
        %v563 = vld [vmem:[%s496 + $0xa8] sm:$0xff]
        %v564 = vld [vmem:[%s496 + $0xb0] sm:$0xf]
        %v565 = vld [vmem:[%s496 + $0xb4] sm:$0xff]
        %v566 = vld [vmem:[%s496 + $0xbc] sm:$0xf]
        %v567 = vpack.c.bf16 %v534, %v533
        %v568 = vld [vmem:[%s500] sm:$0x7]
        %v570 = vlaneseq
        %v571 = vshrl.u32 %v570, 7
        %v572 = vsub.s32 0, %v571
        %v573 = vrot.slane %v568, %v572
        %v574 = vlaneseq
        %v575 = vshrl.u32 %v574, 7
        %v576 = vsub.s32 1, %v575
        %v577 = vrot.slane %v568, %v576
        %v578 = vlaneseq
        %v579 = vshrl.u32 %v578, 7
        %v580 = vsub.s32 2, %v579
        %v581 = vrot.slane %v568, %v580
        %v617 = vunpack.c.l.b16 %v535
        %v618 = vunpack.c.h.b16 %v535
        %v619 = vunpack.c.l.b16 %v536
        %v620 = vunpack.c.l.b16 %v537
        %v621 = vunpack.c.h.b16 %v537
        %v622 = vunpack.c.l.b16 %v538
        %v623 = vunpack.c.l.b16 %v539
        %v624 = vunpack.c.h.b16 %v539
        %v625 = vunpack.c.l.b16 %v540
        %v626 = vunpack.c.l.b16 %v541
        %v627 = vunpack.c.h.b16 %v541
        %v628 = vunpack.c.l.b16 %v542
        %v629 = vunpack.c.l.b16 %v543
        %v630 = vunpack.c.h.b16 %v543
        %v631 = vunpack.c.l.b16 %v544
        %v632 = vunpack.c.l.b16 %v545
        %v633 = vunpack.c.h.b16 %v545
        %v634 = vunpack.c.l.b16 %v546
        %v635 = vunpack.c.l.b16 %v547
        %v636 = vunpack.c.h.b16 %v547
        %v637 = vunpack.c.l.b16 %v548
        %v638 = vunpack.c.l.b16 %v549
        %v639 = vunpack.c.h.b16 %v549
        %v640 = vunpack.c.l.b16 %v550
        %v641 = vunpack.c.l.b16 %v551
        %v642 = vunpack.c.h.b16 %v551
        %v643 = vunpack.c.l.b16 %v552
        %v644 = vunpack.c.l.b16 %v553
        %v645 = vunpack.c.h.b16 %v553
        %v646 = vunpack.c.l.b16 %v554
        %v647 = vunpack.c.l.b16 %v555
        %v648 = vunpack.c.h.b16 %v555
        %v649 = vunpack.c.l.b16 %v556
        %v650 = vunpack.c.l.b16 %v557
        %v651 = vunpack.c.h.b16 %v557
        %v652 = vunpack.c.l.b16 %v558
        %v653 = vunpack.c.l.b16 %v559
        %v654 = vunpack.c.h.b16 %v559
        %v655 = vunpack.c.l.b16 %v560
        %v656 = vunpack.c.l.b16 %v561
        %v657 = vunpack.c.h.b16 %v561
        %v658 = vunpack.c.l.b16 %v562
        %v659 = vunpack.c.l.b16 %v563
        %v660 = vunpack.c.h.b16 %v563
        %v661 = vunpack.c.l.b16 %v564
        %v662 = vunpack.c.l.b16 %v565
        %v663 = vunpack.c.h.b16 %v565
        %v664 = vunpack.c.l.b16 %v566
        %v665 = vpack.c.b16 %v620, %v617
        %v666 = vpack.c.b16 %v621, %v618
        %v667 = vpack.c.b16 %v622, %v619
        %v668 = vpack.c.b16 %v626, %v623
        %v669 = vpack.c.b16 %v627, %v624
        %v670 = vpack.c.b16 %v628, %v625
        %v671 = vpack.c.b16 %v632, %v629
        %v672 = vpack.c.b16 %v633, %v630
        %v673 = vpack.c.b16 %v634, %v631
        %v674 = vpack.c.b16 %v638, %v635
        %v675 = vpack.c.b16 %v639, %v636
        %v676 = vpack.c.b16 %v640, %v637
        %v677 = vpack.c.b16 %v644, %v641
        %v678 = vpack.c.b16 %v645, %v642
        %v679 = vpack.c.b16 %v646, %v643
        %v680 = vpack.c.b16 %v650, %v647
        %v681 = vpack.c.b16 %v651, %v648
        %v682 = vpack.c.b16 %v652, %v649
        %v683 = vpack.c.b16 %v656, %v653
        %v684 = vpack.c.b16 %v657, %v654
        %v685 = vpack.c.b16 %v658, %v655
        %v686 = vpack.c.b16 %v662, %v659
        %v687 = vpack.c.b16 %v663, %v660
        %v688 = vpack.c.b16 %v664, %v661
        %713 = vmatprep.subr.bf16.mxu0 %v666
        %714 = vmatpush1.bf16.msra.mxu0 %v665
        %715 = vmatprep.subr.bf16.mxu0 %v669
        %716 = vmatpush1.bf16.msra.mxu0 %v668
        %717 = vmatprep.subr.bf16.mxu0 %v672
        %718 = vmatpush1.bf16.msra.mxu0 %v671
        %719 = vmatprep.subr.bf16.mxu0 %v675
        %720 = vmatpush1.bf16.msra.mxu0 %v674
        %721 = vmatprep.subr.bf16.mxu0 %v678
        %722 = vmatpush1.bf16.msra.mxu0 %v677
        %723 = vmatprep.subr.bf16.mxu0 %v681
        %724 = vmatpush1.bf16.msra.mxu0 %v680
        %725 = vmatprep.subr.bf16.mxu0 %v684
        %726 = vmatpush1.bf16.msra.mxu0 %v683
        %727 = vmatprep.subr.bf16.mxu0 %v687
        %728 = vmatpush1.bf16.msra.mxu0 %v686
        %729 = vmatprep.subr.bf16.mxu0 0
        %730 = vmatpush1.bf16.msra.mxu0 0
        %731 = vmatprep.subr.bf16.mxu0 0
        %732 = vmatpush1.bf16.msra.mxu0 0
        %733 = vmatprep.subr.bf16.mxu0 0
        %734 = vmatpush1.bf16.msra.mxu0 0
        %735 = vmatprep.subr.bf16.mxu0 0
        %736 = vmatpush1.bf16.msra.mxu0 0
        %737 = vmatprep.subr.bf16.mxu0 0
        %738 = vmatpush1.bf16.msra.mxu0 0
        %739 = vmatprep.subr.bf16.mxu0 0
        %740 = vmatpush1.bf16.msra.mxu0 0
        %741 = vmatprep.subr.bf16.mxu0 0
        %742 = vmatpush1.bf16.msra.mxu0 0
        %743 = vmatprep.subr.bf16.mxu0 0
        %744 = vmatpush1.bf16.msra.mxu0 0
        %745 = vmatprep.mubr.bf16.mxu0 0
        %746 = vmatmul.mubr.bf16.gmra.mrb[0].mxu0 %v567
        %v747 = vpop.f32.mrb[0].mxu0
        %v748 = vadd.f32 %v573, %v747
        %v749 = vpop.f32.mrb[0].mxu0
        %v750 = vadd.f32 %v577, %v749
        %v751 = vpop.f32.mrb[0].mxu0
        %v752 = vadd.f32 %v573, %v751
        %v753 = vpop.f32.mrb[0].mxu0
        %v754 = vadd.f32 %v577, %v753
        %755 = vdwg.mxu0
        %756 = vmatprep.subr.bf16.mxu0 0
        %757 = vmatpush1.bf16.msra.mxu0 %v667
        %758 = vmatprep.subr.bf16.mxu0 0
        %759 = vmatpush1.bf16.msra.mxu0 %v670
        %760 = vmatprep.subr.bf16.mxu0 0
        %761 = vmatpush1.bf16.msra.mxu0 %v673
        %762 = vmatprep.subr.bf16.mxu0 0
        %763 = vmatpush1.bf16.msra.mxu0 %v676
        %764 = vmatprep.subr.bf16.mxu0 0
        %765 = vmatpush1.bf16.msra.mxu0 %v679
        %766 = vmatprep.subr.bf16.mxu0 0
        %767 = vmatpush1.bf16.msra.mxu0 %v682
        %768 = vmatprep.subr.bf16.mxu0 0
        %769 = vmatpush1.bf16.msra.mxu0 %v685
        %770 = vmatprep.subr.bf16.mxu0 0
        %771 = vmatpush1.bf16.msra.mxu0 %v688
        %772 = vmatprep.subr.bf16.mxu0 0
        %773 = vmatpush1.bf16.msra.mxu0 0
        %774 = vmatprep.subr.bf16.mxu0 0
        %775 = vmatpush1.bf16.msra.mxu0 0
        %776 = vmatprep.subr.bf16.mxu0 0
        %777 = vmatpush1.bf16.msra.mxu0 0
        %778 = vmatprep.subr.bf16.mxu0 0
        %779 = vmatpush1.bf16.msra.mxu0 0
        %780 = vmatprep.subr.bf16.mxu0 0
        %781 = vmatpush1.bf16.msra.mxu0 0
        %782 = vmatprep.subr.bf16.mxu0 0
        %783 = vmatpush1.bf16.msra.mxu0 0
        %784 = vmatprep.subr.bf16.mxu0 0
        %785 = vmatpush1.bf16.msra.mxu0 0
        %786 = vmatprep.subr.bf16.mxu0 0
        %787 = vmatpush1.bf16.msra.mxu0 0
        %788 = vmatprep.mubr.bf16.mxu0 0
        %789 = vmatmul.mubr.bf16.gmra.mrb[0].mxu0 %v567
        %v790 = vpop.f32.mrb[0].mxu0
        %v791 = vadd.f32 %v581, %v790
        %v792 = vpop.f32.mrb[0].mxu0
        %v793 = vpop.f32.mrb[0].mxu0
        %v794 = vadd.f32 %v581, %v793
        %v795 = vpop.f32.mrb[0].mxu0
        %796 = vdwg.mxu0
        %v797 = vmul.f32 %v748, 0.17677669
        %v798 = vmul.f32 %v752, 0.17677669
        %v799 = vlaneseq
        %v800 = vand.u32 %v799, 127
        %vm801 = vcmp.ge.s32.totalorder %v800, 0
        %vm802 = vcmp.lt.s32.totalorder %v800, 32
        %vm803 = vmand %vm801, %vm802
        %v804 = vsel %vm803, 1, 0
        %v805 = vcvt.s32.f32 %v804
        %v806 = vmul.f32 %v750, %v805
        %v807 = vmul.f32 %v754, %v805
        %808 = vmatprep.subr.mxu0 0.0
        %809 = vmatpush1.xpose.msra.mxu0 %v806
        %810 = vmatprep.subr.mxu0 0.0
        %811 = vmatpush1.xpose.msra.mxu0 %v807
        %812 = vmatprep.subr.mxu0 0.0
        %813 = vmatpush1.xpose.msra.mxu0 0.0
        %814 = vmatprep.subr.mxu0 0.0
        %815 = vmatpush1.xpose.msra.mxu0 0.0
        %816 = vmatprep.subr.mxu0 0.0
        %817 = vmatpush1.xpose.msra.mxu0 0.0
        %818 = vmatprep.subr.mxu0 0.0
        %819 = vmatpush1.xpose.msra.mxu0 0.0
        %820 = vmatprep.subr.mxu0 0.0
        %821 = vmatpush1.xpose.msra.mxu0 0.0
        %822 = vmatprep.subr.mxu0 0.0
        %823 = vmatpush1.xpose.msra.mxu0 0.0
        %824 = vmatprep.subr.mxu0 0.0
        %825 = vmatpush1.xpose.msra.mxu0 0.0
        %826 = vmatprep.subr.mxu0 0.0
        %827 = vmatpush1.xpose.msra.mxu0 0.0
        %828 = vmatprep.subr.mxu0 0.0
        %829 = vmatpush1.xpose.msra.mxu0 0.0
        %830 = vmatprep.subr.mxu0 0.0
        %831 = vmatpush1.xpose.msra.mxu0 0.0
        %832 = vmatprep.subr.mxu0 0.0
        %833 = vmatpush1.xpose.msra.mxu0 0.0
        %834 = vmatprep.subr.mxu0 0.0
        %835 = vmatpush1.xpose.msra.mxu0 0.0
        %836 = vmatprep.subr.mxu0 0.0
        %837 = vmatpush1.xpose.msra.mxu0 0.0
        %838 = vmatprep.subr.mxu0 0.0
        %839 = vmatpush1.xpose.msra.mxu0 0.0
        %840 = vmatprep.subr.mxu0 0.0
        %841 = vmatpush1.xpose.msra.mxu0 0.0
        %842 = vmatprep.subr.mxu0 0.0
        %843 = vmatpush1.xpose.msra.mxu0 0.0
        %844 = vmatprep.subr.mxu0 0.0
        %845 = vmatpush1.xpose.msra.mxu0 0.0
        %846 = vmatprep.subr.mxu0 0.0
        %847 = vmatpush1.xpose.msra.mxu0 0.0
        %848 = vmatprep.subr.mxu0 0.0
        %849 = vmatpush1.xpose.msra.mxu0 0.0
        %850 = vmatprep.subr.mxu0 0.0
        %851 = vmatpush1.xpose.msra.mxu0 0.0
        %852 = vmatprep.subr.mxu0 0.0
        %853 = vmatpush1.xpose.msra.mxu0 0.0
        %854 = vmatprep.subr.mxu0 0.0
        %855 = vmatpush1.xpose.msra.mxu0 0.0
        %856 = vmatprep.subr.mxu0 0.0
        %857 = vmatpush1.xpose.msra.mxu0 0.0
        %858 = vmatprep.subr.mxu0 0.0
        %859 = vmatpush1.xpose.msra.mxu0 0.0
        %860 = vmatprep.subr.mxu0 0.0
        %861 = vmatpush1.xpose.msra.mxu0 0.0
        %862 = vmatprep.subr.mxu0 0.0
        %863 = vmatpush1.xpose.msra.mxu0 0.0
        %864 = vmatprep.subr.mxu0 0.0
        %865 = vmatpush1.xpose.msra.mxu0 0.0
        %866 = vmatprep.subr.mxu0 0.0
        %867 = vmatpush1.xpose.msra.mxu0 0.0
        %868 = vmatprep.subr.mxu0 0.0
        %869 = vmatpush1.xpose.msra.mxu0 0.0
        %870 = vmatprep.subr.mxu0 0.0
        %871 = vmatpush1.xpose.msra.mxu0 0.0
        %872 = vmatprep.mubr.f32.mxu0 0.0
        %873 = vmatmul.mubr.f32.gmra.mrb[0].mxu0 %v797
        %v874 = vpop.f32.mrb[0].mxu0
        %v875 = vadd.f32 0.0, %v874
        %v876 = vpop.f32.mrb[0].mxu0
        %877 = vmatprep.mubr.f32.mxu0 0.0
        %878 = vmatmul.mubr.f32.gmra.mrb[0].mxu0 %v798
        %v879 = vpop.f32.mrb[0].mxu0
        %v880 = vadd.f32 0.0, %v879
        %v881 = vpop.f32.mrb[0].mxu0
        %882 = vdwg.mxu0
        %vm883 = vcmask 130048
        %v884 = vsel %vm883, %v875, -inf
        %885 = vmax.xlane.f32.xlu0 %v884
        %v886 = vpop.xlane.xlu0 %885
        %v887 = vsel %vm883, %v880, -inf
        %888 = vmax.xlane.f32.xlu0 %v887
        %v889 = vpop.xlane.xlu0 %888
        %v890 = vsub.f32 %v875, %v886
        %v891 = vsub.f32 %v880, %v889
        %v892 = vmul.f32 %v890, 1.442695
        %v893 = vpow.pop %v892
        %v894 = vmul.f32 %v891, 1.442695
        %v895 = vpow.pop %v894
        %v896 = vsel %vm883, %v893, 0.0
        %897 = vadd.xlane.f32.xlu0 %v896
        %v898 = vpop.xlane.xlu0 %897
        %v899 = vsel %vm883, %v895, 0.0
        %900 = vadd.xlane.f32.xlu0 %v899
        %v901 = vpop.xlane.xlu0 %900
        %v902 = vrcp.pop %v898
        %v903 = vrcp.pop %v901
        %v904 = vmul.f32 %v893, %v902
        %v905 = vmul.f32 %v895, %v903
        %v906 = vmul.f32 %v791, %v805
        %v907 = vmul.f32 %v794, %v805
        %vm908 = vcmp.ge.s32.totalorder %v800, 32
        %vm909 = vcmp.lt.s32.totalorder %v800, 64
        %vm910 = vmand %vm908, %vm909
        %v911 = vsel %vm910, 1, 0
        %v912 = vcvt.s32.f32 %v911
        %v913 = vmul.f32 %v750, %v912
        %v914 = vmul.f32 %v754, %v912
        %915 = vmatprep.subr.mxu0 0.0
        %916 = vmatpush1.xpose.msra.mxu0 %v913
        %917 = vmatprep.subr.mxu0 0.0
        %918 = vmatpush1.xpose.msra.mxu0 %v914
        %919 = vmatprep.subr.mxu0 0.0
        %920 = vmatpush1.xpose.msra.mxu0 0.0
        %921 = vmatprep.subr.mxu0 0.0
        %922 = vmatpush1.xpose.msra.mxu0 0.0
        %923 = vmatprep.subr.mxu0 0.0
        %924 = vmatpush1.xpose.msra.mxu0 0.0
        %925 = vmatprep.subr.mxu0 0.0
        %926 = vmatpush1.xpose.msra.mxu0 0.0
        %927 = vmatprep.subr.mxu0 0.0
        %928 = vmatpush1.xpose.msra.mxu0 0.0
        %929 = vmatprep.subr.mxu0 0.0
        %930 = vmatpush1.xpose.msra.mxu0 0.0
        %931 = vmatprep.subr.mxu0 0.0
        %932 = vmatpush1.xpose.msra.mxu0 0.0
        %933 = vmatprep.subr.mxu0 0.0
        %934 = vmatpush1.xpose.msra.mxu0 0.0
        %935 = vmatprep.subr.mxu0 0.0
        %936 = vmatpush1.xpose.msra.mxu0 0.0
        %937 = vmatprep.subr.mxu0 0.0
        %938 = vmatpush1.xpose.msra.mxu0 0.0
        %939 = vmatprep.subr.mxu0 0.0
        %940 = vmatpush1.xpose.msra.mxu0 0.0
        %941 = vmatprep.subr.mxu0 0.0
        %942 = vmatpush1.xpose.msra.mxu0 0.0
        %943 = vmatprep.subr.mxu0 0.0
        %944 = vmatpush1.xpose.msra.mxu0 0.0
        %945 = vmatprep.subr.mxu0 0.0
        %946 = vmatpush1.xpose.msra.mxu0 0.0
        %947 = vmatprep.subr.mxu0 0.0
        %948 = vmatpush1.xpose.msra.mxu0 0.0
        %949 = vmatprep.subr.mxu0 0.0
        %950 = vmatpush1.xpose.msra.mxu0 0.0
        %951 = vmatprep.subr.mxu0 0.0
        %952 = vmatpush1.xpose.msra.mxu0 0.0
        %953 = vmatprep.subr.mxu0 0.0
        %954 = vmatpush1.xpose.msra.mxu0 0.0
        %955 = vmatprep.subr.mxu0 0.0
        %956 = vmatpush1.xpose.msra.mxu0 0.0
        %957 = vmatprep.subr.mxu0 0.0
        %958 = vmatpush1.xpose.msra.mxu0 0.0
        %959 = vmatprep.subr.mxu0 0.0
        %960 = vmatpush1.xpose.msra.mxu0 0.0
        %961 = vmatprep.subr.mxu0 0.0
        %962 = vmatpush1.xpose.msra.mxu0 0.0
        %963 = vmatprep.subr.mxu0 0.0
        %964 = vmatpush1.xpose.msra.mxu0 0.0
        %965 = vmatprep.subr.mxu0 0.0
        %966 = vmatpush1.xpose.msra.mxu0 0.0
        %967 = vmatprep.subr.mxu0 0.0
        %968 = vmatpush1.xpose.msra.mxu0 0.0
        %969 = vmatprep.subr.mxu0 0.0
        %970 = vmatpush1.xpose.msra.mxu0 0.0
        %971 = vmatprep.subr.mxu0 0.0
        %972 = vmatpush1.xpose.msra.mxu0 0.0
        %973 = vmatprep.subr.mxu0 0.0
        %974 = vmatpush1.xpose.msra.mxu0 0.0
        %975 = vmatprep.subr.mxu0 0.0
        %976 = vmatpush1.xpose.msra.mxu0 0.0
        %977 = vmatprep.subr.mxu0 0.0
        %978 = vmatpush1.xpose.msra.mxu0 0.0
        %979 = vmatprep.mubr.f32.mxu0 0.0
        %980 = vmatmul.mubr.f32.gmra.mrb[0].mxu0 %v797
        %v981 = vpop.f32.mrb[0].mxu0
        %v982 = vadd.f32 0.0, %v981
        %v983 = vpop.f32.mrb[0].mxu0
        %984 = vmatprep.mubr.f32.mxu0 0.0
        %985 = vmatmul.mubr.f32.gmra.mrb[0].mxu0 %v798
        %v986 = vpop.f32.mrb[0].mxu0
        %v987 = vadd.f32 0.0, %v986
        %v988 = vpop.f32.mrb[0].mxu0
        %989 = vdwg.mxu0
        %v990 = vsel %vm883, %v982, -inf
        %991 = vmax.xlane.f32.xlu0 %v990
        %v992 = vpop.xlane.xlu0 %991
        %v993 = vsel %vm883, %v987, -inf
        %994 = vmax.xlane.f32.xlu0 %v993
        %v995 = vpop.xlane.xlu0 %994
        %v996 = vsub.f32 %v982, %v992
        %v997 = vsub.f32 %v987, %v995
        %v998 = vmul.f32 %v996, 1.442695
        %v999 = vpow.pop %v998
        %v1000 = vmul.f32 %v997, 1.442695
        %v1001 = vpow.pop %v1000
        %v1002 = vsel %vm883, %v999, 0.0
        %1003 = vadd.xlane.f32.xlu0 %v1002
        %v1004 = vpop.xlane.xlu0 %1003
        %v1005 = vsel %vm883, %v1001, 0.0
        %1006 = vadd.xlane.f32.xlu0 %v1005
        %v1007 = vpop.xlane.xlu0 %1006
        %v1008 = vrcp.pop %v1004
        %v1009 = vrcp.pop %v1007
        %v1010 = vmul.f32 %v999, %v1008
        %v1011 = vmul.f32 %v1001, %v1009
        %v1012 = vmul.f32 %v791, %v912
        %v1013 = vmul.f32 %v794, %v912
        %v1015 = vsel %vm883, %v1010, 0
        %v1018 = vsel %vm883, %v1011, 0
        %1020 = vmatprep.subr.mxu0 0.0
        %1021 = vmatpush1.msra.mxu0 %v1012
        %1022 = vmatprep.subr.mxu0 0.0
        %1023 = vmatpush1.msra.mxu0 %v1013
        %1024 = vmatprep.subr.mxu0 0.0
        %1025 = vmatpush1.msra.mxu0 0.0
        %1026 = vmatprep.subr.mxu0 0.0
        %1027 = vmatpush1.msra.mxu0 0.0
        %1028 = vmatprep.subr.mxu0 0.0
        %1029 = vmatpush1.msra.mxu0 0.0
        %1030 = vmatprep.subr.mxu0 0.0
        %1031 = vmatpush1.msra.mxu0 0.0
        %1032 = vmatprep.subr.mxu0 0.0
        %1033 = vmatpush1.msra.mxu0 0.0
        %1034 = vmatprep.subr.mxu0 0.0
        %1035 = vmatpush1.msra.mxu0 0.0
        %1036 = vmatprep.subr.mxu0 0.0
        %1037 = vmatpush1.msra.mxu0 0.0
        %1038 = vmatprep.subr.mxu0 0.0
        %1039 = vmatpush1.msra.mxu0 0.0
        %1040 = vmatprep.subr.mxu0 0.0
        %1041 = vmatpush1.msra.mxu0 0.0
        %1042 = vmatprep.subr.mxu0 0.0
        %1043 = vmatpush1.msra.mxu0 0.0
        %1044 = vmatprep.subr.mxu0 0.0
        %1045 = vmatpush1.msra.mxu0 0.0
        %1046 = vmatprep.subr.mxu0 0.0
        %1047 = vmatpush1.msra.mxu0 0.0
        %1048 = vmatprep.subr.mxu0 0.0
        %1049 = vmatpush1.msra.mxu0 0.0
        %1050 = vmatprep.subr.mxu0 0.0
        %1051 = vmatpush1.msra.mxu0 0.0
        %1052 = vmatprep.subr.mxu0 0.0
        %1053 = vmatpush1.msra.mxu0 0.0
        %1054 = vmatprep.subr.mxu0 0.0
        %1055 = vmatpush1.msra.mxu0 0.0
        %1056 = vmatprep.subr.mxu0 0.0
        %1057 = vmatpush1.msra.mxu0 0.0
        %1058 = vmatprep.subr.mxu0 0.0
        %1059 = vmatpush1.msra.mxu0 0.0
        %1060 = vmatprep.subr.mxu0 0.0
        %1061 = vmatpush1.msra.mxu0 0.0
        %1062 = vmatprep.subr.mxu0 0.0
        %1063 = vmatpush1.msra.mxu0 0.0
        %1064 = vmatprep.subr.mxu0 0.0
        %1065 = vmatpush1.msra.mxu0 0.0
        %1066 = vmatprep.subr.mxu0 0.0
        %1067 = vmatpush1.msra.mxu0 0.0
        %1068 = vmatprep.subr.mxu0 0.0
        %1069 = vmatpush1.msra.mxu0 0.0
        %1070 = vmatprep.subr.mxu0 0.0
        %1071 = vmatpush1.msra.mxu0 0.0
        %1072 = vmatprep.subr.mxu0 0.0
        %1073 = vmatpush1.msra.mxu0 0.0
        %1074 = vmatprep.subr.mxu0 0.0
        %1075 = vmatpush1.msra.mxu0 0.0
        %1076 = vmatprep.subr.mxu0 0.0
        %1077 = vmatpush1.msra.mxu0 0.0
        %1078 = vmatprep.subr.mxu0 0.0
        %1079 = vmatpush1.msra.mxu0 0.0
        %1080 = vmatprep.subr.mxu0 0.0
        %1081 = vmatpush1.msra.mxu0 0.0
        %1082 = vmatprep.subr.mxu0 0.0
        %1083 = vmatpush1.msra.mxu0 0.0
        %1084 = vmatprep.mubr.f32.mxu0 0.0
        %1085 = vmatmul.mubr.f32.gmra.mrb[0].mxu0 %v1015
        %v1086 = vpop.f32.mrb[0].mxu0
        %v1087 = vadd.f32 0.0, %v1086
        %v1088 = vpop.f32.mrb[0].mxu0
        %1089 = vmatprep.mubr.f32.mxu0 0.0
        %1090 = vmatmul.mubr.f32.gmra.mrb[0].mxu0 %v1018
        %v1091 = vpop.f32.mrb[0].mxu0
        %v1092 = vadd.f32 0.0, %v1091
        %v1093 = vpop.f32.mrb[0].mxu0
        %1094 = vdwg.mxu0
        %v1096 = vsel %vm883, %v904, 0
        %v1099 = vsel %vm883, %v905, 0
        %1101 = vmatprep.subr.mxu0 0.0
        %1102 = vmatpush1.msra.mxu0 %v906
        %1103 = vmatprep.subr.mxu0 0.0
        %1104 = vmatpush1.msra.mxu0 %v907
        %1105 = vmatprep.subr.mxu0 0.0
        %1106 = vmatpush1.msra.mxu0 0.0
        %1107 = vmatprep.subr.mxu0 0.0
        %1108 = vmatpush1.msra.mxu0 0.0
        %1109 = vmatprep.subr.mxu0 0.0
        %1110 = vmatpush1.msra.mxu0 0.0
        %1111 = vmatprep.subr.mxu0 0.0
        %1112 = vmatpush1.msra.mxu0 0.0
        %1113 = vmatprep.subr.mxu0 0.0
        %1114 = vmatpush1.msra.mxu0 0.0
        %1115 = vmatprep.subr.mxu0 0.0
        %1116 = vmatpush1.msra.mxu0 0.0
        %1117 = vmatprep.subr.mxu0 0.0
        %1118 = vmatpush1.msra.mxu0 0.0
        %1119 = vmatprep.subr.mxu0 0.0
        %1120 = vmatpush1.msra.mxu0 0.0
        %1121 = vmatprep.subr.mxu0 0.0
        %1122 = vmatpush1.msra.mxu0 0.0
        %1123 = vmatprep.subr.mxu0 0.0
        %1124 = vmatpush1.msra.mxu0 0.0
        %1125 = vmatprep.subr.mxu0 0.0
        %1126 = vmatpush1.msra.mxu0 0.0
        %1127 = vmatprep.subr.mxu0 0.0
        %1128 = vmatpush1.msra.mxu0 0.0
        %1129 = vmatprep.subr.mxu0 0.0
        %1130 = vmatpush1.msra.mxu0 0.0
        %1131 = vmatprep.subr.mxu0 0.0
        %1132 = vmatpush1.msra.mxu0 0.0
        %1133 = vmatprep.subr.mxu0 0.0
        %1134 = vmatpush1.msra.mxu0 0.0
        %1135 = vmatprep.subr.mxu0 0.0
        %1136 = vmatpush1.msra.mxu0 0.0
        %1137 = vmatprep.subr.mxu0 0.0
        %1138 = vmatpush1.msra.mxu0 0.0
        %1139 = vmatprep.subr.mxu0 0.0
        %1140 = vmatpush1.msra.mxu0 0.0
        %1141 = vmatprep.subr.mxu0 0.0
        %1142 = vmatpush1.msra.mxu0 0.0
        %1143 = vmatprep.subr.mxu0 0.0
        %1144 = vmatpush1.msra.mxu0 0.0
        %1145 = vmatprep.subr.mxu0 0.0
        %1146 = vmatpush1.msra.mxu0 0.0
        %1147 = vmatprep.subr.mxu0 0.0
        %1148 = vmatpush1.msra.mxu0 0.0
        %1149 = vmatprep.subr.mxu0 0.0
        %1150 = vmatpush1.msra.mxu0 0.0
        %1151 = vmatprep.subr.mxu0 0.0
        %1152 = vmatpush1.msra.mxu0 0.0
        %1153 = vmatprep.subr.mxu0 0.0
        %1154 = vmatpush1.msra.mxu0 0.0
        %1155 = vmatprep.subr.mxu0 0.0
        %1156 = vmatpush1.msra.mxu0 0.0
        %1157 = vmatprep.subr.mxu0 0.0
        %1158 = vmatpush1.msra.mxu0 0.0
        %1159 = vmatprep.subr.mxu0 0.0
        %1160 = vmatpush1.msra.mxu0 0.0
        %1161 = vmatprep.subr.mxu0 0.0
        %1162 = vmatpush1.msra.mxu0 0.0
        %1163 = vmatprep.subr.mxu0 0.0
        %1164 = vmatpush1.msra.mxu0 0.0
        %1165 = vmatprep.mubr.f32.mxu0 0.0
        %1166 = vmatmul.mubr.f32.gmra.mrb[0].mxu0 %v1096
        %v1167 = vpop.f32.mrb[0].mxu0
        %v1168 = vadd.f32 %v1087, %v1167
        %v1169 = vpop.f32.mrb[0].mxu0
        %1170 = vmatprep.mubr.f32.mxu0 0.0
        %1171 = vmatmul.mubr.f32.gmra.mrb[0].mxu0 %v1099
        %v1172 = vpop.f32.mrb[0].mxu0
        %v1173 = vadd.f32 %v1092, %v1172
        %v1174 = vpop.f32.mrb[0].mxu0
        %1175 = vdwg.mxu0
        %vm1176 = vcmp.ge.s32.totalorder %v800, 64
        %vm1177 = vcmp.lt.s32.totalorder %v800, 96
        %vm1178 = vmand %vm1176, %vm1177
        %v1179 = vsel %vm1178, 1, 0
        %v1180 = vcvt.s32.f32 %v1179
        %v1181 = vmul.f32 %v750, %v1180
        %v1182 = vmul.f32 %v754, %v1180
        %1183 = vmatprep.subr.mxu0 0.0
        %1184 = vmatpush1.xpose.msra.mxu0 %v1181
        %1185 = vmatprep.subr.mxu0 0.0
        %1186 = vmatpush1.xpose.msra.mxu0 %v1182
        %1187 = vmatprep.subr.mxu0 0.0
        %1188 = vmatpush1.xpose.msra.mxu0 0.0
        %1189 = vmatprep.subr.mxu0 0.0
        %1190 = vmatpush1.xpose.msra.mxu0 0.0
        %1191 = vmatprep.subr.mxu0 0.0
        %1192 = vmatpush1.xpose.msra.mxu0 0.0
        %1193 = vmatprep.subr.mxu0 0.0
        %1194 = vmatpush1.xpose.msra.mxu0 0.0
        %1195 = vmatprep.subr.mxu0 0.0
        %1196 = vmatpush1.xpose.msra.mxu0 0.0
        %1197 = vmatprep.subr.mxu0 0.0
        %1198 = vmatpush1.xpose.msra.mxu0 0.0
        %1199 = vmatprep.subr.mxu0 0.0
        %1200 = vmatpush1.xpose.msra.mxu0 0.0
        %1201 = vmatprep.subr.mxu0 0.0
        %1202 = vmatpush1.xpose.msra.mxu0 0.0
        %1203 = vmatprep.subr.mxu0 0.0
        %1204 = vmatpush1.xpose.msra.mxu0 0.0
        %1205 = vmatprep.subr.mxu0 0.0
        %1206 = vmatpush1.xpose.msra.mxu0 0.0
        %1207 = vmatprep.subr.mxu0 0.0
        %1208 = vmatpush1.xpose.msra.mxu0 0.0
        %1209 = vmatprep.subr.mxu0 0.0
        %1210 = vmatpush1.xpose.msra.mxu0 0.0
        %1211 = vmatprep.subr.mxu0 0.0
        %1212 = vmatpush1.xpose.msra.mxu0 0.0
        %1213 = vmatprep.subr.mxu0 0.0
        %1214 = vmatpush1.xpose.msra.mxu0 0.0
        %1215 = vmatprep.subr.mxu0 0.0
        %1216 = vmatpush1.xpose.msra.mxu0 0.0
        %1217 = vmatprep.subr.mxu0 0.0
        %1218 = vmatpush1.xpose.msra.mxu0 0.0
        %1219 = vmatprep.subr.mxu0 0.0
        %1220 = vmatpush1.xpose.msra.mxu0 0.0
        %1221 = vmatprep.subr.mxu0 0.0
        %1222 = vmatpush1.xpose.msra.mxu0 0.0
        %1223 = vmatprep.subr.mxu0 0.0
        %1224 = vmatpush1.xpose.msra.mxu0 0.0
        %1225 = vmatprep.subr.mxu0 0.0
        %1226 = vmatpush1.xpose.msra.mxu0 0.0
        %1227 = vmatprep.subr.mxu0 0.0
        %1228 = vmatpush1.xpose.msra.mxu0 0.0
        %1229 = vmatprep.subr.mxu0 0.0
        %1230 = vmatpush1.xpose.msra.mxu0 0.0
        %1231 = vmatprep.subr.mxu0 0.0
        %1232 = vmatpush1.xpose.msra.mxu0 0.0
        %1233 = vmatprep.subr.mxu0 0.0
        %1234 = vmatpush1.xpose.msra.mxu0 0.0
        %1235 = vmatprep.subr.mxu0 0.0
        %1236 = vmatpush1.xpose.msra.mxu0 0.0
        %1237 = vmatprep.subr.mxu0 0.0
        %1238 = vmatpush1.xpose.msra.mxu0 0.0
        %1239 = vmatprep.subr.mxu0 0.0
        %1240 = vmatpush1.xpose.msra.mxu0 0.0
        %1241 = vmatprep.subr.mxu0 0.0
        %1242 = vmatpush1.xpose.msra.mxu0 0.0
        %1243 = vmatprep.subr.mxu0 0.0
        %1244 = vmatpush1.xpose.msra.mxu0 0.0
        %1245 = vmatprep.subr.mxu0 0.0
        %1246 = vmatpush1.xpose.msra.mxu0 0.0
        %1247 = vmatprep.mubr.f32.mxu0 0.0
        %1248 = vmatmul.mubr.f32.gmra.mrb[0].mxu0 %v797
        %v1249 = vpop.f32.mrb[0].mxu0
        %v1250 = vadd.f32 0.0, %v1249
        %v1251 = vpop.f32.mrb[0].mxu0
        %1252 = vmatprep.mubr.f32.mxu0 0.0
        %1253 = vmatmul.mubr.f32.gmra.mrb[0].mxu0 %v798
        %v1254 = vpop.f32.mrb[0].mxu0
        %v1255 = vadd.f32 0.0, %v1254
        %v1256 = vpop.f32.mrb[0].mxu0
        %1257 = vdwg.mxu0
        %v1258 = vsel %vm883, %v1250, -inf
        %1259 = vmax.xlane.f32.xlu0 %v1258
        %v1260 = vpop.xlane.xlu0 %1259
        %v1261 = vsel %vm883, %v1255, -inf
        %1262 = vmax.xlane.f32.xlu0 %v1261
        %v1263 = vpop.xlane.xlu0 %1262
        %v1264 = vsub.f32 %v1250, %v1260
        %v1265 = vsub.f32 %v1255, %v1263
        %v1266 = vmul.f32 %v1264, 1.442695
        %v1267 = vpow.pop %v1266
        %v1268 = vmul.f32 %v1265, 1.442695
        %v1269 = vpow.pop %v1268
        %v1270 = vsel %vm883, %v1267, 0.0
        %1271 = vadd.xlane.f32.xlu0 %v1270
        %v1272 = vpop.xlane.xlu0 %1271
        %v1273 = vsel %vm883, %v1269, 0.0
        %1274 = vadd.xlane.f32.xlu0 %v1273
        %v1275 = vpop.xlane.xlu0 %1274
        %v1276 = vrcp.pop %v1272
        %v1277 = vrcp.pop %v1275
        %v1278 = vmul.f32 %v1267, %v1276
        %v1279 = vmul.f32 %v1269, %v1277
        %v1280 = vmul.f32 %v791, %v1180
        %v1281 = vmul.f32 %v794, %v1180
        %v1283 = vsel %vm883, %v1278, 0
        %v1286 = vsel %vm883, %v1279, 0
        %1288 = vmatprep.subr.mxu0 0.0
        %1289 = vmatpush1.msra.mxu0 %v1280
        %1290 = vmatprep.subr.mxu0 0.0
        %1291 = vmatpush1.msra.mxu0 %v1281
        %1292 = vmatprep.subr.mxu0 0.0
        %1293 = vmatpush1.msra.mxu0 0.0
        %1294 = vmatprep.subr.mxu0 0.0
        %1295 = vmatpush1.msra.mxu0 0.0
        %1296 = vmatprep.subr.mxu0 0.0
        %1297 = vmatpush1.msra.mxu0 0.0
        %1298 = vmatprep.subr.mxu0 0.0
        %1299 = vmatpush1.msra.mxu0 0.0
        %1300 = vmatprep.subr.mxu0 0.0
        %1301 = vmatpush1.msra.mxu0 0.0
        %1302 = vmatprep.subr.mxu0 0.0
        %1303 = vmatpush1.msra.mxu0 0.0
        %1304 = vmatprep.subr.mxu0 0.0
        %1305 = vmatpush1.msra.mxu0 0.0
        %1306 = vmatprep.subr.mxu0 0.0
        %1307 = vmatpush1.msra.mxu0 0.0
        %1308 = vmatprep.subr.mxu0 0.0
        %1309 = vmatpush1.msra.mxu0 0.0
        %1310 = vmatprep.subr.mxu0 0.0
        %1311 = vmatpush1.msra.mxu0 0.0
        %1312 = vmatprep.subr.mxu0 0.0
        %1313 = vmatpush1.msra.mxu0 0.0
        %1314 = vmatprep.subr.mxu0 0.0
        %1315 = vmatpush1.msra.mxu0 0.0
        %1316 = vmatprep.subr.mxu0 0.0
        %1317 = vmatpush1.msra.mxu0 0.0
        %1318 = vmatprep.subr.mxu0 0.0
        %1319 = vmatpush1.msra.mxu0 0.0
        %1320 = vmatprep.subr.mxu0 0.0
        %1321 = vmatpush1.msra.mxu0 0.0
        %1322 = vmatprep.subr.mxu0 0.0
        %1323 = vmatpush1.msra.mxu0 0.0
        %1324 = vmatprep.subr.mxu0 0.0
        %1325 = vmatpush1.msra.mxu0 0.0
        %1326 = vmatprep.subr.mxu0 0.0
        %1327 = vmatpush1.msra.mxu0 0.0
        %1328 = vmatprep.subr.mxu0 0.0
        %1329 = vmatpush1.msra.mxu0 0.0
        %1330 = vmatprep.subr.mxu0 0.0
        %1331 = vmatpush1.msra.mxu0 0.0
        %1332 = vmatprep.subr.mxu0 0.0
        %1333 = vmatpush1.msra.mxu0 0.0
        %1334 = vmatprep.subr.mxu0 0.0
        %1335 = vmatpush1.msra.mxu0 0.0
        %1336 = vmatprep.subr.mxu0 0.0
        %1337 = vmatpush1.msra.mxu0 0.0
        %1338 = vmatprep.subr.mxu0 0.0
        %1339 = vmatpush1.msra.mxu0 0.0
        %1340 = vmatprep.subr.mxu0 0.0
        %1341 = vmatpush1.msra.mxu0 0.0
        %1342 = vmatprep.subr.mxu0 0.0
        %1343 = vmatpush1.msra.mxu0 0.0
        %1344 = vmatprep.subr.mxu0 0.0
        %1345 = vmatpush1.msra.mxu0 0.0
        %1346 = vmatprep.subr.mxu0 0.0
        %1347 = vmatpush1.msra.mxu0 0.0
        %1348 = vmatprep.subr.mxu0 0.0
        %1349 = vmatpush1.msra.mxu0 0.0
        %1350 = vmatprep.subr.mxu0 0.0
        %1351 = vmatpush1.msra.mxu0 0.0
        %1352 = vmatprep.mubr.f32.mxu0 0.0
        %1353 = vmatmul.mubr.f32.gmra.mrb[0].mxu0 %v1283
        %v1354 = vpop.f32.mrb[0].mxu0
        %v1355 = vadd.f32 0.0, %v1354
        %v1356 = vpop.f32.mrb[0].mxu0
        %1357 = vmatprep.mubr.f32.mxu0 0.0
        %1358 = vmatmul.mubr.f32.gmra.mrb[0].mxu0 %v1286
        %v1359 = vpop.f32.mrb[0].mxu0
        %v1360 = vadd.f32 0.0, %v1359
        %v1361 = vpop.f32.mrb[0].mxu0
        %1362 = vdwg.mxu0
        %v1363 = vadd.f32 %v1168, %v1355
        %v1364 = vadd.f32 %v1173, %v1360
        %vm1365 = vcmp.ge.s32.totalorder %v800, 96
        %vm1366 = vcmp.lt.s32.totalorder %v800, 128
        %vm1367 = vmand %vm1365, %vm1366
        %v1368 = vsel %vm1367, 1, 0
        %v1369 = vcvt.s32.f32 %v1368
        %v1370 = vmul.f32 %v750, %v1369
        %v1371 = vmul.f32 %v754, %v1369
        %1372 = vmatprep.subr.mxu0 0.0
        %1373 = vmatpush1.xpose.msra.mxu0 %v1370
        %1374 = vmatprep.subr.mxu0 0.0
        %1375 = vmatpush1.xpose.msra.mxu0 %v1371
        %1376 = vmatprep.subr.mxu0 0.0
        %1377 = vmatpush1.xpose.msra.mxu0 0.0
        %1378 = vmatprep.subr.mxu0 0.0
        %1379 = vmatpush1.xpose.msra.mxu0 0.0
        %1380 = vmatprep.subr.mxu0 0.0
        %1381 = vmatpush1.xpose.msra.mxu0 0.0
        %1382 = vmatprep.subr.mxu0 0.0
        %1383 = vmatpush1.xpose.msra.mxu0 0.0
        %1384 = vmatprep.subr.mxu0 0.0
        %1385 = vmatpush1.xpose.msra.mxu0 0.0
        %1386 = vmatprep.subr.mxu0 0.0
        %1387 = vmatpush1.xpose.msra.mxu0 0.0
        %1388 = vmatprep.subr.mxu0 0.0
        %1389 = vmatpush1.xpose.msra.mxu0 0.0
        %1390 = vmatprep.subr.mxu0 0.0
        %1391 = vmatpush1.xpose.msra.mxu0 0.0
        %1392 = vmatprep.subr.mxu0 0.0
        %1393 = vmatpush1.xpose.msra.mxu0 0.0
        %1394 = vmatprep.subr.mxu0 0.0
        %1395 = vmatpush1.xpose.msra.mxu0 0.0
        %1396 = vmatprep.subr.mxu0 0.0
        %1397 = vmatpush1.xpose.msra.mxu0 0.0
        %1398 = vmatprep.subr.mxu0 0.0
        %1399 = vmatpush1.xpose.msra.mxu0 0.0
        %1400 = vmatprep.subr.mxu0 0.0
        %1401 = vmatpush1.xpose.msra.mxu0 0.0
        %1402 = vmatprep.subr.mxu0 0.0
        %1403 = vmatpush1.xpose.msra.mxu0 0.0
        %1404 = vmatprep.subr.mxu0 0.0
        %1405 = vmatpush1.xpose.msra.mxu0 0.0
        %1406 = vmatprep.subr.mxu0 0.0
        %1407 = vmatpush1.xpose.msra.mxu0 0.0
        %1408 = vmatprep.subr.mxu0 0.0
        %1409 = vmatpush1.xpose.msra.mxu0 0.0
        %1410 = vmatprep.subr.mxu0 0.0
        %1411 = vmatpush1.xpose.msra.mxu0 0.0
        %1412 = vmatprep.subr.mxu0 0.0
        %1413 = vmatpush1.xpose.msra.mxu0 0.0
        %1414 = vmatprep.subr.mxu0 0.0
        %1415 = vmatpush1.xpose.msra.mxu0 0.0
        %1416 = vmatprep.subr.mxu0 0.0
        %1417 = vmatpush1.xpose.msra.mxu0 0.0
        %1418 = vmatprep.subr.mxu0 0.0
        %1419 = vmatpush1.xpose.msra.mxu0 0.0
        %1420 = vmatprep.subr.mxu0 0.0
        %1421 = vmatpush1.xpose.msra.mxu0 0.0
        %1422 = vmatprep.subr.mxu0 0.0
        %1423 = vmatpush1.xpose.msra.mxu0 0.0
        %1424 = vmatprep.subr.mxu0 0.0
        %1425 = vmatpush1.xpose.msra.mxu0 0.0
        %1426 = vmatprep.subr.mxu0 0.0
        %1427 = vmatpush1.xpose.msra.mxu0 0.0
        %1428 = vmatprep.subr.mxu0 0.0
        %1429 = vmatpush1.xpose.msra.mxu0 0.0
        %1430 = vmatprep.subr.mxu0 0.0
        %1431 = vmatpush1.xpose.msra.mxu0 0.0
        %1432 = vmatprep.subr.mxu0 0.0
        %1433 = vmatpush1.xpose.msra.mxu0 0.0
        %1434 = vmatprep.subr.mxu0 0.0
        %1435 = vmatpush1.xpose.msra.mxu0 0.0
        %1436 = vmatprep.mubr.f32.mxu0 0.0
        %1437 = vmatmul.mubr.f32.gmra.mrb[0].mxu0 %v797
        %v1438 = vpop.f32.mrb[0].mxu0
        %v1439 = vadd.f32 0.0, %v1438
        %v1440 = vpop.f32.mrb[0].mxu0
        %1441 = vmatprep.mubr.f32.mxu0 0.0
        %1442 = vmatmul.mubr.f32.gmra.mrb[0].mxu0 %v798
        %v1443 = vpop.f32.mrb[0].mxu0
        %v1444 = vadd.f32 0.0, %v1443
        %v1445 = vpop.f32.mrb[0].mxu0
        %1446 = vdwg.mxu0
        %v1447 = vsel %vm883, %v1439, -inf
        %1448 = vmax.xlane.f32.xlu0 %v1447
        %v1449 = vpop.xlane.xlu0 %1448
        %v1450 = vsel %vm883, %v1444, -inf
        %1451 = vmax.xlane.f32.xlu0 %v1450
        %v1452 = vpop.xlane.xlu0 %1451
        %v1453 = vsub.f32 %v1439, %v1449
        %v1454 = vsub.f32 %v1444, %v1452
        %v1455 = vmul.f32 %v1453, 1.442695
        %v1456 = vpow.pop %v1455
        %v1457 = vmul.f32 %v1454, 1.442695
        %v1458 = vpow.pop %v1457
        %v1459 = vsel %vm883, %v1456, 0.0
        %1460 = vadd.xlane.f32.xlu0 %v1459
        %v1461 = vpop.xlane.xlu0 %1460
        %v1462 = vsel %vm883, %v1458, 0.0
        %1463 = vadd.xlane.f32.xlu0 %v1462
        %v1464 = vpop.xlane.xlu0 %1463
        %v1465 = vrcp.pop %v1461
        %v1466 = vrcp.pop %v1464
        %v1467 = vmul.f32 %v1456, %v1465
        %v1468 = vmul.f32 %v1458, %v1466
        %v1469 = vmul.f32 %v791, %v1369
        %v1470 = vmul.f32 %v794, %v1369
        %v1472 = vsel %vm883, %v1467, 0
        %v1475 = vsel %vm883, %v1468, 0
        %1477 = vmatprep.subr.mxu0 0.0
        %1478 = vmatpush1.msra.mxu0 %v1469
        %1479 = vmatprep.subr.mxu0 0.0
        %1480 = vmatpush1.msra.mxu0 %v1470
        %1481 = vmatprep.subr.mxu0 0.0
        %1482 = vmatpush1.msra.mxu0 0.0
        %1483 = vmatprep.subr.mxu0 0.0
        %1484 = vmatpush1.msra.mxu0 0.0
        %1485 = vmatprep.subr.mxu0 0.0
        %1486 = vmatpush1.msra.mxu0 0.0
        %1487 = vmatprep.subr.mxu0 0.0
        %1488 = vmatpush1.msra.mxu0 0.0
        %1489 = vmatprep.subr.mxu0 0.0
        %1490 = vmatpush1.msra.mxu0 0.0
        %1491 = vmatprep.subr.mxu0 0.0
        %1492 = vmatpush1.msra.mxu0 0.0
        %1493 = vmatprep.subr.mxu0 0.0
        %1494 = vmatpush1.msra.mxu0 0.0
        %1495 = vmatprep.subr.mxu0 0.0
        %1496 = vmatpush1.msra.mxu0 0.0
        %1497 = vmatprep.subr.mxu0 0.0
        %1498 = vmatpush1.msra.mxu0 0.0
        %1499 = vmatprep.subr.mxu0 0.0
        %1500 = vmatpush1.msra.mxu0 0.0
        %1501 = vmatprep.subr.mxu0 0.0
        %1502 = vmatpush1.msra.mxu0 0.0
        %1503 = vmatprep.subr.mxu0 0.0
        %1504 = vmatpush1.msra.mxu0 0.0
        %1505 = vmatprep.subr.mxu0 0.0
        %1506 = vmatpush1.msra.mxu0 0.0
        %1507 = vmatprep.subr.mxu0 0.0
        %1508 = vmatpush1.msra.mxu0 0.0
        %1509 = vmatprep.subr.mxu0 0.0
        %1510 = vmatpush1.msra.mxu0 0.0
        %1511 = vmatprep.subr.mxu0 0.0
        %1512 = vmatpush1.msra.mxu0 0.0
        %1513 = vmatprep.subr.mxu0 0.0
        %1514 = vmatpush1.msra.mxu0 0.0
        %1515 = vmatprep.subr.mxu0 0.0
        %1516 = vmatpush1.msra.mxu0 0.0
        %1517 = vmatprep.subr.mxu0 0.0
        %1518 = vmatpush1.msra.mxu0 0.0
        %1519 = vmatprep.subr.mxu0 0.0
        %1520 = vmatpush1.msra.mxu0 0.0
        %1521 = vmatprep.subr.mxu0 0.0
        %1522 = vmatpush1.msra.mxu0 0.0
        %1523 = vmatprep.subr.mxu0 0.0
        %1524 = vmatpush1.msra.mxu0 0.0
        %1525 = vmatprep.subr.mxu0 0.0
        %1526 = vmatpush1.msra.mxu0 0.0
        %1527 = vmatprep.subr.mxu0 0.0
        %1528 = vmatpush1.msra.mxu0 0.0
        %1529 = vmatprep.subr.mxu0 0.0
        %1530 = vmatpush1.msra.mxu0 0.0
        %1531 = vmatprep.subr.mxu0 0.0
        %1532 = vmatpush1.msra.mxu0 0.0
        %1533 = vmatprep.subr.mxu0 0.0
        %1534 = vmatpush1.msra.mxu0 0.0
        %1535 = vmatprep.subr.mxu0 0.0
        %1536 = vmatpush1.msra.mxu0 0.0
        %1537 = vmatprep.subr.mxu0 0.0
        %1538 = vmatpush1.msra.mxu0 0.0
        %1539 = vmatprep.subr.mxu0 0.0
        %1540 = vmatpush1.msra.mxu0 0.0
        %1541 = vmatprep.mubr.f32.mxu0 0.0
        %1542 = vmatmul.mubr.f32.gmra.mrb[0].mxu0 %v1472
        %v1543 = vpop.f32.mrb[0].mxu0
        %v1544 = vadd.f32 0.0, %v1543
        %v1545 = vpop.f32.mrb[0].mxu0
        %1546 = vmatprep.mubr.f32.mxu0 0.0
        %1547 = vmatmul.mubr.f32.gmra.mrb[0].mxu0 %v1475
        %v1548 = vpop.f32.mrb[0].mxu0
        %v1549 = vadd.f32 0.0, %v1548
        %v1550 = vpop.f32.mrb[0].mxu0
        %1551 = vdwg.mxu0
        %v1552 = vadd.f32 %v1363, %v1544
        %v1553 = vadd.f32 %v1364, %v1549
        %v1554 = vld [vmem:[%s505] sm:$0xf]
        %v1555 = vld [vmem:[%s505 + $0x4] sm:$0xf]
        %v1556 = vld [vmem:[%s505 + $0x8] sm:$0xf]
        %v1557 = vld [vmem:[%s505 + $0xc] sm:$0xf]
        %v1558 = vld [vmem:[%s505 + $0x10] sm:$0xf]
        %v1559 = vld [vmem:[%s505 + $0x14] sm:$0xf]
        %v1560 = vld [vmem:[%s505 + $0x18] sm:$0xf]
        %v1561 = vld [vmem:[%s505 + $0x1c] sm:$0xf]
        %v1562 = vld [vmem:[%s505 + $0x20] sm:$0xf]
        %v1563 = vld [vmem:[%s505 + $0x24] sm:$0xf]
        %v1564 = vld [vmem:[%s505 + $0x28] sm:$0xf]
        %v1565 = vld [vmem:[%s505 + $0x2c] sm:$0xf]
        %v1566 = vld [vmem:[%s505 + $0x30] sm:$0xf]
        %v1567 = vld [vmem:[%s505 + $0x34] sm:$0xf]
        %v1568 = vld [vmem:[%s505 + $0x38] sm:$0xf]
        %v1569 = vld [vmem:[%s505 + $0x3c] sm:$0xf]
        %v1570 = vpack.c.bf16 %v1553, %v1552
        %v1587 = vunpack.c.l.b16 %v1554
        %v1588 = vunpack.c.l.b16 %v1555
        %v1589 = vunpack.c.l.b16 %v1556
        %v1590 = vunpack.c.l.b16 %v1557
        %v1591 = vunpack.c.l.b16 %v1558
        %v1592 = vunpack.c.l.b16 %v1559
        %v1593 = vunpack.c.l.b16 %v1560
        %v1594 = vunpack.c.l.b16 %v1561
        %v1595 = vunpack.c.l.b16 %v1562
        %v1596 = vunpack.c.l.b16 %v1563
        %v1597 = vunpack.c.l.b16 %v1564
        %v1598 = vunpack.c.l.b16 %v1565
        %v1599 = vunpack.c.l.b16 %v1566
        %v1600 = vunpack.c.l.b16 %v1567
        %v1601 = vunpack.c.l.b16 %v1568
        %v1602 = vunpack.c.l.b16 %v1569
        %v1603 = vpack.c.b16 %v1588, %v1587
        %v1604 = vpack.c.b16 %v1590, %v1589
        %v1605 = vpack.c.b16 %v1592, %v1591
        %v1606 = vpack.c.b16 %v1594, %v1593
        %v1607 = vpack.c.b16 %v1596, %v1595
        %v1608 = vpack.c.b16 %v1598, %v1597
        %v1609 = vpack.c.b16 %v1600, %v1599
        %v1610 = vpack.c.b16 %v1602, %v1601
        %1619 = vmatprep.subr.bf16.mxu0 0
        %1620 = vmatpush1.bf16.msra.mxu0 %v1603
        %1621 = vmatprep.subr.bf16.mxu0 0
        %1622 = vmatpush1.bf16.msra.mxu0 %v1604
        %1623 = vmatprep.subr.bf16.mxu0 0
        %1624 = vmatpush1.bf16.msra.mxu0 %v1605
        %1625 = vmatprep.subr.bf16.mxu0 0
        %1626 = vmatpush1.bf16.msra.mxu0 %v1606
        %1627 = vmatprep.subr.bf16.mxu0 0
        %1628 = vmatpush1.bf16.msra.mxu0 %v1607
        %1629 = vmatprep.subr.bf16.mxu0 0
        %1630 = vmatpush1.bf16.msra.mxu0 %v1608
        %1631 = vmatprep.subr.bf16.mxu0 0
        %1632 = vmatpush1.bf16.msra.mxu0 %v1609
        %1633 = vmatprep.subr.bf16.mxu0 0
        %1634 = vmatpush1.bf16.msra.mxu0 %v1610
        %1635 = vmatprep.subr.bf16.mxu0 0
        %1636 = vmatpush1.bf16.msra.mxu0 0
        %1637 = vmatprep.subr.bf16.mxu0 0
        %1638 = vmatpush1.bf16.msra.mxu0 0
        %1639 = vmatprep.subr.bf16.mxu0 0
        %1640 = vmatpush1.bf16.msra.mxu0 0
        %1641 = vmatprep.subr.bf16.mxu0 0
        %1642 = vmatpush1.bf16.msra.mxu0 0
        %1643 = vmatprep.subr.bf16.mxu0 0
        %1644 = vmatpush1.bf16.msra.mxu0 0
        %1645 = vmatprep.subr.bf16.mxu0 0
        %1646 = vmatpush1.bf16.msra.mxu0 0
        %1647 = vmatprep.subr.bf16.mxu0 0
        %1648 = vmatpush1.bf16.msra.mxu0 0
        %1649 = vmatprep.subr.bf16.mxu0 0
        %1650 = vmatpush1.bf16.msra.mxu0 0
        %1651 = vmatprep.mubr.bf16.mxu0 0
        %1652 = vmatmul.mubr.bf16.gmra.mrb[0].mxu0 %v1570
        %v1653 = vpop.f32.mrb[0].mxu0
        %v1654 = vadd.f32 0.0, %v1653
        %v1655 = vpop.f32.mrb[0].mxu0
        %v1656 = vpop.f32.mrb[0].mxu0
        %v1657 = vadd.f32 0.0, %v1656
        %v1658 = vpop.f32.mrb[0].mxu0
        %1659 = vdwg.mxu0
        %v1660 = vadd.f32 %v533, %v1654
        %v1661 = vadd.f32 %v534, %v1657
        %v1662 = vld [vmem:[%s508] sm:$0x1]
        %v1664 = vlaneseq
        %v1665 = vshrl.u32 %v1664, 7
        %v1666 = vsub.s32 0, %v1665
        %v1667 = vrot.slane %v1662, %v1666
        %v1669 = vadd.f32 %v1660, %v1667
        %v1670 = vadd.f32 %v1661, %v1667
        %v1671 = vld [vmem:[%s513] sm:$0xf]
        %v1672 = vld [vmem:[%s513 + $0x4] sm:$0xf]
        %v1673 = vld [vmem:[%s513 + $0x8] sm:$0xf]
        %v1674 = vld [vmem:[%s513 + $0xc] sm:$0xf]
        %v1675 = vld [vmem:[%s513 + $0x10] sm:$0xf]
        %v1676 = vld [vmem:[%s513 + $0x14] sm:$0xf]
        %v1677 = vld [vmem:[%s513 + $0x18] sm:$0xf]
        %v1678 = vld [vmem:[%s513 + $0x1c] sm:$0xf]
        %v1679 = vld [vmem:[%s513 + $0x20] sm:$0xf]
        %v1680 = vld [vmem:[%s513 + $0x24] sm:$0xf]
        %v1681 = vld [vmem:[%s513 + $0x28] sm:$0xf]
        %v1682 = vld [vmem:[%s513 + $0x2c] sm:$0xf]
        %v1683 = vld [vmem:[%s513 + $0x30] sm:$0xf]
        %v1684 = vld [vmem:[%s513 + $0x34] sm:$0xf]
        %v1685 = vld [vmem:[%s513 + $0x38] sm:$0xf]
        %v1686 = vld [vmem:[%s513 + $0x3c] sm:$0xf]
        %v1687 = vpack.c.bf16 %v1670, %v1669
        %v1688 = vld [vmem:[%s409] sm:$0x1]
        %v1690 = vlaneseq
        %v1691 = vshrl.u32 %v1690, 7
        %v1692 = vsub.s32 0, %v1691
        %v1693 = vrot.slane %v1688, %v1692
        %v1711 = vunpack.c.l.b16 %v1671
        %v1712 = vunpack.c.l.b16 %v1672
        %v1713 = vunpack.c.l.b16 %v1673
        %v1714 = vunpack.c.l.b16 %v1674
        %v1715 = vunpack.c.l.b16 %v1675
        %v1716 = vunpack.c.l.b16 %v1676
        %v1717 = vunpack.c.l.b16 %v1677
        %v1718 = vunpack.c.l.b16 %v1678
        %v1719 = vunpack.c.l.b16 %v1679
        %v1720 = vunpack.c.l.b16 %v1680
        %v1721 = vunpack.c.l.b16 %v1681
        %v1722 = vunpack.c.l.b16 %v1682
        %v1723 = vunpack.c.l.b16 %v1683
        %v1724 = vunpack.c.l.b16 %v1684
        %v1725 = vunpack.c.l.b16 %v1685
        %v1726 = vunpack.c.l.b16 %v1686
        %v1727 = vpack.c.b16 %v1712, %v1711
        %v1728 = vpack.c.b16 %v1714, %v1713
        %v1729 = vpack.c.b16 %v1716, %v1715
        %v1730 = vpack.c.b16 %v1718, %v1717
        %v1731 = vpack.c.b16 %v1720, %v1719
        %v1732 = vpack.c.b16 %v1722, %v1721
        %v1733 = vpack.c.b16 %v1724, %v1723
        %v1734 = vpack.c.b16 %v1726, %v1725
        %1743 = vmatprep.subr.bf16.mxu0 0
        %1744 = vmatpush1.bf16.msra.mxu0 %v1727
        %1745 = vmatprep.subr.bf16.mxu0 0
        %1746 = vmatpush1.bf16.msra.mxu0 %v1728
        %1747 = vmatprep.subr.bf16.mxu0 0
        %1748 = vmatpush1.bf16.msra.mxu0 %v1729
        %1749 = vmatprep.subr.bf16.mxu0 0
        %1750 = vmatpush1.bf16.msra.mxu0 %v1730
        %1751 = vmatprep.subr.bf16.mxu0 0
        %1752 = vmatpush1.bf16.msra.mxu0 %v1731
        %1753 = vmatprep.subr.bf16.mxu0 0
        %1754 = vmatpush1.bf16.msra.mxu0 %v1732
        %1755 = vmatprep.subr.bf16.mxu0 0
        %1756 = vmatpush1.bf16.msra.mxu0 %v1733
        %1757 = vmatprep.subr.bf16.mxu0 0
        %1758 = vmatpush1.bf16.msra.mxu0 %v1734
        %1759 = vmatprep.subr.bf16.mxu0 0
        %1760 = vmatpush1.bf16.msra.mxu0 0
        %1761 = vmatprep.subr.bf16.mxu0 0
        %1762 = vmatpush1.bf16.msra.mxu0 0
        %1763 = vmatprep.subr.bf16.mxu0 0
        %1764 = vmatpush1.bf16.msra.mxu0 0
        %1765 = vmatprep.subr.bf16.mxu0 0
        %1766 = vmatpush1.bf16.msra.mxu0 0
        %1767 = vmatprep.subr.bf16.mxu0 0
        %1768 = vmatpush1.bf16.msra.mxu0 0
        %1769 = vmatprep.subr.bf16.mxu0 0
        %1770 = vmatpush1.bf16.msra.mxu0 0
        %1771 = vmatprep.subr.bf16.mxu0 0
        %1772 = vmatpush1.bf16.msra.mxu0 0
        %1773 = vmatprep.subr.bf16.mxu0 0
        %1774 = vmatpush1.bf16.msra.mxu0 0
        %1775 = vmatprep.mubr.bf16.mxu0 0
        %1776 = vmatmul.mubr.bf16.gmra.mrb[0].mxu0 %v1687
        %v1777 = vpop.f32.mrb[0].mxu0
        %v1778 = vadd.f32 %v1693, %v1777
        %v1779 = vpop.f32.mrb[0].mxu0
        %v1780 = vpop.f32.mrb[0].mxu0
        %v1781 = vadd.f32 %v1693, %v1780
        %v1782 = vpop.f32.mrb[0].mxu0
        %1783 = vdwg.mxu0
        %v1784 = vmax.f32 %v1778, 0.0
        %v1785 = vmax.f32 %v1781, 0.0
        %v1786 = vld [vmem:[%s518] sm:$0xf]
        %v1787 = vld [vmem:[%s518 + $0x4] sm:$0xf]
        %v1788 = vld [vmem:[%s518 + $0x8] sm:$0xf]
        %v1789 = vld [vmem:[%s518 + $0xc] sm:$0xf]
        %v1790 = vld [vmem:[%s518 + $0x10] sm:$0xf]
        %v1791 = vld [vmem:[%s518 + $0x14] sm:$0xf]
        %v1792 = vld [vmem:[%s518 + $0x18] sm:$0xf]
        %v1793 = vld [vmem:[%s518 + $0x1c] sm:$0xf]
        %v1794 = vld [vmem:[%s518 + $0x20] sm:$0xf]
        %v1795 = vld [vmem:[%s518 + $0x24] sm:$0xf]
        %v1796 = vld [vmem:[%s518 + $0x28] sm:$0xf]
        %v1797 = vld [vmem:[%s518 + $0x2c] sm:$0xf]
        %v1798 = vld [vmem:[%s518 + $0x30] sm:$0xf]
        %v1799 = vld [vmem:[%s518 + $0x34] sm:$0xf]
        %v1800 = vld [vmem:[%s518 + $0x38] sm:$0xf]
        %v1801 = vld [vmem:[%s518 + $0x3c] sm:$0xf]
        %v1802 = vpack.c.bf16 %v1785, %v1784
        %v1819 = vunpack.c.l.b16 %v1786
        %v1820 = vunpack.c.l.b16 %v1787
        %v1821 = vunpack.c.l.b16 %v1788
        %v1822 = vunpack.c.l.b16 %v1789
        %v1823 = vunpack.c.l.b16 %v1790
        %v1824 = vunpack.c.l.b16 %v1791
        %v1825 = vunpack.c.l.b16 %v1792
        %v1826 = vunpack.c.l.b16 %v1793
        %v1827 = vunpack.c.l.b16 %v1794
        %v1828 = vunpack.c.l.b16 %v1795
        %v1829 = vunpack.c.l.b16 %v1796
        %v1830 = vunpack.c.l.b16 %v1797
        %v1831 = vunpack.c.l.b16 %v1798
        %v1832 = vunpack.c.l.b16 %v1799
        %v1833 = vunpack.c.l.b16 %v1800
        %v1834 = vunpack.c.l.b16 %v1801
        %v1835 = vpack.c.b16 %v1820, %v1819
        %v1836 = vpack.c.b16 %v1822, %v1821
        %v1837 = vpack.c.b16 %v1824, %v1823
        %v1838 = vpack.c.b16 %v1826, %v1825
        %v1839 = vpack.c.b16 %v1828, %v1827
        %v1840 = vpack.c.b16 %v1830, %v1829
        %v1841 = vpack.c.b16 %v1832, %v1831
        %v1842 = vpack.c.b16 %v1834, %v1833
        %1851 = vmatprep.subr.bf16.mxu0 0
        %1852 = vmatpush1.bf16.msra.mxu0 %v1835
        %1853 = vmatprep.subr.bf16.mxu0 0
        %1854 = vmatpush1.bf16.msra.mxu0 %v1836
        %1855 = vmatprep.subr.bf16.mxu0 0
        %1856 = vmatpush1.bf16.msra.mxu0 %v1837
        %1857 = vmatprep.subr.bf16.mxu0 0
        %1858 = vmatpush1.bf16.msra.mxu0 %v1838
        %1859 = vmatprep.subr.bf16.mxu0 0
        %1860 = vmatpush1.bf16.msra.mxu0 %v1839
        %1861 = vmatprep.subr.bf16.mxu0 0
        %1862 = vmatpush1.bf16.msra.mxu0 %v1840
        %1863 = vmatprep.subr.bf16.mxu0 0
        %1864 = vmatpush1.bf16.msra.mxu0 %v1841
        %1865 = vmatprep.subr.bf16.mxu0 0
        %1866 = vmatpush1.bf16.msra.mxu0 %v1842
        %1867 = vmatprep.subr.bf16.mxu0 0
        %1868 = vmatpush1.bf16.msra.mxu0 0
        %1869 = vmatprep.subr.bf16.mxu0 0
        %1870 = vmatpush1.bf16.msra.mxu0 0
        %1871 = vmatprep.subr.bf16.mxu0 0
        %1872 = vmatpush1.bf16.msra.mxu0 0
        %1873 = vmatprep.subr.bf16.mxu0 0
        %1874 = vmatpush1.bf16.msra.mxu0 0
        %1875 = vmatprep.subr.bf16.mxu0 0
        %1876 = vmatpush1.bf16.msra.mxu0 0
        %1877 = vmatprep.subr.bf16.mxu0 0
        %1878 = vmatpush1.bf16.msra.mxu0 0
        %1879 = vmatprep.subr.bf16.mxu0 0
        %1880 = vmatpush1.bf16.msra.mxu0 0
        %1881 = vmatprep.subr.bf16.mxu0 0
        %1882 = vmatpush1.bf16.msra.mxu0 0
        %1883 = vmatprep.mubr.bf16.mxu0 0
        %1884 = vmatmul.mubr.bf16.gmra.mrb[0].mxu0 %v1802
        %v1885 = vpop.f32.mrb[0].mxu0
        %v1886 = vadd.f32 0.0, %v1885
        %v1887 = vpop.f32.mrb[0].mxu0
        %v1888 = vpop.f32.mrb[0].mxu0
        %v1889 = vadd.f32 0.0, %v1888
        %v1890 = vpop.f32.mrb[0].mxu0
        %1891 = vdwg.mxu0
        %v1892 = vadd.f32 %v1669, %v1886
        %v1893 = vadd.f32 %v1670, %v1889
        %v1894 = vld [vmem:[%s417] sm:$0x1]
        %v1896 = vlaneseq
        %v1897 = vshrl.u32 %v1896, 7
        %v1898 = vsub.s32 0, %v1897
        %v1899 = vrot.slane %v1894, %v1898
        %v1901 = vadd.f32 %v1892, %v1899
        %v1902 = vadd.f32 %v1893, %v1899
        %1903 = vst [vmem:[#allocation2] sm:$0xff] %v1901
        %1904 = vst [vmem:[#allocation2 + $0x8] sm:$0xff] %v1902
        %p1905 = scmp.eq.s32.totalorder %s31, 5
        // Predicated region
        $region69: #{generator_forward.6} parent=55 // pred_check
          %p1906 = pneg %p1905
        $region70: #{generator_forward.6} parent=55 // pred_check_branch
          %1908 = sbr.rel (%p1906) target = $region72
        $region71: #{generator_forward.6} parent=55 // pred_region
          %1909 = vst [vmem:[%s523] sm:$0xff] %v1901
          %1910 = vst [vmem:[%s523 + $0x8] sm:$0xff] %v1902
        $region72: #{generator_forward.6} parent=55 // pred_fallthru
          _
        %p1911 = scmp.lt.s32.totalorder %s30, 1
        %s1912 = scalar_select %p1911, %s30, 1
        %s1913 = smul.addr %s1912, 2
        %s1914 = smul.addr %s1913, 8
        %s1915 = scalar_lea.vmem %s9, %s1914
        // Predicated region
        $region73: #{generator_forward.6} parent=55 // pred_check
          %p1916 = pneg %p290
        $region74: #{generator_forward.6} parent=55 // pred_check_branch
          %1918 = sbr.rel (%p1916) target = $region76
        $region75: #{generator_forward.6} parent=55 // pred_region
          _
        $region76: #{generator_forward.6} parent=55 // pred_fallthru
          _
      $region56: #{generator_forward.6} parent=5 // pred_fallthru
        _
      %p1919 = scmp.le.s32.totalorder 2, %s21
      // Predicated region
      $region77: #{generator_forward.6} parent=5 // pred_check
        %p1920 = pneg %p1919
      $region78: #{generator_forward.6} parent=5 // pred_check_branch
        %1922 = sbr.rel (%p1920) target = $region80
      $region79: #{generator_forward.6} parent=5 // pred_region
        %s1923 = ssub.s32 %s21, 2
        // Predicated region
        $region81: #{generator_forward.6} parent=79 // pred_check
          %p1924 = pneg %p296
        $region82: #{generator_forward.6} parent=79 // pred_check_branch
          %1926 = sbr.rel (%p1924) target = $region84
        $region83: #{generator_forward.6} parent=79 // pred_region
          %p1927 = scmp.lt.s32.totalorder %s32, 1
          %s1928 = scalar_select %p1927, %s32, 1
          %s1929 = smul.addr %s1928, 2
          %s1930 = smul.addr %s1929, 8
          %s1931 = scalar_lea.vmem %s9, %s1930
        $region84: #{generator_forward.6} parent=79 // pred_fallthru
          _
      $region80: #{generator_forward.6} parent=5 // pred_fallthru
        _
    $region6: #{generator_forward.6} parent=1 // loop_footer
      %s25 = sadd.s32 1, %s21
    $region7: #{generator_forward.6} parent=1 // loop_footer_branch
      %20 = sbr.rel target = $region3
    $region8: #{generator_forward.6} parent=1 // loop_exit
      _
    %1932 = vsyncpa [#allocation4], 1
    %s1933 = scalar_lea.sflag [#allocation4], 1
    %1934 = vsyncpa %s1933, 1
    %1935 = vsyncpa [#allocation6], 1
    %s1936 = scalar_lea.sflag [#allocation6], 1
    %1937 = vsyncpa %s1936, 1

// kernel: generator_forward.5
$region0: #{generator_forward.5}
  #allocation0 [shape = 'u32[]', space=smem, size = 0x4, offset = 0x4, fixed_abs, tag = 'smem constant byte address 0x4 - core index']
  #allocation1 [shape = 'u32[144,128]{1,0:T(1,128)}', space=vmem, size = 0x12000, scoped, tag = 'internal scratch']
  %s0 = inlined_call_operand.vmem [shape: f32[2,17,256], index: 0, kind: input, shape index: {}]
  %s1 = inlined_call_operand.vmem [shape: f32[1,512], index: 1, kind: input, shape index: {}]
  %s2 = inlined_call_operand.vmem [shape: f32[16,128], index: 2, kind: input, shape index: {}]
  %s3 = inlined_call_operand.vmem [shape: bf16[512,128], index: 3, kind: input, shape index: {}]
  %s4 = inlined_call_operand.vmem [shape: f32[1,128], index: 4, kind: input, shape index: {}]
  %s5 = inlined_call_operand.vmem [shape: bf16[128,128], index: 5, kind: input, shape index: {}]
  %s6 = inlined_call_operand.vmem [shape: f32[1,128], index: 6, kind: input, shape index: {}]
  %s7 = inlined_call_operand.vmem [shape: bf16[128,128], index: 7, kind: input, shape index: {}]
  %s8 = inlined_call_operand.vmem [shape: f32[1,128], index: 8, kind: input, shape index: {}]
  %s9 = inlined_call_operand.vmem [shape: bf16[128,128], index: 9, kind: input, shape index: {}]
  %s10 = inlined_call_operand.vmem [shape: f32[1,128], index: 10, kind: input, shape index: {}]
  %s11 = inlined_call_operand.vmem [shape: bf16[128,128], index: 11, kind: input, shape index: {}]
  %s12 = inlined_call_operand.vmem [shape: bf16[128,128], index: 12, kind: input, shape index: {}]
  %s13 = inlined_call_operand.vmem [shape: f32[1,128], index: 13, kind: input, shape index: {}]
  %s14 = inlined_call_operand.vmem [shape: bf16[128,128], index: 14, kind: input, shape index: {}]
  %s15 = inlined_call_operand.vmem [shape: f32[1,128], index: 15, kind: input, shape index: {}]
  %s16 = inlined_call_operand.vmem [shape: bf16[128,128], index: 16, kind: input, shape index: {}]
  %s17 = inlined_call_operand.vmem [shape: f32[1,128], index: 17, kind: input, shape index: {}]
  %s18 = inlined_call_operand.hbm [shape: bf16[128,128], index: 18, kind: input, shape index: {}]
  %s19 = inlined_call_operand.vmem [shape: f32[1,128], index: 19, kind: input, shape index: {}]
  %s20 = inlined_call_operand.vmem [shape: f32[2,16,128], index: 20, kind: output, shape index: {}]
  %s21 = sld [smem:[#allocation0]]
  $region117: #{generator_forward.5} parent=0
    _
  %s23 = ssub.s32 1, %s21
  %s24 = scalar_select 0, %s23, %s21
  $region1: #{generator_forward.5} parent=0
    #allocation2 [shape = 'u8[32768]{0}', space=vmem, size = 0x8000, scoped, tag = 'input window, operand 18, single buffered']
    #allocation3 [shape = 's32[2]{0}', space=sflag, size = 0x8, scoped, tag = 'scoped memory for generator_forward.5']
    %25 = vsyncpa [#allocation3], 0
    loop: start=0, step=1, limit=4
    $region2: #{generator_forward.5} parent=1 // loop_pre_header
      _
    $region3: #{generator_forward.5} parent=1 // loop_header
      %s27 = sphi 0, %s31
      %p28 = scmp.ge.s32.totalorder %s27, 4
      %s37 = sphi 0, %s39
      %s40 = sphi 0, %s37
      %s41 = sphi 0, %s40
      %s57 = sphi 0, %s41
      %s61 = sphi 0, %s61
      %s63 = sphi 0, %s61
      %s64 = sphi 0, %s63
      %s78 = sphi 0, %s64
      %s82 = sphi 0, %s82
      %s84 = sphi 0, %s82
      %s85 = sphi 0, %s84
      %s99 = sphi 0, %s85
      %s103 = sphi 0, %s103
      %s105 = sphi 0, %s103
      %s106 = sphi 0, %s105
      %s120 = sphi 0, %s106
      %s124 = sphi 0, %s124
      %s126 = sphi 0, %s124
      %s127 = sphi 0, %s126
      %s141 = sphi 0, %s127
      %s145 = sphi 0, %s145
      %s147 = sphi 0, %s145
      %s148 = sphi 0, %s147
      %s162 = sphi 0, %s148
      %s166 = sphi 0, %s166
      %s168 = sphi 0, %s166
      %s169 = sphi 0, %s168
      %s183 = sphi 0, %s169
      %s187 = sphi 0, %s187
      %s189 = sphi 0, %s187
      %s190 = sphi 0, %s189
      %s204 = sphi 0, %s190
      %s208 = sphi 0, %s208
      %s210 = sphi 0, %s208
      %s211 = sphi 0, %s210
      %s225 = sphi 0, %s211
      %s229 = sphi 0, %s229
      %s231 = sphi 0, %s229
      %s232 = sphi 0, %s231
      %s246 = sphi 0, %s232
      %s250 = sphi 0, %s250
      %s252 = sphi 0, %s250
      %s253 = sphi 0, %s252
      %s267 = sphi 0, %s253
      %s271 = sphi 0, %s271
      %s273 = sphi 0, %s271
      %s274 = sphi 0, %s273
      %s288 = sphi 0, %s274
      %s292 = sphi 0, %s292
      %s294 = sphi 0, %s292
      %s295 = sphi 0, %s294
      %s309 = sphi 0, %s295
      %s313 = sphi 0, %s313
      %s315 = sphi 0, %s313
      %s316 = sphi 0, %s315
      %s330 = sphi 0, %s316
      %s334 = sphi 0, %s334
      %s336 = sphi 0, %s334
      %s337 = sphi 0, %s336
      %s351 = sphi 0, %s337
      %s355 = sphi 0, %s355
      %s357 = sphi 0, %s355
      %s358 = sphi 0, %s357
      %s372 = sphi 0, %s358
      %s376 = sphi 0, %s376
      %s378 = sphi 0, %s376
      %s379 = sphi 0, %s378
      %s393 = sphi 0, %s379
      %s397 = sphi 0, %s397
      %s399 = sphi 0, %s397
      %s400 = sphi 0, %s399
      %s414 = sphi 0, %s400
      %s418 = sphi 0, %s418
      %s420 = sphi 0, %s418
      %s421 = sphi 0, %s420
      %s435 = sphi 0, %s421
      %s439 = sphi 0, %s439
      %s441 = sphi 0, %s439
      %s442 = sphi 0, %s441
      %s456 = sphi 0, %s442
      %s462 = sphi 0, %s464
      %s465 = sphi 0, %s462
      %s466 = sphi 0, %s465
      %s482 = sphi 0, %s466
    $region4: #{generator_forward.5} parent=1 // loop_header_branch
      %30 = sbr.rel (%p28) target = $region8
    $region5: #{generator_forward.5} parent=1 // loop_body
      %s32 = ssub.s32 %s27, 1
      %s33 = ssub.s32 %s27, 2
      %s34 = sadd.s32 %s27, 1
      %s35 = ssub.s32 %s27, %s34
      %p36 = scmp.eq.s32.totalorder %s35, 0
      %s38 = sadd.s32 %s37, 1
      %s39 = scalar_select %p36, %s37, %s38
      %p42 = pneg %p36
      %p43 = scmp.eq.s32.totalorder %s27, 1
      %p44 = por %p42, %p43
      %p45 = scmp.ne.s32.totalorder %s37, %s40
      %p46 = scmp.eq.s32.totalorder %s27, 0
      %p47 = por %p45, %p46
      %p48 = scmp.ne.s32.totalorder %s37, %s40
      %p49 = scmp.eq.s32.totalorder %s32, 1
      %p50 = por %p48, %p49
      %p51 = scmp.ne.s32.totalorder %s40, %s41
      %p52 = scmp.eq.s32.totalorder %s32, 0
      %p53 = por %p51, %p52
      %p54 = scmp.ne.s32.totalorder %s40, %s41
      %p55 = scmp.eq.s32.totalorder %s33, 1
      %p56 = por %p54, %p55
      %p58 = scmp.ne.s32.totalorder %s41, %s57
      %p59 = scmp.eq.s32.totalorder %s33, 0
      %p60 = por %p58, %p59
      %s62 = sadd.s32 %s61, 1
      %p65 = scmp.eq.s32.totalorder %s27, 1
      %p66 = scmp.ne.s32.totalorder %s61, %s63
      %p67 = scmp.eq.s32.totalorder %s27, 0
      %p68 = por %p66, %p67
      %p69 = scmp.ne.s32.totalorder %s61, %s63
      %p70 = scmp.eq.s32.totalorder %s32, 1
      %p71 = por %p69, %p70
      %p72 = scmp.ne.s32.totalorder %s63, %s64
      %p73 = scmp.eq.s32.totalorder %s32, 0
      %p74 = por %p72, %p73
      %p75 = scmp.ne.s32.totalorder %s63, %s64
      %p76 = scmp.eq.s32.totalorder %s33, 1
      %p77 = por %p75, %p76
      %p79 = scmp.ne.s32.totalorder %s64, %s78
      %p80 = scmp.eq.s32.totalorder %s33, 0
      %p81 = por %p79, %p80
      %s83 = sadd.s32 %s82, 1
      %p86 = scmp.eq.s32.totalorder %s27, 1
      %p87 = scmp.ne.s32.totalorder %s82, %s84
      %p88 = scmp.eq.s32.totalorder %s27, 0
      %p89 = por %p87, %p88
      %p90 = scmp.ne.s32.totalorder %s82, %s84
      %p91 = scmp.eq.s32.totalorder %s32, 1
      %p92 = por %p90, %p91
      %p93 = scmp.ne.s32.totalorder %s84, %s85
      %p94 = scmp.eq.s32.totalorder %s32, 0
      %p95 = por %p93, %p94
      %p96 = scmp.ne.s32.totalorder %s84, %s85
      %p97 = scmp.eq.s32.totalorder %s33, 1
      %p98 = por %p96, %p97
      %p100 = scmp.ne.s32.totalorder %s85, %s99
      %p101 = scmp.eq.s32.totalorder %s33, 0
      %p102 = por %p100, %p101
      %s104 = sadd.s32 %s103, 1
      %p107 = scmp.eq.s32.totalorder %s27, 1
      %p108 = scmp.ne.s32.totalorder %s103, %s105
      %p109 = scmp.eq.s32.totalorder %s27, 0
      %p110 = por %p108, %p109
      %p111 = scmp.ne.s32.totalorder %s103, %s105
      %p112 = scmp.eq.s32.totalorder %s32, 1
      %p113 = por %p111, %p112
      %p114 = scmp.ne.s32.totalorder %s105, %s106
      %p115 = scmp.eq.s32.totalorder %s32, 0
      %p116 = por %p114, %p115
      %p117 = scmp.ne.s32.totalorder %s105, %s106
      %p118 = scmp.eq.s32.totalorder %s33, 1
      %p119 = por %p117, %p118
      %p121 = scmp.ne.s32.totalorder %s106, %s120
      %p122 = scmp.eq.s32.totalorder %s33, 0
      %p123 = por %p121, %p122
      %s125 = sadd.s32 %s124, 1
      %p128 = scmp.eq.s32.totalorder %s27, 1
      %p129 = scmp.ne.s32.totalorder %s124, %s126
      %p130 = scmp.eq.s32.totalorder %s27, 0
      %p131 = por %p129, %p130
      %p132 = scmp.ne.s32.totalorder %s124, %s126
      %p133 = scmp.eq.s32.totalorder %s32, 1
      %p134 = por %p132, %p133
      %p135 = scmp.ne.s32.totalorder %s126, %s127
      %p136 = scmp.eq.s32.totalorder %s32, 0
      %p137 = por %p135, %p136
      %p138 = scmp.ne.s32.totalorder %s126, %s127
      %p139 = scmp.eq.s32.totalorder %s33, 1
      %p140 = por %p138, %p139
      %p142 = scmp.ne.s32.totalorder %s127, %s141
      %p143 = scmp.eq.s32.totalorder %s33, 0
      %p144 = por %p142, %p143
      %s146 = sadd.s32 %s145, 1
      %p149 = scmp.eq.s32.totalorder %s27, 1
      %p150 = scmp.ne.s32.totalorder %s145, %s147
      %p151 = scmp.eq.s32.totalorder %s27, 0
      %p152 = por %p150, %p151
      %p153 = scmp.ne.s32.totalorder %s145, %s147
      %p154 = scmp.eq.s32.totalorder %s32, 1
      %p155 = por %p153, %p154
      %p156 = scmp.ne.s32.totalorder %s147, %s148
      %p157 = scmp.eq.s32.totalorder %s32, 0
      %p158 = por %p156, %p157
      %p159 = scmp.ne.s32.totalorder %s147, %s148
      %p160 = scmp.eq.s32.totalorder %s33, 1
      %p161 = por %p159, %p160
      %p163 = scmp.ne.s32.totalorder %s148, %s162
      %p164 = scmp.eq.s32.totalorder %s33, 0
      %p165 = por %p163, %p164
      %s167 = sadd.s32 %s166, 1
      %p170 = scmp.eq.s32.totalorder %s27, 1
      %p171 = scmp.ne.s32.totalorder %s166, %s168
      %p172 = scmp.eq.s32.totalorder %s27, 0
      %p173 = por %p171, %p172
      %p174 = scmp.ne.s32.totalorder %s166, %s168
      %p175 = scmp.eq.s32.totalorder %s32, 1
      %p176 = por %p174, %p175
      %p177 = scmp.ne.s32.totalorder %s168, %s169
      %p178 = scmp.eq.s32.totalorder %s32, 0
      %p179 = por %p177, %p178
      %p180 = scmp.ne.s32.totalorder %s168, %s169
      %p181 = scmp.eq.s32.totalorder %s33, 1
      %p182 = por %p180, %p181
      %p184 = scmp.ne.s32.totalorder %s169, %s183
      %p185 = scmp.eq.s32.totalorder %s33, 0
      %p186 = por %p184, %p185
      %s188 = sadd.s32 %s187, 1
      %p191 = scmp.eq.s32.totalorder %s27, 1
      %p192 = scmp.ne.s32.totalorder %s187, %s189
      %p193 = scmp.eq.s32.totalorder %s27, 0
      %p194 = por %p192, %p193
      %p195 = scmp.ne.s32.totalorder %s187, %s189
      %p196 = scmp.eq.s32.totalorder %s32, 1
      %p197 = por %p195, %p196
      %p198 = scmp.ne.s32.totalorder %s189, %s190
      %p199 = scmp.eq.s32.totalorder %s32, 0
      %p200 = por %p198, %p199
      %p201 = scmp.ne.s32.totalorder %s189, %s190
      %p202 = scmp.eq.s32.totalorder %s33, 1
      %p203 = por %p201, %p202
      %p205 = scmp.ne.s32.totalorder %s190, %s204
      %p206 = scmp.eq.s32.totalorder %s33, 0
      %p207 = por %p205, %p206
      %s209 = sadd.s32 %s208, 1
      %p212 = scmp.eq.s32.totalorder %s27, 1
      %p213 = scmp.ne.s32.totalorder %s208, %s210
      %p214 = scmp.eq.s32.totalorder %s27, 0
      %p215 = por %p213, %p214
      %p216 = scmp.ne.s32.totalorder %s208, %s210
      %p217 = scmp.eq.s32.totalorder %s32, 1
      %p218 = por %p216, %p217
      %p219 = scmp.ne.s32.totalorder %s210, %s211
      %p220 = scmp.eq.s32.totalorder %s32, 0
      %p221 = por %p219, %p220
      %p222 = scmp.ne.s32.totalorder %s210, %s211
      %p223 = scmp.eq.s32.totalorder %s33, 1
      %p224 = por %p222, %p223
      %p226 = scmp.ne.s32.totalorder %s211, %s225
      %p227 = scmp.eq.s32.totalorder %s33, 0
      %p228 = por %p226, %p227
      %s230 = sadd.s32 %s229, 1
      %p233 = scmp.eq.s32.totalorder %s27, 1
      %p234 = scmp.ne.s32.totalorder %s229, %s231
      %p235 = scmp.eq.s32.totalorder %s27, 0
      %p236 = por %p234, %p235
      %p237 = scmp.ne.s32.totalorder %s229, %s231
      %p238 = scmp.eq.s32.totalorder %s32, 1
      %p239 = por %p237, %p238
      %p240 = scmp.ne.s32.totalorder %s231, %s232
      %p241 = scmp.eq.s32.totalorder %s32, 0
      %p242 = por %p240, %p241
      %p243 = scmp.ne.s32.totalorder %s231, %s232
      %p244 = scmp.eq.s32.totalorder %s33, 1
      %p245 = por %p243, %p244
      %p247 = scmp.ne.s32.totalorder %s232, %s246
      %p248 = scmp.eq.s32.totalorder %s33, 0
      %p249 = por %p247, %p248
      %s251 = sadd.s32 %s250, 1
      %p254 = scmp.eq.s32.totalorder %s27, 1
      %p255 = scmp.ne.s32.totalorder %s250, %s252
      %p256 = scmp.eq.s32.totalorder %s27, 0
      %p257 = por %p255, %p256
      %p258 = scmp.ne.s32.totalorder %s250, %s252
      %p259 = scmp.eq.s32.totalorder %s32, 1
      %p260 = por %p258, %p259
      %p261 = scmp.ne.s32.totalorder %s252, %s253
      %p262 = scmp.eq.s32.totalorder %s32, 0
      %p263 = por %p261, %p262
      %p264 = scmp.ne.s32.totalorder %s252, %s253
      %p265 = scmp.eq.s32.totalorder %s33, 1
      %p266 = por %p264, %p265
      %p268 = scmp.ne.s32.totalorder %s253, %s267
      %p269 = scmp.eq.s32.totalorder %s33, 0
      %p270 = por %p268, %p269
      %s272 = sadd.s32 %s271, 1
      %p275 = scmp.eq.s32.totalorder %s27, 1
      %p276 = scmp.ne.s32.totalorder %s271, %s273
      %p277 = scmp.eq.s32.totalorder %s27, 0
      %p278 = por %p276, %p277
      %p279 = scmp.ne.s32.totalorder %s271, %s273
      %p280 = scmp.eq.s32.totalorder %s32, 1
      %p281 = por %p279, %p280
      %p282 = scmp.ne.s32.totalorder %s273, %s274
      %p283 = scmp.eq.s32.totalorder %s32, 0
      %p284 = por %p282, %p283
      %p285 = scmp.ne.s32.totalorder %s273, %s274
      %p286 = scmp.eq.s32.totalorder %s33, 1
      %p287 = por %p285, %p286
      %p289 = scmp.ne.s32.totalorder %s274, %s288
      %p290 = scmp.eq.s32.totalorder %s33, 0
      %p291 = por %p289, %p290
      %s293 = sadd.s32 %s292, 1
      %p296 = scmp.eq.s32.totalorder %s27, 1
      %p297 = scmp.ne.s32.totalorder %s292, %s294
      %p298 = scmp.eq.s32.totalorder %s27, 0
      %p299 = por %p297, %p298
      %p300 = scmp.ne.s32.totalorder %s292, %s294
      %p301 = scmp.eq.s32.totalorder %s32, 1
      %p302 = por %p300, %p301
      %p303 = scmp.ne.s32.totalorder %s294, %s295
      %p304 = scmp.eq.s32.totalorder %s32, 0
      %p305 = por %p303, %p304
      %p306 = scmp.ne.s32.totalorder %s294, %s295
      %p307 = scmp.eq.s32.totalorder %s33, 1
      %p308 = por %p306, %p307
      %p310 = scmp.ne.s32.totalorder %s295, %s309
      %p311 = scmp.eq.s32.totalorder %s33, 0
      %p312 = por %p310, %p311
      %s314 = sadd.s32 %s313, 1
      %p317 = scmp.eq.s32.totalorder %s27, 1
      %p318 = scmp.ne.s32.totalorder %s313, %s315
      %p319 = scmp.eq.s32.totalorder %s27, 0
      %p320 = por %p318, %p319
      %p321 = scmp.ne.s32.totalorder %s313, %s315
      %p322 = scmp.eq.s32.totalorder %s32, 1
      %p323 = por %p321, %p322
      %p324 = scmp.ne.s32.totalorder %s315, %s316
      %p325 = scmp.eq.s32.totalorder %s32, 0
      %p326 = por %p324, %p325
      %p327 = scmp.ne.s32.totalorder %s315, %s316
      %p328 = scmp.eq.s32.totalorder %s33, 1
      %p329 = por %p327, %p328
      %p331 = scmp.ne.s32.totalorder %s316, %s330
      %p332 = scmp.eq.s32.totalorder %s33, 0
      %p333 = por %p331, %p332
      %s335 = sadd.s32 %s334, 1
      %p338 = scmp.eq.s32.totalorder %s27, 1
      %p339 = scmp.ne.s32.totalorder %s334, %s336
      %p340 = scmp.eq.s32.totalorder %s27, 0
      %p341 = por %p339, %p340
      %p342 = scmp.ne.s32.totalorder %s334, %s336
      %p343 = scmp.eq.s32.totalorder %s32, 1
      %p344 = por %p342, %p343
      %p345 = scmp.ne.s32.totalorder %s336, %s337
      %p346 = scmp.eq.s32.totalorder %s32, 0
      %p347 = por %p345, %p346
      %p348 = scmp.ne.s32.totalorder %s336, %s337
      %p349 = scmp.eq.s32.totalorder %s33, 1
      %p350 = por %p348, %p349
      %p352 = scmp.ne.s32.totalorder %s337, %s351
      %p353 = scmp.eq.s32.totalorder %s33, 0
      %p354 = por %p352, %p353
      %s356 = sadd.s32 %s355, 1
      %p359 = scmp.eq.s32.totalorder %s27, 1
      %p360 = scmp.ne.s32.totalorder %s355, %s357
      %p361 = scmp.eq.s32.totalorder %s27, 0
      %p362 = por %p360, %p361
      %p363 = scmp.ne.s32.totalorder %s355, %s357
      %p364 = scmp.eq.s32.totalorder %s32, 1
      %p365 = por %p363, %p364
      %p366 = scmp.ne.s32.totalorder %s357, %s358
      %p367 = scmp.eq.s32.totalorder %s32, 0
      %p368 = por %p366, %p367
      %p369 = scmp.ne.s32.totalorder %s357, %s358
      %p370 = scmp.eq.s32.totalorder %s33, 1
      %p371 = por %p369, %p370
      %p373 = scmp.ne.s32.totalorder %s358, %s372
      %p374 = scmp.eq.s32.totalorder %s33, 0
      %p375 = por %p373, %p374
      %s377 = sadd.s32 %s376, 1
      %p380 = scmp.eq.s32.totalorder %s27, 1
      %p381 = scmp.ne.s32.totalorder %s376, %s378
      %p382 = scmp.eq.s32.totalorder %s27, 0
      %p383 = por %p381, %p382
      %p384 = scmp.ne.s32.totalorder %s376, %s378
      %p385 = scmp.eq.s32.totalorder %s32, 1
      %p386 = por %p384, %p385
      %p387 = scmp.ne.s32.totalorder %s378, %s379
      %p388 = scmp.eq.s32.totalorder %s32, 0
      %p389 = por %p387, %p388
      %p390 = scmp.ne.s32.totalorder %s378, %s379
      %p391 = scmp.eq.s32.totalorder %s33, 1
      %p392 = por %p390, %p391
      %p394 = scmp.ne.s32.totalorder %s379, %s393
      %p395 = scmp.eq.s32.totalorder %s33, 0
      %p396 = por %p394, %p395
      %s398 = sadd.s32 %s397, 1
      %p401 = scmp.eq.s32.totalorder %s27, 1
      %p402 = scmp.ne.s32.totalorder %s397, %s399
      %p403 = scmp.eq.s32.totalorder %s27, 0
      %p404 = por %p402, %p403
      %p405 = scmp.ne.s32.totalorder %s397, %s399
      %p406 = scmp.eq.s32.totalorder %s32, 1
      %p407 = por %p405, %p406
      %p408 = scmp.ne.s32.totalorder %s399, %s400
      %p409 = scmp.eq.s32.totalorder %s32, 0
      %p410 = por %p408, %p409
      %p411 = scmp.ne.s32.totalorder %s399, %s400
      %p412 = scmp.eq.s32.totalorder %s33, 1
      %p413 = por %p411, %p412
      %p415 = scmp.ne.s32.totalorder %s400, %s414
      %p416 = scmp.eq.s32.totalorder %s33, 0
      %p417 = por %p415, %p416
      %s419 = sadd.s32 %s418, 1
      %p422 = scmp.eq.s32.totalorder %s27, 1
      %p423 = scmp.ne.s32.totalorder %s418, %s420
      %p424 = scmp.eq.s32.totalorder %s27, 0
      %p425 = por %p423, %p424
      %p426 = scmp.ne.s32.totalorder %s418, %s420
      %p427 = scmp.eq.s32.totalorder %s32, 1
      %p428 = por %p426, %p427
      %p429 = scmp.ne.s32.totalorder %s420, %s421
      %p430 = scmp.eq.s32.totalorder %s32, 0
      %p431 = por %p429, %p430
      %p432 = scmp.ne.s32.totalorder %s420, %s421
      %p433 = scmp.eq.s32.totalorder %s33, 1
      %p434 = por %p432, %p433
      %p436 = scmp.ne.s32.totalorder %s421, %s435
      %p437 = scmp.eq.s32.totalorder %s33, 0
      %p438 = por %p436, %p437
      %s440 = sadd.s32 %s439, 1
      %p443 = scmp.eq.s32.totalorder %s27, 1
      %p444 = scmp.ne.s32.totalorder %s439, %s441
      %p445 = scmp.eq.s32.totalorder %s27, 0
      %p446 = por %p444, %p445
      %p447 = scmp.ne.s32.totalorder %s439, %s441
      %p448 = scmp.eq.s32.totalorder %s32, 1
      %p449 = por %p447, %p448
      %p450 = scmp.ne.s32.totalorder %s441, %s442
      %p451 = scmp.eq.s32.totalorder %s32, 0
      %p452 = por %p450, %p451
      %p453 = scmp.ne.s32.totalorder %s441, %s442
      %p454 = scmp.eq.s32.totalorder %s33, 1
      %p455 = por %p453, %p454
      %p457 = scmp.ne.s32.totalorder %s442, %s456
      %p458 = scmp.eq.s32.totalorder %s33, 0
      %p459 = por %p457, %p458
      %s460 = ssub.s32 %s27, %s34
      %p461 = scmp.eq.s32.totalorder %s460, 0
      %s463 = sadd.s32 %s462, 1
      %s464 = scalar_select %p461, %s462, %s463
      %p467 = pneg %p461
      %p468 = scmp.eq.s32.totalorder %s27, 1
      %p469 = por %p467, %p468
      %p470 = scmp.ne.s32.totalorder %s462, %s465
      %p471 = scmp.eq.s32.totalorder %s27, 0
      %p472 = por %p470, %p471
      %p473 = scmp.ne.s32.totalorder %s462, %s465
      %p474 = scmp.eq.s32.totalorder %s32, 1
      %p475 = por %p473, %p474
      %p476 = scmp.ne.s32.totalorder %s465, %s466
      %p477 = scmp.eq.s32.totalorder %s32, 0
      %p478 = por %p476, %p477
      %p479 = scmp.ne.s32.totalorder %s465, %s466
      %p480 = scmp.eq.s32.totalorder %s33, 1
      %p481 = por %p479, %p480
      %p483 = scmp.ne.s32.totalorder %s466, %s482
      %p484 = scmp.eq.s32.totalorder %s33, 0
      %p485 = por %p483, %p484
      %p486 = scmp.le.s32.totalorder 1, %s27
      %p487 = scmp.lt.s32.totalorder %s27, 3
      %p488 = pnand %p486, %p487
      %p489 = pneg %p488
      // Predicated region
      $region9: #{generator_forward.5} parent=5 // pred_check
        _
      $region10: #{generator_forward.5} parent=5 // pred_check_branch
        %491 = sbr.rel (%p488) target = $region12
      $region11: #{generator_forward.5} parent=5 // pred_region
        %s492 = ssub.s32 %s27, 1
        // Predicated region
        $region13: #{generator_forward.5} parent=11 // pred_check
          %p493 = pneg %p74
        $region14: #{generator_forward.5} parent=11 // pred_check_branch
          %495 = sbr.rel (%p493) target = $region16
        $region15: #{generator_forward.5} parent=11 // pred_region
          _
        $region16: #{generator_forward.5} parent=11 // pred_fallthru
          _
        // Predicated region
        $region17: #{generator_forward.5} parent=11 // pred_check
          %p496 = pneg %p95
        $region18: #{generator_forward.5} parent=11 // pred_check_branch
          %498 = sbr.rel (%p496) target = $region20
        $region19: #{generator_forward.5} parent=11 // pred_region
          _
        $region20: #{generator_forward.5} parent=11 // pred_fallthru
          _
        // Predicated region
        $region21: #{generator_forward.5} parent=11 // pred_check
          %p499 = pneg %p116
        $region22: #{generator_forward.5} parent=11 // pred_check_branch
          %501 = sbr.rel (%p499) target = $region24
        $region23: #{generator_forward.5} parent=11 // pred_region
          _
        $region24: #{generator_forward.5} parent=11 // pred_fallthru
          _
        // Predicated region
        $region25: #{generator_forward.5} parent=11 // pred_check
          %p502 = pneg %p137
        $region26: #{generator_forward.5} parent=11 // pred_check_branch
          %504 = sbr.rel (%p502) target = $region28
        $region27: #{generator_forward.5} parent=11 // pred_region
          _
        $region28: #{generator_forward.5} parent=11 // pred_fallthru
          _
        // Predicated region
        $region29: #{generator_forward.5} parent=11 // pred_check
          %p505 = pneg %p158
        $region30: #{generator_forward.5} parent=11 // pred_check_branch
          %507 = sbr.rel (%p505) target = $region32
        $region31: #{generator_forward.5} parent=11 // pred_region
          _
        $region32: #{generator_forward.5} parent=11 // pred_fallthru
          _
        // Predicated region
        $region33: #{generator_forward.5} parent=11 // pred_check
          %p508 = pneg %p179
        $region34: #{generator_forward.5} parent=11 // pred_check_branch
          %510 = sbr.rel (%p508) target = $region36
        $region35: #{generator_forward.5} parent=11 // pred_region
          _
        $region36: #{generator_forward.5} parent=11 // pred_fallthru
          _
        // Predicated region
        $region37: #{generator_forward.5} parent=11 // pred_check
          %p511 = pneg %p200
        $region38: #{generator_forward.5} parent=11 // pred_check_branch
          %513 = sbr.rel (%p511) target = $region40
        $region39: #{generator_forward.5} parent=11 // pred_region
          _
        $region40: #{generator_forward.5} parent=11 // pred_fallthru
          _
        // Predicated region
        $region41: #{generator_forward.5} parent=11 // pred_check
          %p514 = pneg %p221
        $region42: #{generator_forward.5} parent=11 // pred_check_branch
          %516 = sbr.rel (%p514) target = $region44
        $region43: #{generator_forward.5} parent=11 // pred_region
          _
        $region44: #{generator_forward.5} parent=11 // pred_fallthru
          _
        // Predicated region
        $region45: #{generator_forward.5} parent=11 // pred_check
          %p517 = pneg %p242
        $region46: #{generator_forward.5} parent=11 // pred_check_branch
          %519 = sbr.rel (%p517) target = $region48
        $region47: #{generator_forward.5} parent=11 // pred_region
          _
        $region48: #{generator_forward.5} parent=11 // pred_fallthru
          _
        // Predicated region
        $region49: #{generator_forward.5} parent=11 // pred_check
          %p520 = pneg %p263
        $region50: #{generator_forward.5} parent=11 // pred_check_branch
          %522 = sbr.rel (%p520) target = $region52
        $region51: #{generator_forward.5} parent=11 // pred_region
          _
        $region52: #{generator_forward.5} parent=11 // pred_fallthru
          _
        // Predicated region
        $region53: #{generator_forward.5} parent=11 // pred_check
          %p523 = pneg %p284
        $region54: #{generator_forward.5} parent=11 // pred_check_branch
          %525 = sbr.rel (%p523) target = $region56
        $region55: #{generator_forward.5} parent=11 // pred_region
          _
        $region56: #{generator_forward.5} parent=11 // pred_fallthru
          _
        // Predicated region
        $region57: #{generator_forward.5} parent=11 // pred_check
          %p526 = pneg %p305
        $region58: #{generator_forward.5} parent=11 // pred_check_branch
          %528 = sbr.rel (%p526) target = $region60
        $region59: #{generator_forward.5} parent=11 // pred_region
          _
        $region60: #{generator_forward.5} parent=11 // pred_fallthru
          _
        // Predicated region
        $region61: #{generator_forward.5} parent=11 // pred_check
          %p529 = pneg %p326
        $region62: #{generator_forward.5} parent=11 // pred_check_branch
          %531 = sbr.rel (%p529) target = $region64
        $region63: #{generator_forward.5} parent=11 // pred_region
          _
        $region64: #{generator_forward.5} parent=11 // pred_fallthru
          _
        // Predicated region
        $region65: #{generator_forward.5} parent=11 // pred_check
          %p532 = pneg %p347
        $region66: #{generator_forward.5} parent=11 // pred_check_branch
          %534 = sbr.rel (%p532) target = $region68
        $region67: #{generator_forward.5} parent=11 // pred_region
          _
        $region68: #{generator_forward.5} parent=11 // pred_fallthru
          _
        // Predicated region
        $region69: #{generator_forward.5} parent=11 // pred_check
          %p535 = pneg %p368
        $region70: #{generator_forward.5} parent=11 // pred_check_branch
          %537 = sbr.rel (%p535) target = $region72
        $region71: #{generator_forward.5} parent=11 // pred_region
          _
        $region72: #{generator_forward.5} parent=11 // pred_fallthru
          _
        // Predicated region
        $region73: #{generator_forward.5} parent=11 // pred_check
          %p538 = pneg %p389
        $region74: #{generator_forward.5} parent=11 // pred_check_branch
          %540 = sbr.rel (%p538) target = $region76
        $region75: #{generator_forward.5} parent=11 // pred_region
          _
        $region76: #{generator_forward.5} parent=11 // pred_fallthru
          _
        // Predicated region
        $region77: #{generator_forward.5} parent=11 // pred_check
          %p541 = pneg %p410
        $region78: #{generator_forward.5} parent=11 // pred_check_branch
          %543 = sbr.rel (%p541) target = $region80
        $region79: #{generator_forward.5} parent=11 // pred_region
          _
        $region80: #{generator_forward.5} parent=11 // pred_fallthru
          _
        // Predicated region
        $region81: #{generator_forward.5} parent=11 // pred_check
          %p544 = pneg %p431
        $region82: #{generator_forward.5} parent=11 // pred_check_branch
          %546 = sbr.rel (%p544) target = $region84
        $region83: #{generator_forward.5} parent=11 // pred_region
          %s548 = ssub.s32 1024, 1024
          %549 = vsyncadd [#allocation3], %s548
          %s550 = sshll.u32 [#allocation2], 4
          %s551 = int_to_ptr.vmem [resolvable:$true] %s550
          %556 = dma.hbm_to_vmem [thread:$0]  %s18, 1024, %s551, [#allocation3], 64, 64, 4
        $region84: #{generator_forward.5} parent=11 // pred_fallthru
          _
        // Predicated region
        $region85: #{generator_forward.5} parent=11 // pred_check
          %p557 = pneg %p452
        $region86: #{generator_forward.5} parent=11 // pred_check_branch
          %559 = sbr.rel (%p557) target = $region88
        $region87: #{generator_forward.5} parent=11 // pred_region
          _
        $region88: #{generator_forward.5} parent=11 // pred_fallthru
          _
      $region12: #{generator_forward.5} parent=5 // pred_fallthru
        _
      %p560 = scmp.lt.s32.totalorder %s27, 2
      // Predicated region
      $region89: #{generator_forward.5} parent=5 // pred_check
        %p561 = pneg %p560
      $region90: #{generator_forward.5} parent=5 // pred_check_branch
        %563 = sbr.rel (%p561) target = $region92
      $region91: #{generator_forward.5} parent=5 // pred_region
        // Predicated region
        $region93: #{generator_forward.5} parent=91 // pred_check
          %p564 = pneg %p47
        $region94: #{generator_forward.5} parent=91 // pred_check_branch
          %566 = sbr.rel (%p564) target = $region96
        $region95: #{generator_forward.5} parent=91 // pred_region
          %p567 = scmp.lt.s32.totalorder %s27, 1
          %s568 = scalar_select %p567, %s27, 1
          %s569 = smul.addr %s568, 6
          %s570 = smul.addr %s569, 8
          %s571 = scalar_lea.vmem %s0, %s570
        $region96: #{generator_forward.5} parent=91 // pred_fallthru
          _
      $region92: #{generator_forward.5} parent=5 // pred_fallthru
        _
      %p572 = scmp.le.s32.totalorder 1, %s27
      %p573 = scmp.lt.s32.totalorder %s27, 3
      %p574 = pnand %p572, %p573
      %p575 = pneg %p574
      // Predicated region
      $region97: #{generator_forward.5} parent=5 // pred_check
        _
      $region98: #{generator_forward.5} parent=5 // pred_check_branch
        %577 = sbr.rel (%p574) target = $region100
      $region99: #{generator_forward.5} parent=5 // pred_region
        %s578 = ssub.s32 %s27, 1
        // Predicated region
        $region101: #{generator_forward.5} parent=99 // pred_check
          %p579 = pneg %p431
        $region102: #{generator_forward.5} parent=99 // pred_check_branch
          %581 = sbr.rel (%p579) target = $region104
        $region103: #{generator_forward.5} parent=99 // pred_region
          %582 = dma.done [#allocation3], 1024
        $region104: #{generator_forward.5} parent=99 // pred_fallthru
          _
        %p583 = scmp.lt.s32.totalorder %s32, 1
        %s584 = scalar_select %p583, %s32, 1
        %s585 = smul.addr %s584, 6
        %s586 = smul.addr %s585, 8
        %s587 = scalar_lea.vmem %s0, %s586
        %p588 = pneg %p53
        %p589 = pneg %p50
        %p590 = pneg %p74
        %p591 = pneg %p71
        %p592 = pneg %p95
        %p593 = pneg %p92
        %p594 = pneg %p116
        %p595 = pneg %p113
        %p596 = pneg %p137
        %p597 = pneg %p134
        %p598 = pneg %p158
        %p599 = pneg %p155
        %p600 = pneg %p179
        %p601 = pneg %p176
        %p602 = pneg %p200
        %p603 = pneg %p197
        %p604 = pneg %p221
        %p605 = pneg %p218
        %p606 = pneg %p242
        %p607 = pneg %p239
        %p608 = pneg %p263
        %p609 = pneg %p260
        %p610 = pneg %p284
        %p611 = pneg %p281
        %p612 = pneg %p305
        %p613 = pneg %p302
        %p614 = pneg %p326
        %p615 = pneg %p323
        %p616 = pneg %p347
        %p617 = pneg %p344
        %p618 = pneg %p368
        %p619 = pneg %p365
        %p620 = pneg %p389
        %p621 = pneg %p386
        %p622 = pneg %p410
        %p623 = pneg %p407
        %p624 = pneg %p431
        %p625 = pneg %p428
        %p626 = pneg %p452
        %p627 = pneg %p449
        %p628 = pneg %p478
        %p629 = pneg %p475
        %p630 = scmp.lt.s32.totalorder %s32, 1
        %s631 = scalar_select %p630, %s32, 1
        %s632 = smul.addr %s631, 2
        %s633 = smul.addr %s632, 8
        %s634 = scalar_lea.vmem %s20, %s633
        %p635 = scmp.lt.s32.totalorder %s32, 1
        %s636 = scalar_select %p635, %s32, 1
        %s637 = smul.addr %s636, 6
        %s638 = smul.addr %s637, 8
        %s639 = scalar_lea.vmem %s0, %s638
        %p640 = scmp.lt.s32.totalorder %s32, 1
        %s641 = scalar_select %p640, %s32, 1
        %s642 = smul.addr %s641, 2
        %s643 = smul.addr %s642, 8
        %s644 = scalar_lea.vmem %s20, %s643
        %v646 = vld [vmem:[%s639] sm:$0xff]
        %v647 = vld [vmem:[%s639 + $0x8] sm:$0xff]
        %v648 = vld [vmem:[%s639 + $0x10] sm:$0xff]
        %v649 = vld [vmem:[%s639 + $0x18] sm:$0xff]
        %v650 = vld [vmem:[%s639 + $0x20] sm:$0x1]
        %v651 = vld [vmem:[%s639 + $0x28] sm:$0x1]
        %vm658 = vcmask 1046528
        %v659 = vrot.slane %v646, 1
        %v660 = vrot.slane %v648, 1
        %v661 = vsel %vm658, %v659, %v660
        %v662 = vrot.slane %v647, 1
        %v663 = vrot.slane %v649, 1
        %v664 = vsel %vm658, %v662, %v663
        %v665 = vrot.slane %v650, 1
        %v666 = vsel %vm658, %v660, %v665
        %v667 = vrot.slane %v651, 1
        %v668 = vsel %vm658, %v663, %v667
        %v673 = vld [vmem:[%s1] sm:$0xf]
        %v675 = vlaneseq
        %v676 = vshrl.u32 %v675, 7
        %v677 = vsub.s32 0, %v676
        %v678 = vrot.slane %v673, %v677
        %v679 = vlaneseq
        %v680 = vshrl.u32 %v679, 7
        %v681 = vsub.s32 1, %v680
        %v682 = vrot.slane %v673, %v681
        %v683 = vlaneseq
        %v684 = vshrl.u32 %v683, 7
        %v685 = vsub.s32 2, %v684
        %v686 = vrot.slane %v673, %v685
        %v687 = vlaneseq
        %v688 = vshrl.u32 %v687, 7
        %v689 = vsub.s32 3, %v688
        %v690 = vrot.slane %v673, %v689
        %v695 = vmul.f32 %v646, %v678
        %v696 = vmul.f32 %v647, %v682
        %v697 = vmul.f32 %v661, %v686
        %v698 = vmul.f32 %v664, %v690
        %v699 = vmul.f32 %v648, %v678
        %v700 = vmul.f32 %v649, %v682
        %v701 = vmul.f32 %v666, %v686
        %v702 = vmul.f32 %v668, %v690
        %v703 = vld [vmem:[%s3] sm:$0xf]
        %v704 = vld [vmem:[%s3 + $0x4] sm:$0xf]
        %v705 = vld [vmem:[%s3 + $0x8] sm:$0xf]
        %v706 = vld [vmem:[%s3 + $0xc] sm:$0xf]
        %v707 = vld [vmem:[%s3 + $0x10] sm:$0xf]
        %v708 = vld [vmem:[%s3 + $0x14] sm:$0xf]
        %v709 = vld [vmem:[%s3 + $0x18] sm:$0xf]
        %v710 = vld [vmem:[%s3 + $0x1c] sm:$0xf]
        %v711 = vld [vmem:[%s3 + $0x20] sm:$0xf]
        %v712 = vld [vmem:[%s3 + $0x24] sm:$0xf]
        %v713 = vld [vmem:[%s3 + $0x28] sm:$0xf]
        %v714 = vld [vmem:[%s3 + $0x2c] sm:$0xf]
        %v715 = vld [vmem:[%s3 + $0x30] sm:$0xf]
        %v716 = vld [vmem:[%s3 + $0x34] sm:$0xf]
        %v717 = vld [vmem:[%s3 + $0x38] sm:$0xf]
        %v718 = vld [vmem:[%s3 + $0x3c] sm:$0xf]
        %v719 = vld [vmem:[%s3 + $0x40] sm:$0xf]
        %v720 = vld [vmem:[%s3 + $0x44] sm:$0xf]
        %v721 = vld [vmem:[%s3 + $0x48] sm:$0xf]
        %v722 = vld [vmem:[%s3 + $0x4c] sm:$0xf]
        %v723 = vld [vmem:[%s3 + $0x50] sm:$0xf]
        %v724 = vld [vmem:[%s3 + $0x54] sm:$0xf]
        %v725 = vld [vmem:[%s3 + $0x58] sm:$0xf]
        %v726 = vld [vmem:[%s3 + $0x5c] sm:$0xf]
        %v727 = vld [vmem:[%s3 + $0x60] sm:$0xf]
        %v728 = vld [vmem:[%s3 + $0x64] sm:$0xf]
        %v729 = vld [vmem:[%s3 + $0x68] sm:$0xf]
        %v730 = vld [vmem:[%s3 + $0x6c] sm:$0xf]
        %v731 = vld [vmem:[%s3 + $0x70] sm:$0xf]
        %v732 = vld [vmem:[%s3 + $0x74] sm:$0xf]
        %v733 = vld [vmem:[%s3 + $0x78] sm:$0xf]
        %v734 = vld [vmem:[%s3 + $0x7c] sm:$0xf]
        %v735 = vld [vmem:[%s3 + $0x80] sm:$0xf]
        %v736 = vld [vmem:[%s3 + $0x84] sm:$0xf]
        %v737 = vld [vmem:[%s3 + $0x88] sm:$0xf]
        %v738 = vld [vmem:[%s3 + $0x8c] sm:$0xf]
        %v739 = vld [vmem:[%s3 + $0x90] sm:$0xf]
        %v740 = vld [vmem:[%s3 + $0x94] sm:$0xf]
        %v741 = vld [vmem:[%s3 + $0x98] sm:$0xf]
        %v742 = vld [vmem:[%s3 + $0x9c] sm:$0xf]
        %v743 = vld [vmem:[%s3 + $0xa0] sm:$0xf]
        %v744 = vld [vmem:[%s3 + $0xa4] sm:$0xf]
        %v745 = vld [vmem:[%s3 + $0xa8] sm:$0xf]
        %v746 = vld [vmem:[%s3 + $0xac] sm:$0xf]
        %v747 = vld [vmem:[%s3 + $0xb0] sm:$0xf]
        %v748 = vld [vmem:[%s3 + $0xb4] sm:$0xf]
        %v749 = vld [vmem:[%s3 + $0xb8] sm:$0xf]
        %v750 = vld [vmem:[%s3 + $0xbc] sm:$0xf]
        %v751 = vld [vmem:[%s3 + $0xc0] sm:$0xf]
        %v752 = vld [vmem:[%s3 + $0xc4] sm:$0xf]
        %v753 = vld [vmem:[%s3 + $0xc8] sm:$0xf]
        %v754 = vld [vmem:[%s3 + $0xcc] sm:$0xf]
        %v755 = vld [vmem:[%s3 + $0xd0] sm:$0xf]
        %v756 = vld [vmem:[%s3 + $0xd4] sm:$0xf]
        %v757 = vld [vmem:[%s3 + $0xd8] sm:$0xf]
        %v758 = vld [vmem:[%s3 + $0xdc] sm:$0xf]
        %v759 = vld [vmem:[%s3 + $0xe0] sm:$0xf]
        %v760 = vld [vmem:[%s3 + $0xe4] sm:$0xf]
        %v761 = vld [vmem:[%s3 + $0xe8] sm:$0xf]
        %v762 = vld [vmem:[%s3 + $0xec] sm:$0xf]
        %v763 = vld [vmem:[%s3 + $0xf0] sm:$0xf]
        %v764 = vld [vmem:[%s3 + $0xf4] sm:$0xf]
        %v765 = vld [vmem:[%s3 + $0xf8] sm:$0xf]
        %v766 = vld [vmem:[%s3 + $0xfc] sm:$0xf]
        %v767 = vld [vmem:[%s4] sm:$0x1]
        %v768 = vld [vmem:[%s5] sm:$0xf]
        %v769 = vld [vmem:[%s5 + $0x4] sm:$0xf]
        %v770 = vld [vmem:[%s5 + $0x8] sm:$0xf]
        %v771 = vld [vmem:[%s5 + $0xc] sm:$0xf]
        %v772 = vld [vmem:[%s5 + $0x10] sm:$0xf]
        %v773 = vld [vmem:[%s5 + $0x14] sm:$0xf]
        %v774 = vld [vmem:[%s5 + $0x18] sm:$0xf]
        %v775 = vld [vmem:[%s5 + $0x1c] sm:$0xf]
        %v776 = vld [vmem:[%s5 + $0x20] sm:$0xf]
        %v777 = vld [vmem:[%s5 + $0x24] sm:$0xf]
        %v778 = vld [vmem:[%s5 + $0x28] sm:$0xf]
        %v779 = vld [vmem:[%s5 + $0x2c] sm:$0xf]
        %v780 = vld [vmem:[%s5 + $0x30] sm:$0xf]
        %v781 = vld [vmem:[%s5 + $0x34] sm:$0xf]
        %v782 = vld [vmem:[%s5 + $0x38] sm:$0xf]
        %v783 = vld [vmem:[%s5 + $0x3c] sm:$0xf]
        %v784 = vld [vmem:[%s6] sm:$0x1]
        %v785 = vld [vmem:[%s7] sm:$0xf]
        %v786 = vld [vmem:[%s7 + $0x4] sm:$0xf]
        %v787 = vld [vmem:[%s7 + $0x8] sm:$0xf]
        %v788 = vld [vmem:[%s7 + $0xc] sm:$0xf]
        %v789 = vld [vmem:[%s7 + $0x10] sm:$0xf]
        %v790 = vld [vmem:[%s7 + $0x14] sm:$0xf]
        %v791 = vld [vmem:[%s7 + $0x18] sm:$0xf]
        %v792 = vld [vmem:[%s7 + $0x1c] sm:$0xf]
        %v793 = vld [vmem:[%s7 + $0x20] sm:$0xf]
        %v794 = vld [vmem:[%s7 + $0x24] sm:$0xf]
        %v795 = vld [vmem:[%s7 + $0x28] sm:$0xf]
        %v796 = vld [vmem:[%s7 + $0x2c] sm:$0xf]
        %v797 = vld [vmem:[%s7 + $0x30] sm:$0xf]
        %v798 = vld [vmem:[%s7 + $0x34] sm:$0xf]
        %v799 = vld [vmem:[%s7 + $0x38] sm:$0xf]
        %v800 = vld [vmem:[%s7 + $0x3c] sm:$0xf]
        %v801 = vld [vmem:[%s8] sm:$0x1]
        %v802 = vld [vmem:[%s9] sm:$0xf]
        %v803 = vld [vmem:[%s9 + $0x4] sm:$0xf]
        %v804 = vld [vmem:[%s9 + $0x8] sm:$0xf]
        %v805 = vld [vmem:[%s9 + $0xc] sm:$0xf]
        %v806 = vld [vmem:[%s9 + $0x10] sm:$0xf]
        %v807 = vld [vmem:[%s9 + $0x14] sm:$0xf]
        %v808 = vld [vmem:[%s9 + $0x18] sm:$0xf]
        %v809 = vld [vmem:[%s9 + $0x1c] sm:$0xf]
        %v810 = vld [vmem:[%s9 + $0x20] sm:$0xf]
        %v811 = vld [vmem:[%s9 + $0x24] sm:$0xf]
        %v812 = vld [vmem:[%s9 + $0x28] sm:$0xf]
        %v813 = vld [vmem:[%s9 + $0x2c] sm:$0xf]
        %v814 = vld [vmem:[%s9 + $0x30] sm:$0xf]
        %v815 = vld [vmem:[%s9 + $0x34] sm:$0xf]
        %v816 = vld [vmem:[%s9 + $0x38] sm:$0xf]
        %v817 = vld [vmem:[%s9 + $0x3c] sm:$0xf]
        %v818 = vld [vmem:[%s10] sm:$0x1]
        %v819 = vpack.c.bf16 %v699, %v695
        %v820 = vpack.c.bf16 %v700, %v696
        %v821 = vpack.c.bf16 %v701, %v697
        %v822 = vpack.c.bf16 %v702, %v698
        %v824 = vlaneseq
        %v825 = vshrl.u32 %v824, 7
        %v826 = vsub.s32 0, %v825
        %v827 = vrot.slane %v767, %v826
        %v893 = vunpack.c.l.b16 %v703
        %v894 = vunpack.c.l.b16 %v704
        %v895 = vunpack.c.l.b16 %v705
        %v896 = vunpack.c.l.b16 %v706
        %v897 = vunpack.c.l.b16 %v707
        %v898 = vunpack.c.l.b16 %v708
        %v899 = vunpack.c.l.b16 %v709
        %v900 = vunpack.c.l.b16 %v710
        %v901 = vunpack.c.l.b16 %v711
        %v902 = vunpack.c.l.b16 %v712
        %v903 = vunpack.c.l.b16 %v713
        %v904 = vunpack.c.l.b16 %v714
        %v905 = vunpack.c.l.b16 %v715
        %v906 = vunpack.c.l.b16 %v716
        %v907 = vunpack.c.l.b16 %v717
        %v908 = vunpack.c.l.b16 %v718
        %v909 = vunpack.c.l.b16 %v719
        %v910 = vunpack.c.l.b16 %v720
        %v911 = vunpack.c.l.b16 %v721
        %v912 = vunpack.c.l.b16 %v722
        %v913 = vunpack.c.l.b16 %v723
        %v914 = vunpack.c.l.b16 %v724
        %v915 = vunpack.c.l.b16 %v725
        %v916 = vunpack.c.l.b16 %v726
        %v917 = vunpack.c.l.b16 %v727
        %v918 = vunpack.c.l.b16 %v728
        %v919 = vunpack.c.l.b16 %v729
        %v920 = vunpack.c.l.b16 %v730
        %v921 = vunpack.c.l.b16 %v731
        %v922 = vunpack.c.l.b16 %v732
        %v923 = vunpack.c.l.b16 %v733
        %v924 = vunpack.c.l.b16 %v734
        %v925 = vunpack.c.l.b16 %v735
        %v926 = vunpack.c.l.b16 %v736
        %v927 = vunpack.c.l.b16 %v737
        %v928 = vunpack.c.l.b16 %v738
        %v929 = vunpack.c.l.b16 %v739
        %v930 = vunpack.c.l.b16 %v740
        %v931 = vunpack.c.l.b16 %v741
        %v932 = vunpack.c.l.b16 %v742
        %v933 = vunpack.c.l.b16 %v743
        %v934 = vunpack.c.l.b16 %v744
        %v935 = vunpack.c.l.b16 %v745
        %v936 = vunpack.c.l.b16 %v746
        %v937 = vunpack.c.l.b16 %v747
        %v938 = vunpack.c.l.b16 %v748
        %v939 = vunpack.c.l.b16 %v749
        %v940 = vunpack.c.l.b16 %v750
        %v941 = vunpack.c.l.b16 %v751
        %v942 = vunpack.c.l.b16 %v752
        %v943 = vunpack.c.l.b16 %v753
        %v944 = vunpack.c.l.b16 %v754
        %v945 = vunpack.c.l.b16 %v755
        %v946 = vunpack.c.l.b16 %v756
        %v947 = vunpack.c.l.b16 %v757
        %v948 = vunpack.c.l.b16 %v758
        %v949 = vunpack.c.l.b16 %v759
        %v950 = vunpack.c.l.b16 %v760
        %v951 = vunpack.c.l.b16 %v761
        %v952 = vunpack.c.l.b16 %v762
        %v953 = vunpack.c.l.b16 %v763
        %v954 = vunpack.c.l.b16 %v764
        %v955 = vunpack.c.l.b16 %v765
        %v956 = vunpack.c.l.b16 %v766
        %v957 = vpack.c.b16 %v894, %v893
        %v958 = vpack.c.b16 %v896, %v895
        %v959 = vpack.c.b16 %v898, %v897
        %v960 = vpack.c.b16 %v900, %v899
        %v961 = vpack.c.b16 %v902, %v901
        %v962 = vpack.c.b16 %v904, %v903
        %v963 = vpack.c.b16 %v906, %v905
        %v964 = vpack.c.b16 %v908, %v907
        %v965 = vpack.c.b16 %v910, %v909
        %v966 = vpack.c.b16 %v912, %v911
        %v967 = vpack.c.b16 %v914, %v913
        %v968 = vpack.c.b16 %v916, %v915
        %v969 = vpack.c.b16 %v918, %v917
        %v970 = vpack.c.b16 %v920, %v919
        %v971 = vpack.c.b16 %v922, %v921
        %v972 = vpack.c.b16 %v924, %v923
        %v973 = vpack.c.b16 %v926, %v925
        %v974 = vpack.c.b16 %v928, %v927
        %v975 = vpack.c.b16 %v930, %v929
        %v976 = vpack.c.b16 %v932, %v931
        %v977 = vpack.c.b16 %v934, %v933
        %v978 = vpack.c.b16 %v936, %v935
        %v979 = vpack.c.b16 %v938, %v937
        %v980 = vpack.c.b16 %v940, %v939
        %v981 = vpack.c.b16 %v942, %v941
        %v982 = vpack.c.b16 %v944, %v943
        %v983 = vpack.c.b16 %v946, %v945
        %v984 = vpack.c.b16 %v948, %v947
        %v985 = vpack.c.b16 %v950, %v949
        %v986 = vpack.c.b16 %v952, %v951
        %v987 = vpack.c.b16 %v954, %v953
        %v988 = vpack.c.b16 %v956, %v955
        %1021 = vmatprep.subr.bf16.mxu0 0
        %1022 = vmatpush1.bf16.msra.mxu0 %v957
        %1023 = vmatprep.subr.bf16.mxu0 0
        %1024 = vmatpush1.bf16.msra.mxu0 %v958
        %1025 = vmatprep.subr.bf16.mxu0 0
        %1026 = vmatpush1.bf16.msra.mxu0 %v959
        %1027 = vmatprep.subr.bf16.mxu0 0
        %1028 = vmatpush1.bf16.msra.mxu0 %v960
        %1029 = vmatprep.subr.bf16.mxu0 0
        %1030 = vmatpush1.bf16.msra.mxu0 %v961
        %1031 = vmatprep.subr.bf16.mxu0 0
        %1032 = vmatpush1.bf16.msra.mxu0 %v962
        %1033 = vmatprep.subr.bf16.mxu0 0
        %1034 = vmatpush1.bf16.msra.mxu0 %v963
        %1035 = vmatprep.subr.bf16.mxu0 0
        %1036 = vmatpush1.bf16.msra.mxu0 %v964
        %1037 = vmatprep.subr.bf16.mxu0 0
        %1038 = vmatpush1.bf16.msra.mxu0 %v965
        %1039 = vmatprep.subr.bf16.mxu0 0
        %1040 = vmatpush1.bf16.msra.mxu0 %v966
        %1041 = vmatprep.subr.bf16.mxu0 0
        %1042 = vmatpush1.bf16.msra.mxu0 %v967
        %1043 = vmatprep.subr.bf16.mxu0 0
        %1044 = vmatpush1.bf16.msra.mxu0 %v968
        %1045 = vmatprep.subr.bf16.mxu0 0
        %1046 = vmatpush1.bf16.msra.mxu0 %v969
        %1047 = vmatprep.subr.bf16.mxu0 0
        %1048 = vmatpush1.bf16.msra.mxu0 %v970
        %1049 = vmatprep.subr.bf16.mxu0 0
        %1050 = vmatpush1.bf16.msra.mxu0 %v971
        %1051 = vmatprep.subr.bf16.mxu0 0
        %1052 = vmatpush1.bf16.msra.mxu0 %v972
        %1053 = vmatprep.mubr.bf16.mxu0 %v820
        %1054 = vmatmul.mubr.bf16.gmra.mrb[0].mxu0 %v819
        %v1055 = vpop.f32.mrb[0].mxu0
        %v1056 = vadd.f32 %v827, %v1055
        %v1057 = vpop.f32.mrb[0].mxu0
        %v1058 = vpop.f32.mrb[0].mxu0
        %v1059 = vadd.f32 %v827, %v1058
        %v1060 = vpop.f32.mrb[0].mxu0
        %1061 = vdwg.mxu0
        %1062 = vmatprep.subr.bf16.mxu0 0
        %1063 = vmatpush1.bf16.msra.mxu0 %v973
        %1064 = vmatprep.subr.bf16.mxu0 0
        %1065 = vmatpush1.bf16.msra.mxu0 %v974
        %1066 = vmatprep.subr.bf16.mxu0 0
        %1067 = vmatpush1.bf16.msra.mxu0 %v975
        %1068 = vmatprep.subr.bf16.mxu0 0
        %1069 = vmatpush1.bf16.msra.mxu0 %v976
        %1070 = vmatprep.subr.bf16.mxu0 0
        %1071 = vmatpush1.bf16.msra.mxu0 %v977
        %1072 = vmatprep.subr.bf16.mxu0 0
        %1073 = vmatpush1.bf16.msra.mxu0 %v978
        %1074 = vmatprep.subr.bf16.mxu0 0
        %1075 = vmatpush1.bf16.msra.mxu0 %v979
        %1076 = vmatprep.subr.bf16.mxu0 0
        %1077 = vmatpush1.bf16.msra.mxu0 %v980
        %1078 = vmatprep.subr.bf16.mxu0 0
        %1079 = vmatpush1.bf16.msra.mxu0 %v981
        %1080 = vmatprep.subr.bf16.mxu0 0
        %1081 = vmatpush1.bf16.msra.mxu0 %v982
        %1082 = vmatprep.subr.bf16.mxu0 0
        %1083 = vmatpush1.bf16.msra.mxu0 %v983
        %1084 = vmatprep.subr.bf16.mxu0 0
        %1085 = vmatpush1.bf16.msra.mxu0 %v984
        %1086 = vmatprep.subr.bf16.mxu0 0
        %1087 = vmatpush1.bf16.msra.mxu0 %v985
        %1088 = vmatprep.subr.bf16.mxu0 0
        %1089 = vmatpush1.bf16.msra.mxu0 %v986
        %1090 = vmatprep.subr.bf16.mxu0 0
        %1091 = vmatpush1.bf16.msra.mxu0 %v987
        %1092 = vmatprep.subr.bf16.mxu0 0
        %1093 = vmatpush1.bf16.msra.mxu0 %v988
        %1094 = vmatprep.mubr.bf16.mxu0 %v822
        %1095 = vmatmul.mubr.bf16.gmra.mrb[0].mxu0 %v821
        %v1096 = vpop.f32.mrb[0].mxu0
        %v1097 = vadd.f32 %v1056, %v1096
        %v1098 = vpop.f32.mrb[0].mxu0
        %v1099 = vpop.f32.mrb[0].mxu0
        %v1100 = vadd.f32 %v1059, %v1099
        %v1101 = vpop.f32.mrb[0].mxu0
        %1102 = vdwg.mxu0
        %vm1103 = vcmp.gt.f32.partialorder %v1097, 0.0
        %vm1104 = vcmp.gt.f32.partialorder %v1100, 0.0
        %v1105 = vmul.f32 %v1097, 0.2
        %v1106 = vmul.f32 %v1100, 0.2
        %v1107 = vsel %vm1103, %v1097, %v1105
        %v1108 = vsel %vm1104, %v1100, %v1106
        %v1109 = vpack.c.bf16 %v1108, %v1107
        %v1111 = vlaneseq
        %v1112 = vshrl.u32 %v1111, 7
        %v1113 = vsub.s32 0, %v1112
        %v1114 = vrot.slane %v784, %v1113
        %v1132 = vunpack.c.l.b16 %v768
        %v1133 = vunpack.c.l.b16 %v769
        %v1134 = vunpack.c.l.b16 %v770
        %v1135 = vunpack.c.l.b16 %v771
        %v1136 = vunpack.c.l.b16 %v772
        %v1137 = vunpack.c.l.b16 %v773
        %v1138 = vunpack.c.l.b16 %v774
        %v1139 = vunpack.c.l.b16 %v775
        %v1140 = vunpack.c.l.b16 %v776
        %v1141 = vunpack.c.l.b16 %v777
        %v1142 = vunpack.c.l.b16 %v778
        %v1143 = vunpack.c.l.b16 %v779
        %v1144 = vunpack.c.l.b16 %v780
        %v1145 = vunpack.c.l.b16 %v781
        %v1146 = vunpack.c.l.b16 %v782
        %v1147 = vunpack.c.l.b16 %v783
        %v1148 = vpack.c.b16 %v1133, %v1132
        %v1149 = vpack.c.b16 %v1135, %v1134
        %v1150 = vpack.c.b16 %v1137, %v1136
        %v1151 = vpack.c.b16 %v1139, %v1138
        %v1152 = vpack.c.b16 %v1141, %v1140
        %v1153 = vpack.c.b16 %v1143, %v1142
        %v1154 = vpack.c.b16 %v1145, %v1144
        %v1155 = vpack.c.b16 %v1147, %v1146
        %1164 = vmatprep.subr.bf16.mxu0 0
        %1165 = vmatpush1.bf16.msra.mxu0 %v1148
        %1166 = vmatprep.subr.bf16.mxu0 0
        %1167 = vmatpush1.bf16.msra.mxu0 %v1149
        %1168 = vmatprep.subr.bf16.mxu0 0
        %1169 = vmatpush1.bf16.msra.mxu0 %v1150
        %1170 = vmatprep.subr.bf16.mxu0 0
        %1171 = vmatpush1.bf16.msra.mxu0 %v1151
        %1172 = vmatprep.subr.bf16.mxu0 0
        %1173 = vmatpush1.bf16.msra.mxu0 %v1152
        %1174 = vmatprep.subr.bf16.mxu0 0
        %1175 = vmatpush1.bf16.msra.mxu0 %v1153
        %1176 = vmatprep.subr.bf16.mxu0 0
        %1177 = vmatpush1.bf16.msra.mxu0 %v1154
        %1178 = vmatprep.subr.bf16.mxu0 0
        %1179 = vmatpush1.bf16.msra.mxu0 %v1155
        %1180 = vmatprep.subr.bf16.mxu0 0
        %1181 = vmatpush1.bf16.msra.mxu0 0
        %1182 = vmatprep.subr.bf16.mxu0 0
        %1183 = vmatpush1.bf16.msra.mxu0 0
        %1184 = vmatprep.subr.bf16.mxu0 0
        %1185 = vmatpush1.bf16.msra.mxu0 0
        %1186 = vmatprep.subr.bf16.mxu0 0
        %1187 = vmatpush1.bf16.msra.mxu0 0
        %1188 = vmatprep.subr.bf16.mxu0 0
        %1189 = vmatpush1.bf16.msra.mxu0 0
        %1190 = vmatprep.subr.bf16.mxu0 0
        %1191 = vmatpush1.bf16.msra.mxu0 0
        %1192 = vmatprep.subr.bf16.mxu0 0
        %1193 = vmatpush1.bf16.msra.mxu0 0
        %1194 = vmatprep.subr.bf16.mxu0 0
        %1195 = vmatpush1.bf16.msra.mxu0 0
        %1196 = vmatprep.mubr.bf16.mxu0 0
        %1197 = vmatmul.mubr.bf16.gmra.mrb[0].mxu0 %v1109
        %v1198 = vpop.f32.mrb[0].mxu0
        %v1199 = vadd.f32 %v1114, %v1198
        %v1200 = vpop.f32.mrb[0].mxu0
        %v1201 = vpop.f32.mrb[0].mxu0
        %v1202 = vadd.f32 %v1114, %v1201
        %v1203 = vpop.f32.mrb[0].mxu0
        %1204 = vdwg.mxu0
        %vm1205 = vcmp.gt.f32.partialorder %v1199, 0.0
        %vm1206 = vcmp.gt.f32.partialorder %v1202, 0.0
        %v1207 = vmul.f32 %v1199, 0.2
        %v1208 = vmul.f32 %v1202, 0.2
        %v1209 = vsel %vm1205, %v1199, %v1207
        %v1210 = vsel %vm1206, %v1202, %v1208
        %v1211 = vpack.c.bf16 %v1210, %v1209
        %v1213 = vlaneseq
        %v1214 = vshrl.u32 %v1213, 7
        %v1215 = vsub.s32 0, %v1214
        %v1216 = vrot.slane %v801, %v1215
        %v1234 = vunpack.c.l.b16 %v785
        %v1235 = vunpack.c.l.b16 %v786
        %v1236 = vunpack.c.l.b16 %v787
        %v1237 = vunpack.c.l.b16 %v788
        %v1238 = vunpack.c.l.b16 %v789
        %v1239 = vunpack.c.l.b16 %v790
        %v1240 = vunpack.c.l.b16 %v791
        %v1241 = vunpack.c.l.b16 %v792
        %v1242 = vunpack.c.l.b16 %v793
        %v1243 = vunpack.c.l.b16 %v794
        %v1244 = vunpack.c.l.b16 %v795
        %v1245 = vunpack.c.l.b16 %v796
        %v1246 = vunpack.c.l.b16 %v797
        %v1247 = vunpack.c.l.b16 %v798
        %v1248 = vunpack.c.l.b16 %v799
        %v1249 = vunpack.c.l.b16 %v800
        %v1250 = vpack.c.b16 %v1235, %v1234
        %v1251 = vpack.c.b16 %v1237, %v1236
        %v1252 = vpack.c.b16 %v1239, %v1238
        %v1253 = vpack.c.b16 %v1241, %v1240
        %v1254 = vpack.c.b16 %v1243, %v1242
        %v1255 = vpack.c.b16 %v1245, %v1244
        %v1256 = vpack.c.b16 %v1247, %v1246
        %v1257 = vpack.c.b16 %v1249, %v1248
        %1266 = vmatprep.subr.bf16.mxu0 0
        %1267 = vmatpush1.bf16.msra.mxu0 %v1250
        %1268 = vmatprep.subr.bf16.mxu0 0
        %1269 = vmatpush1.bf16.msra.mxu0 %v1251
        %1270 = vmatprep.subr.bf16.mxu0 0
        %1271 = vmatpush1.bf16.msra.mxu0 %v1252
        %1272 = vmatprep.subr.bf16.mxu0 0
        %1273 = vmatpush1.bf16.msra.mxu0 %v1253
        %1274 = vmatprep.subr.bf16.mxu0 0
        %1275 = vmatpush1.bf16.msra.mxu0 %v1254
        %1276 = vmatprep.subr.bf16.mxu0 0
        %1277 = vmatpush1.bf16.msra.mxu0 %v1255
        %1278 = vmatprep.subr.bf16.mxu0 0
        %1279 = vmatpush1.bf16.msra.mxu0 %v1256
        %1280 = vmatprep.subr.bf16.mxu0 0
        %1281 = vmatpush1.bf16.msra.mxu0 %v1257
        %1282 = vmatprep.subr.bf16.mxu0 0
        %1283 = vmatpush1.bf16.msra.mxu0 0
        %1284 = vmatprep.subr.bf16.mxu0 0
        %1285 = vmatpush1.bf16.msra.mxu0 0
        %1286 = vmatprep.subr.bf16.mxu0 0
        %1287 = vmatpush1.bf16.msra.mxu0 0
        %1288 = vmatprep.subr.bf16.mxu0 0
        %1289 = vmatpush1.bf16.msra.mxu0 0
        %1290 = vmatprep.subr.bf16.mxu0 0
        %1291 = vmatpush1.bf16.msra.mxu0 0
        %1292 = vmatprep.subr.bf16.mxu0 0
        %1293 = vmatpush1.bf16.msra.mxu0 0
        %1294 = vmatprep.subr.bf16.mxu0 0
        %1295 = vmatpush1.bf16.msra.mxu0 0
        %1296 = vmatprep.subr.bf16.mxu0 0
        %1297 = vmatpush1.bf16.msra.mxu0 0
        %1298 = vmatprep.mubr.bf16.mxu0 0
        %1299 = vmatmul.mubr.bf16.gmra.mrb[0].mxu0 %v1211
        %v1300 = vpop.f32.mrb[0].mxu0
        %v1301 = vadd.f32 %v1216, %v1300
        %v1302 = vpop.f32.mrb[0].mxu0
        %v1303 = vpop.f32.mrb[0].mxu0
        %v1304 = vadd.f32 %v1216, %v1303
        %v1305 = vpop.f32.mrb[0].mxu0
        %1306 = vdwg.mxu0
        %vm1307 = vcmp.gt.f32.partialorder %v1301, 0.0
        %vm1308 = vcmp.gt.f32.partialorder %v1304, 0.0
        %v1309 = vmul.f32 %v1301, 0.2
        %v1310 = vmul.f32 %v1304, 0.2
        %v1311 = vsel %vm1307, %v1301, %v1309
        %v1312 = vsel %vm1308, %v1304, %v1310
        %v1313 = vpack.c.bf16 %v1312, %v1311
        %v1315 = vlaneseq
        %v1316 = vshrl.u32 %v1315, 7
        %v1317 = vsub.s32 0, %v1316
        %v1318 = vrot.slane %v818, %v1317
        %v1336 = vunpack.c.l.b16 %v802
        %v1337 = vunpack.c.l.b16 %v803
        %v1338 = vunpack.c.l.b16 %v804
        %v1339 = vunpack.c.l.b16 %v805
        %v1340 = vunpack.c.l.b16 %v806
        %v1341 = vunpack.c.l.b16 %v807
        %v1342 = vunpack.c.l.b16 %v808
        %v1343 = vunpack.c.l.b16 %v809
        %v1344 = vunpack.c.l.b16 %v810
        %v1345 = vunpack.c.l.b16 %v811
        %v1346 = vunpack.c.l.b16 %v812
        %v1347 = vunpack.c.l.b16 %v813
        %v1348 = vunpack.c.l.b16 %v814
        %v1349 = vunpack.c.l.b16 %v815
        %v1350 = vunpack.c.l.b16 %v816
        %v1351 = vunpack.c.l.b16 %v817
        %v1352 = vpack.c.b16 %v1337, %v1336
        %v1353 = vpack.c.b16 %v1339, %v1338
        %v1354 = vpack.c.b16 %v1341, %v1340
        %v1355 = vpack.c.b16 %v1343, %v1342
        %v1356 = vpack.c.b16 %v1345, %v1344
        %v1357 = vpack.c.b16 %v1347, %v1346
        %v1358 = vpack.c.b16 %v1349, %v1348
        %v1359 = vpack.c.b16 %v1351, %v1350
        %1368 = vmatprep.subr.bf16.mxu0 0
        %1369 = vmatpush1.bf16.msra.mxu0 %v1352
        %1370 = vmatprep.subr.bf16.mxu0 0
        %1371 = vmatpush1.bf16.msra.mxu0 %v1353
        %1372 = vmatprep.subr.bf16.mxu0 0
        %1373 = vmatpush1.bf16.msra.mxu0 %v1354
        %1374 = vmatprep.subr.bf16.mxu0 0
        %1375 = vmatpush1.bf16.msra.mxu0 %v1355
        %1376 = vmatprep.subr.bf16.mxu0 0
        %1377 = vmatpush1.bf16.msra.mxu0 %v1356
        %1378 = vmatprep.subr.bf16.mxu0 0
        %1379 = vmatpush1.bf16.msra.mxu0 %v1357
        %1380 = vmatprep.subr.bf16.mxu0 0
        %1381 = vmatpush1.bf16.msra.mxu0 %v1358
        %1382 = vmatprep.subr.bf16.mxu0 0
        %1383 = vmatpush1.bf16.msra.mxu0 %v1359
        %1384 = vmatprep.subr.bf16.mxu0 0
        %1385 = vmatpush1.bf16.msra.mxu0 0
        %1386 = vmatprep.subr.bf16.mxu0 0
        %1387 = vmatpush1.bf16.msra.mxu0 0
        %1388 = vmatprep.subr.bf16.mxu0 0
        %1389 = vmatpush1.bf16.msra.mxu0 0
        %1390 = vmatprep.subr.bf16.mxu0 0
        %1391 = vmatpush1.bf16.msra.mxu0 0
        %1392 = vmatprep.subr.bf16.mxu0 0
        %1393 = vmatpush1.bf16.msra.mxu0 0
        %1394 = vmatprep.subr.bf16.mxu0 0
        %1395 = vmatpush1.bf16.msra.mxu0 0
        %1396 = vmatprep.subr.bf16.mxu0 0
        %1397 = vmatpush1.bf16.msra.mxu0 0
        %1398 = vmatprep.subr.bf16.mxu0 0
        %1399 = vmatpush1.bf16.msra.mxu0 0
        %1400 = vmatprep.mubr.bf16.mxu0 0
        %1401 = vmatmul.mubr.bf16.gmra.mrb[0].mxu0 %v1313
        %v1402 = vpop.f32.mrb[0].mxu0
        %v1403 = vadd.f32 %v1318, %v1402
        %v1404 = vpop.f32.mrb[0].mxu0
        %v1405 = vpop.f32.mrb[0].mxu0
        %v1406 = vadd.f32 %v1318, %v1405
        %v1407 = vpop.f32.mrb[0].mxu0
        %1408 = vdwg.mxu0
        %v1409 = vld [vmem:[%s2] sm:$0xff]
        %v1410 = vld [vmem:[%s2 + $0x8] sm:$0xff]
        %v1411 = vld [vmem:[%s11] sm:$0xf]
        %v1412 = vld [vmem:[%s11 + $0x4] sm:$0xf]
        %v1413 = vld [vmem:[%s11 + $0x8] sm:$0xf]
        %v1414 = vld [vmem:[%s11 + $0xc] sm:$0xf]
        %v1415 = vld [vmem:[%s11 + $0x10] sm:$0xf]
        %v1416 = vld [vmem:[%s11 + $0x14] sm:$0xf]
        %v1417 = vld [vmem:[%s11 + $0x18] sm:$0xf]
        %v1418 = vld [vmem:[%s11 + $0x1c] sm:$0xf]
        %v1419 = vld [vmem:[%s11 + $0x20] sm:$0xf]
        %v1420 = vld [vmem:[%s11 + $0x24] sm:$0xf]
        %v1421 = vld [vmem:[%s11 + $0x28] sm:$0xf]
        %v1422 = vld [vmem:[%s11 + $0x2c] sm:$0xf]
        %v1423 = vld [vmem:[%s11 + $0x30] sm:$0xf]
        %v1424 = vld [vmem:[%s11 + $0x34] sm:$0xf]
        %v1425 = vld [vmem:[%s11 + $0x38] sm:$0xf]
        %v1426 = vld [vmem:[%s11 + $0x3c] sm:$0xf]
        %v1427 = vpack.c.bf16 %v1406, %v1403
        %v1428 = vld [vmem:[%s12] sm:$0xf]
        %v1429 = vld [vmem:[%s12 + $0x4] sm:$0xf]
        %v1430 = vld [vmem:[%s12 + $0x8] sm:$0xf]
        %v1431 = vld [vmem:[%s12 + $0xc] sm:$0xf]
        %v1432 = vld [vmem:[%s12 + $0x10] sm:$0xf]
        %v1433 = vld [vmem:[%s12 + $0x14] sm:$0xf]
        %v1434 = vld [vmem:[%s12 + $0x18] sm:$0xf]
        %v1435 = vld [vmem:[%s12 + $0x1c] sm:$0xf]
        %v1436 = vld [vmem:[%s12 + $0x20] sm:$0xf]
        %v1437 = vld [vmem:[%s12 + $0x24] sm:$0xf]
        %v1438 = vld [vmem:[%s12 + $0x28] sm:$0xf]
        %v1439 = vld [vmem:[%s12 + $0x2c] sm:$0xf]
        %v1440 = vld [vmem:[%s12 + $0x30] sm:$0xf]
        %v1441 = vld [vmem:[%s12 + $0x34] sm:$0xf]
        %v1442 = vld [vmem:[%s12 + $0x38] sm:$0xf]
        %v1443 = vld [vmem:[%s12 + $0x3c] sm:$0xf]
        %v1444 = vpack.c.bf16 %v1410, %v1409
        %v1461 = vunpack.c.l.b16 %v1428
        %v1462 = vunpack.c.l.b16 %v1429
        %v1463 = vunpack.c.l.b16 %v1430
        %v1464 = vunpack.c.l.b16 %v1431
        %v1465 = vunpack.c.l.b16 %v1432
        %v1466 = vunpack.c.l.b16 %v1433
        %v1467 = vunpack.c.l.b16 %v1434
        %v1468 = vunpack.c.l.b16 %v1435
        %v1469 = vunpack.c.l.b16 %v1436
        %v1470 = vunpack.c.l.b16 %v1437
        %v1471 = vunpack.c.l.b16 %v1438
        %v1472 = vunpack.c.l.b16 %v1439
        %v1473 = vunpack.c.l.b16 %v1440
        %v1474 = vunpack.c.l.b16 %v1441
        %v1475 = vunpack.c.l.b16 %v1442
        %v1476 = vunpack.c.l.b16 %v1443
        %v1477 = vpack.c.b16 %v1462, %v1461
        %v1478 = vpack.c.b16 %v1464, %v1463
        %v1479 = vpack.c.b16 %v1466, %v1465
        %v1480 = vpack.c.b16 %v1468, %v1467
        %v1481 = vpack.c.b16 %v1470, %v1469
        %v1482 = vpack.c.b16 %v1472, %v1471
        %v1483 = vpack.c.b16 %v1474, %v1473
        %v1484 = vpack.c.b16 %v1476, %v1475
        %1493 = vmatprep.subr.bf16.mxu0 0
        %1494 = vmatpush1.bf16.msra.mxu0 %v1477
        %1495 = vmatprep.subr.bf16.mxu0 0
        %1496 = vmatpush1.bf16.msra.mxu0 %v1478
        %1497 = vmatprep.subr.bf16.mxu0 0
        %1498 = vmatpush1.bf16.msra.mxu0 %v1479
        %1499 = vmatprep.subr.bf16.mxu0 0
        %1500 = vmatpush1.bf16.msra.mxu0 %v1480
        %1501 = vmatprep.subr.bf16.mxu0 0
        %1502 = vmatpush1.bf16.msra.mxu0 %v1481
        %1503 = vmatprep.subr.bf16.mxu0 0
        %1504 = vmatpush1.bf16.msra.mxu0 %v1482
        %1505 = vmatprep.subr.bf16.mxu0 0
        %1506 = vmatpush1.bf16.msra.mxu0 %v1483
        %1507 = vmatprep.subr.bf16.mxu0 0
        %1508 = vmatpush1.bf16.msra.mxu0 %v1484
        %1509 = vmatprep.subr.bf16.mxu0 0
        %1510 = vmatpush1.bf16.msra.mxu0 0
        %1511 = vmatprep.subr.bf16.mxu0 0
        %1512 = vmatpush1.bf16.msra.mxu0 0
        %1513 = vmatprep.subr.bf16.mxu0 0
        %1514 = vmatpush1.bf16.msra.mxu0 0
        %1515 = vmatprep.subr.bf16.mxu0 0
        %1516 = vmatpush1.bf16.msra.mxu0 0
        %1517 = vmatprep.subr.bf16.mxu0 0
        %1518 = vmatpush1.bf16.msra.mxu0 0
        %1519 = vmatprep.subr.bf16.mxu0 0
        %1520 = vmatpush1.bf16.msra.mxu0 0
        %1521 = vmatprep.subr.bf16.mxu0 0
        %1522 = vmatpush1.bf16.msra.mxu0 0
        %1523 = vmatprep.subr.bf16.mxu0 0
        %1524 = vmatpush1.bf16.msra.mxu0 0
        %1525 = vmatprep.mubr.bf16.mxu0 0
        %1526 = vmatmul.mubr.bf16.gmra.mrb[0].mxu0 %v1444
        %v1527 = vpop.f32.mrb[0].mxu0
        %v1528 = vadd.f32 0.0, %v1527
        %v1529 = vpop.f32.mrb[0].mxu0
        %v1530 = vpop.f32.mrb[0].mxu0
        %v1531 = vadd.f32 0.0, %v1530
        %v1532 = vpop.f32.mrb[0].mxu0
        %1533 = vdwg.mxu0
        %v1550 = vunpack.c.l.b16 %v1411
        %v1551 = vunpack.c.l.b16 %v1412
        %v1552 = vunpack.c.l.b16 %v1413
        %v1553 = vunpack.c.l.b16 %v1414
        %v1554 = vunpack.c.l.b16 %v1415
        %v1555 = vunpack.c.l.b16 %v1416
        %v1556 = vunpack.c.l.b16 %v1417
        %v1557 = vunpack.c.l.b16 %v1418
        %v1558 = vunpack.c.l.b16 %v1419
        %v1559 = vunpack.c.l.b16 %v1420
        %v1560 = vunpack.c.l.b16 %v1421
        %v1561 = vunpack.c.l.b16 %v1422
        %v1562 = vunpack.c.l.b16 %v1423
        %v1563 = vunpack.c.l.b16 %v1424
        %v1564 = vunpack.c.l.b16 %v1425
        %v1565 = vunpack.c.l.b16 %v1426
        %v1566 = vpack.c.b16 %v1551, %v1550
        %v1567 = vpack.c.b16 %v1553, %v1552
        %v1568 = vpack.c.b16 %v1555, %v1554
        %v1569 = vpack.c.b16 %v1557, %v1556
        %v1570 = vpack.c.b16 %v1559, %v1558
        %v1571 = vpack.c.b16 %v1561, %v1560
        %v1572 = vpack.c.b16 %v1563, %v1562
        %v1573 = vpack.c.b16 %v1565, %v1564
        %1582 = vmatprep.subr.bf16.mxu0 0
        %1583 = vmatpush1.bf16.msra.mxu0 %v1566
        %1584 = vmatprep.subr.bf16.mxu0 0
        %1585 = vmatpush1.bf16.msra.mxu0 %v1567
        %1586 = vmatprep.subr.bf16.mxu0 0
        %1587 = vmatpush1.bf16.msra.mxu0 %v1568
        %1588 = vmatprep.subr.bf16.mxu0 0
        %1589 = vmatpush1.bf16.msra.mxu0 %v1569
        %1590 = vmatprep.subr.bf16.mxu0 0
        %1591 = vmatpush1.bf16.msra.mxu0 %v1570
        %1592 = vmatprep.subr.bf16.mxu0 0
        %1593 = vmatpush1.bf16.msra.mxu0 %v1571
        %1594 = vmatprep.subr.bf16.mxu0 0
        %1595 = vmatpush1.bf16.msra.mxu0 %v1572
        %1596 = vmatprep.subr.bf16.mxu0 0
        %1597 = vmatpush1.bf16.msra.mxu0 %v1573
        %1598 = vmatprep.subr.bf16.mxu0 0
        %1599 = vmatpush1.bf16.msra.mxu0 0
        %1600 = vmatprep.subr.bf16.mxu0 0
        %1601 = vmatpush1.bf16.msra.mxu0 0
        %1602 = vmatprep.subr.bf16.mxu0 0
        %1603 = vmatpush1.bf16.msra.mxu0 0
        %1604 = vmatprep.subr.bf16.mxu0 0
        %1605 = vmatpush1.bf16.msra.mxu0 0
        %1606 = vmatprep.subr.bf16.mxu0 0
        %1607 = vmatpush1.bf16.msra.mxu0 0
        %1608 = vmatprep.subr.bf16.mxu0 0
        %1609 = vmatpush1.bf16.msra.mxu0 0
        %1610 = vmatprep.subr.bf16.mxu0 0
        %1611 = vmatpush1.bf16.msra.mxu0 0
        %1612 = vmatprep.subr.bf16.mxu0 0
        %1613 = vmatpush1.bf16.msra.mxu0 0
        %1614 = vmatprep.mubr.bf16.mxu0 0
        %1615 = vmatmul.mubr.bf16.gmra.mrb[0].mxu0 %v1427
        %v1616 = vpop.f32.mrb[0].mxu0
        %v1617 = vadd.f32 %v1528, %v1616
        %v1618 = vpop.f32.mrb[0].mxu0
        %v1619 = vpop.f32.mrb[0].mxu0
        %v1620 = vadd.f32 %v1531, %v1619
        %v1621 = vpop.f32.mrb[0].mxu0
        %1622 = vdwg.mxu0
        %v1623 = vld [vmem:[%s13] sm:$0x1]
        %v1625 = vlaneseq
        %v1626 = vshrl.u32 %v1625, 7
        %v1627 = vsub.s32 0, %v1626
        %v1628 = vrot.slane %v1623, %v1627
        %v1630 = vadd.f32 %v1617, %v1628
        %v1631 = vadd.f32 %v1620, %v1628
        %vm1632 = vcmp.gt.f32.partialorder %v1630, 0.0
        %vm1633 = vcmp.gt.f32.partialorder %v1631, 0.0
        %v1634 = vmul.f32 %v1630, 0.2
        %v1635 = vmul.f32 %v1631, 0.2
        %v1636 = vsel %vm1632, %v1630, %v1634
        %v1637 = vsel %vm1633, %v1631, %v1635
        %v1638 = vld [vmem:[%s14] sm:$0xf]
        %v1639 = vld [vmem:[%s14 + $0x4] sm:$0xf]
        %v1640 = vld [vmem:[%s14 + $0x8] sm:$0xf]
        %v1641 = vld [vmem:[%s14 + $0xc] sm:$0xf]
        %v1642 = vld [vmem:[%s14 + $0x10] sm:$0xf]
        %v1643 = vld [vmem:[%s14 + $0x14] sm:$0xf]
        %v1644 = vld [vmem:[%s14 + $0x18] sm:$0xf]
        %v1645 = vld [vmem:[%s14 + $0x1c] sm:$0xf]
        %v1646 = vld [vmem:[%s14 + $0x20] sm:$0xf]
        %v1647 = vld [vmem:[%s14 + $0x24] sm:$0xf]
        %v1648 = vld [vmem:[%s14 + $0x28] sm:$0xf]
        %v1649 = vld [vmem:[%s14 + $0x2c] sm:$0xf]
        %v1650 = vld [vmem:[%s14 + $0x30] sm:$0xf]
        %v1651 = vld [vmem:[%s14 + $0x34] sm:$0xf]
        %v1652 = vld [vmem:[%s14 + $0x38] sm:$0xf]
        %v1653 = vld [vmem:[%s14 + $0x3c] sm:$0xf]
        %v1654 = vpack.c.bf16 %v1637, %v1636
        %v1655 = vld [vmem:[%s15] sm:$0x1]
        %v1657 = vlaneseq
        %v1658 = vshrl.u32 %v1657, 7
        %v1659 = vsub.s32 0, %v1658
        %v1660 = vrot.slane %v1655, %v1659
        %v1678 = vunpack.c.l.b16 %v1638
        %v1679 = vunpack.c.l.b16 %v1639
        %v1680 = vunpack.c.l.b16 %v1640
        %v1681 = vunpack.c.l.b16 %v1641
        %v1682 = vunpack.c.l.b16 %v1642
        %v1683 = vunpack.c.l.b16 %v1643
        %v1684 = vunpack.c.l.b16 %v1644
        %v1685 = vunpack.c.l.b16 %v1645
        %v1686 = vunpack.c.l.b16 %v1646
        %v1687 = vunpack.c.l.b16 %v1647
        %v1688 = vunpack.c.l.b16 %v1648
        %v1689 = vunpack.c.l.b16 %v1649
        %v1690 = vunpack.c.l.b16 %v1650
        %v1691 = vunpack.c.l.b16 %v1651
        %v1692 = vunpack.c.l.b16 %v1652
        %v1693 = vunpack.c.l.b16 %v1653
        %v1694 = vpack.c.b16 %v1679, %v1678
        %v1695 = vpack.c.b16 %v1681, %v1680
        %v1696 = vpack.c.b16 %v1683, %v1682
        %v1697 = vpack.c.b16 %v1685, %v1684
        %v1698 = vpack.c.b16 %v1687, %v1686
        %v1699 = vpack.c.b16 %v1689, %v1688
        %v1700 = vpack.c.b16 %v1691, %v1690
        %v1701 = vpack.c.b16 %v1693, %v1692
        %1710 = vmatprep.subr.bf16.mxu0 0
        %1711 = vmatpush1.bf16.msra.mxu0 %v1694
        %1712 = vmatprep.subr.bf16.mxu0 0
        %1713 = vmatpush1.bf16.msra.mxu0 %v1695
        %1714 = vmatprep.subr.bf16.mxu0 0
        %1715 = vmatpush1.bf16.msra.mxu0 %v1696
        %1716 = vmatprep.subr.bf16.mxu0 0
        %1717 = vmatpush1.bf16.msra.mxu0 %v1697
        %1718 = vmatprep.subr.bf16.mxu0 0
        %1719 = vmatpush1.bf16.msra.mxu0 %v1698
        %1720 = vmatprep.subr.bf16.mxu0 0
        %1721 = vmatpush1.bf16.msra.mxu0 %v1699
        %1722 = vmatprep.subr.bf16.mxu0 0
        %1723 = vmatpush1.bf16.msra.mxu0 %v1700
        %1724 = vmatprep.subr.bf16.mxu0 0
        %1725 = vmatpush1.bf16.msra.mxu0 %v1701
        %1726 = vmatprep.subr.bf16.mxu0 0
        %1727 = vmatpush1.bf16.msra.mxu0 0
        %1728 = vmatprep.subr.bf16.mxu0 0
        %1729 = vmatpush1.bf16.msra.mxu0 0
        %1730 = vmatprep.subr.bf16.mxu0 0
        %1731 = vmatpush1.bf16.msra.mxu0 0
        %1732 = vmatprep.subr.bf16.mxu0 0
        %1733 = vmatpush1.bf16.msra.mxu0 0
        %1734 = vmatprep.subr.bf16.mxu0 0
        %1735 = vmatpush1.bf16.msra.mxu0 0
        %1736 = vmatprep.subr.bf16.mxu0 0
        %1737 = vmatpush1.bf16.msra.mxu0 0
        %1738 = vmatprep.subr.bf16.mxu0 0
        %1739 = vmatpush1.bf16.msra.mxu0 0
        %1740 = vmatprep.subr.bf16.mxu0 0
        %1741 = vmatpush1.bf16.msra.mxu0 0
        %1742 = vmatprep.mubr.bf16.mxu0 0
        %1743 = vmatmul.mubr.bf16.gmra.mrb[0].mxu0 %v1654
        %v1744 = vpop.f32.mrb[0].mxu0
        %v1745 = vadd.f32 %v1660, %v1744
        %v1746 = vpop.f32.mrb[0].mxu0
        %v1747 = vpop.f32.mrb[0].mxu0
        %v1748 = vadd.f32 %v1660, %v1747
        %v1749 = vpop.f32.mrb[0].mxu0
        %1750 = vdwg.mxu0
        %vm1751 = vcmp.gt.f32.partialorder %v1745, 0.0
        %vm1752 = vcmp.gt.f32.partialorder %v1748, 0.0
        %v1753 = vmul.f32 %v1745, 0.2
        %v1754 = vmul.f32 %v1748, 0.2
        %v1755 = vsel %vm1751, %v1745, %v1753
        %v1756 = vsel %vm1752, %v1748, %v1754
        %v1757 = vld [vmem:[%s16] sm:$0xf]
        %v1758 = vld [vmem:[%s16 + $0x4] sm:$0xf]
        %v1759 = vld [vmem:[%s16 + $0x8] sm:$0xf]
        %v1760 = vld [vmem:[%s16 + $0xc] sm:$0xf]
        %v1761 = vld [vmem:[%s16 + $0x10] sm:$0xf]
        %v1762 = vld [vmem:[%s16 + $0x14] sm:$0xf]
        %v1763 = vld [vmem:[%s16 + $0x18] sm:$0xf]
        %v1764 = vld [vmem:[%s16 + $0x1c] sm:$0xf]
        %v1765 = vld [vmem:[%s16 + $0x20] sm:$0xf]
        %v1766 = vld [vmem:[%s16 + $0x24] sm:$0xf]
        %v1767 = vld [vmem:[%s16 + $0x28] sm:$0xf]
        %v1768 = vld [vmem:[%s16 + $0x2c] sm:$0xf]
        %v1769 = vld [vmem:[%s16 + $0x30] sm:$0xf]
        %v1770 = vld [vmem:[%s16 + $0x34] sm:$0xf]
        %v1771 = vld [vmem:[%s16 + $0x38] sm:$0xf]
        %v1772 = vld [vmem:[%s16 + $0x3c] sm:$0xf]
        %v1773 = vpack.c.bf16 %v1756, %v1755
        %v1774 = vld [vmem:[%s17] sm:$0x1]
        %v1776 = vlaneseq
        %v1777 = vshrl.u32 %v1776, 7
        %v1778 = vsub.s32 0, %v1777
        %v1779 = vrot.slane %v1774, %v1778
        %v1797 = vunpack.c.l.b16 %v1757
        %v1798 = vunpack.c.l.b16 %v1758
        %v1799 = vunpack.c.l.b16 %v1759
        %v1800 = vunpack.c.l.b16 %v1760
        %v1801 = vunpack.c.l.b16 %v1761
        %v1802 = vunpack.c.l.b16 %v1762
        %v1803 = vunpack.c.l.b16 %v1763
        %v1804 = vunpack.c.l.b16 %v1764
        %v1805 = vunpack.c.l.b16 %v1765
        %v1806 = vunpack.c.l.b16 %v1766
        %v1807 = vunpack.c.l.b16 %v1767
        %v1808 = vunpack.c.l.b16 %v1768
        %v1809 = vunpack.c.l.b16 %v1769
        %v1810 = vunpack.c.l.b16 %v1770
        %v1811 = vunpack.c.l.b16 %v1771
        %v1812 = vunpack.c.l.b16 %v1772
        %v1813 = vpack.c.b16 %v1798, %v1797
        %v1814 = vpack.c.b16 %v1800, %v1799
        %v1815 = vpack.c.b16 %v1802, %v1801
        %v1816 = vpack.c.b16 %v1804, %v1803
        %v1817 = vpack.c.b16 %v1806, %v1805
        %v1818 = vpack.c.b16 %v1808, %v1807
        %v1819 = vpack.c.b16 %v1810, %v1809
        %v1820 = vpack.c.b16 %v1812, %v1811
        %1829 = vmatprep.subr.bf16.mxu0 0
        %1830 = vmatpush1.bf16.msra.mxu0 %v1813
        %1831 = vmatprep.subr.bf16.mxu0 0
        %1832 = vmatpush1.bf16.msra.mxu0 %v1814
        %1833 = vmatprep.subr.bf16.mxu0 0
        %1834 = vmatpush1.bf16.msra.mxu0 %v1815
        %1835 = vmatprep.subr.bf16.mxu0 0
        %1836 = vmatpush1.bf16.msra.mxu0 %v1816
        %1837 = vmatprep.subr.bf16.mxu0 0
        %1838 = vmatpush1.bf16.msra.mxu0 %v1817
        %1839 = vmatprep.subr.bf16.mxu0 0
        %1840 = vmatpush1.bf16.msra.mxu0 %v1818
        %1841 = vmatprep.subr.bf16.mxu0 0
        %1842 = vmatpush1.bf16.msra.mxu0 %v1819
        %1843 = vmatprep.subr.bf16.mxu0 0
        %1844 = vmatpush1.bf16.msra.mxu0 %v1820
        %1845 = vmatprep.subr.bf16.mxu0 0
        %1846 = vmatpush1.bf16.msra.mxu0 0
        %1847 = vmatprep.subr.bf16.mxu0 0
        %1848 = vmatpush1.bf16.msra.mxu0 0
        %1849 = vmatprep.subr.bf16.mxu0 0
        %1850 = vmatpush1.bf16.msra.mxu0 0
        %1851 = vmatprep.subr.bf16.mxu0 0
        %1852 = vmatpush1.bf16.msra.mxu0 0
        %1853 = vmatprep.subr.bf16.mxu0 0
        %1854 = vmatpush1.bf16.msra.mxu0 0
        %1855 = vmatprep.subr.bf16.mxu0 0
        %1856 = vmatpush1.bf16.msra.mxu0 0
        %1857 = vmatprep.subr.bf16.mxu0 0
        %1858 = vmatpush1.bf16.msra.mxu0 0
        %1859 = vmatprep.subr.bf16.mxu0 0
        %1860 = vmatpush1.bf16.msra.mxu0 0
        %1861 = vmatprep.mubr.bf16.mxu0 0
        %1862 = vmatmul.mubr.bf16.gmra.mrb[0].mxu0 %v1773
        %v1863 = vpop.f32.mrb[0].mxu0
        %v1864 = vadd.f32 %v1779, %v1863
        %v1865 = vpop.f32.mrb[0].mxu0
        %v1866 = vpop.f32.mrb[0].mxu0
        %v1867 = vadd.f32 %v1779, %v1866
        %v1868 = vpop.f32.mrb[0].mxu0
        %1869 = vdwg.mxu0
        %vm1870 = vcmp.gt.f32.partialorder %v1864, 0.0
        %vm1871 = vcmp.gt.f32.partialorder %v1867, 0.0
        %v1872 = vmul.f32 %v1864, 0.2
        %v1873 = vmul.f32 %v1867, 0.2
        %v1874 = vsel %vm1870, %v1864, %v1872
        %v1875 = vsel %vm1871, %v1867, %v1873
        %v1876 = vld [vmem:[#allocation2] sm:$0xf]
        %v1877 = vld [vmem:[#allocation2 + $0x4] sm:$0xf]
        %v1878 = vld [vmem:[#allocation2 + $0x8] sm:$0xf]
        %v1879 = vld [vmem:[#allocation2 + $0xc] sm:$0xf]
        %v1880 = vld [vmem:[#allocation2 + $0x10] sm:$0xf]
        %v1881 = vld [vmem:[#allocation2 + $0x14] sm:$0xf]
        %v1882 = vld [vmem:[#allocation2 + $0x18] sm:$0xf]
        %v1883 = vld [vmem:[#allocation2 + $0x1c] sm:$0xf]
        %v1884 = vld [vmem:[#allocation2 + $0x20] sm:$0xf]
        %v1885 = vld [vmem:[#allocation2 + $0x24] sm:$0xf]
        %v1886 = vld [vmem:[#allocation2 + $0x28] sm:$0xf]
        %v1887 = vld [vmem:[#allocation2 + $0x2c] sm:$0xf]
        %v1888 = vld [vmem:[#allocation2 + $0x30] sm:$0xf]
        %v1889 = vld [vmem:[#allocation2 + $0x34] sm:$0xf]
        %v1890 = vld [vmem:[#allocation2 + $0x38] sm:$0xf]
        %v1891 = vld [vmem:[#allocation2 + $0x3c] sm:$0xf]
        %v1892 = vpack.c.bf16 %v1875, %v1874
        %v1893 = vld [vmem:[%s19] sm:$0x1]
        %v1895 = vlaneseq
        %v1896 = vshrl.u32 %v1895, 7
        %v1897 = vsub.s32 0, %v1896
        %v1898 = vrot.slane %v1893, %v1897
        %v1916 = vunpack.c.l.b16 %v1876
        %v1917 = vunpack.c.l.b16 %v1877
        %v1918 = vunpack.c.l.b16 %v1878
        %v1919 = vunpack.c.l.b16 %v1879
        %v1920 = vunpack.c.l.b16 %v1880
        %v1921 = vunpack.c.l.b16 %v1881
        %v1922 = vunpack.c.l.b16 %v1882
        %v1923 = vunpack.c.l.b16 %v1883
        %v1924 = vunpack.c.l.b16 %v1884
        %v1925 = vunpack.c.l.b16 %v1885
        %v1926 = vunpack.c.l.b16 %v1886
        %v1927 = vunpack.c.l.b16 %v1887
        %v1928 = vunpack.c.l.b16 %v1888
        %v1929 = vunpack.c.l.b16 %v1889
        %v1930 = vunpack.c.l.b16 %v1890
        %v1931 = vunpack.c.l.b16 %v1891
        %v1932 = vpack.c.b16 %v1917, %v1916
        %v1933 = vpack.c.b16 %v1919, %v1918
        %v1934 = vpack.c.b16 %v1921, %v1920
        %v1935 = vpack.c.b16 %v1923, %v1922
        %v1936 = vpack.c.b16 %v1925, %v1924
        %v1937 = vpack.c.b16 %v1927, %v1926
        %v1938 = vpack.c.b16 %v1929, %v1928
        %v1939 = vpack.c.b16 %v1931, %v1930
        %1948 = vmatprep.subr.bf16.mxu0 0
        %1949 = vmatpush1.bf16.msra.mxu0 %v1932
        %1950 = vmatprep.subr.bf16.mxu0 0
        %1951 = vmatpush1.bf16.msra.mxu0 %v1933
        %1952 = vmatprep.subr.bf16.mxu0 0
        %1953 = vmatpush1.bf16.msra.mxu0 %v1934
        %1954 = vmatprep.subr.bf16.mxu0 0
        %1955 = vmatpush1.bf16.msra.mxu0 %v1935
        %1956 = vmatprep.subr.bf16.mxu0 0
        %1957 = vmatpush1.bf16.msra.mxu0 %v1936
        %1958 = vmatprep.subr.bf16.mxu0 0
        %1959 = vmatpush1.bf16.msra.mxu0 %v1937
        %1960 = vmatprep.subr.bf16.mxu0 0
        %1961 = vmatpush1.bf16.msra.mxu0 %v1938
        %1962 = vmatprep.subr.bf16.mxu0 0
        %1963 = vmatpush1.bf16.msra.mxu0 %v1939
        %1964 = vmatprep.subr.bf16.mxu0 0
        %1965 = vmatpush1.bf16.msra.mxu0 0
        %1966 = vmatprep.subr.bf16.mxu0 0
        %1967 = vmatpush1.bf16.msra.mxu0 0
        %1968 = vmatprep.subr.bf16.mxu0 0
        %1969 = vmatpush1.bf16.msra.mxu0 0
        %1970 = vmatprep.subr.bf16.mxu0 0
        %1971 = vmatpush1.bf16.msra.mxu0 0
        %1972 = vmatprep.subr.bf16.mxu0 0
        %1973 = vmatpush1.bf16.msra.mxu0 0
        %1974 = vmatprep.subr.bf16.mxu0 0
        %1975 = vmatpush1.bf16.msra.mxu0 0
        %1976 = vmatprep.subr.bf16.mxu0 0
        %1977 = vmatpush1.bf16.msra.mxu0 0
        %1978 = vmatprep.subr.bf16.mxu0 0
        %1979 = vmatpush1.bf16.msra.mxu0 0
        %1980 = vmatprep.mubr.bf16.mxu0 0
        %1981 = vmatmul.mubr.bf16.gmra.mrb[0].mxu0 %v1892
        %v1982 = vpop.f32.mrb[0].mxu0
        %v1983 = vadd.f32 %v1898, %v1982
        %v1984 = vpop.f32.mrb[0].mxu0
        %v1985 = vpop.f32.mrb[0].mxu0
        %v1986 = vadd.f32 %v1898, %v1985
        %v1987 = vpop.f32.mrb[0].mxu0
        %1988 = vdwg.mxu0
        %1989 = vst [vmem:[%s644] sm:$0xff] %v1983
        %1990 = vst [vmem:[%s644 + $0x8] sm:$0xff] %v1986
        %p1991 = scmp.lt.s32.totalorder %s32, 1
        %s1992 = scalar_select %p1991, %s32, 1
        %s1993 = smul.addr %s1992, 2
        %s1994 = smul.addr %s1993, 8
        %s1995 = scalar_lea.vmem %s20, %s1994
        // Predicated region
        $region105: #{generator_forward.5} parent=99 // pred_check
          %p1996 = pneg %p475
        $region106: #{generator_forward.5} parent=99 // pred_check_branch
          %1998 = sbr.rel (%p1996) target = $region108
        $region107: #{generator_forward.5} parent=99 // pred_region
          _
        $region108: #{generator_forward.5} parent=99 // pred_fallthru
          _
      $region100: #{generator_forward.5} parent=5 // pred_fallthru
        _
      %p1999 = scmp.le.s32.totalorder 2, %s27
      // Predicated region
      $region109: #{generator_forward.5} parent=5 // pred_check
        %p2000 = pneg %p1999
      $region110: #{generator_forward.5} parent=5 // pred_check_branch
        %2002 = sbr.rel (%p2000) target = $region112
      $region111: #{generator_forward.5} parent=5 // pred_region
        %s2003 = ssub.s32 %s27, 2
        // Predicated region
        $region113: #{generator_forward.5} parent=111 // pred_check
          %p2004 = pneg %p481
        $region114: #{generator_forward.5} parent=111 // pred_check_branch
          %2006 = sbr.rel (%p2004) target = $region116
        $region115: #{generator_forward.5} parent=111 // pred_region
          %p2007 = scmp.lt.s32.totalorder %s33, 1
          %s2008 = scalar_select %p2007, %s33, 1
          %s2009 = smul.addr %s2008, 2
          %s2010 = smul.addr %s2009, 8
          %s2011 = scalar_lea.vmem %s20, %s2010
        $region116: #{generator_forward.5} parent=111 // pred_fallthru
          _
      $region112: #{generator_forward.5} parent=5 // pred_fallthru
        _
    $region6: #{generator_forward.5} parent=1 // loop_footer
      %s31 = sadd.s32 1, %s27
    $region7: #{generator_forward.5} parent=1 // loop_footer_branch
      %26 = sbr.rel target = $region3
    $region8: #{generator_forward.5} parent=1 // loop_exit
      _
    %2012 = vsyncpa [#allocation3], 1
    %s2013 = scalar_lea.sflag [#allocation3], 1
    %2014 = vsyncpa %s2013, 1

// kernel: generator_forward.7
$region0: #{generator_forward.7}
  #allocation0 [shape = 'u32[]', space=smem, size = 0x4, offset = 0x4, fixed_abs, tag = 'smem constant byte address 0x4 - core index']
  #allocation1 [shape = 'u32[144,128]{1,0:T(1,128)}', space=vmem, size = 0x12000, scoped, tag = 'internal scratch']
  %s0 = inlined_call_operand.vmem [shape: f32[2,16,128], index: 0, kind: input, shape index: {}]
  %s1 = inlined_call_operand.vmem [shape: f32[1,512], index: 1, kind: input, shape index: {}]
  %s2 = inlined_call_operand.vmem [shape: bf16[128,128], index: 2, kind: input, shape index: {}]
  %s3 = inlined_call_operand.vmem [shape: f32[1,128], index: 3, kind: input, shape index: {}]
  %s4 = inlined_call_operand.vmem [shape: bf16[128,128], index: 4, kind: input, shape index: {}]
  %s5 = inlined_call_operand.vmem [shape: f32[1,128], index: 5, kind: input, shape index: {}]
  %s6 = inlined_call_operand.vmem [shape: bf16[128,128], index: 6, kind: input, shape index: {}]
  %s7 = inlined_call_operand.vmem [shape: f32[1,128], index: 7, kind: input, shape index: {}]
  %s8 = inlined_call_operand.vmem [shape: bf16[128,512], index: 8, kind: input, shape index: {}]
  %s9 = inlined_call_operand.vmem [shape: f32[1,512], index: 9, kind: input, shape index: {}]
  %s10 = inlined_call_operand.vmem [shape: f32[2,17,256], index: 10, kind: output, shape index: {}]
  %s11 = sld [smem:[#allocation0]]
  $region73: #{generator_forward.7} parent=0
    _
  %s13 = ssub.s32 1, %s11
  %s14 = scalar_select 0, %s13, %s11
  loop: start=0, step=1, limit=4
  $region2: #{generator_forward.7} parent=0 // loop_pre_header
    _
  $region3: #{generator_forward.7} parent=0 // loop_header
    %s16 = sphi 0, %s20
    %p17 = scmp.ge.s32.totalorder %s16, 4
    %s26 = sphi 0, %s28
    %s29 = sphi 0, %s26
    %s30 = sphi 0, %s29
    %s46 = sphi 0, %s30
    %s50 = sphi 0, %s50
    %s52 = sphi 0, %s50
    %s53 = sphi 0, %s52
    %s67 = sphi 0, %s53
    %s71 = sphi 0, %s71
    %s73 = sphi 0, %s71
    %s74 = sphi 0, %s73
    %s88 = sphi 0, %s74
    %s92 = sphi 0, %s92
    %s94 = sphi 0, %s92
    %s95 = sphi 0, %s94
    %s109 = sphi 0, %s95
    %s113 = sphi 0, %s113
    %s115 = sphi 0, %s113
    %s116 = sphi 0, %s115
    %s130 = sphi 0, %s116
    %s134 = sphi 0, %s134
    %s136 = sphi 0, %s134
    %s137 = sphi 0, %s136
    %s151 = sphi 0, %s137
    %s155 = sphi 0, %s155
    %s157 = sphi 0, %s155
    %s158 = sphi 0, %s157
    %s172 = sphi 0, %s158
    %s176 = sphi 0, %s176
    %s178 = sphi 0, %s176
    %s179 = sphi 0, %s178
    %s193 = sphi 0, %s179
    %s197 = sphi 0, %s197
    %s199 = sphi 0, %s197
    %s200 = sphi 0, %s199
    %s214 = sphi 0, %s200
    %s218 = sphi 0, %s218
    %s220 = sphi 0, %s218
    %s221 = sphi 0, %s220
    %s235 = sphi 0, %s221
    %s241 = sphi 0, %s243
    %s244 = sphi 0, %s241
    %s245 = sphi 0, %s244
    %s261 = sphi 0, %s245
  $region4: #{generator_forward.7} parent=0 // loop_header_branch
    %19 = sbr.rel (%p17) target = $region8
  $region5: #{generator_forward.7} parent=0 // loop_body
    %s21 = ssub.s32 %s16, 1
    %s22 = ssub.s32 %s16, 2
    %s23 = sadd.s32 %s16, 1
    %s24 = ssub.s32 %s16, %s23
    %p25 = scmp.eq.s32.totalorder %s24, 0
    %s27 = sadd.s32 %s26, 1
    %s28 = scalar_select %p25, %s26, %s27
    %p31 = pneg %p25
    %p32 = scmp.eq.s32.totalorder %s16, 1
    %p33 = por %p31, %p32
    %p34 = scmp.ne.s32.totalorder %s26, %s29
    %p35 = scmp.eq.s32.totalorder %s16, 0
    %p36 = por %p34, %p35
    %p37 = scmp.ne.s32.totalorder %s26, %s29
    %p38 = scmp.eq.s32.totalorder %s21, 1
    %p39 = por %p37, %p38
    %p40 = scmp.ne.s32.totalorder %s29, %s30
    %p41 = scmp.eq.s32.totalorder %s21, 0
    %p42 = por %p40, %p41
    %p43 = scmp.ne.s32.totalorder %s29, %s30
    %p44 = scmp.eq.s32.totalorder %s22, 1
    %p45 = por %p43, %p44
    %p47 = scmp.ne.s32.totalorder %s30, %s46
    %p48 = scmp.eq.s32.totalorder %s22, 0
    %p49 = por %p47, %p48
    %s51 = sadd.s32 %s50, 1
    %p54 = scmp.eq.s32.totalorder %s16, 1
    %p55 = scmp.ne.s32.totalorder %s50, %s52
    %p56 = scmp.eq.s32.totalorder %s16, 0
    %p57 = por %p55, %p56
    %p58 = scmp.ne.s32.totalorder %s50, %s52
    %p59 = scmp.eq.s32.totalorder %s21, 1
    %p60 = por %p58, %p59
    %p61 = scmp.ne.s32.totalorder %s52, %s53
    %p62 = scmp.eq.s32.totalorder %s21, 0
    %p63 = por %p61, %p62
    %p64 = scmp.ne.s32.totalorder %s52, %s53
    %p65 = scmp.eq.s32.totalorder %s22, 1
    %p66 = por %p64, %p65
    %p68 = scmp.ne.s32.totalorder %s53, %s67
    %p69 = scmp.eq.s32.totalorder %s22, 0
    %p70 = por %p68, %p69
    %s72 = sadd.s32 %s71, 1
    %p75 = scmp.eq.s32.totalorder %s16, 1
    %p76 = scmp.ne.s32.totalorder %s71, %s73
    %p77 = scmp.eq.s32.totalorder %s16, 0
    %p78 = por %p76, %p77
    %p79 = scmp.ne.s32.totalorder %s71, %s73
    %p80 = scmp.eq.s32.totalorder %s21, 1
    %p81 = por %p79, %p80
    %p82 = scmp.ne.s32.totalorder %s73, %s74
    %p83 = scmp.eq.s32.totalorder %s21, 0
    %p84 = por %p82, %p83
    %p85 = scmp.ne.s32.totalorder %s73, %s74
    %p86 = scmp.eq.s32.totalorder %s22, 1
    %p87 = por %p85, %p86
    %p89 = scmp.ne.s32.totalorder %s74, %s88
    %p90 = scmp.eq.s32.totalorder %s22, 0
    %p91 = por %p89, %p90
    %s93 = sadd.s32 %s92, 1
    %p96 = scmp.eq.s32.totalorder %s16, 1
    %p97 = scmp.ne.s32.totalorder %s92, %s94
    %p98 = scmp.eq.s32.totalorder %s16, 0
    %p99 = por %p97, %p98
    %p100 = scmp.ne.s32.totalorder %s92, %s94
    %p101 = scmp.eq.s32.totalorder %s21, 1
    %p102 = por %p100, %p101
    %p103 = scmp.ne.s32.totalorder %s94, %s95
    %p104 = scmp.eq.s32.totalorder %s21, 0
    %p105 = por %p103, %p104
    %p106 = scmp.ne.s32.totalorder %s94, %s95
    %p107 = scmp.eq.s32.totalorder %s22, 1
    %p108 = por %p106, %p107
    %p110 = scmp.ne.s32.totalorder %s95, %s109
    %p111 = scmp.eq.s32.totalorder %s22, 0
    %p112 = por %p110, %p111
    %s114 = sadd.s32 %s113, 1
    %p117 = scmp.eq.s32.totalorder %s16, 1
    %p118 = scmp.ne.s32.totalorder %s113, %s115
    %p119 = scmp.eq.s32.totalorder %s16, 0
    %p120 = por %p118, %p119
    %p121 = scmp.ne.s32.totalorder %s113, %s115
    %p122 = scmp.eq.s32.totalorder %s21, 1
    %p123 = por %p121, %p122
    %p124 = scmp.ne.s32.totalorder %s115, %s116
    %p125 = scmp.eq.s32.totalorder %s21, 0
    %p126 = por %p124, %p125
    %p127 = scmp.ne.s32.totalorder %s115, %s116
    %p128 = scmp.eq.s32.totalorder %s22, 1
    %p129 = por %p127, %p128
    %p131 = scmp.ne.s32.totalorder %s116, %s130
    %p132 = scmp.eq.s32.totalorder %s22, 0
    %p133 = por %p131, %p132
    %s135 = sadd.s32 %s134, 1
    %p138 = scmp.eq.s32.totalorder %s16, 1
    %p139 = scmp.ne.s32.totalorder %s134, %s136
    %p140 = scmp.eq.s32.totalorder %s16, 0
    %p141 = por %p139, %p140
    %p142 = scmp.ne.s32.totalorder %s134, %s136
    %p143 = scmp.eq.s32.totalorder %s21, 1
    %p144 = por %p142, %p143
    %p145 = scmp.ne.s32.totalorder %s136, %s137
    %p146 = scmp.eq.s32.totalorder %s21, 0
    %p147 = por %p145, %p146
    %p148 = scmp.ne.s32.totalorder %s136, %s137
    %p149 = scmp.eq.s32.totalorder %s22, 1
    %p150 = por %p148, %p149
    %p152 = scmp.ne.s32.totalorder %s137, %s151
    %p153 = scmp.eq.s32.totalorder %s22, 0
    %p154 = por %p152, %p153
    %s156 = sadd.s32 %s155, 1
    %p159 = scmp.eq.s32.totalorder %s16, 1
    %p160 = scmp.ne.s32.totalorder %s155, %s157
    %p161 = scmp.eq.s32.totalorder %s16, 0
    %p162 = por %p160, %p161
    %p163 = scmp.ne.s32.totalorder %s155, %s157
    %p164 = scmp.eq.s32.totalorder %s21, 1
    %p165 = por %p163, %p164
    %p166 = scmp.ne.s32.totalorder %s157, %s158
    %p167 = scmp.eq.s32.totalorder %s21, 0
    %p168 = por %p166, %p167
    %p169 = scmp.ne.s32.totalorder %s157, %s158
    %p170 = scmp.eq.s32.totalorder %s22, 1
    %p171 = por %p169, %p170
    %p173 = scmp.ne.s32.totalorder %s158, %s172
    %p174 = scmp.eq.s32.totalorder %s22, 0
    %p175 = por %p173, %p174
    %s177 = sadd.s32 %s176, 1
    %p180 = scmp.eq.s32.totalorder %s16, 1
    %p181 = scmp.ne.s32.totalorder %s176, %s178
    %p182 = scmp.eq.s32.totalorder %s16, 0
    %p183 = por %p181, %p182
    %p184 = scmp.ne.s32.totalorder %s176, %s178
    %p185 = scmp.eq.s32.totalorder %s21, 1
    %p186 = por %p184, %p185
    %p187 = scmp.ne.s32.totalorder %s178, %s179
    %p188 = scmp.eq.s32.totalorder %s21, 0
    %p189 = por %p187, %p188
    %p190 = scmp.ne.s32.totalorder %s178, %s179
    %p191 = scmp.eq.s32.totalorder %s22, 1
    %p192 = por %p190, %p191
    %p194 = scmp.ne.s32.totalorder %s179, %s193
    %p195 = scmp.eq.s32.totalorder %s22, 0
    %p196 = por %p194, %p195
    %s198 = sadd.s32 %s197, 1
    %p201 = scmp.eq.s32.totalorder %s16, 1
    %p202 = scmp.ne.s32.totalorder %s197, %s199
    %p203 = scmp.eq.s32.totalorder %s16, 0
    %p204 = por %p202, %p203
    %p205 = scmp.ne.s32.totalorder %s197, %s199
    %p206 = scmp.eq.s32.totalorder %s21, 1
    %p207 = por %p205, %p206
    %p208 = scmp.ne.s32.totalorder %s199, %s200
    %p209 = scmp.eq.s32.totalorder %s21, 0
    %p210 = por %p208, %p209
    %p211 = scmp.ne.s32.totalorder %s199, %s200
    %p212 = scmp.eq.s32.totalorder %s22, 1
    %p213 = por %p211, %p212
    %p215 = scmp.ne.s32.totalorder %s200, %s214
    %p216 = scmp.eq.s32.totalorder %s22, 0
    %p217 = por %p215, %p216
    %s219 = sadd.s32 %s218, 1
    %p222 = scmp.eq.s32.totalorder %s16, 1
    %p223 = scmp.ne.s32.totalorder %s218, %s220
    %p224 = scmp.eq.s32.totalorder %s16, 0
    %p225 = por %p223, %p224
    %p226 = scmp.ne.s32.totalorder %s218, %s220
    %p227 = scmp.eq.s32.totalorder %s21, 1
    %p228 = por %p226, %p227
    %p229 = scmp.ne.s32.totalorder %s220, %s221
    %p230 = scmp.eq.s32.totalorder %s21, 0
    %p231 = por %p229, %p230
    %p232 = scmp.ne.s32.totalorder %s220, %s221
    %p233 = scmp.eq.s32.totalorder %s22, 1
    %p234 = por %p232, %p233
    %p236 = scmp.ne.s32.totalorder %s221, %s235
    %p237 = scmp.eq.s32.totalorder %s22, 0
    %p238 = por %p236, %p237
    %s239 = ssub.s32 %s16, %s23
    %p240 = scmp.eq.s32.totalorder %s239, 0
    %s242 = sadd.s32 %s241, 1
    %s243 = scalar_select %p240, %s241, %s242
    %p246 = pneg %p240
    %p247 = scmp.eq.s32.totalorder %s16, 1
    %p248 = por %p246, %p247
    %p249 = scmp.ne.s32.totalorder %s241, %s244
    %p250 = scmp.eq.s32.totalorder %s16, 0
    %p251 = por %p249, %p250
    %p252 = scmp.ne.s32.totalorder %s241, %s244
    %p253 = scmp.eq.s32.totalorder %s21, 1
    %p254 = por %p252, %p253
    %p255 = scmp.ne.s32.totalorder %s244, %s245
    %p256 = scmp.eq.s32.totalorder %s21, 0
    %p257 = por %p255, %p256
    %p258 = scmp.ne.s32.totalorder %s244, %s245
    %p259 = scmp.eq.s32.totalorder %s22, 1
    %p260 = por %p258, %p259
    %p262 = scmp.ne.s32.totalorder %s245, %s261
    %p263 = scmp.eq.s32.totalorder %s22, 0
    %p264 = por %p262, %p263
    %p265 = scmp.le.s32.totalorder 1, %s16
    %p266 = scmp.lt.s32.totalorder %s16, 3
    %p267 = pnand %p265, %p266
    %p268 = pneg %p267
    // Predicated region
    $region9: #{generator_forward.7} parent=5 // pred_check
      _
    $region10: #{generator_forward.7} parent=5 // pred_check_branch
      %270 = sbr.rel (%p267) target = $region12
    $region11: #{generator_forward.7} parent=5 // pred_region
      %s271 = ssub.s32 %s16, 1
      // Predicated region
      $region13: #{generator_forward.7} parent=11 // pred_check
        %p272 = pneg %p63
      $region14: #{generator_forward.7} parent=11 // pred_check_branch
        %274 = sbr.rel (%p272) target = $region16
      $region15: #{generator_forward.7} parent=11 // pred_region
        _
      $region16: #{generator_forward.7} parent=11 // pred_fallthru
        _
      // Predicated region
      $region17: #{generator_forward.7} parent=11 // pred_check
        %p275 = pneg %p84
      $region18: #{generator_forward.7} parent=11 // pred_check_branch
        %277 = sbr.rel (%p275) target = $region20
      $region19: #{generator_forward.7} parent=11 // pred_region
        _
      $region20: #{generator_forward.7} parent=11 // pred_fallthru
        _
      // Predicated region
      $region21: #{generator_forward.7} parent=11 // pred_check
        %p278 = pneg %p105
      $region22: #{generator_forward.7} parent=11 // pred_check_branch
        %280 = sbr.rel (%p278) target = $region24
      $region23: #{generator_forward.7} parent=11 // pred_region
        _
      $region24: #{generator_forward.7} parent=11 // pred_fallthru
        _
      // Predicated region
      $region25: #{generator_forward.7} parent=11 // pred_check
        %p281 = pneg %p126
      $region26: #{generator_forward.7} parent=11 // pred_check_branch
        %283 = sbr.rel (%p281) target = $region28
      $region27: #{generator_forward.7} parent=11 // pred_region
        _
      $region28: #{generator_forward.7} parent=11 // pred_fallthru
        _
      // Predicated region
      $region29: #{generator_forward.7} parent=11 // pred_check
        %p284 = pneg %p147
      $region30: #{generator_forward.7} parent=11 // pred_check_branch
        %286 = sbr.rel (%p284) target = $region32
      $region31: #{generator_forward.7} parent=11 // pred_region
        _
      $region32: #{generator_forward.7} parent=11 // pred_fallthru
        _
      // Predicated region
      $region33: #{generator_forward.7} parent=11 // pred_check
        %p287 = pneg %p168
      $region34: #{generator_forward.7} parent=11 // pred_check_branch
        %289 = sbr.rel (%p287) target = $region36
      $region35: #{generator_forward.7} parent=11 // pred_region
        _
      $region36: #{generator_forward.7} parent=11 // pred_fallthru
        _
      // Predicated region
      $region37: #{generator_forward.7} parent=11 // pred_check
        %p290 = pneg %p189
      $region38: #{generator_forward.7} parent=11 // pred_check_branch
        %292 = sbr.rel (%p290) target = $region40
      $region39: #{generator_forward.7} parent=11 // pred_region
        _
      $region40: #{generator_forward.7} parent=11 // pred_fallthru
        _
      // Predicated region
      $region41: #{generator_forward.7} parent=11 // pred_check
        %p293 = pneg %p210
      $region42: #{generator_forward.7} parent=11 // pred_check_branch
        %295 = sbr.rel (%p293) target = $region44
      $region43: #{generator_forward.7} parent=11 // pred_region
        _
      $region44: #{generator_forward.7} parent=11 // pred_fallthru
        _
      // Predicated region
      $region45: #{generator_forward.7} parent=11 // pred_check
        %p296 = pneg %p231
      $region46: #{generator_forward.7} parent=11 // pred_check_branch
        %298 = sbr.rel (%p296) target = $region48
      $region47: #{generator_forward.7} parent=11 // pred_region
        _
      $region48: #{generator_forward.7} parent=11 // pred_fallthru
        _
    $region12: #{generator_forward.7} parent=5 // pred_fallthru
      _
    %p299 = scmp.lt.s32.totalorder %s16, 2
    // Predicated region
    $region49: #{generator_forward.7} parent=5 // pred_check
      %p300 = pneg %p299
    $region50: #{generator_forward.7} parent=5 // pred_check_branch
      %302 = sbr.rel (%p300) target = $region52
    $region51: #{generator_forward.7} parent=5 // pred_region
      // Predicated region
      $region53: #{generator_forward.7} parent=51 // pred_check
        %p303 = pneg %p36
      $region54: #{generator_forward.7} parent=51 // pred_check_branch
        %305 = sbr.rel (%p303) target = $region56
      $region55: #{generator_forward.7} parent=51 // pred_region
        %p306 = scmp.lt.s32.totalorder %s16, 1
        %s307 = scalar_select %p306, %s16, 1
        %s308 = smul.addr %s307, 2
        %s309 = smul.addr %s308, 8
        %s310 = scalar_lea.vmem %s0, %s309
      $region56: #{generator_forward.7} parent=51 // pred_fallthru
        _
    $region52: #{generator_forward.7} parent=5 // pred_fallthru
      _
    %p311 = scmp.le.s32.totalorder 1, %s16
    %p312 = scmp.lt.s32.totalorder %s16, 3
    %p313 = pnand %p311, %p312
    %p314 = pneg %p313
    // Predicated region
    $region57: #{generator_forward.7} parent=5 // pred_check
      _
    $region58: #{generator_forward.7} parent=5 // pred_check_branch
      %316 = sbr.rel (%p313) target = $region60
    $region59: #{generator_forward.7} parent=5 // pred_region
      %s317 = ssub.s32 %s16, 1
      %p318 = scmp.lt.s32.totalorder %s21, 1
      %s319 = scalar_select %p318, %s21, 1
      %s320 = smul.addr %s319, 2
      %s321 = smul.addr %s320, 8
      %s322 = scalar_lea.vmem %s0, %s321
      %p323 = pneg %p42
      %p324 = pneg %p39
      %p325 = pneg %p63
      %p326 = pneg %p60
      %p327 = pneg %p84
      %p328 = pneg %p81
      %p329 = pneg %p105
      %p330 = pneg %p102
      %p331 = pneg %p126
      %p332 = pneg %p123
      %p333 = pneg %p147
      %p334 = pneg %p144
      %p335 = pneg %p168
      %p336 = pneg %p165
      %p337 = pneg %p189
      %p338 = pneg %p186
      %p339 = pneg %p210
      %p340 = pneg %p207
      %p341 = pneg %p231
      %p342 = pneg %p228
      %p343 = pneg %p257
      %p344 = pneg %p254
      %p345 = scmp.lt.s32.totalorder %s21, 1
      %s346 = scalar_select %p345, %s21, 1
      %s347 = smul.addr %s346, 6
      %s348 = smul.addr %s347, 8
      %s349 = scalar_lea.vmem %s10, %s348
      %p350 = scmp.lt.s32.totalorder %s21, 1
      %s351 = scalar_select %p350, %s21, 1
      %s352 = smul.addr %s351, 2
      %s353 = smul.addr %s352, 8
      %s354 = scalar_lea.vmem %s0, %s353
      %p355 = scmp.lt.s32.totalorder %s21, 1
      %s356 = scalar_select %p355, %s21, 1
      %s357 = smul.addr %s356, 6
      %s358 = smul.addr %s357, 8
      %s359 = scalar_lea.vmem %s10, %s358
      %v361 = vld [vmem:[%s354] sm:$0xff]
      %v362 = vld [vmem:[%s354 + $0x8] sm:$0xff]
      %v363 = vld [vmem:[%s2] sm:$0xf]
      %v364 = vld [vmem:[%s2 + $0x4] sm:$0xf]
      %v365 = vld [vmem:[%s2 + $0x8] sm:$0xf]
      %v366 = vld [vmem:[%s2 + $0xc] sm:$0xf]
      %v367 = vld [vmem:[%s2 + $0x10] sm:$0xf]
      %v368 = vld [vmem:[%s2 + $0x14] sm:$0xf]
      %v369 = vld [vmem:[%s2 + $0x18] sm:$0xf]
      %v370 = vld [vmem:[%s2 + $0x1c] sm:$0xf]
      %v371 = vld [vmem:[%s2 + $0x20] sm:$0xf]
      %v372 = vld [vmem:[%s2 + $0x24] sm:$0xf]
      %v373 = vld [vmem:[%s2 + $0x28] sm:$0xf]
      %v374 = vld [vmem:[%s2 + $0x2c] sm:$0xf]
      %v375 = vld [vmem:[%s2 + $0x30] sm:$0xf]
      %v376 = vld [vmem:[%s2 + $0x34] sm:$0xf]
      %v377 = vld [vmem:[%s2 + $0x38] sm:$0xf]
      %v378 = vld [vmem:[%s2 + $0x3c] sm:$0xf]
      %v379 = vld [vmem:[%s3] sm:$0x1]
      %v380 = vld [vmem:[%s4] sm:$0xf]
      %v381 = vld [vmem:[%s4 + $0x4] sm:$0xf]
      %v382 = vld [vmem:[%s4 + $0x8] sm:$0xf]
      %v383 = vld [vmem:[%s4 + $0xc] sm:$0xf]
      %v384 = vld [vmem:[%s4 + $0x10] sm:$0xf]
      %v385 = vld [vmem:[%s4 + $0x14] sm:$0xf]
      %v386 = vld [vmem:[%s4 + $0x18] sm:$0xf]
      %v387 = vld [vmem:[%s4 + $0x1c] sm:$0xf]
      %v388 = vld [vmem:[%s4 + $0x20] sm:$0xf]
      %v389 = vld [vmem:[%s4 + $0x24] sm:$0xf]
      %v390 = vld [vmem:[%s4 + $0x28] sm:$0xf]
      %v391 = vld [vmem:[%s4 + $0x2c] sm:$0xf]
      %v392 = vld [vmem:[%s4 + $0x30] sm:$0xf]
      %v393 = vld [vmem:[%s4 + $0x34] sm:$0xf]
      %v394 = vld [vmem:[%s4 + $0x38] sm:$0xf]
      %v395 = vld [vmem:[%s4 + $0x3c] sm:$0xf]
      %v396 = vld [vmem:[%s5] sm:$0x1]
      %v397 = vld [vmem:[%s6] sm:$0xf]
      %v398 = vld [vmem:[%s6 + $0x4] sm:$0xf]
      %v399 = vld [vmem:[%s6 + $0x8] sm:$0xf]
      %v400 = vld [vmem:[%s6 + $0xc] sm:$0xf]
      %v401 = vld [vmem:[%s6 + $0x10] sm:$0xf]
      %v402 = vld [vmem:[%s6 + $0x14] sm:$0xf]
      %v403 = vld [vmem:[%s6 + $0x18] sm:$0xf]
      %v404 = vld [vmem:[%s6 + $0x1c] sm:$0xf]
      %v405 = vld [vmem:[%s6 + $0x20] sm:$0xf]
      %v406 = vld [vmem:[%s6 + $0x24] sm:$0xf]
      %v407 = vld [vmem:[%s6 + $0x28] sm:$0xf]
      %v408 = vld [vmem:[%s6 + $0x2c] sm:$0xf]
      %v409 = vld [vmem:[%s6 + $0x30] sm:$0xf]
      %v410 = vld [vmem:[%s6 + $0x34] sm:$0xf]
      %v411 = vld [vmem:[%s6 + $0x38] sm:$0xf]
      %v412 = vld [vmem:[%s6 + $0x3c] sm:$0xf]
      %v413 = vld [vmem:[%s7] sm:$0x1]
      %v414 = vld [vmem:[%s8] sm:$0xff]
      %v415 = vld [vmem:[%s8 + $0x8] sm:$0xff]
      %v416 = vld [vmem:[%s8 + $0x10] sm:$0xff]
      %v417 = vld [vmem:[%s8 + $0x18] sm:$0xff]
      %v418 = vld [vmem:[%s8 + $0x20] sm:$0xff]
      %v419 = vld [vmem:[%s8 + $0x28] sm:$0xff]
      %v420 = vld [vmem:[%s8 + $0x30] sm:$0xff]
      %v421 = vld [vmem:[%s8 + $0x38] sm:$0xff]
      %v422 = vld [vmem:[%s8 + $0x40] sm:$0xff]
      %v423 = vld [vmem:[%s8 + $0x48] sm:$0xff]
      %v424 = vld [vmem:[%s8 + $0x50] sm:$0xff]
      %v425 = vld [vmem:[%s8 + $0x58] sm:$0xff]
      %v426 = vld [vmem:[%s8 + $0x60] sm:$0xff]
      %v427 = vld [vmem:[%s8 + $0x68] sm:$0xff]
      %v428 = vld [vmem:[%s8 + $0x70] sm:$0xff]
      %v429 = vld [vmem:[%s8 + $0x78] sm:$0xff]
      %v430 = vld [vmem:[%s8 + $0x80] sm:$0xff]
      %v431 = vld [vmem:[%s8 + $0x88] sm:$0xff]
      %v432 = vld [vmem:[%s8 + $0x90] sm:$0xff]
      %v433 = vld [vmem:[%s8 + $0x98] sm:$0xff]
      %v434 = vld [vmem:[%s8 + $0xa0] sm:$0xff]
      %v435 = vld [vmem:[%s8 + $0xa8] sm:$0xff]
      %v436 = vld [vmem:[%s8 + $0xb0] sm:$0xff]
      %v437 = vld [vmem:[%s8 + $0xb8] sm:$0xff]
      %v438 = vld [vmem:[%s8 + $0xc0] sm:$0xff]
      %v439 = vld [vmem:[%s8 + $0xc8] sm:$0xff]
      %v440 = vld [vmem:[%s8 + $0xd0] sm:$0xff]
      %v441 = vld [vmem:[%s8 + $0xd8] sm:$0xff]
      %v442 = vld [vmem:[%s8 + $0xe0] sm:$0xff]
      %v443 = vld [vmem:[%s8 + $0xe8] sm:$0xff]
      %v444 = vld [vmem:[%s8 + $0xf0] sm:$0xff]
      %v445 = vld [vmem:[%s8 + $0xf8] sm:$0xff]
      %v446 = vld [vmem:[%s9] sm:$0xf]
      %v447 = vpack.c.bf16 %v362, %v361
      %v449 = vlaneseq
      %v450 = vshrl.u32 %v449, 7
      %v451 = vsub.s32 0, %v450
      %v452 = vrot.slane %v379, %v451
      %v470 = vunpack.c.l.b16 %v363
      %v471 = vunpack.c.l.b16 %v364
      %v472 = vunpack.c.l.b16 %v365
      %v473 = vunpack.c.l.b16 %v366
      %v474 = vunpack.c.l.b16 %v367
      %v475 = vunpack.c.l.b16 %v368
      %v476 = vunpack.c.l.b16 %v369
      %v477 = vunpack.c.l.b16 %v370
      %v478 = vunpack.c.l.b16 %v371
      %v479 = vunpack.c.l.b16 %v372
      %v480 = vunpack.c.l.b16 %v373
      %v481 = vunpack.c.l.b16 %v374
      %v482 = vunpack.c.l.b16 %v375
      %v483 = vunpack.c.l.b16 %v376
      %v484 = vunpack.c.l.b16 %v377
      %v485 = vunpack.c.l.b16 %v378
      %v486 = vpack.c.b16 %v471, %v470
      %v487 = vpack.c.b16 %v473, %v472
      %v488 = vpack.c.b16 %v475, %v474
      %v489 = vpack.c.b16 %v477, %v476
      %v490 = vpack.c.b16 %v479, %v478
      %v491 = vpack.c.b16 %v481, %v480
      %v492 = vpack.c.b16 %v483, %v482
      %v493 = vpack.c.b16 %v485, %v484
      %502 = vmatprep.subr.bf16.mxu0 0
      %503 = vmatpush1.bf16.msra.mxu0 %v486
      %504 = vmatprep.subr.bf16.mxu0 0
      %505 = vmatpush1.bf16.msra.mxu0 %v487
      %506 = vmatprep.subr.bf16.mxu0 0
      %507 = vmatpush1.bf16.msra.mxu0 %v488
      %508 = vmatprep.subr.bf16.mxu0 0
      %509 = vmatpush1.bf16.msra.mxu0 %v489
      %510 = vmatprep.subr.bf16.mxu0 0
      %511 = vmatpush1.bf16.msra.mxu0 %v490
      %512 = vmatprep.subr.bf16.mxu0 0
      %513 = vmatpush1.bf16.msra.mxu0 %v491
      %514 = vmatprep.subr.bf16.mxu0 0
      %515 = vmatpush1.bf16.msra.mxu0 %v492
      %516 = vmatprep.subr.bf16.mxu0 0
      %517 = vmatpush1.bf16.msra.mxu0 %v493
      %518 = vmatprep.subr.bf16.mxu0 0
      %519 = vmatpush1.bf16.msra.mxu0 0
      %520 = vmatprep.subr.bf16.mxu0 0
      %521 = vmatpush1.bf16.msra.mxu0 0
      %522 = vmatprep.subr.bf16.mxu0 0
      %523 = vmatpush1.bf16.msra.mxu0 0
      %524 = vmatprep.subr.bf16.mxu0 0
      %525 = vmatpush1.bf16.msra.mxu0 0
      %526 = vmatprep.subr.bf16.mxu0 0
      %527 = vmatpush1.bf16.msra.mxu0 0
      %528 = vmatprep.subr.bf16.mxu0 0
      %529 = vmatpush1.bf16.msra.mxu0 0
      %530 = vmatprep.subr.bf16.mxu0 0
      %531 = vmatpush1.bf16.msra.mxu0 0
      %532 = vmatprep.subr.bf16.mxu0 0
      %533 = vmatpush1.bf16.msra.mxu0 0
      %534 = vmatprep.mubr.bf16.mxu0 0
      %535 = vmatmul.mubr.bf16.gmra.mrb[0].mxu0 %v447
      %v536 = vpop.f32.mrb[0].mxu0
      %v537 = vadd.f32 %v452, %v536
      %v538 = vpop.f32.mrb[0].mxu0
      %v539 = vpop.f32.mrb[0].mxu0
      %v540 = vadd.f32 %v452, %v539
      %v541 = vpop.f32.mrb[0].mxu0
      %542 = vdwg.mxu0
      %vm543 = vcmp.gt.f32.partialorder %v537, 0.0
      %vm544 = vcmp.gt.f32.partialorder %v540, 0.0
      %v545 = vmul.f32 %v537, 0.2
      %v546 = vmul.f32 %v540, 0.2
      %v547 = vsel %vm543, %v537, %v545
      %v548 = vsel %vm544, %v540, %v546
      %v549 = vpack.c.bf16 %v548, %v547
      %v551 = vlaneseq
      %v552 = vshrl.u32 %v551, 7
      %v553 = vsub.s32 0, %v552
      %v554 = vrot.slane %v396, %v553
      %v572 = vunpack.c.l.b16 %v380
      %v573 = vunpack.c.l.b16 %v381
      %v574 = vunpack.c.l.b16 %v382
      %v575 = vunpack.c.l.b16 %v383
      %v576 = vunpack.c.l.b16 %v384
      %v577 = vunpack.c.l.b16 %v385
      %v578 = vunpack.c.l.b16 %v386
      %v579 = vunpack.c.l.b16 %v387
      %v580 = vunpack.c.l.b16 %v388
      %v581 = vunpack.c.l.b16 %v389
      %v582 = vunpack.c.l.b16 %v390
      %v583 = vunpack.c.l.b16 %v391
      %v584 = vunpack.c.l.b16 %v392
      %v585 = vunpack.c.l.b16 %v393
      %v586 = vunpack.c.l.b16 %v394
      %v587 = vunpack.c.l.b16 %v395
      %v588 = vpack.c.b16 %v573, %v572
      %v589 = vpack.c.b16 %v575, %v574
      %v590 = vpack.c.b16 %v577, %v576
      %v591 = vpack.c.b16 %v579, %v578
      %v592 = vpack.c.b16 %v581, %v580
      %v593 = vpack.c.b16 %v583, %v582
      %v594 = vpack.c.b16 %v585, %v584
      %v595 = vpack.c.b16 %v587, %v586
      %604 = vmatprep.subr.bf16.mxu0 0
      %605 = vmatpush1.bf16.msra.mxu0 %v588
      %606 = vmatprep.subr.bf16.mxu0 0
      %607 = vmatpush1.bf16.msra.mxu0 %v589
      %608 = vmatprep.subr.bf16.mxu0 0
      %609 = vmatpush1.bf16.msra.mxu0 %v590
      %610 = vmatprep.subr.bf16.mxu0 0
      %611 = vmatpush1.bf16.msra.mxu0 %v591
      %612 = vmatprep.subr.bf16.mxu0 0
      %613 = vmatpush1.bf16.msra.mxu0 %v592
      %614 = vmatprep.subr.bf16.mxu0 0
      %615 = vmatpush1.bf16.msra.mxu0 %v593
      %616 = vmatprep.subr.bf16.mxu0 0
      %617 = vmatpush1.bf16.msra.mxu0 %v594
      %618 = vmatprep.subr.bf16.mxu0 0
      %619 = vmatpush1.bf16.msra.mxu0 %v595
      %620 = vmatprep.subr.bf16.mxu0 0
      %621 = vmatpush1.bf16.msra.mxu0 0
      %622 = vmatprep.subr.bf16.mxu0 0
      %623 = vmatpush1.bf16.msra.mxu0 0
      %624 = vmatprep.subr.bf16.mxu0 0
      %625 = vmatpush1.bf16.msra.mxu0 0
      %626 = vmatprep.subr.bf16.mxu0 0
      %627 = vmatpush1.bf16.msra.mxu0 0
      %628 = vmatprep.subr.bf16.mxu0 0
      %629 = vmatpush1.bf16.msra.mxu0 0
      %630 = vmatprep.subr.bf16.mxu0 0
      %631 = vmatpush1.bf16.msra.mxu0 0
      %632 = vmatprep.subr.bf16.mxu0 0
      %633 = vmatpush1.bf16.msra.mxu0 0
      %634 = vmatprep.subr.bf16.mxu0 0
      %635 = vmatpush1.bf16.msra.mxu0 0
      %636 = vmatprep.mubr.bf16.mxu0 0
      %637 = vmatmul.mubr.bf16.gmra.mrb[0].mxu0 %v549
      %v638 = vpop.f32.mrb[0].mxu0
      %v639 = vadd.f32 %v554, %v638
      %v640 = vpop.f32.mrb[0].mxu0
      %v641 = vpop.f32.mrb[0].mxu0
      %v642 = vadd.f32 %v554, %v641
      %v643 = vpop.f32.mrb[0].mxu0
      %644 = vdwg.mxu0
      %vm645 = vcmp.gt.f32.partialorder %v639, 0.0
      %vm646 = vcmp.gt.f32.partialorder %v642, 0.0
      %v647 = vmul.f32 %v639, 0.2
      %v648 = vmul.f32 %v642, 0.2
      %v649 = vsel %vm645, %v639, %v647
      %v650 = vsel %vm646, %v642, %v648
      %v651 = vpack.c.bf16 %v650, %v649
      %v653 = vlaneseq
      %v654 = vshrl.u32 %v653, 7
      %v655 = vsub.s32 0, %v654
      %v656 = vrot.slane %v413, %v655
      %v674 = vunpack.c.l.b16 %v397
      %v675 = vunpack.c.l.b16 %v398
      %v676 = vunpack.c.l.b16 %v399
      %v677 = vunpack.c.l.b16 %v400
      %v678 = vunpack.c.l.b16 %v401
      %v679 = vunpack.c.l.b16 %v402
      %v680 = vunpack.c.l.b16 %v403
      %v681 = vunpack.c.l.b16 %v404
      %v682 = vunpack.c.l.b16 %v405
      %v683 = vunpack.c.l.b16 %v406
      %v684 = vunpack.c.l.b16 %v407
      %v685 = vunpack.c.l.b16 %v408
      %v686 = vunpack.c.l.b16 %v409
      %v687 = vunpack.c.l.b16 %v410
      %v688 = vunpack.c.l.b16 %v411
      %v689 = vunpack.c.l.b16 %v412
      %v690 = vpack.c.b16 %v675, %v674
      %v691 = vpack.c.b16 %v677, %v676
      %v692 = vpack.c.b16 %v679, %v678
      %v693 = vpack.c.b16 %v681, %v680
      %v694 = vpack.c.b16 %v683, %v682
      %v695 = vpack.c.b16 %v685, %v684
      %v696 = vpack.c.b16 %v687, %v686
      %v697 = vpack.c.b16 %v689, %v688
      %706 = vmatprep.subr.bf16.mxu0 0
      %707 = vmatpush1.bf16.msra.mxu0 %v690
      %708 = vmatprep.subr.bf16.mxu0 0
      %709 = vmatpush1.bf16.msra.mxu0 %v691
      %710 = vmatprep.subr.bf16.mxu0 0
      %711 = vmatpush1.bf16.msra.mxu0 %v692
      %712 = vmatprep.subr.bf16.mxu0 0
      %713 = vmatpush1.bf16.msra.mxu0 %v693
      %714 = vmatprep.subr.bf16.mxu0 0
      %715 = vmatpush1.bf16.msra.mxu0 %v694
      %716 = vmatprep.subr.bf16.mxu0 0
      %717 = vmatpush1.bf16.msra.mxu0 %v695
      %718 = vmatprep.subr.bf16.mxu0 0
      %719 = vmatpush1.bf16.msra.mxu0 %v696
      %720 = vmatprep.subr.bf16.mxu0 0
      %721 = vmatpush1.bf16.msra.mxu0 %v697
      %722 = vmatprep.subr.bf16.mxu0 0
      %723 = vmatpush1.bf16.msra.mxu0 0
      %724 = vmatprep.subr.bf16.mxu0 0
      %725 = vmatpush1.bf16.msra.mxu0 0
      %726 = vmatprep.subr.bf16.mxu0 0
      %727 = vmatpush1.bf16.msra.mxu0 0
      %728 = vmatprep.subr.bf16.mxu0 0
      %729 = vmatpush1.bf16.msra.mxu0 0
      %730 = vmatprep.subr.bf16.mxu0 0
      %731 = vmatpush1.bf16.msra.mxu0 0
      %732 = vmatprep.subr.bf16.mxu0 0
      %733 = vmatpush1.bf16.msra.mxu0 0
      %734 = vmatprep.subr.bf16.mxu0 0
      %735 = vmatpush1.bf16.msra.mxu0 0
      %736 = vmatprep.subr.bf16.mxu0 0
      %737 = vmatpush1.bf16.msra.mxu0 0
      %738 = vmatprep.mubr.bf16.mxu0 0
      %739 = vmatmul.mubr.bf16.gmra.mrb[0].mxu0 %v651
      %v740 = vpop.f32.mrb[0].mxu0
      %v741 = vadd.f32 %v656, %v740
      %v742 = vpop.f32.mrb[0].mxu0
      %v743 = vpop.f32.mrb[0].mxu0
      %v744 = vadd.f32 %v656, %v743
      %v745 = vpop.f32.mrb[0].mxu0
      %746 = vdwg.mxu0
      %vm747 = vcmp.gt.f32.partialorder %v741, 0.0
      %vm748 = vcmp.gt.f32.partialorder %v744, 0.0
      %v749 = vmul.f32 %v741, 0.2
      %v750 = vmul.f32 %v744, 0.2
      %v751 = vsel %vm747, %v741, %v749
      %v752 = vsel %vm748, %v744, %v750
      %v753 = vpack.c.bf16 %v752, %v751
      %v755 = vlaneseq
      %v756 = vshrl.u32 %v755, 7
      %v757 = vsub.s32 0, %v756
      %v758 = vrot.slane %v446, %v757
      %v759 = vlaneseq
      %v760 = vshrl.u32 %v759, 7
      %v761 = vsub.s32 1, %v760
      %v762 = vrot.slane %v446, %v761
      %v763 = vlaneseq
      %v764 = vshrl.u32 %v763, 7
      %v765 = vsub.s32 2, %v764
      %v766 = vrot.slane %v446, %v765
      %v767 = vlaneseq
      %v768 = vshrl.u32 %v767, 7
      %v769 = vsub.s32 3, %v768
      %v770 = vrot.slane %v446, %v769
      %v807 = vunpack.c.l.b16 %v414
      %v808 = vunpack.c.h.b16 %v414
      %v809 = vunpack.c.l.b16 %v415
      %v810 = vunpack.c.h.b16 %v415
      %v811 = vunpack.c.l.b16 %v416
      %v812 = vunpack.c.h.b16 %v416
      %v813 = vunpack.c.l.b16 %v417
      %v814 = vunpack.c.h.b16 %v417
      %v815 = vunpack.c.l.b16 %v418
      %v816 = vunpack.c.h.b16 %v418
      %v817 = vunpack.c.l.b16 %v419
      %v818 = vunpack.c.h.b16 %v419
      %v819 = vunpack.c.l.b16 %v420
      %v820 = vunpack.c.h.b16 %v420
      %v821 = vunpack.c.l.b16 %v421
      %v822 = vunpack.c.h.b16 %v421
      %v823 = vunpack.c.l.b16 %v422
      %v824 = vunpack.c.h.b16 %v422
      %v825 = vunpack.c.l.b16 %v423
      %v826 = vunpack.c.h.b16 %v423
      %v827 = vunpack.c.l.b16 %v424
      %v828 = vunpack.c.h.b16 %v424
      %v829 = vunpack.c.l.b16 %v425
      %v830 = vunpack.c.h.b16 %v425
      %v831 = vunpack.c.l.b16 %v426
      %v832 = vunpack.c.h.b16 %v426
      %v833 = vunpack.c.l.b16 %v427
      %v834 = vunpack.c.h.b16 %v427
      %v835 = vunpack.c.l.b16 %v428
      %v836 = vunpack.c.h.b16 %v428
      %v837 = vunpack.c.l.b16 %v429
      %v838 = vunpack.c.h.b16 %v429
      %v839 = vunpack.c.l.b16 %v430
      %v840 = vunpack.c.h.b16 %v430
      %v841 = vunpack.c.l.b16 %v431
      %v842 = vunpack.c.h.b16 %v431
      %v843 = vunpack.c.l.b16 %v432
      %v844 = vunpack.c.h.b16 %v432
      %v845 = vunpack.c.l.b16 %v433
      %v846 = vunpack.c.h.b16 %v433
      %v847 = vunpack.c.l.b16 %v434
      %v848 = vunpack.c.h.b16 %v434
      %v849 = vunpack.c.l.b16 %v435
      %v850 = vunpack.c.h.b16 %v435
      %v851 = vunpack.c.l.b16 %v436
      %v852 = vunpack.c.h.b16 %v436
      %v853 = vunpack.c.l.b16 %v437
      %v854 = vunpack.c.h.b16 %v437
      %v855 = vunpack.c.l.b16 %v438
      %v856 = vunpack.c.h.b16 %v438
      %v857 = vunpack.c.l.b16 %v439
      %v858 = vunpack.c.h.b16 %v439
      %v859 = vunpack.c.l.b16 %v440
      %v860 = vunpack.c.h.b16 %v440
      %v861 = vunpack.c.l.b16 %v441
      %v862 = vunpack.c.h.b16 %v441
      %v863 = vunpack.c.l.b16 %v442
      %v864 = vunpack.c.h.b16 %v442
      %v865 = vunpack.c.l.b16 %v443
      %v866 = vunpack.c.h.b16 %v443
      %v867 = vunpack.c.l.b16 %v444
      %v868 = vunpack.c.h.b16 %v444
      %v869 = vunpack.c.l.b16 %v445
      %v870 = vunpack.c.h.b16 %v445
      %v871 = vpack.c.b16 %v811, %v807
      %v872 = vpack.c.b16 %v812, %v808
      %v873 = vpack.c.b16 %v813, %v809
      %v874 = vpack.c.b16 %v814, %v810
      %v875 = vpack.c.b16 %v819, %v815
      %v876 = vpack.c.b16 %v820, %v816
      %v877 = vpack.c.b16 %v821, %v817
      %v878 = vpack.c.b16 %v822, %v818
      %v879 = vpack.c.b16 %v827, %v823
      %v880 = vpack.c.b16 %v828, %v824
      %v881 = vpack.c.b16 %v829, %v825
      %v882 = vpack.c.b16 %v830, %v826
      %v883 = vpack.c.b16 %v835, %v831
      %v884 = vpack.c.b16 %v836, %v832
      %v885 = vpack.c.b16 %v837, %v833
      %v886 = vpack.c.b16 %v838, %v834
      %v887 = vpack.c.b16 %v843, %v839
      %v888 = vpack.c.b16 %v844, %v840
      %v889 = vpack.c.b16 %v845, %v841
      %v890 = vpack.c.b16 %v846, %v842
      %v891 = vpack.c.b16 %v851, %v847
      %v892 = vpack.c.b16 %v852, %v848
      %v893 = vpack.c.b16 %v853, %v849
      %v894 = vpack.c.b16 %v854, %v850
      %v895 = vpack.c.b16 %v859, %v855
      %v896 = vpack.c.b16 %v860, %v856
      %v897 = vpack.c.b16 %v861, %v857
      %v898 = vpack.c.b16 %v862, %v858
      %v899 = vpack.c.b16 %v867, %v863
      %v900 = vpack.c.b16 %v868, %v864
      %v901 = vpack.c.b16 %v869, %v865
      %v902 = vpack.c.b16 %v870, %v866
      %935 = vmatprep.subr.bf16.mxu0 %v872
      %936 = vmatpush1.bf16.msra.mxu0 %v871
      %937 = vmatprep.subr.bf16.mxu0 %v876
      %938 = vmatpush1.bf16.msra.mxu0 %v875
      %939 = vmatprep.subr.bf16.mxu0 %v880
      %940 = vmatpush1.bf16.msra.mxu0 %v879
      %941 = vmatprep.subr.bf16.mxu0 %v884
      %942 = vmatpush1.bf16.msra.mxu0 %v883
      %943 = vmatprep.subr.bf16.mxu0 %v888
      %944 = vmatpush1.bf16.msra.mxu0 %v887
      %945 = vmatprep.subr.bf16.mxu0 %v892
      %946 = vmatpush1.bf16.msra.mxu0 %v891
      %947 = vmatprep.subr.bf16.mxu0 %v896
      %948 = vmatpush1.bf16.msra.mxu0 %v895
      %949 = vmatprep.subr.bf16.mxu0 %v900
      %950 = vmatpush1.bf16.msra.mxu0 %v899
      %951 = vmatprep.subr.bf16.mxu0 0
      %952 = vmatpush1.bf16.msra.mxu0 0
      %953 = vmatprep.subr.bf16.mxu0 0
      %954 = vmatpush1.bf16.msra.mxu0 0
      %955 = vmatprep.subr.bf16.mxu0 0
      %956 = vmatpush1.bf16.msra.mxu0 0
      %957 = vmatprep.subr.bf16.mxu0 0
      %958 = vmatpush1.bf16.msra.mxu0 0
      %959 = vmatprep.subr.bf16.mxu0 0
      %960 = vmatpush1.bf16.msra.mxu0 0
      %961 = vmatprep.subr.bf16.mxu0 0
      %962 = vmatpush1.bf16.msra.mxu0 0
      %963 = vmatprep.subr.bf16.mxu0 0
      %964 = vmatpush1.bf16.msra.mxu0 0
      %965 = vmatprep.subr.bf16.mxu0 0
      %966 = vmatpush1.bf16.msra.mxu0 0
      %967 = vmatprep.mubr.bf16.mxu0 0
      %968 = vmatmul.mubr.bf16.gmra.mrb[0].mxu0 %v753
      %v969 = vpop.f32.mrb[0].mxu0
      %v970 = vadd.f32 %v758, %v969
      %v971 = vpop.f32.mrb[0].mxu0
      %v972 = vadd.f32 %v762, %v971
      %v973 = vpop.f32.mrb[0].mxu0
      %v974 = vadd.f32 %v758, %v973
      %v975 = vpop.f32.mrb[0].mxu0
      %v976 = vadd.f32 %v762, %v975
      %977 = vdwg.mxu0
      %978 = vmatprep.subr.bf16.mxu0 %v874
      %979 = vmatpush1.bf16.msra.mxu0 %v873
      %980 = vmatprep.subr.bf16.mxu0 %v878
      %981 = vmatpush1.bf16.msra.mxu0 %v877
      %982 = vmatprep.subr.bf16.mxu0 %v882
      %983 = vmatpush1.bf16.msra.mxu0 %v881
      %984 = vmatprep.subr.bf16.mxu0 %v886
      %985 = vmatpush1.bf16.msra.mxu0 %v885
      %986 = vmatprep.subr.bf16.mxu0 %v890
      %987 = vmatpush1.bf16.msra.mxu0 %v889
      %988 = vmatprep.subr.bf16.mxu0 %v894
      %989 = vmatpush1.bf16.msra.mxu0 %v893
      %990 = vmatprep.subr.bf16.mxu0 %v898
      %991 = vmatpush1.bf16.msra.mxu0 %v897
      %992 = vmatprep.subr.bf16.mxu0 %v902
      %993 = vmatpush1.bf16.msra.mxu0 %v901
      %994 = vmatprep.subr.bf16.mxu0 0
      %995 = vmatpush1.bf16.msra.mxu0 0
      %996 = vmatprep.subr.bf16.mxu0 0
      %997 = vmatpush1.bf16.msra.mxu0 0
      %998 = vmatprep.subr.bf16.mxu0 0
      %999 = vmatpush1.bf16.msra.mxu0 0
      %1000 = vmatprep.subr.bf16.mxu0 0
      %1001 = vmatpush1.bf16.msra.mxu0 0
      %1002 = vmatprep.subr.bf16.mxu0 0
      %1003 = vmatpush1.bf16.msra.mxu0 0
      %1004 = vmatprep.subr.bf16.mxu0 0
      %1005 = vmatpush1.bf16.msra.mxu0 0
      %1006 = vmatprep.subr.bf16.mxu0 0
      %1007 = vmatpush1.bf16.msra.mxu0 0
      %1008 = vmatprep.subr.bf16.mxu0 0
      %1009 = vmatpush1.bf16.msra.mxu0 0
      %1010 = vmatprep.mubr.bf16.mxu0 0
      %1011 = vmatmul.mubr.bf16.gmra.mrb[0].mxu0 %v753
      %v1012 = vpop.f32.mrb[0].mxu0
      %v1013 = vadd.f32 %v766, %v1012
      %v1014 = vpop.f32.mrb[0].mxu0
      %v1015 = vadd.f32 %v770, %v1014
      %v1016 = vpop.f32.mrb[0].mxu0
      %v1017 = vadd.f32 %v766, %v1016
      %v1018 = vpop.f32.mrb[0].mxu0
      %v1019 = vadd.f32 %v770, %v1018
      %1020 = vdwg.mxu0
      %v1021 = vld [vmem:[%s1] sm:$0xf]
      %v1023 = vlaneseq
      %v1024 = vshrl.u32 %v1023, 7
      %v1025 = vsub.s32 0, %v1024
      %v1026 = vrot.slane %v1021, %v1025
      %v1027 = vlaneseq
      %v1028 = vshrl.u32 %v1027, 7
      %v1029 = vsub.s32 1, %v1028
      %v1030 = vrot.slane %v1021, %v1029
      %v1031 = vlaneseq
      %v1032 = vshrl.u32 %v1031, 7
      %v1033 = vsub.s32 2, %v1032
      %v1034 = vrot.slane %v1021, %v1033
      %v1035 = vlaneseq
      %v1036 = vshrl.u32 %v1035, 7
      %v1037 = vsub.s32 3, %v1036
      %v1038 = vrot.slane %v1021, %v1037
      %v1043 = vmul.f32 %v970, %v1026
      %v1044 = vmul.f32 %v972, %v1030
      %v1045 = vmul.f32 %v1013, %v1034
      %v1046 = vmul.f32 %v1015, %v1038
      %v1047 = vmul.f32 %v974, %v1026
      %v1048 = vmul.f32 %v976, %v1030
      %v1049 = vmul.f32 %v1017, %v1034
      %v1050 = vmul.f32 %v1019, %v1038
      %v1053 = vcombine.low %v1043, %v1044
      %v1055 = vunpack.c.l.s4 1966171168
      %v1056 = vunpack.c.0.s8 %v1055
      %v1057 = vlaneseq
      %v1058 = vshrl.u32 %v1057, 7
      %v1059 = vsub.s32 %v1056, %v1058
      %v1060 = vrot.slane %v1053, %v1059
      %v1062 = vunpack.c.l.s4 1966171168
      %v1063 = vunpack.c.0.s8 %v1062
      %v1064 = vlaneseq
      %v1065 = vshrl.u32 %v1064, 7
      %v1066 = vsub.s32 %v1063, %v1065
      %v1067 = vrot.slane %v1060, %v1066
      %v1069 = vlaneseq
      %vm1070 = vcmp.ge.s32.totalorder %v1069, 0
      %vm1071 = vcmp.lt.s32.totalorder %v1069, 256
      %vm1072 = vmand %vm1070, %vm1071
      %1073 = vst.msk [vmem:[%s359] ss:$8 sm:$0x3] %vm1072, %v1067
      %1074 = vst.msk [vmem:[%s359] ss:$8 sm:$0x0] %vm1072, %v1067
      %vm1079 = vcmask 1040384
      %v1080 = vrot.slane %v1045, 7
      %v1081 = vrot.slane %v1046, 7
      %v1082 = vrot.slane %v1049, 7
      %v1083 = vsel %vm1079, %v1080, %v1082
      %v1084 = vrot.slane %v1050, 7
      %v1085 = vsel %vm1079, %v1081, %v1084
      %v1090 = vadd.f32 %v1043, %v1080
      %v1091 = vadd.f32 %v1044, %v1081
      %v1092 = vadd.f32 %v1047, %v1083
      %v1093 = vadd.f32 %v1048, %v1085
      %1094 = vst [vmem:[%s359] sm:$0xfe] %v1090
      %1095 = vst [vmem:[%s359 + $0x8] sm:$0xfe] %v1091
      %1096 = vst [vmem:[%s359 + $0x10] sm:$0xff] %v1092
      %1097 = vst [vmem:[%s359 + $0x18] sm:$0xff] %v1093
      %v1098 = vcombine.high %v1049, %v1050
      %v1100 = vunpack.c.l.s4 1966171168
      %v1101 = vunpack.c.0.s8 %v1100
      %v1102 = vlaneseq
      %v1103 = vshrl.u32 %v1102, 7
      %v1104 = vsub.s32 %v1101, %v1103
      %v1105 = vrot.slane %v1098, %v1104
      %v1106 = vcombine.high %v1105, %v1105
      %v1108 = vunpack.c.l.s4 1966171168
      %v1109 = vunpack.c.0.s8 %v1108
      %v1110 = vlaneseq
      %v1111 = vshrl.u32 %v1110, 7
      %v1112 = vsub.s32 %v1109, %v1111
      %v1113 = vrot.slane %v1106, %v1112
      %v1114 = vcombine.high %v1113, %v1113
      %s1116 = scalar_lea.vmem %s359, 32
      %1117 = vst.msk [vmem:[%s1116] ss:$8 sm:$0x3] %vm1072, %v1114
      %1118 = vst.msk [vmem:[%s1116] ss:$8 sm:$0x0] %vm1072, %v1114
      %p1119 = scmp.lt.s32.totalorder %s21, 1
      %s1120 = scalar_select %p1119, %s21, 1
      %s1121 = smul.addr %s1120, 6
      %s1122 = smul.addr %s1121, 8
      %s1123 = scalar_lea.vmem %s10, %s1122
      // Predicated region
      $region61: #{generator_forward.7} parent=59 // pred_check
        %p1124 = pneg %p254
      $region62: #{generator_forward.7} parent=59 // pred_check_branch
        %1126 = sbr.rel (%p1124) target = $region64
      $region63: #{generator_forward.7} parent=59 // pred_region
        _
      $region64: #{generator_forward.7} parent=59 // pred_fallthru
        _
    $region60: #{generator_forward.7} parent=5 // pred_fallthru
      _
    %p1127 = scmp.le.s32.totalorder 2, %s16
    // Predicated region
    $region65: #{generator_forward.7} parent=5 // pred_check
      %p1128 = pneg %p1127
    $region66: #{generator_forward.7} parent=5 // pred_check_branch
      %1130 = sbr.rel (%p1128) target = $region68
    $region67: #{generator_forward.7} parent=5 // pred_region
      %s1131 = ssub.s32 %s16, 2
      // Predicated region
      $region69: #{generator_forward.7} parent=67 // pred_check
        %p1132 = pneg %p260
      $region70: #{generator_forward.7} parent=67 // pred_check_branch
        %1134 = sbr.rel (%p1132) target = $region72
      $region71: #{generator_forward.7} parent=67 // pred_region
        %p1135 = scmp.lt.s32.totalorder %s22, 1
        %s1136 = scalar_select %p1135, %s22, 1
        %s1137 = smul.addr %s1136, 6
        %s1138 = smul.addr %s1137, 8
        %s1139 = scalar_lea.vmem %s10, %s1138
      $region72: #{generator_forward.7} parent=67 // pred_fallthru
        _
    $region68: #{generator_forward.7} parent=5 // pred_fallthru
      _
  $region6: #{generator_forward.7} parent=0 // loop_footer
    %s20 = sadd.s32 1, %s16
  $region7: #{generator_forward.7} parent=0 // loop_footer_branch
    %15 = sbr.rel target = $region3
  $region8: #{generator_forward.7} parent=0 // loop_exit
    _

</llo_original>
